<compile_context>
chip_gen: v6e
topology: v6e:2x2x1
jax: 0.10.0
libtpu: 0.0.40
codegen_flags: <defaults>
</compile_context>

<pallas_src>
import functools

import jax
import jax.numpy as jnp
from jax.experimental import pallas as pl
from jax.experimental.pallas import tpu as pltpu


def mlp_kernel(x_ref, w1_ref, b1_ref, w2_ref, b2_ref, w3_ref, b3_ref, o_ref, *, chunk):
    # x_ref: (tile, 13) row block; o_ref: (1, tile) lane-dense output block.
    # w*: PyTorch layout (out, in); b1/b2: (out, 1) columns; b3: (1, 1) scalar in SMEM.
    tile = x_ref.shape[0]
    n_chunks = tile // chunk
    hp = jax.lax.Precision.HIGHEST

    # Loop-invariant loads (weights are VMEM-resident across the grid).
    w1 = w1_ref[...]            # (64, 13)
    b1 = b1_ref[...]            # (64, 1)
    w2 = w2_ref[...]            # (64, 64)
    b2 = b2_ref[...]            # (64, 1)
    w3 = w3_ref[...]            # (1, 64)
    b3 = b3_ref[0, 0]           # scalar

    def body(c, carry):
        c0 = pl.multiple_of(c * chunk, chunk)
        xc = x_ref[pl.ds(c0, chunk), :]                       # (chunk, 13)

        # layer 1: contract the feature axis of (64,13) and (chunk,13) -> (64, chunk)
        h1 = jax.lax.dot_general(
            w1, xc, (((1,), (1,)), ((), ())),
            preferred_element_type=jnp.float32, precision=hp)
        h1 = jnp.maximum(h1 + b1, 0.0)

        # layer 2: Linear(64, 64) + ReLU -> (64, chunk)
        h2 = jnp.dot(w2, h1, preferred_element_type=jnp.float32, precision=hp)
        h2 = jnp.maximum(h2 + b2, 0.0)

        # output: Linear(64, 1) + Sigmoid -> (1, chunk), lane-dense store
        z = jnp.dot(w3, h2, preferred_element_type=jnp.float32, precision=hp)
        o_ref[:, pl.ds(c0, chunk)] = jax.nn.sigmoid(z + b3).astype(o_ref.dtype)
        return carry

    jax.lax.fori_loop(0, n_chunks, body, 0, unroll=True)


def _num_tensorcores_per_chip():
    # v5e / v6e expose 1 TensorCore per chip; v7x exposes 2.
    try:
        kind = str(jax.devices()[0].device_kind).lower()
    except Exception:
        return 1
    return 2 if "v7" in kind else 1


def _pick_tile(B, tb, n_cores):
    LANE = 128
    Bp0 = -(-B // LANE) * LANE
    tb_eff = max(LANE, (tb // LANE) * LANE)
    if n_cores >= 2:
        # 2 TensorCores: aim for >= 4 balanced parallel grid steps.
        cap = max(LANE, (Bp0 // (4 * LANE)) * LANE)
        return min(tb_eff, cap)
    # Single TensorCore: the grid is a serial loop; use one big tile per step.
    return min(tb_eff, Bp0)


def dnn_forward(x, params, *, tb=1024):
    """x: (B, 13) float32. params in PyTorch layout: w (out, in), b (out,).
    Returns (B, 1) float32."""
    B, F = x.shape
    assert F == 13

    n_cores = _num_tensorcores_per_chip()
    tile = _pick_tile(B, tb, n_cores)
    # tile is always a lane (128) multiple; chunk the lanes so live activations
    # stay at (64, chunk) regardless of how big the BlockSpec tile is.
    chunk = 256 if tile % 256 == 0 else 128
    Bp = -(-B // tile) * tile
    n_tiles = Bp // tile

    # Row-pad only (no transpose materialization), and only when needed.
    xp = x if Bp == B else jnp.pad(x, ((0, Bp - B), (0, 0)))

    w1, b1 = params["w1"], params["b1"].reshape(64, 1)
    w2, b2 = params["w2"], params["b2"].reshape(64, 1)
    w3, b3 = params["w3"], params["b3"].reshape(1, 1)

    full = lambda a: pl.BlockSpec(a.shape, lambda i: (0, 0))

    outT = pl.pallas_call(
        functools.partial(mlp_kernel, chunk=chunk),
        out_shape=jax.ShapeDtypeStruct((1, Bp), jnp.float32),
        grid_spec=pltpu.PrefetchScalarGridSpec(
            num_scalar_prefetch=0,
            grid=(n_tiles,),
            in_specs=[
                pl.BlockSpec((tile, F), lambda i: (i, 0)),           # x row block
                full(w1), full(b1),                                  # (64,13), (64,1)
                full(w2), full(b2),                                  # (64,64), (64,1)
                full(w3),                                            # (1,64)
                pl.BlockSpec(memory_space=pltpu.MemorySpace.SMEM),   # (1,1) scalar bias
            ],
            out_specs=pl.BlockSpec((1, tile), lambda i: (0, i)),     # lane-dense output
        ),
        compiler_params=pltpu.CompilerParams(
            dimension_semantics=("parallel",),
        ),
    )(xp, w1, b1, w2, b2, w3, b3)

    # (1, Bp) -> (Bp, 1) is a pure row-major reshape, then drop the padding.
    return outT.reshape(Bp, 1)[:B]


def init_params(key):
    """Deterministic init matching nn.Linear layout: W (out,in), b (out,), uniform +-1/sqrt(fan_in)."""
    ks = jax.random.split(key, 6)

    def lin(kw, kb, fan_in, fan_out):
        bound = 1.0 / jnp.sqrt(jnp.float32(fan_in))
        w = jax.random.uniform(kw, (fan_out, fan_in), jnp.float32, -bound, bound)
        b = jax.random.uniform(kb, (fan_out,), jnp.float32, -bound, bound)
        return w, b

    w1, b1 = lin(ks[0], ks[1], 13, 64)
    w2, b2 = lin(ks[2], ks[3], 64, 64)
    w3, b3 = lin(ks[4], ks[5], 64, 1)
    return {"w1": w1, "b1": b1, "w2": w2, "b2": b2, "w3": w3, "b3": b3}


def dnn_reference(x, p):
    hp = jax.lax.Precision.HIGHEST
    h = jnp.maximum(jnp.dot(x, p["w1"].T, precision=hp) + p["b1"], 0.0)
    h = jnp.maximum(jnp.dot(h, p["w2"].T, precision=hp) + p["b2"], 0.0)
    return jax.nn.sigmoid(jnp.dot(h, p["w3"].T, precision=hp) + p["b3"])


if __name__ == "__main__":
    key = jax.random.PRNGKey(0)
    kp, kx = jax.random.split(key)
    params = init_params(kp)

    B = 300  # small, non-tile-multiple batch -> exercises the row-padding path
    x = jax.random.normal(kx, (B, 13), dtype=jnp.float32)

    out = dnn_forward(x, params)
    out = jax.block_until_ready(out)

    ref = dnn_reference(x, params)
    assert out.shape == (B, 1)
    assert jnp.allclose(out, ref, atol=2e-5, rtol=2e-5)
    print("KERNEL_OK")
</pallas_src>

<mosaic_0001>
module attributes {stable_mosaic.version = 11 : i64} {
  func.func @mlp_kernel(%arg0: i32, %arg1: memref<384x13xf32, #tpu.memory_space<vmem>>, %arg2: memref<64x13xf32, #tpu.memory_space<vmem>>, %arg3: memref<64x1xf32, #tpu.memory_space<vmem>>, %arg4: memref<64x64xf32, #tpu.memory_space<vmem>>, %arg5: memref<64x1xf32, #tpu.memory_space<vmem>>, %arg6: memref<1x64xf32, #tpu.memory_space<vmem>>, %arg7: memref<1x1xf32, #tpu.memory_space<smem>>, %arg8: memref<1x384xf32, #tpu.memory_space<vmem>>) attributes {dimension_semantics = [#tpu.dimension_semantics<parallel>], iteration_bounds = array<i64: 1>, scalar_prefetch = 0 : i64, scratch_operands = 0 : i64, tpu.core_type = #tpu.core_type<tc>, window_params = [{transform_indices = @transform_0, window_bounds = array<i64: 384, 13>}, {pipeline_mode = #tpu.pipeline_mode<synchronous>, transform_indices = @transform_1, window_bounds = array<i64: 64, 13>}, {pipeline_mode = #tpu.pipeline_mode<synchronous>, transform_indices = @transform_2, window_bounds = array<i64: 64, 1>}, {pipeline_mode = #tpu.pipeline_mode<synchronous>, transform_indices = @transform_3, window_bounds = array<i64: 64, 64>}, {pipeline_mode = #tpu.pipeline_mode<synchronous>, transform_indices = @transform_4, window_bounds = array<i64: 64, 1>}, {pipeline_mode = #tpu.pipeline_mode<synchronous>, transform_indices = @transform_5, window_bounds = array<i64: 1, 64>}, {transform_indices = @transform_6, window_bounds = array<i64: 1, 1>}, {transform_indices = @transform_7, window_bounds = array<i64: 1, 384>}]} {
    %c0 = arith.constant 0 : index
    %c0_0 = arith.constant 0 : index
    %0 = vector.load %arg2[%c0, %c0_0] : memref<64x13xf32, #tpu.memory_space<vmem>>, vector<64x13xf32>
    %c0_1 = arith.constant 0 : index
    %c0_2 = arith.constant 0 : index
    %1 = vector.load %arg3[%c0_1, %c0_2] : memref<64x1xf32, #tpu.memory_space<vmem>>, vector<64x1xf32>
    %c0_3 = arith.constant 0 : index
    %c0_4 = arith.constant 0 : index
    %2 = vector.load %arg4[%c0_3, %c0_4] : memref<64x64xf32, #tpu.memory_space<vmem>>, vector<64x64xf32>
    %c0_5 = arith.constant 0 : index
    %c0_6 = arith.constant 0 : index
    %3 = vector.load %arg5[%c0_5, %c0_6] : memref<64x1xf32, #tpu.memory_space<vmem>>, vector<64x1xf32>
    %c0_7 = arith.constant 0 : index
    %c0_8 = arith.constant 0 : index
    %4 = vector.load %arg6[%c0_7, %c0_8] : memref<1x64xf32, #tpu.memory_space<vmem>>, vector<1x64xf32>
    %c0_9 = arith.constant 0 : index
    %c0_10 = arith.constant 0 : index
    %5 = memref.load %arg7[%c0_9, %c0_10] : memref<1x1xf32, #tpu.memory_space<smem>>
    %c0_i32 = arith.constant 0 : i32
    %c128_i32 = arith.constant 128 : i32
    %6 = arith.muli %c0_i32, %c128_i32 : i32
    %7 = tpu.assume_multiple %6, 128 : i32
    %8 = arith.index_cast %7 : i32 to index
    %c0_11 = arith.constant 0 : index
    %9 = vector.load %arg1[%8, %c0_11] : memref<384x13xf32, #tpu.memory_space<vmem>>, vector<128x13xf32>
    %cst = arith.constant dense<0.000000e+00> : vector<64x128xf32>
    %10 = tpu.matmul %0, %9, %cst {dimension_numbers = #tpu.dot_dimension_numbers<[1], [1], [0], [0], [0, 0, 1, 0], [], []>, precision = #tpu.contract_precision<fp32>} : vector<64x13xf32>, vector<128x13xf32>, vector<64x128xf32> -> vector<64x128xf32>
    %11 = vector.broadcast %1 : vector<64x1xf32> to vector<64x128xf32>
    %12 = arith.addf %10, %11 : vector<64x128xf32>
    %cst_12 = arith.constant 0.000000e+00 : f32
    %13 = vector.broadcast %cst_12 : f32 to vector<64x128xf32>
    %14 = arith.maximumf %12, %13 : vector<64x128xf32>
    %cst_13 = arith.constant dense<0.000000e+00> : vector<64x128xf32>
    %15 = tpu.matmul %2, %14, %cst_13 {dimension_numbers = #tpu.dot_dimension_numbers<[1], [0], [0], [1], [0, 0, 1, 1], [], []>, precision = #tpu.contract_precision<fp32>} : vector<64x64xf32>, vector<64x128xf32>, vector<64x128xf32> -> vector<64x128xf32>
    %16 = vector.broadcast %3 : vector<64x1xf32> to vector<64x128xf32>
    %17 = arith.addf %15, %16 : vector<64x128xf32>
    %cst_14 = arith.constant 0.000000e+00 : f32
    %18 = vector.broadcast %cst_14 : f32 to vector<64x128xf32>
    %19 = arith.maximumf %17, %18 : vector<64x128xf32>
    %cst_15 = arith.constant dense<0.000000e+00> : vector<1x128xf32>
    %20 = tpu.matmul %4, %19, %cst_15 {dimension_numbers = #tpu.dot_dimension_numbers<[1], [0], [0], [1], [0, 0, 1, 1], [], []>, precision = #tpu.contract_precision<fp32>} : vector<1x64xf32>, vector<64x128xf32>, vector<1x128xf32> -> vector<1x128xf32>
    %21 = vector.broadcast %5 : f32 to vector<1x128xf32>
    %22 = arith.addf %20, %21 : vector<1x128xf32>
    %23 = arith.negf %22 : vector<1x128xf32>
    %24 = math.exp %23 : vector<1x128xf32>
    %cst_16 = arith.constant 1.000000e+00 : f32
    %25 = vector.broadcast %cst_16 : f32 to vector<1x128xf32>
    %26 = arith.addf %25, %24 : vector<1x128xf32>
    %27 = arith.divf %25, %26 : vector<1x128xf32>
    %c0_17 = arith.constant 0 : index
    %28 = arith.index_cast %7 : i32 to index
    %29 = vector.load %arg8[%c0_17, %28] : memref<1x384xf32, #tpu.memory_space<vmem>>, vector<1x128xf32>
    tpu.vector_store %arg8[%c0_17, %28], %27 {strides = array<i32>} : memref<1x384xf32, #tpu.memory_space<vmem>>, vector<1x128xf32>,
    %c1_i32 = arith.constant 1 : i32
    %c128_i32_18 = arith.constant 128 : i32
    %30 = arith.muli %c1_i32, %c128_i32_18 : i32
    %31 = tpu.assume_multiple %30, 128 : i32
    %32 = arith.index_cast %31 : i32 to index
    %c0_19 = arith.constant 0 : index
    %33 = vector.load %arg1[%32, %c0_19] : memref<384x13xf32, #tpu.memory_space<vmem>>, vector<128x13xf32>
    %cst_20 = arith.constant dense<0.000000e+00> : vector<64x128xf32>
    %34 = tpu.matmul %0, %33, %cst_20 {dimension_numbers = #tpu.dot_dimension_numbers<[1], [1], [0], [0], [0, 0, 1, 0], [], []>, precision = #tpu.contract_precision<fp32>} : vector<64x13xf32>, vector<128x13xf32>, vector<64x128xf32> -> vector<64x128xf32>
    %35 = vector.broadcast %1 : vector<64x1xf32> to vector<64x128xf32>
    %36 = arith.addf %34, %35 : vector<64x128xf32>
    %cst_21 = arith.constant 0.000000e+00 : f32
    %37 = vector.broadcast %cst_21 : f32 to vector<64x128xf32>
    %38 = arith.maximumf %36, %37 : vector<64x128xf32>
    %cst_22 = arith.constant dense<0.000000e+00> : vector<64x128xf32>
    %39 = tpu.matmul %2, %38, %cst_22 {dimension_numbers = #tpu.dot_dimension_numbers<[1], [0], [0], [1], [0, 0, 1, 1], [], []>, precision = #tpu.contract_precision<fp32>} : vector<64x64xf32>, vector<64x128xf32>, vector<64x128xf32> -> vector<64x128xf32>
    %40 = vector.broadcast %3 : vector<64x1xf32> to vector<64x128xf32>
    %41 = arith.addf %39, %40 : vector<64x128xf32>
    %cst_23 = arith.constant 0.000000e+00 : f32
    %42 = vector.broadcast %cst_23 : f32 to vector<64x128xf32>
    %43 = arith.maximumf %41, %42 : vector<64x128xf32>
    %cst_24 = arith.constant dense<0.000000e+00> : vector<1x128xf32>
    %44 = tpu.matmul %4, %43, %cst_24 {dimension_numbers = #tpu.dot_dimension_numbers<[1], [0], [0], [1], [0, 0, 1, 1], [], []>, precision = #tpu.contract_precision<fp32>} : vector<1x64xf32>, vector<64x128xf32>, vector<1x128xf32> -> vector<1x128xf32>
    %45 = vector.broadcast %5 : f32 to vector<1x128xf32>
    %46 = arith.addf %44, %45 : vector<1x128xf32>
    %47 = arith.negf %46 : vector<1x128xf32>
    %48 = math.exp %47 : vector<1x128xf32>
    %cst_25 = arith.constant 1.000000e+00 : f32
    %49 = vector.broadcast %cst_25 : f32 to vector<1x128xf32>
    %50 = arith.addf %49, %48 : vector<1x128xf32>
    %51 = arith.divf %49, %50 : vector<1x128xf32>
    %c0_26 = arith.constant 0 : index
    %52 = arith.index_cast %31 : i32 to index
    %53 = vector.load %arg8[%c0_26, %52] : memref<1x384xf32, #tpu.memory_space<vmem>>, vector<1x128xf32>
    tpu.vector_store %arg8[%c0_26, %52], %51 {strides = array<i32>} : memref<1x384xf32, #tpu.memory_space<vmem>>, vector<1x128xf32>,
    %c2_i32 = arith.constant 2 : i32
    %c128_i32_27 = arith.constant 128 : i32
    %54 = arith.muli %c2_i32, %c128_i32_27 : i32
    %55 = tpu.assume_multiple %54, 128 : i32
    %56 = arith.index_cast %55 : i32 to index
    %c0_28 = arith.constant 0 : index
    %57 = vector.load %arg1[%56, %c0_28] : memref<384x13xf32, #tpu.memory_space<vmem>>, vector<128x13xf32>
    %cst_29 = arith.constant dense<0.000000e+00> : vector<64x128xf32>
    %58 = tpu.matmul %0, %57, %cst_29 {dimension_numbers = #tpu.dot_dimension_numbers<[1], [1], [0], [0], [0, 0, 1, 0], [], []>, precision = #tpu.contract_precision<fp32>} : vector<64x13xf32>, vector<128x13xf32>, vector<64x128xf32> -> vector<64x128xf32>
    %59 = vector.broadcast %1 : vector<64x1xf32> to vector<64x128xf32>
    %60 = arith.addf %58, %59 : vector<64x128xf32>
    %cst_30 = arith.constant 0.000000e+00 : f32
    %61 = vector.broadcast %cst_30 : f32 to vector<64x128xf32>
    %62 = arith.maximumf %60, %61 : vector<64x128xf32>
    %cst_31 = arith.constant dense<0.000000e+00> : vector<64x128xf32>
    %63 = tpu.matmul %2, %62, %cst_31 {dimension_numbers = #tpu.dot_dimension_numbers<[1], [0], [0], [1], [0, 0, 1, 1], [], []>, precision = #tpu.contract_precision<fp32>} : vector<64x64xf32>, vector<64x128xf32>, vector<64x128xf32> -> vector<64x128xf32>
    %64 = vector.broadcast %3 : vector<64x1xf32> to vector<64x128xf32>
    %65 = arith.addf %63, %64 : vector<64x128xf32>
    %cst_32 = arith.constant 0.000000e+00 : f32
    %66 = vector.broadcast %cst_32 : f32 to vector<64x128xf32>
    %67 = arith.maximumf %65, %66 : vector<64x128xf32>
    %cst_33 = arith.constant dense<0.000000e+00> : vector<1x128xf32>
    %68 = tpu.matmul %4, %67, %cst_33 {dimension_numbers = #tpu.dot_dimension_numbers<[1], [0], [0], [1], [0, 0, 1, 1], [], []>, precision = #tpu.contract_precision<fp32>} : vector<1x64xf32>, vector<64x128xf32>, vector<1x128xf32> -> vector<1x128xf32>
    %69 = vector.broadcast %5 : f32 to vector<1x128xf32>
    %70 = arith.addf %68, %69 : vector<1x128xf32>
    %71 = arith.negf %70 : vector<1x128xf32>
    %72 = math.exp %71 : vector<1x128xf32>
    %cst_34 = arith.constant 1.000000e+00 : f32
    %73 = vector.broadcast %cst_34 : f32 to vector<1x128xf32>
    %74 = arith.addf %73, %72 : vector<1x128xf32>
    %75 = arith.divf %73, %74 : vector<1x128xf32>
    %c0_35 = arith.constant 0 : index
    %76 = arith.index_cast %55 : i32 to index
    %77 = vector.load %arg8[%c0_35, %76] : memref<1x384xf32, #tpu.memory_space<vmem>>, vector<1x128xf32>
    tpu.vector_store %arg8[%c0_35, %76], %75 {strides = array<i32>} : memref<1x384xf32, #tpu.memory_space<vmem>>, vector<1x128xf32>,
    %c3_i32 = arith.constant 3 : i32
    return
  }
  func.func @transform_0(%arg0: i32) -> (i32, i32) {
    %c0_i32 = arith.constant 0 : i32
    %c0_i32_0 = arith.constant 0 : i32
    return %arg0, %c0_i32 : i32, i32
  }
  func.func @transform_1(%arg0: i32) -> (i32, i32) {
    %c0_i32 = arith.constant 0 : i32
    %c0_i32_0 = arith.constant 0 : i32
    %c0_i32_1 = arith.constant 0 : i32
    return %c0_i32, %c0_i32_0 : i32, i32
  }
  func.func @transform_2(%arg0: i32) -> (i32, i32) {
    %c0_i32 = arith.constant 0 : i32
    %c0_i32_0 = arith.constant 0 : i32
    %c0_i32_1 = arith.constant 0 : i32
    return %c0_i32, %c0_i32_0 : i32, i32
  }
  func.func @transform_3(%arg0: i32) -> (i32, i32) {
    %c0_i32 = arith.constant 0 : i32
    %c0_i32_0 = arith.constant 0 : i32
    %c0_i32_1 = arith.constant 0 : i32
    return %c0_i32, %c0_i32_0 : i32, i32
  }
  func.func @transform_4(%arg0: i32) -> (i32, i32) {
    %c0_i32 = arith.constant 0 : i32
    %c0_i32_0 = arith.constant 0 : i32
    %c0_i32_1 = arith.constant 0 : i32
    return %c0_i32, %c0_i32_0 : i32, i32
  }
  func.func @transform_5(%arg0: i32) -> (i32, i32) {
    %c0_i32 = arith.constant 0 : i32
    %c0_i32_0 = arith.constant 0 : i32
    %c0_i32_1 = arith.constant 0 : i32
    return %c0_i32, %c0_i32_0 : i32, i32
  }
  func.func @transform_6(%arg0: i32) -> (i32, i32) {
    %c0_i32 = arith.constant 0 : i32
    %c0_i32_0 = arith.constant 0 : i32
    %c0_i32_1 = arith.constant 0 : i32
    return %c0_i32, %c0_i32_0 : i32, i32
  }
  func.func @transform_7(%arg0: i32) -> (i32, i32) {
    %c0_i32 = arith.constant 0 : i32
    %c0_i32_0 = arith.constant 0 : i32
    return %c0_i32, %arg0 : i32, i32
  }
}

</mosaic_0001>

<llo_original>
// kernel: tpu_custom_call.1
$region0: #{tpu_custom_call.1}
  #allocation0 [shape = 'u32[]', space=smem, size = 0x4, offset = 0x4, fixed_abs, tag = 'smem constant byte address 0x4 - core index']
  #allocation1 [shape = 'u32[144,128]{1,0:T(1,128)}', space=vmem, size = 0x12000, scoped, tag = 'internal scratch']
  #allocation2 [shape = 'f32[1,1]{1,0:T(1,128)S(6)}', space=smem, size = 0x200, scoped, tag = 'scoped memory for tpu_custom_call.1']
  %s0 = inlined_call_operand.vmem [shape: f32[384,13], index: 0, kind: input, shape index: {}]
  %s1 = inlined_call_operand.vmem [shape: f32[64,13], index: 1, kind: input, shape index: {}]
  %s2 = inlined_call_operand.vmem [shape: f32[64,1], index: 2, kind: input, shape index: {}]
  %s3 = inlined_call_operand.vmem [shape: f32[64,64], index: 3, kind: input, shape index: {}]
  %s4 = inlined_call_operand.vmem [shape: f32[64,1], index: 4, kind: input, shape index: {}]
  %s5 = inlined_call_operand.vmem [shape: f32[1,64], index: 5, kind: input, shape index: {}]
  %s6 = inlined_call_operand.<no memory space> [shape: f32[1,1], index: 6, kind: input, shape index: {}]
  %s7 = inlined_call_operand.hbm [shape: f32[1,384], index: 7, kind: output, shape index: {}]
  %s8 = sld [smem:[#allocation0]]
  $region38: #{tpu_custom_call.1} parent=0
    _
  %s10 = ssub.s32 1, %s8
  %s11 = scalar_select 0, %s10, %s8
  %12 = sst [smem:[#allocation2]] %s6
  $region1: #{tpu_custom_call.1} parent=0
    #allocation3 [shape = 'u8[1536]{0}', space=vmem, size = 0x800, scoped, tag = 'output window, operand 0, single buffered']
    #allocation4 [shape = 's32[1]{0}', space=sflag, size = 0x4, scoped, tag = 'scoped memory for tpu_custom_call.1']
    %13 = vsyncpa [#allocation4], 0
    // Predicated region
    $region2: #{tpu_custom_call.1} parent=1 // pred_check
      _
    $region3: #{tpu_custom_call.1} parent=1 // pred_check_branch
      %15 = sbr.rel (0) target = $region5
    $region4: #{tpu_custom_call.1} parent=1 // pred_region
      _
    $region5: #{tpu_custom_call.1} parent=1 // pred_fallthru
      _
    // Predicated region
    $region6: #{tpu_custom_call.1} parent=1 // pred_check
      _
    $region7: #{tpu_custom_call.1} parent=1 // pred_check_branch
      %17 = sbr.rel (0) target = $region9
    $region8: #{tpu_custom_call.1} parent=1 // pred_region
      _
    $region9: #{tpu_custom_call.1} parent=1 // pred_fallthru
      _
    // Predicated region
    $region10: #{tpu_custom_call.1} parent=1 // pred_check
      _
    $region11: #{tpu_custom_call.1} parent=1 // pred_check_branch
      %19 = sbr.rel (0) target = $region13
    $region12: #{tpu_custom_call.1} parent=1 // pred_region
      _
    $region13: #{tpu_custom_call.1} parent=1 // pred_fallthru
      _
    // Predicated region
    $region14: #{tpu_custom_call.1} parent=1 // pred_check
      _
    $region15: #{tpu_custom_call.1} parent=1 // pred_check_branch
      %21 = sbr.rel (0) target = $region17
    $region16: #{tpu_custom_call.1} parent=1 // pred_region
      _
    $region17: #{tpu_custom_call.1} parent=1 // pred_fallthru
      _
    // Predicated region
    $region18: #{tpu_custom_call.1} parent=1 // pred_check
      _
    $region19: #{tpu_custom_call.1} parent=1 // pred_check_branch
      %23 = sbr.rel (0) target = $region21
    $region20: #{tpu_custom_call.1} parent=1 // pred_region
      _
    $region21: #{tpu_custom_call.1} parent=1 // pred_fallthru
      _
    // Predicated region
    $region22: #{tpu_custom_call.1} parent=1 // pred_check
      _
    $region23: #{tpu_custom_call.1} parent=1 // pred_check_branch
      %25 = sbr.rel (0) target = $region25
    $region24: #{tpu_custom_call.1} parent=1 // pred_region
      _
    $region25: #{tpu_custom_call.1} parent=1 // pred_fallthru
      _
    // Predicated region
    $region26: #{tpu_custom_call.1} parent=1 // pred_check
      _
    $region27: #{tpu_custom_call.1} parent=1 // pred_check_branch
      %27 = sbr.rel (0) target = $region29
    $region28: #{tpu_custom_call.1} parent=1 // pred_region
      _
    $region29: #{tpu_custom_call.1} parent=1 // pred_fallthru
      _
    %v28 = vld [vmem:[%s1] sm:$0xff]
    %v29 = vld [vmem:[%s1 + $0x8] sm:$0xff]
    %v30 = vld [vmem:[%s1 + $0x10] sm:$0xff]
    %v31 = vld [vmem:[%s1 + $0x18] sm:$0xff]
    %v32 = vld [vmem:[%s1 + $0x20] sm:$0xff]
    %v33 = vld [vmem:[%s1 + $0x28] sm:$0xff]
    %v34 = vld [vmem:[%s1 + $0x30] sm:$0xff]
    %v35 = vld [vmem:[%s1 + $0x38] sm:$0xff]
    %v36 = vld [vmem:[%s2] sm:$0xff]
    %v37 = vld [vmem:[%s2 + $0x8] sm:$0xff]
    %v38 = vld [vmem:[%s2 + $0x10] sm:$0xff]
    %v39 = vld [vmem:[%s2 + $0x18] sm:$0xff]
    %v40 = vld [vmem:[%s2 + $0x20] sm:$0xff]
    %v41 = vld [vmem:[%s2 + $0x28] sm:$0xff]
    %v42 = vld [vmem:[%s2 + $0x30] sm:$0xff]
    %v43 = vld [vmem:[%s2 + $0x38] sm:$0xff]
    %v44 = vld [vmem:[%s3] sm:$0xff]
    %v45 = vld [vmem:[%s3 + $0x8] sm:$0xff]
    %v46 = vld [vmem:[%s3 + $0x10] sm:$0xff]
    %v47 = vld [vmem:[%s3 + $0x18] sm:$0xff]
    %v48 = vld [vmem:[%s3 + $0x20] sm:$0xff]
    %v49 = vld [vmem:[%s3 + $0x28] sm:$0xff]
    %v50 = vld [vmem:[%s3 + $0x30] sm:$0xff]
    %v51 = vld [vmem:[%s3 + $0x38] sm:$0xff]
    %v52 = vld [vmem:[%s4] sm:$0xff]
    %v53 = vld [vmem:[%s4 + $0x8] sm:$0xff]
    %v54 = vld [vmem:[%s4 + $0x10] sm:$0xff]
    %v55 = vld [vmem:[%s4 + $0x18] sm:$0xff]
    %v56 = vld [vmem:[%s4 + $0x20] sm:$0xff]
    %v57 = vld [vmem:[%s4 + $0x28] sm:$0xff]
    %v58 = vld [vmem:[%s4 + $0x30] sm:$0xff]
    %v59 = vld [vmem:[%s4 + $0x38] sm:$0xff]
    %v60 = vld [vmem:[%s5] sm:$0x1]
    %s61 = sld [smem:[#allocation2]]
    %v62 = vld [vmem:[%s0] sm:$0xff]
    %v63 = vld [vmem:[%s0 + $0x8] sm:$0xff]
    %v64 = vld [vmem:[%s0 + $0x10] sm:$0xff]
    %v65 = vld [vmem:[%s0 + $0x18] sm:$0xff]
    %v66 = vld [vmem:[%s0 + $0x20] sm:$0xff]
    %v67 = vld [vmem:[%s0 + $0x28] sm:$0xff]
    %v68 = vld [vmem:[%s0 + $0x30] sm:$0xff]
    %v69 = vld [vmem:[%s0 + $0x38] sm:$0xff]
    %v70 = vld [vmem:[%s0 + $0x40] sm:$0xff]
    %v71 = vld [vmem:[%s0 + $0x48] sm:$0xff]
    %v72 = vld [vmem:[%s0 + $0x50] sm:$0xff]
    %v73 = vld [vmem:[%s0 + $0x58] sm:$0xff]
    %v74 = vld [vmem:[%s0 + $0x60] sm:$0xff]
    %v75 = vld [vmem:[%s0 + $0x68] sm:$0xff]
    %v76 = vld [vmem:[%s0 + $0x70] sm:$0xff]
    %v77 = vld [vmem:[%s0 + $0x78] sm:$0xff]
    %79 = vset.pattern.permute.xlu0 0
    %80 = vperm.xlu0 %79, %v36
    %v81 = vpop.permute.xlu0 %80
    %84 = vset.pattern.permute.xlu0 0
    %85 = vperm.xlu0 %84, %v37
    %v86 = vpop.permute.xlu0 %85
    %89 = vset.pattern.permute.xlu0 0
    %90 = vperm.xlu0 %89, %v38
    %v91 = vpop.permute.xlu0 %90
    %94 = vset.pattern.permute.xlu0 0
    %95 = vperm.xlu0 %94, %v39
    %v96 = vpop.permute.xlu0 %95
    %99 = vset.pattern.permute.xlu0 0
    %100 = vperm.xlu0 %99, %v40
    %v101 = vpop.permute.xlu0 %100
    %104 = vset.pattern.permute.xlu0 0
    %105 = vperm.xlu0 %104, %v41
    %v106 = vpop.permute.xlu0 %105
    %109 = vset.pattern.permute.xlu0 0
    %110 = vperm.xlu0 %109, %v42
    %v111 = vpop.permute.xlu0 %110
    %114 = vset.pattern.permute.xlu0 0
    %115 = vperm.xlu0 %114, %v43
    %v116 = vpop.permute.xlu0 %115
    %vm118 = vcmask 105472
    %v120 = vsel %vm118, %v28, 0
    %v123 = vsel %vm118, %v29, 0
    %v126 = vsel %vm118, %v30, 0
    %v129 = vsel %vm118, %v31, 0
    %v132 = vsel %vm118, %v32, 0
    %v135 = vsel %vm118, %v33, 0
    %v138 = vsel %vm118, %v34, 0
    %v141 = vsel %vm118, %v35, 0
    %v144 = vsel %vm118, %v62, 0
    %v147 = vsel %vm118, %v63, 0
    %v150 = vsel %vm118, %v64, 0
    %v153 = vsel %vm118, %v65, 0
    %v156 = vsel %vm118, %v66, 0
    %v159 = vsel %vm118, %v67, 0
    %v162 = vsel %vm118, %v68, 0
    %v165 = vsel %vm118, %v69, 0
    %v168 = vsel %vm118, %v70, 0
    %v171 = vsel %vm118, %v71, 0
    %v174 = vsel %vm118, %v72, 0
    %v177 = vsel %vm118, %v73, 0
    %v180 = vsel %vm118, %v74, 0
    %v183 = vsel %vm118, %v75, 0
    %v186 = vsel %vm118, %v76, 0
    %v189 = vsel %vm118, %v77, 0
    %191 = vmatprep.subr.mxu0 0.0
    %v192 = vand.u32 %v189, 4294901760
    %193 = vmatpush1.xpose.msra.mxu0 %v192
    %194 = vmatprep.subr.mxu0 0.0
    %v195 = vand.u32 %v186, 4294901760
    %196 = vmatpush1.xpose.msra.mxu0 %v195
    %197 = vmatprep.subr.mxu0 0.0
    %v198 = vand.u32 %v183, 4294901760
    %199 = vmatpush1.xpose.msra.mxu0 %v198
    %200 = vmatprep.subr.mxu0 0.0
    %v201 = vand.u32 %v180, 4294901760
    %202 = vmatpush1.xpose.msra.mxu0 %v201
    %203 = vmatprep.subr.mxu0 0.0
    %v204 = vand.u32 %v177, 4294901760
    %205 = vmatpush1.xpose.msra.mxu0 %v204
    %206 = vmatprep.subr.mxu0 0.0
    %v207 = vand.u32 %v174, 4294901760
    %208 = vmatpush1.xpose.msra.mxu0 %v207
    %209 = vmatprep.subr.mxu0 0.0
    %v210 = vand.u32 %v171, 4294901760
    %211 = vmatpush1.xpose.msra.mxu0 %v210
    %212 = vmatprep.subr.mxu0 0.0
    %v213 = vand.u32 %v168, 4294901760
    %214 = vmatpush1.xpose.msra.mxu0 %v213
    %215 = vmatprep.subr.mxu0 0.0
    %v216 = vand.u32 %v165, 4294901760
    %217 = vmatpush1.xpose.msra.mxu0 %v216
    %218 = vmatprep.subr.mxu0 0.0
    %v219 = vand.u32 %v162, 4294901760
    %220 = vmatpush1.xpose.msra.mxu0 %v219
    %221 = vmatprep.subr.mxu0 0.0
    %v222 = vand.u32 %v159, 4294901760
    %223 = vmatpush1.xpose.msra.mxu0 %v222
    %224 = vmatprep.subr.mxu0 0.0
    %v225 = vand.u32 %v156, 4294901760
    %226 = vmatpush1.xpose.msra.mxu0 %v225
    %227 = vmatprep.subr.mxu0 0.0
    %v228 = vand.u32 %v153, 4294901760
    %229 = vmatpush1.xpose.msra.mxu0 %v228
    %230 = vmatprep.subr.mxu0 0.0
    %v231 = vand.u32 %v150, 4294901760
    %232 = vmatpush1.xpose.msra.mxu0 %v231
    %233 = vmatprep.subr.mxu0 0.0
    %v234 = vand.u32 %v147, 4294901760
    %235 = vmatpush1.xpose.msra.mxu0 %v234
    %236 = vmatprep.subr.mxu0 0.0
    %v237 = vand.u32 %v144, 4294901760
    %238 = vmatpush1.xpose.msra.mxu0 %v237
    %239 = vmatprep.subr.mxu0 0.0
    %240 = vmatpush2.xpose.msra.mxu0 0.0
    %241 = vmatprep.subr.mxu0 0.0
    %242 = vmatpush2.xpose.msra.mxu0 0.0
    %243 = vmatprep.subr.mxu0 0.0
    %244 = vmatpush2.xpose.msra.mxu0 0.0
    %245 = vmatprep.subr.mxu0 0.0
    %246 = vmatpush2.xpose.msra.mxu0 0.0
    %247 = vmatprep.subr.mxu0 0.0
    %248 = vmatpush2.xpose.msra.mxu0 0.0
    %249 = vmatprep.subr.mxu0 0.0
    %250 = vmatpush2.xpose.msra.mxu0 0.0
    %251 = vmatprep.subr.mxu0 0.0
    %252 = vmatpush2.xpose.msra.mxu0 0.0
    %253 = vmatprep.subr.mxu0 0.0
    %254 = vmatpush2.xpose.msra.mxu0 0.0
    %255 = vmatprep.subr.mxu0 0.0
    %256 = vmatpush2.xpose.msra.mxu0 0.0
    %257 = vmatprep.subr.mxu0 0.0
    %258 = vmatpush2.xpose.msra.mxu0 0.0
    %259 = vmatprep.subr.mxu0 0.0
    %260 = vmatpush2.xpose.msra.mxu0 0.0
    %261 = vmatprep.subr.mxu0 0.0
    %262 = vmatpush2.xpose.msra.mxu0 0.0
    %263 = vmatprep.subr.mxu0 0.0
    %264 = vmatpush2.xpose.msra.mxu0 0.0
    %265 = vmatprep.subr.mxu0 0.0
    %266 = vmatpush2.xpose.msra.mxu0 0.0
    %267 = vmatprep.subr.mxu0 0.0
    %268 = vmatpush2.xpose.msra.mxu0 0.0
    %269 = vmatprep.subr.mxu0 0.0
    %270 = vmatpush2.xpose.msra.mxu0 0.0
    %271 = vmatprep.mubr.f32.mxu0 0.0
    %v272 = vand.u32 %v120, 4294901760
    %v273 = vsub.f32 %v120, %v272
    %v274 = vand.u32 %v273, 4294901760
    %v275 = vsub.f32 %v273, %v274
    %v276 = vand.u32 %v275, 4294901760
    %277 = vmatmul.mubr.f32.gmra.mxu0 %v276
    %v278 = vpop.f32.mrf.mxu0
    %v279 = vadd.f32 %v81, %v278
    %v280 = vpop.f32.mrf.mxu0
    %281 = vmatprep.mubr.f32.mxu0 0.0
    %v282 = vand.u32 %v123, 4294901760
    %v283 = vsub.f32 %v123, %v282
    %v284 = vand.u32 %v283, 4294901760
    %v285 = vsub.f32 %v283, %v284
    %v286 = vand.u32 %v285, 4294901760
    %287 = vmatmul.mubr.f32.gmra.mxu0 %v286
    %v288 = vpop.f32.mrf.mxu0
    %v289 = vadd.f32 %v86, %v288
    %v290 = vpop.f32.mrf.mxu0
    %291 = vmatprep.mubr.f32.mxu0 0.0
    %v292 = vand.u32 %v126, 4294901760
    %v293 = vsub.f32 %v126, %v292
    %v294 = vand.u32 %v293, 4294901760
    %v295 = vsub.f32 %v293, %v294
    %v296 = vand.u32 %v295, 4294901760
    %297 = vmatmul.mubr.f32.gmra.mxu0 %v296
    %v298 = vpop.f32.mrf.mxu0
    %v299 = vadd.f32 %v91, %v298
    %v300 = vpop.f32.mrf.mxu0
    %301 = vmatprep.mubr.f32.mxu0 0.0
    %v302 = vand.u32 %v129, 4294901760
    %v303 = vsub.f32 %v129, %v302
    %v304 = vand.u32 %v303, 4294901760
    %v305 = vsub.f32 %v303, %v304
    %v306 = vand.u32 %v305, 4294901760
    %307 = vmatmul.mubr.f32.gmra.mxu0 %v306
    %v308 = vpop.f32.mrf.mxu0
    %v309 = vadd.f32 %v96, %v308
    %v310 = vpop.f32.mrf.mxu0
    %311 = vmatprep.mubr.f32.mxu0 0.0
    %v312 = vand.u32 %v132, 4294901760
    %v313 = vsub.f32 %v132, %v312
    %v314 = vand.u32 %v313, 4294901760
    %v315 = vsub.f32 %v313, %v314
    %v316 = vand.u32 %v315, 4294901760
    %317 = vmatmul.mubr.f32.gmra.mxu0 %v316
    %v318 = vpop.f32.mrf.mxu0
    %v319 = vadd.f32 %v101, %v318
    %v320 = vpop.f32.mrf.mxu0
    %321 = vmatprep.mubr.f32.mxu0 0.0
    %v322 = vand.u32 %v135, 4294901760
    %v323 = vsub.f32 %v135, %v322
    %v324 = vand.u32 %v323, 4294901760
    %v325 = vsub.f32 %v323, %v324
    %v326 = vand.u32 %v325, 4294901760
    %327 = vmatmul.mubr.f32.gmra.mxu0 %v326
    %v328 = vpop.f32.mrf.mxu0
    %v329 = vadd.f32 %v106, %v328
    %v330 = vpop.f32.mrf.mxu0
    %331 = vmatprep.mubr.f32.mxu0 0.0
    %v332 = vand.u32 %v138, 4294901760
    %v333 = vsub.f32 %v138, %v332
    %v334 = vand.u32 %v333, 4294901760
    %v335 = vsub.f32 %v333, %v334
    %v336 = vand.u32 %v335, 4294901760
    %337 = vmatmul.mubr.f32.gmra.mxu0 %v336
    %v338 = vpop.f32.mrf.mxu0
    %v339 = vadd.f32 %v111, %v338
    %v340 = vpop.f32.mrf.mxu0
    %341 = vmatprep.mubr.f32.mxu0 0.0
    %v342 = vand.u32 %v141, 4294901760
    %v343 = vsub.f32 %v141, %v342
    %v344 = vand.u32 %v343, 4294901760
    %v345 = vsub.f32 %v343, %v344
    %v346 = vand.u32 %v345, 4294901760
    %347 = vmatmul.mubr.f32.gmra.mxu0 %v346
    %v348 = vpop.f32.mrf.mxu0
    %v349 = vadd.f32 %v116, %v348
    %v350 = vpop.f32.mrf.mxu0
    %351 = vdwg.mxu0
    %352 = vmatprep.subr.mxu0 0.0
    %v353 = vand.u32 %v189, 4294901760
    %v354 = vsub.f32 %v189, %v353
    %v355 = vand.u32 %v354, 4294901760
    %v356 = vsub.f32 %v354, %v355
    %v357 = vand.u32 %v356, 4294901760
    %358 = vmatpush1.xpose.msra.mxu0 %v357
    %359 = vmatprep.subr.mxu0 0.0
    %v360 = vand.u32 %v186, 4294901760
    %v361 = vsub.f32 %v186, %v360
    %v362 = vand.u32 %v361, 4294901760
    %v363 = vsub.f32 %v361, %v362
    %v364 = vand.u32 %v363, 4294901760
    %365 = vmatpush1.xpose.msra.mxu0 %v364
    %366 = vmatprep.subr.mxu0 0.0
    %v367 = vand.u32 %v183, 4294901760
    %v368 = vsub.f32 %v183, %v367
    %v369 = vand.u32 %v368, 4294901760
    %v370 = vsub.f32 %v368, %v369
    %v371 = vand.u32 %v370, 4294901760
    %372 = vmatpush1.xpose.msra.mxu0 %v371
    %373 = vmatprep.subr.mxu0 0.0
    %v374 = vand.u32 %v180, 4294901760
    %v375 = vsub.f32 %v180, %v374
    %v376 = vand.u32 %v375, 4294901760
    %v377 = vsub.f32 %v375, %v376
    %v378 = vand.u32 %v377, 4294901760
    %379 = vmatpush1.xpose.msra.mxu0 %v378
    %380 = vmatprep.subr.mxu0 0.0
    %v381 = vand.u32 %v177, 4294901760
    %v382 = vsub.f32 %v177, %v381
    %v383 = vand.u32 %v382, 4294901760
    %v384 = vsub.f32 %v382, %v383
    %v385 = vand.u32 %v384, 4294901760
    %386 = vmatpush1.xpose.msra.mxu0 %v385
    %387 = vmatprep.subr.mxu0 0.0
    %v388 = vand.u32 %v174, 4294901760
    %v389 = vsub.f32 %v174, %v388
    %v390 = vand.u32 %v389, 4294901760
    %v391 = vsub.f32 %v389, %v390
    %v392 = vand.u32 %v391, 4294901760
    %393 = vmatpush1.xpose.msra.mxu0 %v392
    %394 = vmatprep.subr.mxu0 0.0
    %v395 = vand.u32 %v171, 4294901760
    %v396 = vsub.f32 %v171, %v395
    %v397 = vand.u32 %v396, 4294901760
    %v398 = vsub.f32 %v396, %v397
    %v399 = vand.u32 %v398, 4294901760
    %400 = vmatpush1.xpose.msra.mxu0 %v399
    %401 = vmatprep.subr.mxu0 0.0
    %v402 = vand.u32 %v168, 4294901760
    %v403 = vsub.f32 %v168, %v402
    %v404 = vand.u32 %v403, 4294901760
    %v405 = vsub.f32 %v403, %v404
    %v406 = vand.u32 %v405, 4294901760
    %407 = vmatpush1.xpose.msra.mxu0 %v406
    %408 = vmatprep.subr.mxu0 0.0
    %v409 = vand.u32 %v165, 4294901760
    %v410 = vsub.f32 %v165, %v409
    %v411 = vand.u32 %v410, 4294901760
    %v412 = vsub.f32 %v410, %v411
    %v413 = vand.u32 %v412, 4294901760
    %414 = vmatpush1.xpose.msra.mxu0 %v413
    %415 = vmatprep.subr.mxu0 0.0
    %v416 = vand.u32 %v162, 4294901760
    %v417 = vsub.f32 %v162, %v416
    %v418 = vand.u32 %v417, 4294901760
    %v419 = vsub.f32 %v417, %v418
    %v420 = vand.u32 %v419, 4294901760
    %421 = vmatpush1.xpose.msra.mxu0 %v420
    %422 = vmatprep.subr.mxu0 0.0
    %v423 = vand.u32 %v159, 4294901760
    %v424 = vsub.f32 %v159, %v423
    %v425 = vand.u32 %v424, 4294901760
    %v426 = vsub.f32 %v424, %v425
    %v427 = vand.u32 %v426, 4294901760
    %428 = vmatpush1.xpose.msra.mxu0 %v427
    %429 = vmatprep.subr.mxu0 0.0
    %v430 = vand.u32 %v156, 4294901760
    %v431 = vsub.f32 %v156, %v430
    %v432 = vand.u32 %v431, 4294901760
    %v433 = vsub.f32 %v431, %v432
    %v434 = vand.u32 %v433, 4294901760
    %435 = vmatpush1.xpose.msra.mxu0 %v434
    %436 = vmatprep.subr.mxu0 0.0
    %v437 = vand.u32 %v153, 4294901760
    %v438 = vsub.f32 %v153, %v437
    %v439 = vand.u32 %v438, 4294901760
    %v440 = vsub.f32 %v438, %v439
    %v441 = vand.u32 %v440, 4294901760
    %442 = vmatpush1.xpose.msra.mxu0 %v441
    %443 = vmatprep.subr.mxu0 0.0
    %v444 = vand.u32 %v150, 4294901760
    %v445 = vsub.f32 %v150, %v444
    %v446 = vand.u32 %v445, 4294901760
    %v447 = vsub.f32 %v445, %v446
    %v448 = vand.u32 %v447, 4294901760
    %449 = vmatpush1.xpose.msra.mxu0 %v448
    %450 = vmatprep.subr.mxu0 0.0
    %v451 = vand.u32 %v147, 4294901760
    %v452 = vsub.f32 %v147, %v451
    %v453 = vand.u32 %v452, 4294901760
    %v454 = vsub.f32 %v452, %v453
    %v455 = vand.u32 %v454, 4294901760
    %456 = vmatpush1.xpose.msra.mxu0 %v455
    %457 = vmatprep.subr.mxu0 0.0
    %v458 = vand.u32 %v144, 4294901760
    %v459 = vsub.f32 %v144, %v458
    %v460 = vand.u32 %v459, 4294901760
    %v461 = vsub.f32 %v459, %v460
    %v462 = vand.u32 %v461, 4294901760
    %463 = vmatpush1.xpose.msra.mxu0 %v462
    %464 = vmatprep.subr.mxu0 0.0
    %465 = vmatpush2.xpose.msra.mxu0 0.0
    %466 = vmatprep.subr.mxu0 0.0
    %467 = vmatpush2.xpose.msra.mxu0 0.0
    %468 = vmatprep.subr.mxu0 0.0
    %469 = vmatpush2.xpose.msra.mxu0 0.0
    %470 = vmatprep.subr.mxu0 0.0
    %471 = vmatpush2.xpose.msra.mxu0 0.0
    %472 = vmatprep.subr.mxu0 0.0
    %473 = vmatpush2.xpose.msra.mxu0 0.0
    %474 = vmatprep.subr.mxu0 0.0
    %475 = vmatpush2.xpose.msra.mxu0 0.0
    %476 = vmatprep.subr.mxu0 0.0
    %477 = vmatpush2.xpose.msra.mxu0 0.0
    %478 = vmatprep.subr.mxu0 0.0
    %479 = vmatpush2.xpose.msra.mxu0 0.0
    %480 = vmatprep.subr.mxu0 0.0
    %481 = vmatpush2.xpose.msra.mxu0 0.0
    %482 = vmatprep.subr.mxu0 0.0
    %483 = vmatpush2.xpose.msra.mxu0 0.0
    %484 = vmatprep.subr.mxu0 0.0
    %485 = vmatpush2.xpose.msra.mxu0 0.0
    %486 = vmatprep.subr.mxu0 0.0
    %487 = vmatpush2.xpose.msra.mxu0 0.0
    %488 = vmatprep.subr.mxu0 0.0
    %489 = vmatpush2.xpose.msra.mxu0 0.0
    %490 = vmatprep.subr.mxu0 0.0
    %491 = vmatpush2.xpose.msra.mxu0 0.0
    %492 = vmatprep.subr.mxu0 0.0
    %493 = vmatpush2.xpose.msra.mxu0 0.0
    %494 = vmatprep.subr.mxu0 0.0
    %495 = vmatpush2.xpose.msra.mxu0 0.0
    %496 = vmatprep.mubr.f32.mxu0 0.0
    %v497 = vand.u32 %v120, 4294901760
    %498 = vmatmul.mubr.f32.gmra.mxu0 %v497
    %v499 = vpop.f32.mrf.mxu0
    %v500 = vadd.f32 %v279, %v499
    %v501 = vpop.f32.mrf.mxu0
    %502 = vmatprep.mubr.f32.mxu0 0.0
    %v503 = vand.u32 %v123, 4294901760
    %504 = vmatmul.mubr.f32.gmra.mxu0 %v503
    %v505 = vpop.f32.mrf.mxu0
    %v506 = vadd.f32 %v289, %v505
    %v507 = vpop.f32.mrf.mxu0
    %508 = vmatprep.mubr.f32.mxu0 0.0
    %v509 = vand.u32 %v126, 4294901760
    %510 = vmatmul.mubr.f32.gmra.mxu0 %v509
    %v511 = vpop.f32.mrf.mxu0
    %v512 = vadd.f32 %v299, %v511
    %v513 = vpop.f32.mrf.mxu0
    %514 = vmatprep.mubr.f32.mxu0 0.0
    %v515 = vand.u32 %v129, 4294901760
    %516 = vmatmul.mubr.f32.gmra.mxu0 %v515
    %v517 = vpop.f32.mrf.mxu0
    %v518 = vadd.f32 %v309, %v517
    %v519 = vpop.f32.mrf.mxu0
    %520 = vmatprep.mubr.f32.mxu0 0.0
    %v521 = vand.u32 %v132, 4294901760
    %522 = vmatmul.mubr.f32.gmra.mxu0 %v521
    %v523 = vpop.f32.mrf.mxu0
    %v524 = vadd.f32 %v319, %v523
    %v525 = vpop.f32.mrf.mxu0
    %526 = vmatprep.mubr.f32.mxu0 0.0
    %v527 = vand.u32 %v135, 4294901760
    %528 = vmatmul.mubr.f32.gmra.mxu0 %v527
    %v529 = vpop.f32.mrf.mxu0
    %v530 = vadd.f32 %v329, %v529
    %v531 = vpop.f32.mrf.mxu0
    %532 = vmatprep.mubr.f32.mxu0 0.0
    %v533 = vand.u32 %v138, 4294901760
    %534 = vmatmul.mubr.f32.gmra.mxu0 %v533
    %v535 = vpop.f32.mrf.mxu0
    %v536 = vadd.f32 %v339, %v535
    %v537 = vpop.f32.mrf.mxu0
    %538 = vmatprep.mubr.f32.mxu0 0.0
    %v539 = vand.u32 %v141, 4294901760
    %540 = vmatmul.mubr.f32.gmra.mxu0 %v539
    %v541 = vpop.f32.mrf.mxu0
    %v542 = vadd.f32 %v349, %v541
    %v543 = vpop.f32.mrf.mxu0
    %544 = vdwg.mxu0
    %545 = vmatprep.subr.mxu0 0.0
    %v546 = vand.u32 %v189, 4294901760
    %v547 = vsub.f32 %v189, %v546
    %548 = vmatpush1.xpose.msra.mxu0 %v547
    %549 = vmatprep.subr.mxu0 0.0
    %v550 = vand.u32 %v186, 4294901760
    %v551 = vsub.f32 %v186, %v550
    %552 = vmatpush1.xpose.msra.mxu0 %v551
    %553 = vmatprep.subr.mxu0 0.0
    %v554 = vand.u32 %v183, 4294901760
    %v555 = vsub.f32 %v183, %v554
    %556 = vmatpush1.xpose.msra.mxu0 %v555
    %557 = vmatprep.subr.mxu0 0.0
    %v558 = vand.u32 %v180, 4294901760
    %v559 = vsub.f32 %v180, %v558
    %560 = vmatpush1.xpose.msra.mxu0 %v559
    %561 = vmatprep.subr.mxu0 0.0
    %v562 = vand.u32 %v177, 4294901760
    %v563 = vsub.f32 %v177, %v562
    %564 = vmatpush1.xpose.msra.mxu0 %v563
    %565 = vmatprep.subr.mxu0 0.0
    %v566 = vand.u32 %v174, 4294901760
    %v567 = vsub.f32 %v174, %v566
    %568 = vmatpush1.xpose.msra.mxu0 %v567
    %569 = vmatprep.subr.mxu0 0.0
    %v570 = vand.u32 %v171, 4294901760
    %v571 = vsub.f32 %v171, %v570
    %572 = vmatpush1.xpose.msra.mxu0 %v571
    %573 = vmatprep.subr.mxu0 0.0
    %v574 = vand.u32 %v168, 4294901760
    %v575 = vsub.f32 %v168, %v574
    %576 = vmatpush1.xpose.msra.mxu0 %v575
    %577 = vmatprep.subr.mxu0 0.0
    %v578 = vand.u32 %v165, 4294901760
    %v579 = vsub.f32 %v165, %v578
    %580 = vmatpush1.xpose.msra.mxu0 %v579
    %581 = vmatprep.subr.mxu0 0.0
    %v582 = vand.u32 %v162, 4294901760
    %v583 = vsub.f32 %v162, %v582
    %584 = vmatpush1.xpose.msra.mxu0 %v583
    %585 = vmatprep.subr.mxu0 0.0
    %v586 = vand.u32 %v159, 4294901760
    %v587 = vsub.f32 %v159, %v586
    %588 = vmatpush1.xpose.msra.mxu0 %v587
    %589 = vmatprep.subr.mxu0 0.0
    %v590 = vand.u32 %v156, 4294901760
    %v591 = vsub.f32 %v156, %v590
    %592 = vmatpush1.xpose.msra.mxu0 %v591
    %593 = vmatprep.subr.mxu0 0.0
    %v594 = vand.u32 %v153, 4294901760
    %v595 = vsub.f32 %v153, %v594
    %596 = vmatpush1.xpose.msra.mxu0 %v595
    %597 = vmatprep.subr.mxu0 0.0
    %v598 = vand.u32 %v150, 4294901760
    %v599 = vsub.f32 %v150, %v598
    %600 = vmatpush1.xpose.msra.mxu0 %v599
    %601 = vmatprep.subr.mxu0 0.0
    %v602 = vand.u32 %v147, 4294901760
    %v603 = vsub.f32 %v147, %v602
    %604 = vmatpush1.xpose.msra.mxu0 %v603
    %605 = vmatprep.subr.mxu0 0.0
    %v606 = vand.u32 %v144, 4294901760
    %v607 = vsub.f32 %v144, %v606
    %608 = vmatpush1.xpose.msra.mxu0 %v607
    %609 = vmatprep.subr.mxu0 0.0
    %610 = vmatpush2.xpose.msra.mxu0 0.0
    %611 = vmatprep.subr.mxu0 0.0
    %612 = vmatpush2.xpose.msra.mxu0 0.0
    %613 = vmatprep.subr.mxu0 0.0
    %614 = vmatpush2.xpose.msra.mxu0 0.0
    %615 = vmatprep.subr.mxu0 0.0
    %616 = vmatpush2.xpose.msra.mxu0 0.0
    %617 = vmatprep.subr.mxu0 0.0
    %618 = vmatpush2.xpose.msra.mxu0 0.0
    %619 = vmatprep.subr.mxu0 0.0
    %620 = vmatpush2.xpose.msra.mxu0 0.0
    %621 = vmatprep.subr.mxu0 0.0
    %622 = vmatpush2.xpose.msra.mxu0 0.0
    %623 = vmatprep.subr.mxu0 0.0
    %624 = vmatpush2.xpose.msra.mxu0 0.0
    %625 = vmatprep.subr.mxu0 0.0
    %626 = vmatpush2.xpose.msra.mxu0 0.0
    %627 = vmatprep.subr.mxu0 0.0
    %628 = vmatpush2.xpose.msra.mxu0 0.0
    %629 = vmatprep.subr.mxu0 0.0
    %630 = vmatpush2.xpose.msra.mxu0 0.0
    %631 = vmatprep.subr.mxu0 0.0
    %632 = vmatpush2.xpose.msra.mxu0 0.0
    %633 = vmatprep.subr.mxu0 0.0
    %634 = vmatpush2.xpose.msra.mxu0 0.0
    %635 = vmatprep.subr.mxu0 0.0
    %636 = vmatpush2.xpose.msra.mxu0 0.0
    %637 = vmatprep.subr.mxu0 0.0
    %638 = vmatpush2.xpose.msra.mxu0 0.0
    %639 = vmatprep.subr.mxu0 0.0
    %640 = vmatpush2.xpose.msra.mxu0 0.0
    %641 = vmatprep.mubr.f32.mxu0 0.0
    %v642 = vand.u32 %v120, 4294901760
    %v643 = vsub.f32 %v120, %v642
    %644 = vmatmul.mubr.f32.gmra.mxu0 %v643
    %v645 = vpop.f32.mrf.mxu0
    %v646 = vadd.f32 %v500, %v645
    %v647 = vpop.f32.mrf.mxu0
    %648 = vmatprep.mubr.f32.mxu0 0.0
    %v649 = vand.u32 %v123, 4294901760
    %v650 = vsub.f32 %v123, %v649
    %651 = vmatmul.mubr.f32.gmra.mxu0 %v650
    %v652 = vpop.f32.mrf.mxu0
    %v653 = vadd.f32 %v506, %v652
    %v654 = vpop.f32.mrf.mxu0
    %655 = vmatprep.mubr.f32.mxu0 0.0
    %v656 = vand.u32 %v126, 4294901760
    %v657 = vsub.f32 %v126, %v656
    %658 = vmatmul.mubr.f32.gmra.mxu0 %v657
    %v659 = vpop.f32.mrf.mxu0
    %v660 = vadd.f32 %v512, %v659
    %v661 = vpop.f32.mrf.mxu0
    %662 = vmatprep.mubr.f32.mxu0 0.0
    %v663 = vand.u32 %v129, 4294901760
    %v664 = vsub.f32 %v129, %v663
    %665 = vmatmul.mubr.f32.gmra.mxu0 %v664
    %v666 = vpop.f32.mrf.mxu0
    %v667 = vadd.f32 %v518, %v666
    %v668 = vpop.f32.mrf.mxu0
    %669 = vmatprep.mubr.f32.mxu0 0.0
    %v670 = vand.u32 %v132, 4294901760
    %v671 = vsub.f32 %v132, %v670
    %672 = vmatmul.mubr.f32.gmra.mxu0 %v671
    %v673 = vpop.f32.mrf.mxu0
    %v674 = vadd.f32 %v524, %v673
    %v675 = vpop.f32.mrf.mxu0
    %676 = vmatprep.mubr.f32.mxu0 0.0
    %v677 = vand.u32 %v135, 4294901760
    %v678 = vsub.f32 %v135, %v677
    %679 = vmatmul.mubr.f32.gmra.mxu0 %v678
    %v680 = vpop.f32.mrf.mxu0
    %v681 = vadd.f32 %v530, %v680
    %v682 = vpop.f32.mrf.mxu0
    %683 = vmatprep.mubr.f32.mxu0 0.0
    %v684 = vand.u32 %v138, 4294901760
    %v685 = vsub.f32 %v138, %v684
    %686 = vmatmul.mubr.f32.gmra.mxu0 %v685
    %v687 = vpop.f32.mrf.mxu0
    %v688 = vadd.f32 %v536, %v687
    %v689 = vpop.f32.mrf.mxu0
    %690 = vmatprep.mubr.f32.mxu0 0.0
    %v691 = vand.u32 %v141, 4294901760
    %v692 = vsub.f32 %v141, %v691
    %693 = vmatmul.mubr.f32.gmra.mxu0 %v692
    %v694 = vpop.f32.mrf.mxu0
    %v695 = vadd.f32 %v542, %v694
    %v696 = vpop.f32.mrf.mxu0
    %697 = vdwg.mxu0
    %698 = vmatprep.subr.mxu0 0.0
    %v699 = vand.u32 %v189, 4294901760
    %700 = vmatpush1.xpose.msra.mxu0 %v699
    %701 = vmatprep.subr.mxu0 0.0
    %v702 = vand.u32 %v186, 4294901760
    %703 = vmatpush1.xpose.msra.mxu0 %v702
    %704 = vmatprep.subr.mxu0 0.0
    %v705 = vand.u32 %v183, 4294901760
    %706 = vmatpush1.xpose.msra.mxu0 %v705
    %707 = vmatprep.subr.mxu0 0.0
    %v708 = vand.u32 %v180, 4294901760
    %709 = vmatpush1.xpose.msra.mxu0 %v708
    %710 = vmatprep.subr.mxu0 0.0
    %v711 = vand.u32 %v177, 4294901760
    %712 = vmatpush1.xpose.msra.mxu0 %v711
    %713 = vmatprep.subr.mxu0 0.0
    %v714 = vand.u32 %v174, 4294901760
    %715 = vmatpush1.xpose.msra.mxu0 %v714
    %716 = vmatprep.subr.mxu0 0.0
    %v717 = vand.u32 %v171, 4294901760
    %718 = vmatpush1.xpose.msra.mxu0 %v717
    %719 = vmatprep.subr.mxu0 0.0
    %v720 = vand.u32 %v168, 4294901760
    %721 = vmatpush1.xpose.msra.mxu0 %v720
    %722 = vmatprep.subr.mxu0 0.0
    %v723 = vand.u32 %v165, 4294901760
    %724 = vmatpush1.xpose.msra.mxu0 %v723
    %725 = vmatprep.subr.mxu0 0.0
    %v726 = vand.u32 %v162, 4294901760
    %727 = vmatpush1.xpose.msra.mxu0 %v726
    %728 = vmatprep.subr.mxu0 0.0
    %v729 = vand.u32 %v159, 4294901760
    %730 = vmatpush1.xpose.msra.mxu0 %v729
    %731 = vmatprep.subr.mxu0 0.0
    %v732 = vand.u32 %v156, 4294901760
    %733 = vmatpush1.xpose.msra.mxu0 %v732
    %734 = vmatprep.subr.mxu0 0.0
    %v735 = vand.u32 %v153, 4294901760
    %736 = vmatpush1.xpose.msra.mxu0 %v735
    %737 = vmatprep.subr.mxu0 0.0
    %v738 = vand.u32 %v150, 4294901760
    %739 = vmatpush1.xpose.msra.mxu0 %v738
    %740 = vmatprep.subr.mxu0 0.0
    %v741 = vand.u32 %v147, 4294901760
    %742 = vmatpush1.xpose.msra.mxu0 %v741
    %743 = vmatprep.subr.mxu0 0.0
    %v744 = vand.u32 %v144, 4294901760
    %745 = vmatpush1.xpose.msra.mxu0 %v744
    %746 = vmatprep.subr.mxu0 0.0
    %747 = vmatpush2.xpose.msra.mxu0 0.0
    %748 = vmatprep.subr.mxu0 0.0
    %749 = vmatpush2.xpose.msra.mxu0 0.0
    %750 = vmatprep.subr.mxu0 0.0
    %751 = vmatpush2.xpose.msra.mxu0 0.0
    %752 = vmatprep.subr.mxu0 0.0
    %753 = vmatpush2.xpose.msra.mxu0 0.0
    %754 = vmatprep.subr.mxu0 0.0
    %755 = vmatpush2.xpose.msra.mxu0 0.0
    %756 = vmatprep.subr.mxu0 0.0
    %757 = vmatpush2.xpose.msra.mxu0 0.0
    %758 = vmatprep.subr.mxu0 0.0
    %759 = vmatpush2.xpose.msra.mxu0 0.0
    %760 = vmatprep.subr.mxu0 0.0
    %761 = vmatpush2.xpose.msra.mxu0 0.0
    %762 = vmatprep.subr.mxu0 0.0
    %763 = vmatpush2.xpose.msra.mxu0 0.0
    %764 = vmatprep.subr.mxu0 0.0
    %765 = vmatpush2.xpose.msra.mxu0 0.0
    %766 = vmatprep.subr.mxu0 0.0
    %767 = vmatpush2.xpose.msra.mxu0 0.0
    %768 = vmatprep.subr.mxu0 0.0
    %769 = vmatpush2.xpose.msra.mxu0 0.0
    %770 = vmatprep.subr.mxu0 0.0
    %771 = vmatpush2.xpose.msra.mxu0 0.0
    %772 = vmatprep.subr.mxu0 0.0
    %773 = vmatpush2.xpose.msra.mxu0 0.0
    %774 = vmatprep.subr.mxu0 0.0
    %775 = vmatpush2.xpose.msra.mxu0 0.0
    %776 = vmatprep.subr.mxu0 0.0
    %777 = vmatpush2.xpose.msra.mxu0 0.0
    %778 = vmatprep.mubr.f32.mxu0 0.0
    %v779 = vand.u32 %v120, 4294901760
    %v780 = vsub.f32 %v120, %v779
    %v781 = vand.u32 %v780, 4294901760
    %782 = vmatmul.mubr.f32.gmra.mxu0 %v781
    %v783 = vpop.f32.mrf.mxu0
    %v784 = vadd.f32 %v646, %v783
    %v785 = vpop.f32.mrf.mxu0
    %786 = vmatprep.mubr.f32.mxu0 0.0
    %v787 = vand.u32 %v123, 4294901760
    %v788 = vsub.f32 %v123, %v787
    %v789 = vand.u32 %v788, 4294901760
    %790 = vmatmul.mubr.f32.gmra.mxu0 %v789
    %v791 = vpop.f32.mrf.mxu0
    %v792 = vadd.f32 %v653, %v791
    %v793 = vpop.f32.mrf.mxu0
    %794 = vmatprep.mubr.f32.mxu0 0.0
    %v795 = vand.u32 %v126, 4294901760
    %v796 = vsub.f32 %v126, %v795
    %v797 = vand.u32 %v796, 4294901760
    %798 = vmatmul.mubr.f32.gmra.mxu0 %v797
    %v799 = vpop.f32.mrf.mxu0
    %v800 = vadd.f32 %v660, %v799
    %v801 = vpop.f32.mrf.mxu0
    %802 = vmatprep.mubr.f32.mxu0 0.0
    %v803 = vand.u32 %v129, 4294901760
    %v804 = vsub.f32 %v129, %v803
    %v805 = vand.u32 %v804, 4294901760
    %806 = vmatmul.mubr.f32.gmra.mxu0 %v805
    %v807 = vpop.f32.mrf.mxu0
    %v808 = vadd.f32 %v667, %v807
    %v809 = vpop.f32.mrf.mxu0
    %810 = vmatprep.mubr.f32.mxu0 0.0
    %v811 = vand.u32 %v132, 4294901760
    %v812 = vsub.f32 %v132, %v811
    %v813 = vand.u32 %v812, 4294901760
    %814 = vmatmul.mubr.f32.gmra.mxu0 %v813
    %v815 = vpop.f32.mrf.mxu0
    %v816 = vadd.f32 %v674, %v815
    %v817 = vpop.f32.mrf.mxu0
    %818 = vmatprep.mubr.f32.mxu0 0.0
    %v819 = vand.u32 %v135, 4294901760
    %v820 = vsub.f32 %v135, %v819
    %v821 = vand.u32 %v820, 4294901760
    %822 = vmatmul.mubr.f32.gmra.mxu0 %v821
    %v823 = vpop.f32.mrf.mxu0
    %v824 = vadd.f32 %v681, %v823
    %v825 = vpop.f32.mrf.mxu0
    %826 = vmatprep.mubr.f32.mxu0 0.0
    %v827 = vand.u32 %v138, 4294901760
    %v828 = vsub.f32 %v138, %v827
    %v829 = vand.u32 %v828, 4294901760
    %830 = vmatmul.mubr.f32.gmra.mxu0 %v829
    %v831 = vpop.f32.mrf.mxu0
    %v832 = vadd.f32 %v688, %v831
    %v833 = vpop.f32.mrf.mxu0
    %834 = vmatprep.mubr.f32.mxu0 0.0
    %v835 = vand.u32 %v141, 4294901760
    %v836 = vsub.f32 %v141, %v835
    %v837 = vand.u32 %v836, 4294901760
    %838 = vmatmul.mubr.f32.gmra.mxu0 %v837
    %v839 = vpop.f32.mrf.mxu0
    %v840 = vadd.f32 %v695, %v839
    %v841 = vpop.f32.mrf.mxu0
    %842 = vdwg.mxu0
    %843 = vmatprep.subr.mxu0 0.0
    %v844 = vand.u32 %v189, 4294901760
    %v845 = vsub.f32 %v189, %v844
    %v846 = vand.u32 %v845, 4294901760
    %847 = vmatpush1.xpose.msra.mxu0 %v846
    %848 = vmatprep.subr.mxu0 0.0
    %v849 = vand.u32 %v186, 4294901760
    %v850 = vsub.f32 %v186, %v849
    %v851 = vand.u32 %v850, 4294901760
    %852 = vmatpush1.xpose.msra.mxu0 %v851
    %853 = vmatprep.subr.mxu0 0.0
    %v854 = vand.u32 %v183, 4294901760
    %v855 = vsub.f32 %v183, %v854
    %v856 = vand.u32 %v855, 4294901760
    %857 = vmatpush1.xpose.msra.mxu0 %v856
    %858 = vmatprep.subr.mxu0 0.0
    %v859 = vand.u32 %v180, 4294901760
    %v860 = vsub.f32 %v180, %v859
    %v861 = vand.u32 %v860, 4294901760
    %862 = vmatpush1.xpose.msra.mxu0 %v861
    %863 = vmatprep.subr.mxu0 0.0
    %v864 = vand.u32 %v177, 4294901760
    %v865 = vsub.f32 %v177, %v864
    %v866 = vand.u32 %v865, 4294901760
    %867 = vmatpush1.xpose.msra.mxu0 %v866
    %868 = vmatprep.subr.mxu0 0.0
    %v869 = vand.u32 %v174, 4294901760
    %v870 = vsub.f32 %v174, %v869
    %v871 = vand.u32 %v870, 4294901760
    %872 = vmatpush1.xpose.msra.mxu0 %v871
    %873 = vmatprep.subr.mxu0 0.0
    %v874 = vand.u32 %v171, 4294901760
    %v875 = vsub.f32 %v171, %v874
    %v876 = vand.u32 %v875, 4294901760
    %877 = vmatpush1.xpose.msra.mxu0 %v876
    %878 = vmatprep.subr.mxu0 0.0
    %v879 = vand.u32 %v168, 4294901760
    %v880 = vsub.f32 %v168, %v879
    %v881 = vand.u32 %v880, 4294901760
    %882 = vmatpush1.xpose.msra.mxu0 %v881
    %883 = vmatprep.subr.mxu0 0.0
    %v884 = vand.u32 %v165, 4294901760
    %v885 = vsub.f32 %v165, %v884
    %v886 = vand.u32 %v885, 4294901760
    %887 = vmatpush1.xpose.msra.mxu0 %v886
    %888 = vmatprep.subr.mxu0 0.0
    %v889 = vand.u32 %v162, 4294901760
    %v890 = vsub.f32 %v162, %v889
    %v891 = vand.u32 %v890, 4294901760
    %892 = vmatpush1.xpose.msra.mxu0 %v891
    %893 = vmatprep.subr.mxu0 0.0
    %v894 = vand.u32 %v159, 4294901760
    %v895 = vsub.f32 %v159, %v894
    %v896 = vand.u32 %v895, 4294901760
    %897 = vmatpush1.xpose.msra.mxu0 %v896
    %898 = vmatprep.subr.mxu0 0.0
    %v899 = vand.u32 %v156, 4294901760
    %v900 = vsub.f32 %v156, %v899
    %v901 = vand.u32 %v900, 4294901760
    %902 = vmatpush1.xpose.msra.mxu0 %v901
    %903 = vmatprep.subr.mxu0 0.0
    %v904 = vand.u32 %v153, 4294901760
    %v905 = vsub.f32 %v153, %v904
    %v906 = vand.u32 %v905, 4294901760
    %907 = vmatpush1.xpose.msra.mxu0 %v906
    %908 = vmatprep.subr.mxu0 0.0
    %v909 = vand.u32 %v150, 4294901760
    %v910 = vsub.f32 %v150, %v909
    %v911 = vand.u32 %v910, 4294901760
    %912 = vmatpush1.xpose.msra.mxu0 %v911
    %913 = vmatprep.subr.mxu0 0.0
    %v914 = vand.u32 %v147, 4294901760
    %v915 = vsub.f32 %v147, %v914
    %v916 = vand.u32 %v915, 4294901760
    %917 = vmatpush1.xpose.msra.mxu0 %v916
    %918 = vmatprep.subr.mxu0 0.0
    %v919 = vand.u32 %v144, 4294901760
    %v920 = vsub.f32 %v144, %v919
    %v921 = vand.u32 %v920, 4294901760
    %922 = vmatpush1.xpose.msra.mxu0 %v921
    %923 = vmatprep.subr.mxu0 0.0
    %924 = vmatpush2.xpose.msra.mxu0 0.0
    %925 = vmatprep.subr.mxu0 0.0
    %926 = vmatpush2.xpose.msra.mxu0 0.0
    %927 = vmatprep.subr.mxu0 0.0
    %928 = vmatpush2.xpose.msra.mxu0 0.0
    %929 = vmatprep.subr.mxu0 0.0
    %930 = vmatpush2.xpose.msra.mxu0 0.0
    %931 = vmatprep.subr.mxu0 0.0
    %932 = vmatpush2.xpose.msra.mxu0 0.0
    %933 = vmatprep.subr.mxu0 0.0
    %934 = vmatpush2.xpose.msra.mxu0 0.0
    %935 = vmatprep.subr.mxu0 0.0
    %936 = vmatpush2.xpose.msra.mxu0 0.0
    %937 = vmatprep.subr.mxu0 0.0
    %938 = vmatpush2.xpose.msra.mxu0 0.0
    %939 = vmatprep.subr.mxu0 0.0
    %940 = vmatpush2.xpose.msra.mxu0 0.0
    %941 = vmatprep.subr.mxu0 0.0
    %942 = vmatpush2.xpose.msra.mxu0 0.0
    %943 = vmatprep.subr.mxu0 0.0
    %944 = vmatpush2.xpose.msra.mxu0 0.0
    %945 = vmatprep.subr.mxu0 0.0
    %946 = vmatpush2.xpose.msra.mxu0 0.0
    %947 = vmatprep.subr.mxu0 0.0
    %948 = vmatpush2.xpose.msra.mxu0 0.0
    %949 = vmatprep.subr.mxu0 0.0
    %950 = vmatpush2.xpose.msra.mxu0 0.0
    %951 = vmatprep.subr.mxu0 0.0
    %952 = vmatpush2.xpose.msra.mxu0 0.0
    %953 = vmatprep.subr.mxu0 0.0
    %954 = vmatpush2.xpose.msra.mxu0 0.0
    %955 = vmatprep.mubr.f32.mxu0 0.0
    %v956 = vand.u32 %v120, 4294901760
    %957 = vmatmul.mubr.f32.gmra.mxu0 %v956
    %v958 = vpop.f32.mrf.mxu0
    %v959 = vadd.f32 %v784, %v958
    %v960 = vpop.f32.mrf.mxu0
    %961 = vmatprep.mubr.f32.mxu0 0.0
    %v962 = vand.u32 %v123, 4294901760
    %963 = vmatmul.mubr.f32.gmra.mxu0 %v962
    %v964 = vpop.f32.mrf.mxu0
    %v965 = vadd.f32 %v792, %v964
    %v966 = vpop.f32.mrf.mxu0
    %967 = vmatprep.mubr.f32.mxu0 0.0
    %v968 = vand.u32 %v126, 4294901760
    %969 = vmatmul.mubr.f32.gmra.mxu0 %v968
    %v970 = vpop.f32.mrf.mxu0
    %v971 = vadd.f32 %v800, %v970
    %v972 = vpop.f32.mrf.mxu0
    %973 = vmatprep.mubr.f32.mxu0 0.0
    %v974 = vand.u32 %v129, 4294901760
    %975 = vmatmul.mubr.f32.gmra.mxu0 %v974
    %v976 = vpop.f32.mrf.mxu0
    %v977 = vadd.f32 %v808, %v976
    %v978 = vpop.f32.mrf.mxu0
    %979 = vmatprep.mubr.f32.mxu0 0.0
    %v980 = vand.u32 %v132, 4294901760
    %981 = vmatmul.mubr.f32.gmra.mxu0 %v980
    %v982 = vpop.f32.mrf.mxu0
    %v983 = vadd.f32 %v816, %v982
    %v984 = vpop.f32.mrf.mxu0
    %985 = vmatprep.mubr.f32.mxu0 0.0
    %v986 = vand.u32 %v135, 4294901760
    %987 = vmatmul.mubr.f32.gmra.mxu0 %v986
    %v988 = vpop.f32.mrf.mxu0
    %v989 = vadd.f32 %v824, %v988
    %v990 = vpop.f32.mrf.mxu0
    %991 = vmatprep.mubr.f32.mxu0 0.0
    %v992 = vand.u32 %v138, 4294901760
    %993 = vmatmul.mubr.f32.gmra.mxu0 %v992
    %v994 = vpop.f32.mrf.mxu0
    %v995 = vadd.f32 %v832, %v994
    %v996 = vpop.f32.mrf.mxu0
    %997 = vmatprep.mubr.f32.mxu0 0.0
    %v998 = vand.u32 %v141, 4294901760
    %999 = vmatmul.mubr.f32.gmra.mxu0 %v998
    %v1000 = vpop.f32.mrf.mxu0
    %v1001 = vadd.f32 %v840, %v1000
    %v1002 = vpop.f32.mrf.mxu0
    %1003 = vdwg.mxu0
    %1004 = vmatprep.subr.mxu0 0.0
    %v1005 = vand.u32 %v189, 4294901760
    %1006 = vmatpush1.xpose.msra.mxu0 %v1005
    %1007 = vmatprep.subr.mxu0 0.0
    %v1008 = vand.u32 %v186, 4294901760
    %1009 = vmatpush1.xpose.msra.mxu0 %v1008
    %1010 = vmatprep.subr.mxu0 0.0
    %v1011 = vand.u32 %v183, 4294901760
    %1012 = vmatpush1.xpose.msra.mxu0 %v1011
    %1013 = vmatprep.subr.mxu0 0.0
    %v1014 = vand.u32 %v180, 4294901760
    %1015 = vmatpush1.xpose.msra.mxu0 %v1014
    %1016 = vmatprep.subr.mxu0 0.0
    %v1017 = vand.u32 %v177, 4294901760
    %1018 = vmatpush1.xpose.msra.mxu0 %v1017
    %1019 = vmatprep.subr.mxu0 0.0
    %v1020 = vand.u32 %v174, 4294901760
    %1021 = vmatpush1.xpose.msra.mxu0 %v1020
    %1022 = vmatprep.subr.mxu0 0.0
    %v1023 = vand.u32 %v171, 4294901760
    %1024 = vmatpush1.xpose.msra.mxu0 %v1023
    %1025 = vmatprep.subr.mxu0 0.0
    %v1026 = vand.u32 %v168, 4294901760
    %1027 = vmatpush1.xpose.msra.mxu0 %v1026
    %1028 = vmatprep.subr.mxu0 0.0
    %v1029 = vand.u32 %v165, 4294901760
    %1030 = vmatpush1.xpose.msra.mxu0 %v1029
    %1031 = vmatprep.subr.mxu0 0.0
    %v1032 = vand.u32 %v162, 4294901760
    %1033 = vmatpush1.xpose.msra.mxu0 %v1032
    %1034 = vmatprep.subr.mxu0 0.0
    %v1035 = vand.u32 %v159, 4294901760
    %1036 = vmatpush1.xpose.msra.mxu0 %v1035
    %1037 = vmatprep.subr.mxu0 0.0
    %v1038 = vand.u32 %v156, 4294901760
    %1039 = vmatpush1.xpose.msra.mxu0 %v1038
    %1040 = vmatprep.subr.mxu0 0.0
    %v1041 = vand.u32 %v153, 4294901760
    %1042 = vmatpush1.xpose.msra.mxu0 %v1041
    %1043 = vmatprep.subr.mxu0 0.0
    %v1044 = vand.u32 %v150, 4294901760
    %1045 = vmatpush1.xpose.msra.mxu0 %v1044
    %1046 = vmatprep.subr.mxu0 0.0
    %v1047 = vand.u32 %v147, 4294901760
    %1048 = vmatpush1.xpose.msra.mxu0 %v1047
    %1049 = vmatprep.subr.mxu0 0.0
    %v1050 = vand.u32 %v144, 4294901760
    %1051 = vmatpush1.xpose.msra.mxu0 %v1050
    %1052 = vmatprep.subr.mxu0 0.0
    %1053 = vmatpush2.xpose.msra.mxu0 0.0
    %1054 = vmatprep.subr.mxu0 0.0
    %1055 = vmatpush2.xpose.msra.mxu0 0.0
    %1056 = vmatprep.subr.mxu0 0.0
    %1057 = vmatpush2.xpose.msra.mxu0 0.0
    %1058 = vmatprep.subr.mxu0 0.0
    %1059 = vmatpush2.xpose.msra.mxu0 0.0
    %1060 = vmatprep.subr.mxu0 0.0
    %1061 = vmatpush2.xpose.msra.mxu0 0.0
    %1062 = vmatprep.subr.mxu0 0.0
    %1063 = vmatpush2.xpose.msra.mxu0 0.0
    %1064 = vmatprep.subr.mxu0 0.0
    %1065 = vmatpush2.xpose.msra.mxu0 0.0
    %1066 = vmatprep.subr.mxu0 0.0
    %1067 = vmatpush2.xpose.msra.mxu0 0.0
    %1068 = vmatprep.subr.mxu0 0.0
    %1069 = vmatpush2.xpose.msra.mxu0 0.0
    %1070 = vmatprep.subr.mxu0 0.0
    %1071 = vmatpush2.xpose.msra.mxu0 0.0
    %1072 = vmatprep.subr.mxu0 0.0
    %1073 = vmatpush2.xpose.msra.mxu0 0.0
    %1074 = vmatprep.subr.mxu0 0.0
    %1075 = vmatpush2.xpose.msra.mxu0 0.0
    %1076 = vmatprep.subr.mxu0 0.0
    %1077 = vmatpush2.xpose.msra.mxu0 0.0
    %1078 = vmatprep.subr.mxu0 0.0
    %1079 = vmatpush2.xpose.msra.mxu0 0.0
    %1080 = vmatprep.subr.mxu0 0.0
    %1081 = vmatpush2.xpose.msra.mxu0 0.0
    %1082 = vmatprep.subr.mxu0 0.0
    %1083 = vmatpush2.xpose.msra.mxu0 0.0
    %1084 = vmatprep.mubr.f32.mxu0 0.0
    %v1085 = vand.u32 %v120, 4294901760
    %1086 = vmatmul.mubr.f32.gmra.mxu0 %v1085
    %v1087 = vpop.f32.mrf.mxu0
    %v1088 = vadd.f32 %v959, %v1087
    %v1089 = vpop.f32.mrf.mxu0
    %1090 = vmatprep.mubr.f32.mxu0 0.0
    %v1091 = vand.u32 %v123, 4294901760
    %1092 = vmatmul.mubr.f32.gmra.mxu0 %v1091
    %v1093 = vpop.f32.mrf.mxu0
    %v1094 = vadd.f32 %v965, %v1093
    %v1095 = vpop.f32.mrf.mxu0
    %1096 = vmatprep.mubr.f32.mxu0 0.0
    %v1097 = vand.u32 %v126, 4294901760
    %1098 = vmatmul.mubr.f32.gmra.mxu0 %v1097
    %v1099 = vpop.f32.mrf.mxu0
    %v1100 = vadd.f32 %v971, %v1099
    %v1101 = vpop.f32.mrf.mxu0
    %1102 = vmatprep.mubr.f32.mxu0 0.0
    %v1103 = vand.u32 %v129, 4294901760
    %1104 = vmatmul.mubr.f32.gmra.mxu0 %v1103
    %v1105 = vpop.f32.mrf.mxu0
    %v1106 = vadd.f32 %v977, %v1105
    %v1107 = vpop.f32.mrf.mxu0
    %1108 = vmatprep.mubr.f32.mxu0 0.0
    %v1109 = vand.u32 %v132, 4294901760
    %1110 = vmatmul.mubr.f32.gmra.mxu0 %v1109
    %v1111 = vpop.f32.mrf.mxu0
    %v1112 = vadd.f32 %v983, %v1111
    %v1113 = vpop.f32.mrf.mxu0
    %1114 = vmatprep.mubr.f32.mxu0 0.0
    %v1115 = vand.u32 %v135, 4294901760
    %1116 = vmatmul.mubr.f32.gmra.mxu0 %v1115
    %v1117 = vpop.f32.mrf.mxu0
    %v1118 = vadd.f32 %v989, %v1117
    %v1119 = vpop.f32.mrf.mxu0
    %1120 = vmatprep.mubr.f32.mxu0 0.0
    %v1121 = vand.u32 %v138, 4294901760
    %1122 = vmatmul.mubr.f32.gmra.mxu0 %v1121
    %v1123 = vpop.f32.mrf.mxu0
    %v1124 = vadd.f32 %v995, %v1123
    %v1125 = vpop.f32.mrf.mxu0
    %1126 = vmatprep.mubr.f32.mxu0 0.0
    %v1127 = vand.u32 %v141, 4294901760
    %1128 = vmatmul.mubr.f32.gmra.mxu0 %v1127
    %v1129 = vpop.f32.mrf.mxu0
    %v1130 = vadd.f32 %v1001, %v1129
    %v1131 = vpop.f32.mrf.mxu0
    %1132 = vdwg.mxu0
    %v1133 = vmax.f32 %v1088, 0.0
    %v1134 = vmax.f32 %v1094, 0.0
    %v1135 = vmax.f32 %v1100, 0.0
    %v1136 = vmax.f32 %v1106, 0.0
    %v1137 = vmax.f32 %v1112, 0.0
    %v1138 = vmax.f32 %v1118, 0.0
    %v1139 = vmax.f32 %v1124, 0.0
    %v1140 = vmax.f32 %v1130, 0.0
    %1142 = vset.pattern.permute.xlu0 0
    %1143 = vperm.xlu0 %1142, %v52
    %v1144 = vpop.permute.xlu0 %1143
    %1147 = vset.pattern.permute.xlu0 0
    %1148 = vperm.xlu0 %1147, %v53
    %v1149 = vpop.permute.xlu0 %1148
    %1152 = vset.pattern.permute.xlu0 0
    %1153 = vperm.xlu0 %1152, %v54
    %v1154 = vpop.permute.xlu0 %1153
    %1157 = vset.pattern.permute.xlu0 0
    %1158 = vperm.xlu0 %1157, %v55
    %v1159 = vpop.permute.xlu0 %1158
    %1162 = vset.pattern.permute.xlu0 0
    %1163 = vperm.xlu0 %1162, %v56
    %v1164 = vpop.permute.xlu0 %1163
    %1167 = vset.pattern.permute.xlu0 0
    %1168 = vperm.xlu0 %1167, %v57
    %v1169 = vpop.permute.xlu0 %1168
    %1172 = vset.pattern.permute.xlu0 0
    %1173 = vperm.xlu0 %1172, %v58
    %v1174 = vpop.permute.xlu0 %1173
    %1177 = vset.pattern.permute.xlu0 0
    %1178 = vperm.xlu0 %1177, %v59
    %v1179 = vpop.permute.xlu0 %1178
    %vm1181 = vcmask 523264
    %v1183 = vsel %vm1181, %v44, 0
    %v1186 = vsel %vm1181, %v45, 0
    %v1189 = vsel %vm1181, %v46, 0
    %v1192 = vsel %vm1181, %v47, 0
    %v1195 = vsel %vm1181, %v48, 0
    %v1198 = vsel %vm1181, %v49, 0
    %v1201 = vsel %vm1181, %v50, 0
    %v1204 = vsel %vm1181, %v51, 0
    %1206 = vmatprep.subr.mxu0 0.0
    %1207 = vmatpush1.msra.mxu0 0.0
    %1208 = vmatprep.subr.mxu0 0.0
    %1209 = vmatpush1.msra.mxu0 0.0
    %1210 = vmatprep.subr.mxu0 0.0
    %1211 = vmatpush1.msra.mxu0 0.0
    %1212 = vmatprep.subr.mxu0 0.0
    %1213 = vmatpush1.msra.mxu0 0.0
    %1214 = vmatprep.subr.mxu0 0.0
    %1215 = vmatpush1.msra.mxu0 0.0
    %1216 = vmatprep.subr.mxu0 0.0
    %1217 = vmatpush1.msra.mxu0 0.0
    %1218 = vmatprep.subr.mxu0 0.0
    %1219 = vmatpush1.msra.mxu0 0.0
    %1220 = vmatprep.subr.mxu0 0.0
    %1221 = vmatpush1.msra.mxu0 0.0
    %1222 = vmatprep.subr.mxu0 0.0
    %v1223 = vand.u32 %v1140, 4294901760
    %1224 = vmatpush1.msra.mxu0 %v1223
    %1225 = vmatprep.subr.mxu0 0.0
    %v1226 = vand.u32 %v1139, 4294901760
    %1227 = vmatpush1.msra.mxu0 %v1226
    %1228 = vmatprep.subr.mxu0 0.0
    %v1229 = vand.u32 %v1138, 4294901760
    %1230 = vmatpush1.msra.mxu0 %v1229
    %1231 = vmatprep.subr.mxu0 0.0
    %v1232 = vand.u32 %v1137, 4294901760
    %1233 = vmatpush1.msra.mxu0 %v1232
    %1234 = vmatprep.subr.mxu0 0.0
    %v1235 = vand.u32 %v1136, 4294901760
    %1236 = vmatpush1.msra.mxu0 %v1235
    %1237 = vmatprep.subr.mxu0 0.0
    %v1238 = vand.u32 %v1135, 4294901760
    %1239 = vmatpush1.msra.mxu0 %v1238
    %1240 = vmatprep.subr.mxu0 0.0
    %v1241 = vand.u32 %v1134, 4294901760
    %1242 = vmatpush1.msra.mxu0 %v1241
    %1243 = vmatprep.subr.mxu0 0.0
    %v1244 = vand.u32 %v1133, 4294901760
    %1245 = vmatpush1.msra.mxu0 %v1244
    %1246 = vmatprep.subr.mxu0 0.0
    %1247 = vmatpush2.msra.mxu0 0.0
    %1248 = vmatprep.subr.mxu0 0.0
    %1249 = vmatpush2.msra.mxu0 0.0
    %1250 = vmatprep.subr.mxu0 0.0
    %1251 = vmatpush2.msra.mxu0 0.0
    %1252 = vmatprep.subr.mxu0 0.0
    %1253 = vmatpush2.msra.mxu0 0.0
    %1254 = vmatprep.subr.mxu0 0.0
    %1255 = vmatpush2.msra.mxu0 0.0
    %1256 = vmatprep.subr.mxu0 0.0
    %1257 = vmatpush2.msra.mxu0 0.0
    %1258 = vmatprep.subr.mxu0 0.0
    %1259 = vmatpush2.msra.mxu0 0.0
    %1260 = vmatprep.subr.mxu0 0.0
    %1261 = vmatpush2.msra.mxu0 0.0
    %1262 = vmatprep.subr.mxu0 0.0
    %1263 = vmatpush2.msra.mxu0 0.0
    %1264 = vmatprep.subr.mxu0 0.0
    %1265 = vmatpush2.msra.mxu0 0.0
    %1266 = vmatprep.subr.mxu0 0.0
    %1267 = vmatpush2.msra.mxu0 0.0
    %1268 = vmatprep.subr.mxu0 0.0
    %1269 = vmatpush2.msra.mxu0 0.0
    %1270 = vmatprep.subr.mxu0 0.0
    %1271 = vmatpush2.msra.mxu0 0.0
    %1272 = vmatprep.subr.mxu0 0.0
    %1273 = vmatpush2.msra.mxu0 0.0
    %1274 = vmatprep.subr.mxu0 0.0
    %1275 = vmatpush2.msra.mxu0 0.0
    %1276 = vmatprep.subr.mxu0 0.0
    %1277 = vmatpush2.msra.mxu0 0.0
    %1278 = vmatprep.mubr.f32.mxu0 0.0
    %v1279 = vand.u32 %v1183, 4294901760
    %v1280 = vsub.f32 %v1183, %v1279
    %v1281 = vand.u32 %v1280, 4294901760
    %v1282 = vsub.f32 %v1280, %v1281
    %v1283 = vand.u32 %v1282, 4294901760
    %1284 = vmatmul.mubr.f32.gmra.mxu0 %v1283
    %v1285 = vpop.f32.mrf.mxu0
    %v1286 = vadd.f32 %v1144, %v1285
    %v1287 = vpop.f32.mrf.mxu0
    %1288 = vmatprep.mubr.f32.mxu0 0.0
    %v1289 = vand.u32 %v1186, 4294901760
    %v1290 = vsub.f32 %v1186, %v1289
    %v1291 = vand.u32 %v1290, 4294901760
    %v1292 = vsub.f32 %v1290, %v1291
    %v1293 = vand.u32 %v1292, 4294901760
    %1294 = vmatmul.mubr.f32.gmra.mxu0 %v1293
    %v1295 = vpop.f32.mrf.mxu0
    %v1296 = vadd.f32 %v1149, %v1295
    %v1297 = vpop.f32.mrf.mxu0
    %1298 = vmatprep.mubr.f32.mxu0 0.0
    %v1299 = vand.u32 %v1189, 4294901760
    %v1300 = vsub.f32 %v1189, %v1299
    %v1301 = vand.u32 %v1300, 4294901760
    %v1302 = vsub.f32 %v1300, %v1301
    %v1303 = vand.u32 %v1302, 4294901760
    %1304 = vmatmul.mubr.f32.gmra.mxu0 %v1303
    %v1305 = vpop.f32.mrf.mxu0
    %v1306 = vadd.f32 %v1154, %v1305
    %v1307 = vpop.f32.mrf.mxu0
    %1308 = vmatprep.mubr.f32.mxu0 0.0
    %v1309 = vand.u32 %v1192, 4294901760
    %v1310 = vsub.f32 %v1192, %v1309
    %v1311 = vand.u32 %v1310, 4294901760
    %v1312 = vsub.f32 %v1310, %v1311
    %v1313 = vand.u32 %v1312, 4294901760
    %1314 = vmatmul.mubr.f32.gmra.mxu0 %v1313
    %v1315 = vpop.f32.mrf.mxu0
    %v1316 = vadd.f32 %v1159, %v1315
    %v1317 = vpop.f32.mrf.mxu0
    %1318 = vmatprep.mubr.f32.mxu0 0.0
    %v1319 = vand.u32 %v1195, 4294901760
    %v1320 = vsub.f32 %v1195, %v1319
    %v1321 = vand.u32 %v1320, 4294901760
    %v1322 = vsub.f32 %v1320, %v1321
    %v1323 = vand.u32 %v1322, 4294901760
    %1324 = vmatmul.mubr.f32.gmra.mxu0 %v1323
    %v1325 = vpop.f32.mrf.mxu0
    %v1326 = vadd.f32 %v1164, %v1325
    %v1327 = vpop.f32.mrf.mxu0
    %1328 = vmatprep.mubr.f32.mxu0 0.0
    %v1329 = vand.u32 %v1198, 4294901760
    %v1330 = vsub.f32 %v1198, %v1329
    %v1331 = vand.u32 %v1330, 4294901760
    %v1332 = vsub.f32 %v1330, %v1331
    %v1333 = vand.u32 %v1332, 4294901760
    %1334 = vmatmul.mubr.f32.gmra.mxu0 %v1333
    %v1335 = vpop.f32.mrf.mxu0
    %v1336 = vadd.f32 %v1169, %v1335
    %v1337 = vpop.f32.mrf.mxu0
    %1338 = vmatprep.mubr.f32.mxu0 0.0
    %v1339 = vand.u32 %v1201, 4294901760
    %v1340 = vsub.f32 %v1201, %v1339
    %v1341 = vand.u32 %v1340, 4294901760
    %v1342 = vsub.f32 %v1340, %v1341
    %v1343 = vand.u32 %v1342, 4294901760
    %1344 = vmatmul.mubr.f32.gmra.mxu0 %v1343
    %v1345 = vpop.f32.mrf.mxu0
    %v1346 = vadd.f32 %v1174, %v1345
    %v1347 = vpop.f32.mrf.mxu0
    %1348 = vmatprep.mubr.f32.mxu0 0.0
    %v1349 = vand.u32 %v1204, 4294901760
    %v1350 = vsub.f32 %v1204, %v1349
    %v1351 = vand.u32 %v1350, 4294901760
    %v1352 = vsub.f32 %v1350, %v1351
    %v1353 = vand.u32 %v1352, 4294901760
    %1354 = vmatmul.mubr.f32.gmra.mxu0 %v1353
    %v1355 = vpop.f32.mrf.mxu0
    %v1356 = vadd.f32 %v1179, %v1355
    %v1357 = vpop.f32.mrf.mxu0
    %1358 = vdwg.mxu0
    %1359 = vmatprep.subr.mxu0 0.0
    %1360 = vmatpush1.msra.mxu0 0.0
    %1361 = vmatprep.subr.mxu0 0.0
    %1362 = vmatpush1.msra.mxu0 0.0
    %1363 = vmatprep.subr.mxu0 0.0
    %1364 = vmatpush1.msra.mxu0 0.0
    %1365 = vmatprep.subr.mxu0 0.0
    %1366 = vmatpush1.msra.mxu0 0.0
    %1367 = vmatprep.subr.mxu0 0.0
    %1368 = vmatpush1.msra.mxu0 0.0
    %1369 = vmatprep.subr.mxu0 0.0
    %1370 = vmatpush1.msra.mxu0 0.0
    %1371 = vmatprep.subr.mxu0 0.0
    %1372 = vmatpush1.msra.mxu0 0.0
    %1373 = vmatprep.subr.mxu0 0.0
    %1374 = vmatpush1.msra.mxu0 0.0
    %1375 = vmatprep.subr.mxu0 0.0
    %v1376 = vand.u32 %v1140, 4294901760
    %v1377 = vsub.f32 %v1140, %v1376
    %v1378 = vand.u32 %v1377, 4294901760
    %v1379 = vsub.f32 %v1377, %v1378
    %v1380 = vand.u32 %v1379, 4294901760
    %1381 = vmatpush1.msra.mxu0 %v1380
    %1382 = vmatprep.subr.mxu0 0.0
    %v1383 = vand.u32 %v1139, 4294901760
    %v1384 = vsub.f32 %v1139, %v1383
    %v1385 = vand.u32 %v1384, 4294901760
    %v1386 = vsub.f32 %v1384, %v1385
    %v1387 = vand.u32 %v1386, 4294901760
    %1388 = vmatpush1.msra.mxu0 %v1387
    %1389 = vmatprep.subr.mxu0 0.0
    %v1390 = vand.u32 %v1138, 4294901760
    %v1391 = vsub.f32 %v1138, %v1390
    %v1392 = vand.u32 %v1391, 4294901760
    %v1393 = vsub.f32 %v1391, %v1392
    %v1394 = vand.u32 %v1393, 4294901760
    %1395 = vmatpush1.msra.mxu0 %v1394
    %1396 = vmatprep.subr.mxu0 0.0
    %v1397 = vand.u32 %v1137, 4294901760
    %v1398 = vsub.f32 %v1137, %v1397
    %v1399 = vand.u32 %v1398, 4294901760
    %v1400 = vsub.f32 %v1398, %v1399
    %v1401 = vand.u32 %v1400, 4294901760
    %1402 = vmatpush1.msra.mxu0 %v1401
    %1403 = vmatprep.subr.mxu0 0.0
    %v1404 = vand.u32 %v1136, 4294901760
    %v1405 = vsub.f32 %v1136, %v1404
    %v1406 = vand.u32 %v1405, 4294901760
    %v1407 = vsub.f32 %v1405, %v1406
    %v1408 = vand.u32 %v1407, 4294901760
    %1409 = vmatpush1.msra.mxu0 %v1408
    %1410 = vmatprep.subr.mxu0 0.0
    %v1411 = vand.u32 %v1135, 4294901760
    %v1412 = vsub.f32 %v1135, %v1411
    %v1413 = vand.u32 %v1412, 4294901760
    %v1414 = vsub.f32 %v1412, %v1413
    %v1415 = vand.u32 %v1414, 4294901760
    %1416 = vmatpush1.msra.mxu0 %v1415
    %1417 = vmatprep.subr.mxu0 0.0
    %v1418 = vand.u32 %v1134, 4294901760
    %v1419 = vsub.f32 %v1134, %v1418
    %v1420 = vand.u32 %v1419, 4294901760
    %v1421 = vsub.f32 %v1419, %v1420
    %v1422 = vand.u32 %v1421, 4294901760
    %1423 = vmatpush1.msra.mxu0 %v1422
    %1424 = vmatprep.subr.mxu0 0.0
    %v1425 = vand.u32 %v1133, 4294901760
    %v1426 = vsub.f32 %v1133, %v1425
    %v1427 = vand.u32 %v1426, 4294901760
    %v1428 = vsub.f32 %v1426, %v1427
    %v1429 = vand.u32 %v1428, 4294901760
    %1430 = vmatpush1.msra.mxu0 %v1429
    %1431 = vmatprep.subr.mxu0 0.0
    %1432 = vmatpush2.msra.mxu0 0.0
    %1433 = vmatprep.subr.mxu0 0.0
    %1434 = vmatpush2.msra.mxu0 0.0
    %1435 = vmatprep.subr.mxu0 0.0
    %1436 = vmatpush2.msra.mxu0 0.0
    %1437 = vmatprep.subr.mxu0 0.0
    %1438 = vmatpush2.msra.mxu0 0.0
    %1439 = vmatprep.subr.mxu0 0.0
    %1440 = vmatpush2.msra.mxu0 0.0
    %1441 = vmatprep.subr.mxu0 0.0
    %1442 = vmatpush2.msra.mxu0 0.0
    %1443 = vmatprep.subr.mxu0 0.0
    %1444 = vmatpush2.msra.mxu0 0.0
    %1445 = vmatprep.subr.mxu0 0.0
    %1446 = vmatpush2.msra.mxu0 0.0
    %1447 = vmatprep.subr.mxu0 0.0
    %1448 = vmatpush2.msra.mxu0 0.0
    %1449 = vmatprep.subr.mxu0 0.0
    %1450 = vmatpush2.msra.mxu0 0.0
    %1451 = vmatprep.subr.mxu0 0.0
    %1452 = vmatpush2.msra.mxu0 0.0
    %1453 = vmatprep.subr.mxu0 0.0
    %1454 = vmatpush2.msra.mxu0 0.0
    %1455 = vmatprep.subr.mxu0 0.0
    %1456 = vmatpush2.msra.mxu0 0.0
    %1457 = vmatprep.subr.mxu0 0.0
    %1458 = vmatpush2.msra.mxu0 0.0
    %1459 = vmatprep.subr.mxu0 0.0
    %1460 = vmatpush2.msra.mxu0 0.0
    %1461 = vmatprep.subr.mxu0 0.0
    %1462 = vmatpush2.msra.mxu0 0.0
    %1463 = vmatprep.mubr.f32.mxu0 0.0
    %v1464 = vand.u32 %v1183, 4294901760
    %1465 = vmatmul.mubr.f32.gmra.mxu0 %v1464
    %v1466 = vpop.f32.mrf.mxu0
    %v1467 = vadd.f32 %v1286, %v1466
    %v1468 = vpop.f32.mrf.mxu0
    %1469 = vmatprep.mubr.f32.mxu0 0.0
    %v1470 = vand.u32 %v1186, 4294901760
    %1471 = vmatmul.mubr.f32.gmra.mxu0 %v1470
    %v1472 = vpop.f32.mrf.mxu0
    %v1473 = vadd.f32 %v1296, %v1472
    %v1474 = vpop.f32.mrf.mxu0
    %1475 = vmatprep.mubr.f32.mxu0 0.0
    %v1476 = vand.u32 %v1189, 4294901760
    %1477 = vmatmul.mubr.f32.gmra.mxu0 %v1476
    %v1478 = vpop.f32.mrf.mxu0
    %v1479 = vadd.f32 %v1306, %v1478
    %v1480 = vpop.f32.mrf.mxu0
    %1481 = vmatprep.mubr.f32.mxu0 0.0
    %v1482 = vand.u32 %v1192, 4294901760
    %1483 = vmatmul.mubr.f32.gmra.mxu0 %v1482
    %v1484 = vpop.f32.mrf.mxu0
    %v1485 = vadd.f32 %v1316, %v1484
    %v1486 = vpop.f32.mrf.mxu0
    %1487 = vmatprep.mubr.f32.mxu0 0.0
    %v1488 = vand.u32 %v1195, 4294901760
    %1489 = vmatmul.mubr.f32.gmra.mxu0 %v1488
    %v1490 = vpop.f32.mrf.mxu0
    %v1491 = vadd.f32 %v1326, %v1490
    %v1492 = vpop.f32.mrf.mxu0
    %1493 = vmatprep.mubr.f32.mxu0 0.0
    %v1494 = vand.u32 %v1198, 4294901760
    %1495 = vmatmul.mubr.f32.gmra.mxu0 %v1494
    %v1496 = vpop.f32.mrf.mxu0
    %v1497 = vadd.f32 %v1336, %v1496
    %v1498 = vpop.f32.mrf.mxu0
    %1499 = vmatprep.mubr.f32.mxu0 0.0
    %v1500 = vand.u32 %v1201, 4294901760
    %1501 = vmatmul.mubr.f32.gmra.mxu0 %v1500
    %v1502 = vpop.f32.mrf.mxu0
    %v1503 = vadd.f32 %v1346, %v1502
    %v1504 = vpop.f32.mrf.mxu0
    %1505 = vmatprep.mubr.f32.mxu0 0.0
    %v1506 = vand.u32 %v1204, 4294901760
    %1507 = vmatmul.mubr.f32.gmra.mxu0 %v1506
    %v1508 = vpop.f32.mrf.mxu0
    %v1509 = vadd.f32 %v1356, %v1508
    %v1510 = vpop.f32.mrf.mxu0
    %1511 = vdwg.mxu0
    %1512 = vmatprep.subr.mxu0 0.0
    %1513 = vmatpush1.msra.mxu0 0.0
    %1514 = vmatprep.subr.mxu0 0.0
    %1515 = vmatpush1.msra.mxu0 0.0
    %1516 = vmatprep.subr.mxu0 0.0
    %1517 = vmatpush1.msra.mxu0 0.0
    %1518 = vmatprep.subr.mxu0 0.0
    %1519 = vmatpush1.msra.mxu0 0.0
    %1520 = vmatprep.subr.mxu0 0.0
    %1521 = vmatpush1.msra.mxu0 0.0
    %1522 = vmatprep.subr.mxu0 0.0
    %1523 = vmatpush1.msra.mxu0 0.0
    %1524 = vmatprep.subr.mxu0 0.0
    %1525 = vmatpush1.msra.mxu0 0.0
    %1526 = vmatprep.subr.mxu0 0.0
    %1527 = vmatpush1.msra.mxu0 0.0
    %1528 = vmatprep.subr.mxu0 0.0
    %v1529 = vand.u32 %v1140, 4294901760
    %v1530 = vsub.f32 %v1140, %v1529
    %1531 = vmatpush1.msra.mxu0 %v1530
    %1532 = vmatprep.subr.mxu0 0.0
    %v1533 = vand.u32 %v1139, 4294901760
    %v1534 = vsub.f32 %v1139, %v1533
    %1535 = vmatpush1.msra.mxu0 %v1534
    %1536 = vmatprep.subr.mxu0 0.0
    %v1537 = vand.u32 %v1138, 4294901760
    %v1538 = vsub.f32 %v1138, %v1537
    %1539 = vmatpush1.msra.mxu0 %v1538
    %1540 = vmatprep.subr.mxu0 0.0
    %v1541 = vand.u32 %v1137, 4294901760
    %v1542 = vsub.f32 %v1137, %v1541
    %1543 = vmatpush1.msra.mxu0 %v1542
    %1544 = vmatprep.subr.mxu0 0.0
    %v1545 = vand.u32 %v1136, 4294901760
    %v1546 = vsub.f32 %v1136, %v1545
    %1547 = vmatpush1.msra.mxu0 %v1546
    %1548 = vmatprep.subr.mxu0 0.0
    %v1549 = vand.u32 %v1135, 4294901760
    %v1550 = vsub.f32 %v1135, %v1549
    %1551 = vmatpush1.msra.mxu0 %v1550
    %1552 = vmatprep.subr.mxu0 0.0
    %v1553 = vand.u32 %v1134, 4294901760
    %v1554 = vsub.f32 %v1134, %v1553
    %1555 = vmatpush1.msra.mxu0 %v1554
    %1556 = vmatprep.subr.mxu0 0.0
    %v1557 = vand.u32 %v1133, 4294901760
    %v1558 = vsub.f32 %v1133, %v1557
    %1559 = vmatpush1.msra.mxu0 %v1558
    %1560 = vmatprep.subr.mxu0 0.0
    %1561 = vmatpush2.msra.mxu0 0.0
    %1562 = vmatprep.subr.mxu0 0.0
    %1563 = vmatpush2.msra.mxu0 0.0
    %1564 = vmatprep.subr.mxu0 0.0
    %1565 = vmatpush2.msra.mxu0 0.0
    %1566 = vmatprep.subr.mxu0 0.0
    %1567 = vmatpush2.msra.mxu0 0.0
    %1568 = vmatprep.subr.mxu0 0.0
    %1569 = vmatpush2.msra.mxu0 0.0
    %1570 = vmatprep.subr.mxu0 0.0
    %1571 = vmatpush2.msra.mxu0 0.0
    %1572 = vmatprep.subr.mxu0 0.0
    %1573 = vmatpush2.msra.mxu0 0.0
    %1574 = vmatprep.subr.mxu0 0.0
    %1575 = vmatpush2.msra.mxu0 0.0
    %1576 = vmatprep.subr.mxu0 0.0
    %1577 = vmatpush2.msra.mxu0 0.0
    %1578 = vmatprep.subr.mxu0 0.0
    %1579 = vmatpush2.msra.mxu0 0.0
    %1580 = vmatprep.subr.mxu0 0.0
    %1581 = vmatpush2.msra.mxu0 0.0
    %1582 = vmatprep.subr.mxu0 0.0
    %1583 = vmatpush2.msra.mxu0 0.0
    %1584 = vmatprep.subr.mxu0 0.0
    %1585 = vmatpush2.msra.mxu0 0.0
    %1586 = vmatprep.subr.mxu0 0.0
    %1587 = vmatpush2.msra.mxu0 0.0
    %1588 = vmatprep.subr.mxu0 0.0
    %1589 = vmatpush2.msra.mxu0 0.0
    %1590 = vmatprep.subr.mxu0 0.0
    %1591 = vmatpush2.msra.mxu0 0.0
    %1592 = vmatprep.mubr.f32.mxu0 0.0
    %v1593 = vand.u32 %v1183, 4294901760
    %v1594 = vsub.f32 %v1183, %v1593
    %1595 = vmatmul.mubr.f32.gmra.mxu0 %v1594
    %v1596 = vpop.f32.mrf.mxu0
    %v1597 = vadd.f32 %v1467, %v1596
    %v1598 = vpop.f32.mrf.mxu0
    %1599 = vmatprep.mubr.f32.mxu0 0.0
    %v1600 = vand.u32 %v1186, 4294901760
    %v1601 = vsub.f32 %v1186, %v1600
    %1602 = vmatmul.mubr.f32.gmra.mxu0 %v1601
    %v1603 = vpop.f32.mrf.mxu0
    %v1604 = vadd.f32 %v1473, %v1603
    %v1605 = vpop.f32.mrf.mxu0
    %1606 = vmatprep.mubr.f32.mxu0 0.0
    %v1607 = vand.u32 %v1189, 4294901760
    %v1608 = vsub.f32 %v1189, %v1607
    %1609 = vmatmul.mubr.f32.gmra.mxu0 %v1608
    %v1610 = vpop.f32.mrf.mxu0
    %v1611 = vadd.f32 %v1479, %v1610
    %v1612 = vpop.f32.mrf.mxu0
    %1613 = vmatprep.mubr.f32.mxu0 0.0
    %v1614 = vand.u32 %v1192, 4294901760
    %v1615 = vsub.f32 %v1192, %v1614
    %1616 = vmatmul.mubr.f32.gmra.mxu0 %v1615
    %v1617 = vpop.f32.mrf.mxu0
    %v1618 = vadd.f32 %v1485, %v1617
    %v1619 = vpop.f32.mrf.mxu0
    %1620 = vmatprep.mubr.f32.mxu0 0.0
    %v1621 = vand.u32 %v1195, 4294901760
    %v1622 = vsub.f32 %v1195, %v1621
    %1623 = vmatmul.mubr.f32.gmra.mxu0 %v1622
    %v1624 = vpop.f32.mrf.mxu0
    %v1625 = vadd.f32 %v1491, %v1624
    %v1626 = vpop.f32.mrf.mxu0
    %1627 = vmatprep.mubr.f32.mxu0 0.0
    %v1628 = vand.u32 %v1198, 4294901760
    %v1629 = vsub.f32 %v1198, %v1628
    %1630 = vmatmul.mubr.f32.gmra.mxu0 %v1629
    %v1631 = vpop.f32.mrf.mxu0
    %v1632 = vadd.f32 %v1497, %v1631
    %v1633 = vpop.f32.mrf.mxu0
    %1634 = vmatprep.mubr.f32.mxu0 0.0
    %v1635 = vand.u32 %v1201, 4294901760
    %v1636 = vsub.f32 %v1201, %v1635
    %1637 = vmatmul.mubr.f32.gmra.mxu0 %v1636
    %v1638 = vpop.f32.mrf.mxu0
    %v1639 = vadd.f32 %v1503, %v1638
    %v1640 = vpop.f32.mrf.mxu0
    %1641 = vmatprep.mubr.f32.mxu0 0.0
    %v1642 = vand.u32 %v1204, 4294901760
    %v1643 = vsub.f32 %v1204, %v1642
    %1644 = vmatmul.mubr.f32.gmra.mxu0 %v1643
    %v1645 = vpop.f32.mrf.mxu0
    %v1646 = vadd.f32 %v1509, %v1645
    %v1647 = vpop.f32.mrf.mxu0
    %1648 = vdwg.mxu0
    %1649 = vmatprep.subr.mxu0 0.0
    %1650 = vmatpush1.msra.mxu0 0.0
    %1651 = vmatprep.subr.mxu0 0.0
    %1652 = vmatpush1.msra.mxu0 0.0
    %1653 = vmatprep.subr.mxu0 0.0
    %1654 = vmatpush1.msra.mxu0 0.0
    %1655 = vmatprep.subr.mxu0 0.0
    %1656 = vmatpush1.msra.mxu0 0.0
    %1657 = vmatprep.subr.mxu0 0.0
    %1658 = vmatpush1.msra.mxu0 0.0
    %1659 = vmatprep.subr.mxu0 0.0
    %1660 = vmatpush1.msra.mxu0 0.0
    %1661 = vmatprep.subr.mxu0 0.0
    %1662 = vmatpush1.msra.mxu0 0.0
    %1663 = vmatprep.subr.mxu0 0.0
    %1664 = vmatpush1.msra.mxu0 0.0
    %1665 = vmatprep.subr.mxu0 0.0
    %v1666 = vand.u32 %v1140, 4294901760
    %1667 = vmatpush1.msra.mxu0 %v1666
    %1668 = vmatprep.subr.mxu0 0.0
    %v1669 = vand.u32 %v1139, 4294901760
    %1670 = vmatpush1.msra.mxu0 %v1669
    %1671 = vmatprep.subr.mxu0 0.0
    %v1672 = vand.u32 %v1138, 4294901760
    %1673 = vmatpush1.msra.mxu0 %v1672
    %1674 = vmatprep.subr.mxu0 0.0
    %v1675 = vand.u32 %v1137, 4294901760
    %1676 = vmatpush1.msra.mxu0 %v1675
    %1677 = vmatprep.subr.mxu0 0.0
    %v1678 = vand.u32 %v1136, 4294901760
    %1679 = vmatpush1.msra.mxu0 %v1678
    %1680 = vmatprep.subr.mxu0 0.0
    %v1681 = vand.u32 %v1135, 4294901760
    %1682 = vmatpush1.msra.mxu0 %v1681
    %1683 = vmatprep.subr.mxu0 0.0
    %v1684 = vand.u32 %v1134, 4294901760
    %1685 = vmatpush1.msra.mxu0 %v1684
    %1686 = vmatprep.subr.mxu0 0.0
    %v1687 = vand.u32 %v1133, 4294901760
    %1688 = vmatpush1.msra.mxu0 %v1687
    %1689 = vmatprep.subr.mxu0 0.0
    %1690 = vmatpush2.msra.mxu0 0.0
    %1691 = vmatprep.subr.mxu0 0.0
    %1692 = vmatpush2.msra.mxu0 0.0
    %1693 = vmatprep.subr.mxu0 0.0
    %1694 = vmatpush2.msra.mxu0 0.0
    %1695 = vmatprep.subr.mxu0 0.0
    %1696 = vmatpush2.msra.mxu0 0.0
    %1697 = vmatprep.subr.mxu0 0.0
    %1698 = vmatpush2.msra.mxu0 0.0
    %1699 = vmatprep.subr.mxu0 0.0
    %1700 = vmatpush2.msra.mxu0 0.0
    %1701 = vmatprep.subr.mxu0 0.0
    %1702 = vmatpush2.msra.mxu0 0.0
    %1703 = vmatprep.subr.mxu0 0.0
    %1704 = vmatpush2.msra.mxu0 0.0
    %1705 = vmatprep.subr.mxu0 0.0
    %1706 = vmatpush2.msra.mxu0 0.0
    %1707 = vmatprep.subr.mxu0 0.0
    %1708 = vmatpush2.msra.mxu0 0.0
    %1709 = vmatprep.subr.mxu0 0.0
    %1710 = vmatpush2.msra.mxu0 0.0
    %1711 = vmatprep.subr.mxu0 0.0
    %1712 = vmatpush2.msra.mxu0 0.0
    %1713 = vmatprep.subr.mxu0 0.0
    %1714 = vmatpush2.msra.mxu0 0.0
    %1715 = vmatprep.subr.mxu0 0.0
    %1716 = vmatpush2.msra.mxu0 0.0
    %1717 = vmatprep.subr.mxu0 0.0
    %1718 = vmatpush2.msra.mxu0 0.0
    %1719 = vmatprep.subr.mxu0 0.0
    %1720 = vmatpush2.msra.mxu0 0.0
    %1721 = vmatprep.mubr.f32.mxu0 0.0
    %v1722 = vand.u32 %v1183, 4294901760
    %v1723 = vsub.f32 %v1183, %v1722
    %v1724 = vand.u32 %v1723, 4294901760
    %1725 = vmatmul.mubr.f32.gmra.mxu0 %v1724
    %v1726 = vpop.f32.mrf.mxu0
    %v1727 = vadd.f32 %v1597, %v1726
    %v1728 = vpop.f32.mrf.mxu0
    %1729 = vmatprep.mubr.f32.mxu0 0.0
    %v1730 = vand.u32 %v1186, 4294901760
    %v1731 = vsub.f32 %v1186, %v1730
    %v1732 = vand.u32 %v1731, 4294901760
    %1733 = vmatmul.mubr.f32.gmra.mxu0 %v1732
    %v1734 = vpop.f32.mrf.mxu0
    %v1735 = vadd.f32 %v1604, %v1734
    %v1736 = vpop.f32.mrf.mxu0
    %1737 = vmatprep.mubr.f32.mxu0 0.0
    %v1738 = vand.u32 %v1189, 4294901760
    %v1739 = vsub.f32 %v1189, %v1738
    %v1740 = vand.u32 %v1739, 4294901760
    %1741 = vmatmul.mubr.f32.gmra.mxu0 %v1740
    %v1742 = vpop.f32.mrf.mxu0
    %v1743 = vadd.f32 %v1611, %v1742
    %v1744 = vpop.f32.mrf.mxu0
    %1745 = vmatprep.mubr.f32.mxu0 0.0
    %v1746 = vand.u32 %v1192, 4294901760
    %v1747 = vsub.f32 %v1192, %v1746
    %v1748 = vand.u32 %v1747, 4294901760
    %1749 = vmatmul.mubr.f32.gmra.mxu0 %v1748
    %v1750 = vpop.f32.mrf.mxu0
    %v1751 = vadd.f32 %v1618, %v1750
    %v1752 = vpop.f32.mrf.mxu0
    %1753 = vmatprep.mubr.f32.mxu0 0.0
    %v1754 = vand.u32 %v1195, 4294901760
    %v1755 = vsub.f32 %v1195, %v1754
    %v1756 = vand.u32 %v1755, 4294901760
    %1757 = vmatmul.mubr.f32.gmra.mxu0 %v1756
    %v1758 = vpop.f32.mrf.mxu0
    %v1759 = vadd.f32 %v1625, %v1758
    %v1760 = vpop.f32.mrf.mxu0
    %1761 = vmatprep.mubr.f32.mxu0 0.0
    %v1762 = vand.u32 %v1198, 4294901760
    %v1763 = vsub.f32 %v1198, %v1762
    %v1764 = vand.u32 %v1763, 4294901760
    %1765 = vmatmul.mubr.f32.gmra.mxu0 %v1764
    %v1766 = vpop.f32.mrf.mxu0
    %v1767 = vadd.f32 %v1632, %v1766
    %v1768 = vpop.f32.mrf.mxu0
    %1769 = vmatprep.mubr.f32.mxu0 0.0
    %v1770 = vand.u32 %v1201, 4294901760
    %v1771 = vsub.f32 %v1201, %v1770
    %v1772 = vand.u32 %v1771, 4294901760
    %1773 = vmatmul.mubr.f32.gmra.mxu0 %v1772
    %v1774 = vpop.f32.mrf.mxu0
    %v1775 = vadd.f32 %v1639, %v1774
    %v1776 = vpop.f32.mrf.mxu0
    %1777 = vmatprep.mubr.f32.mxu0 0.0
    %v1778 = vand.u32 %v1204, 4294901760
    %v1779 = vsub.f32 %v1204, %v1778
    %v1780 = vand.u32 %v1779, 4294901760
    %1781 = vmatmul.mubr.f32.gmra.mxu0 %v1780
    %v1782 = vpop.f32.mrf.mxu0
    %v1783 = vadd.f32 %v1646, %v1782
    %v1784 = vpop.f32.mrf.mxu0
    %1785 = vdwg.mxu0
    %1786 = vmatprep.subr.mxu0 0.0
    %1787 = vmatpush1.msra.mxu0 0.0
    %1788 = vmatprep.subr.mxu0 0.0
    %1789 = vmatpush1.msra.mxu0 0.0
    %1790 = vmatprep.subr.mxu0 0.0
    %1791 = vmatpush1.msra.mxu0 0.0
    %1792 = vmatprep.subr.mxu0 0.0
    %1793 = vmatpush1.msra.mxu0 0.0
    %1794 = vmatprep.subr.mxu0 0.0
    %1795 = vmatpush1.msra.mxu0 0.0
    %1796 = vmatprep.subr.mxu0 0.0
    %1797 = vmatpush1.msra.mxu0 0.0
    %1798 = vmatprep.subr.mxu0 0.0
    %1799 = vmatpush1.msra.mxu0 0.0
    %1800 = vmatprep.subr.mxu0 0.0
    %1801 = vmatpush1.msra.mxu0 0.0
    %1802 = vmatprep.subr.mxu0 0.0
    %v1803 = vand.u32 %v1140, 4294901760
    %v1804 = vsub.f32 %v1140, %v1803
    %v1805 = vand.u32 %v1804, 4294901760
    %1806 = vmatpush1.msra.mxu0 %v1805
    %1807 = vmatprep.subr.mxu0 0.0
    %v1808 = vand.u32 %v1139, 4294901760
    %v1809 = vsub.f32 %v1139, %v1808
    %v1810 = vand.u32 %v1809, 4294901760
    %1811 = vmatpush1.msra.mxu0 %v1810
    %1812 = vmatprep.subr.mxu0 0.0
    %v1813 = vand.u32 %v1138, 4294901760
    %v1814 = vsub.f32 %v1138, %v1813
    %v1815 = vand.u32 %v1814, 4294901760
    %1816 = vmatpush1.msra.mxu0 %v1815
    %1817 = vmatprep.subr.mxu0 0.0
    %v1818 = vand.u32 %v1137, 4294901760
    %v1819 = vsub.f32 %v1137, %v1818
    %v1820 = vand.u32 %v1819, 4294901760
    %1821 = vmatpush1.msra.mxu0 %v1820
    %1822 = vmatprep.subr.mxu0 0.0
    %v1823 = vand.u32 %v1136, 4294901760
    %v1824 = vsub.f32 %v1136, %v1823
    %v1825 = vand.u32 %v1824, 4294901760
    %1826 = vmatpush1.msra.mxu0 %v1825
    %1827 = vmatprep.subr.mxu0 0.0
    %v1828 = vand.u32 %v1135, 4294901760
    %v1829 = vsub.f32 %v1135, %v1828
    %v1830 = vand.u32 %v1829, 4294901760
    %1831 = vmatpush1.msra.mxu0 %v1830
    %1832 = vmatprep.subr.mxu0 0.0
    %v1833 = vand.u32 %v1134, 4294901760
    %v1834 = vsub.f32 %v1134, %v1833
    %v1835 = vand.u32 %v1834, 4294901760
    %1836 = vmatpush1.msra.mxu0 %v1835
    %1837 = vmatprep.subr.mxu0 0.0
    %v1838 = vand.u32 %v1133, 4294901760
    %v1839 = vsub.f32 %v1133, %v1838
    %v1840 = vand.u32 %v1839, 4294901760
    %1841 = vmatpush1.msra.mxu0 %v1840
    %1842 = vmatprep.subr.mxu0 0.0
    %1843 = vmatpush2.msra.mxu0 0.0
    %1844 = vmatprep.subr.mxu0 0.0
    %1845 = vmatpush2.msra.mxu0 0.0
    %1846 = vmatprep.subr.mxu0 0.0
    %1847 = vmatpush2.msra.mxu0 0.0
    %1848 = vmatprep.subr.mxu0 0.0
    %1849 = vmatpush2.msra.mxu0 0.0
    %1850 = vmatprep.subr.mxu0 0.0
    %1851 = vmatpush2.msra.mxu0 0.0
    %1852 = vmatprep.subr.mxu0 0.0
    %1853 = vmatpush2.msra.mxu0 0.0
    %1854 = vmatprep.subr.mxu0 0.0
    %1855 = vmatpush2.msra.mxu0 0.0
    %1856 = vmatprep.subr.mxu0 0.0
    %1857 = vmatpush2.msra.mxu0 0.0
    %1858 = vmatprep.subr.mxu0 0.0
    %1859 = vmatpush2.msra.mxu0 0.0
    %1860 = vmatprep.subr.mxu0 0.0
    %1861 = vmatpush2.msra.mxu0 0.0
    %1862 = vmatprep.subr.mxu0 0.0
    %1863 = vmatpush2.msra.mxu0 0.0
    %1864 = vmatprep.subr.mxu0 0.0
    %1865 = vmatpush2.msra.mxu0 0.0
    %1866 = vmatprep.subr.mxu0 0.0
    %1867 = vmatpush2.msra.mxu0 0.0
    %1868 = vmatprep.subr.mxu0 0.0
    %1869 = vmatpush2.msra.mxu0 0.0
    %1870 = vmatprep.subr.mxu0 0.0
    %1871 = vmatpush2.msra.mxu0 0.0
    %1872 = vmatprep.subr.mxu0 0.0
    %1873 = vmatpush2.msra.mxu0 0.0
    %1874 = vmatprep.mubr.f32.mxu0 0.0
    %v1875 = vand.u32 %v1183, 4294901760
    %1876 = vmatmul.mubr.f32.gmra.mxu0 %v1875
    %v1877 = vpop.f32.mrf.mxu0
    %v1878 = vadd.f32 %v1727, %v1877
    %v1879 = vpop.f32.mrf.mxu0
    %1880 = vmatprep.mubr.f32.mxu0 0.0
    %v1881 = vand.u32 %v1186, 4294901760
    %1882 = vmatmul.mubr.f32.gmra.mxu0 %v1881
    %v1883 = vpop.f32.mrf.mxu0
    %v1884 = vadd.f32 %v1735, %v1883
    %v1885 = vpop.f32.mrf.mxu0
    %1886 = vmatprep.mubr.f32.mxu0 0.0
    %v1887 = vand.u32 %v1189, 4294901760
    %1888 = vmatmul.mubr.f32.gmra.mxu0 %v1887
    %v1889 = vpop.f32.mrf.mxu0
    %v1890 = vadd.f32 %v1743, %v1889
    %v1891 = vpop.f32.mrf.mxu0
    %1892 = vmatprep.mubr.f32.mxu0 0.0
    %v1893 = vand.u32 %v1192, 4294901760
    %1894 = vmatmul.mubr.f32.gmra.mxu0 %v1893
    %v1895 = vpop.f32.mrf.mxu0
    %v1896 = vadd.f32 %v1751, %v1895
    %v1897 = vpop.f32.mrf.mxu0
    %1898 = vmatprep.mubr.f32.mxu0 0.0
    %v1899 = vand.u32 %v1195, 4294901760
    %1900 = vmatmul.mubr.f32.gmra.mxu0 %v1899
    %v1901 = vpop.f32.mrf.mxu0
    %v1902 = vadd.f32 %v1759, %v1901
    %v1903 = vpop.f32.mrf.mxu0
    %1904 = vmatprep.mubr.f32.mxu0 0.0
    %v1905 = vand.u32 %v1198, 4294901760
    %1906 = vmatmul.mubr.f32.gmra.mxu0 %v1905
    %v1907 = vpop.f32.mrf.mxu0
    %v1908 = vadd.f32 %v1767, %v1907
    %v1909 = vpop.f32.mrf.mxu0
    %1910 = vmatprep.mubr.f32.mxu0 0.0
    %v1911 = vand.u32 %v1201, 4294901760
    %1912 = vmatmul.mubr.f32.gmra.mxu0 %v1911
    %v1913 = vpop.f32.mrf.mxu0
    %v1914 = vadd.f32 %v1775, %v1913
    %v1915 = vpop.f32.mrf.mxu0
    %1916 = vmatprep.mubr.f32.mxu0 0.0
    %v1917 = vand.u32 %v1204, 4294901760
    %1918 = vmatmul.mubr.f32.gmra.mxu0 %v1917
    %v1919 = vpop.f32.mrf.mxu0
    %v1920 = vadd.f32 %v1783, %v1919
    %v1921 = vpop.f32.mrf.mxu0
    %1922 = vdwg.mxu0
    %1923 = vmatprep.subr.mxu0 0.0
    %1924 = vmatpush1.msra.mxu0 0.0
    %1925 = vmatprep.subr.mxu0 0.0
    %1926 = vmatpush1.msra.mxu0 0.0
    %1927 = vmatprep.subr.mxu0 0.0
    %1928 = vmatpush1.msra.mxu0 0.0
    %1929 = vmatprep.subr.mxu0 0.0
    %1930 = vmatpush1.msra.mxu0 0.0
    %1931 = vmatprep.subr.mxu0 0.0
    %1932 = vmatpush1.msra.mxu0 0.0
    %1933 = vmatprep.subr.mxu0 0.0
    %1934 = vmatpush1.msra.mxu0 0.0
    %1935 = vmatprep.subr.mxu0 0.0
    %1936 = vmatpush1.msra.mxu0 0.0
    %1937 = vmatprep.subr.mxu0 0.0
    %1938 = vmatpush1.msra.mxu0 0.0
    %1939 = vmatprep.subr.mxu0 0.0
    %v1940 = vand.u32 %v1140, 4294901760
    %1941 = vmatpush1.msra.mxu0 %v1940
    %1942 = vmatprep.subr.mxu0 0.0
    %v1943 = vand.u32 %v1139, 4294901760
    %1944 = vmatpush1.msra.mxu0 %v1943
    %1945 = vmatprep.subr.mxu0 0.0
    %v1946 = vand.u32 %v1138, 4294901760
    %1947 = vmatpush1.msra.mxu0 %v1946
    %1948 = vmatprep.subr.mxu0 0.0
    %v1949 = vand.u32 %v1137, 4294901760
    %1950 = vmatpush1.msra.mxu0 %v1949
    %1951 = vmatprep.subr.mxu0 0.0
    %v1952 = vand.u32 %v1136, 4294901760
    %1953 = vmatpush1.msra.mxu0 %v1952
    %1954 = vmatprep.subr.mxu0 0.0
    %v1955 = vand.u32 %v1135, 4294901760
    %1956 = vmatpush1.msra.mxu0 %v1955
    %1957 = vmatprep.subr.mxu0 0.0
    %v1958 = vand.u32 %v1134, 4294901760
    %1959 = vmatpush1.msra.mxu0 %v1958
    %1960 = vmatprep.subr.mxu0 0.0
    %v1961 = vand.u32 %v1133, 4294901760
    %1962 = vmatpush1.msra.mxu0 %v1961
    %1963 = vmatprep.subr.mxu0 0.0
    %1964 = vmatpush2.msra.mxu0 0.0
    %1965 = vmatprep.subr.mxu0 0.0
    %1966 = vmatpush2.msra.mxu0 0.0
    %1967 = vmatprep.subr.mxu0 0.0
    %1968 = vmatpush2.msra.mxu0 0.0
    %1969 = vmatprep.subr.mxu0 0.0
    %1970 = vmatpush2.msra.mxu0 0.0
    %1971 = vmatprep.subr.mxu0 0.0
    %1972 = vmatpush2.msra.mxu0 0.0
    %1973 = vmatprep.subr.mxu0 0.0
    %1974 = vmatpush2.msra.mxu0 0.0
    %1975 = vmatprep.subr.mxu0 0.0
    %1976 = vmatpush2.msra.mxu0 0.0
    %1977 = vmatprep.subr.mxu0 0.0
    %1978 = vmatpush2.msra.mxu0 0.0
    %1979 = vmatprep.subr.mxu0 0.0
    %1980 = vmatpush2.msra.mxu0 0.0
    %1981 = vmatprep.subr.mxu0 0.0
    %1982 = vmatpush2.msra.mxu0 0.0
    %1983 = vmatprep.subr.mxu0 0.0
    %1984 = vmatpush2.msra.mxu0 0.0
    %1985 = vmatprep.subr.mxu0 0.0
    %1986 = vmatpush2.msra.mxu0 0.0
    %1987 = vmatprep.subr.mxu0 0.0
    %1988 = vmatpush2.msra.mxu0 0.0
    %1989 = vmatprep.subr.mxu0 0.0
    %1990 = vmatpush2.msra.mxu0 0.0
    %1991 = vmatprep.subr.mxu0 0.0
    %1992 = vmatpush2.msra.mxu0 0.0
    %1993 = vmatprep.subr.mxu0 0.0
    %1994 = vmatpush2.msra.mxu0 0.0
    %1995 = vmatprep.mubr.f32.mxu0 0.0
    %v1996 = vand.u32 %v1183, 4294901760
    %1997 = vmatmul.mubr.f32.gmra.mxu0 %v1996
    %v1998 = vpop.f32.mrf.mxu0
    %v1999 = vadd.f32 %v1878, %v1998
    %v2000 = vpop.f32.mrf.mxu0
    %2001 = vmatprep.mubr.f32.mxu0 0.0
    %v2002 = vand.u32 %v1186, 4294901760
    %2003 = vmatmul.mubr.f32.gmra.mxu0 %v2002
    %v2004 = vpop.f32.mrf.mxu0
    %v2005 = vadd.f32 %v1884, %v2004
    %v2006 = vpop.f32.mrf.mxu0
    %2007 = vmatprep.mubr.f32.mxu0 0.0
    %v2008 = vand.u32 %v1189, 4294901760
    %2009 = vmatmul.mubr.f32.gmra.mxu0 %v2008
    %v2010 = vpop.f32.mrf.mxu0
    %v2011 = vadd.f32 %v1890, %v2010
    %v2012 = vpop.f32.mrf.mxu0
    %2013 = vmatprep.mubr.f32.mxu0 0.0
    %v2014 = vand.u32 %v1192, 4294901760
    %2015 = vmatmul.mubr.f32.gmra.mxu0 %v2014
    %v2016 = vpop.f32.mrf.mxu0
    %v2017 = vadd.f32 %v1896, %v2016
    %v2018 = vpop.f32.mrf.mxu0
    %2019 = vmatprep.mubr.f32.mxu0 0.0
    %v2020 = vand.u32 %v1195, 4294901760
    %2021 = vmatmul.mubr.f32.gmra.mxu0 %v2020
    %v2022 = vpop.f32.mrf.mxu0
    %v2023 = vadd.f32 %v1902, %v2022
    %v2024 = vpop.f32.mrf.mxu0
    %2025 = vmatprep.mubr.f32.mxu0 0.0
    %v2026 = vand.u32 %v1198, 4294901760
    %2027 = vmatmul.mubr.f32.gmra.mxu0 %v2026
    %v2028 = vpop.f32.mrf.mxu0
    %v2029 = vadd.f32 %v1908, %v2028
    %v2030 = vpop.f32.mrf.mxu0
    %2031 = vmatprep.mubr.f32.mxu0 0.0
    %v2032 = vand.u32 %v1201, 4294901760
    %2033 = vmatmul.mubr.f32.gmra.mxu0 %v2032
    %v2034 = vpop.f32.mrf.mxu0
    %v2035 = vadd.f32 %v1914, %v2034
    %v2036 = vpop.f32.mrf.mxu0
    %2037 = vmatprep.mubr.f32.mxu0 0.0
    %v2038 = vand.u32 %v1204, 4294901760
    %2039 = vmatmul.mubr.f32.gmra.mxu0 %v2038
    %v2040 = vpop.f32.mrf.mxu0
    %v2041 = vadd.f32 %v1920, %v2040
    %v2042 = vpop.f32.mrf.mxu0
    %2043 = vdwg.mxu0
    %v2044 = vmax.f32 %v1999, 0.0
    %v2045 = vmax.f32 %v2005, 0.0
    %v2046 = vmax.f32 %v2011, 0.0
    %v2047 = vmax.f32 %v2017, 0.0
    %v2048 = vmax.f32 %v2023, 0.0
    %v2049 = vmax.f32 %v2029, 0.0
    %v2050 = vmax.f32 %v2035, 0.0
    %v2051 = vmax.f32 %v2041, 0.0
    %v2052 = vstv %s61
    %v2054 = vsel %vm1181, %v60, 0
    %2056 = vmatprep.subr.mxu0 0.0
    %2057 = vmatpush1.msra.mxu0 0.0
    %2058 = vmatprep.subr.mxu0 0.0
    %2059 = vmatpush1.msra.mxu0 0.0
    %2060 = vmatprep.subr.mxu0 0.0
    %2061 = vmatpush1.msra.mxu0 0.0
    %2062 = vmatprep.subr.mxu0 0.0
    %2063 = vmatpush1.msra.mxu0 0.0
    %2064 = vmatprep.subr.mxu0 0.0
    %2065 = vmatpush1.msra.mxu0 0.0
    %2066 = vmatprep.subr.mxu0 0.0
    %2067 = vmatpush1.msra.mxu0 0.0
    %2068 = vmatprep.subr.mxu0 0.0
    %2069 = vmatpush1.msra.mxu0 0.0
    %2070 = vmatprep.subr.mxu0 0.0
    %2071 = vmatpush1.msra.mxu0 0.0
    %2072 = vmatprep.subr.mxu0 0.0
    %v2073 = vand.u32 %v2051, 4294901760
    %2074 = vmatpush1.msra.mxu0 %v2073
    %2075 = vmatprep.subr.mxu0 0.0
    %v2076 = vand.u32 %v2050, 4294901760
    %2077 = vmatpush1.msra.mxu0 %v2076
    %2078 = vmatprep.subr.mxu0 0.0
    %v2079 = vand.u32 %v2049, 4294901760
    %2080 = vmatpush1.msra.mxu0 %v2079
    %2081 = vmatprep.subr.mxu0 0.0
    %v2082 = vand.u32 %v2048, 4294901760
    %2083 = vmatpush1.msra.mxu0 %v2082
    %2084 = vmatprep.subr.mxu0 0.0
    %v2085 = vand.u32 %v2047, 4294901760
    %2086 = vmatpush1.msra.mxu0 %v2085
    %2087 = vmatprep.subr.mxu0 0.0
    %v2088 = vand.u32 %v2046, 4294901760
    %2089 = vmatpush1.msra.mxu0 %v2088
    %2090 = vmatprep.subr.mxu0 0.0
    %v2091 = vand.u32 %v2045, 4294901760
    %2092 = vmatpush1.msra.mxu0 %v2091
    %2093 = vmatprep.subr.mxu0 0.0
    %v2094 = vand.u32 %v2044, 4294901760
    %2095 = vmatpush1.msra.mxu0 %v2094
    %2096 = vmatprep.subr.mxu0 0.0
    %2097 = vmatpush2.msra.mxu0 0.0
    %2098 = vmatprep.subr.mxu0 0.0
    %2099 = vmatpush2.msra.mxu0 0.0
    %2100 = vmatprep.subr.mxu0 0.0
    %2101 = vmatpush2.msra.mxu0 0.0
    %2102 = vmatprep.subr.mxu0 0.0
    %2103 = vmatpush2.msra.mxu0 0.0
    %2104 = vmatprep.subr.mxu0 0.0
    %2105 = vmatpush2.msra.mxu0 0.0
    %2106 = vmatprep.subr.mxu0 0.0
    %2107 = vmatpush2.msra.mxu0 0.0
    %2108 = vmatprep.subr.mxu0 0.0
    %2109 = vmatpush2.msra.mxu0 0.0
    %2110 = vmatprep.subr.mxu0 0.0
    %2111 = vmatpush2.msra.mxu0 0.0
    %2112 = vmatprep.subr.mxu0 0.0
    %2113 = vmatpush2.msra.mxu0 0.0
    %2114 = vmatprep.subr.mxu0 0.0
    %2115 = vmatpush2.msra.mxu0 0.0
    %2116 = vmatprep.subr.mxu0 0.0
    %2117 = vmatpush2.msra.mxu0 0.0
    %2118 = vmatprep.subr.mxu0 0.0
    %2119 = vmatpush2.msra.mxu0 0.0
    %2120 = vmatprep.subr.mxu0 0.0
    %2121 = vmatpush2.msra.mxu0 0.0
    %2122 = vmatprep.subr.mxu0 0.0
    %2123 = vmatpush2.msra.mxu0 0.0
    %2124 = vmatprep.subr.mxu0 0.0
    %2125 = vmatpush2.msra.mxu0 0.0
    %2126 = vmatprep.subr.mxu0 0.0
    %2127 = vmatpush2.msra.mxu0 0.0
    %2128 = vmatprep.mubr.f32.mxu0 0.0
    %v2129 = vand.u32 %v2054, 4294901760
    %v2130 = vsub.f32 %v2054, %v2129
    %v2131 = vand.u32 %v2130, 4294901760
    %v2132 = vsub.f32 %v2130, %v2131
    %v2133 = vand.u32 %v2132, 4294901760
    %2134 = vmatmul.mubr.f32.gmra.mxu0 %v2133
    %v2135 = vpop.f32.mrf.mxu0
    %v2136 = vadd.f32 %v2052, %v2135
    %v2137 = vpop.f32.mrf.mxu0
    %2138 = vdwg.mxu0
    %2139 = vmatprep.subr.mxu0 0.0
    %2140 = vmatpush1.msra.mxu0 0.0
    %2141 = vmatprep.subr.mxu0 0.0
    %2142 = vmatpush1.msra.mxu0 0.0
    %2143 = vmatprep.subr.mxu0 0.0
    %2144 = vmatpush1.msra.mxu0 0.0
    %2145 = vmatprep.subr.mxu0 0.0
    %2146 = vmatpush1.msra.mxu0 0.0
    %2147 = vmatprep.subr.mxu0 0.0
    %2148 = vmatpush1.msra.mxu0 0.0
    %2149 = vmatprep.subr.mxu0 0.0
    %2150 = vmatpush1.msra.mxu0 0.0
    %2151 = vmatprep.subr.mxu0 0.0
    %2152 = vmatpush1.msra.mxu0 0.0
    %2153 = vmatprep.subr.mxu0 0.0
    %2154 = vmatpush1.msra.mxu0 0.0
    %2155 = vmatprep.subr.mxu0 0.0
    %v2156 = vand.u32 %v2051, 4294901760
    %v2157 = vsub.f32 %v2051, %v2156
    %v2158 = vand.u32 %v2157, 4294901760
    %v2159 = vsub.f32 %v2157, %v2158
    %v2160 = vand.u32 %v2159, 4294901760
    %2161 = vmatpush1.msra.mxu0 %v2160
    %2162 = vmatprep.subr.mxu0 0.0
    %v2163 = vand.u32 %v2050, 4294901760
    %v2164 = vsub.f32 %v2050, %v2163
    %v2165 = vand.u32 %v2164, 4294901760
    %v2166 = vsub.f32 %v2164, %v2165
    %v2167 = vand.u32 %v2166, 4294901760
    %2168 = vmatpush1.msra.mxu0 %v2167
    %2169 = vmatprep.subr.mxu0 0.0
    %v2170 = vand.u32 %v2049, 4294901760
    %v2171 = vsub.f32 %v2049, %v2170
    %v2172 = vand.u32 %v2171, 4294901760
    %v2173 = vsub.f32 %v2171, %v2172
    %v2174 = vand.u32 %v2173, 4294901760
    %2175 = vmatpush1.msra.mxu0 %v2174
    %2176 = vmatprep.subr.mxu0 0.0
    %v2177 = vand.u32 %v2048, 4294901760
    %v2178 = vsub.f32 %v2048, %v2177
    %v2179 = vand.u32 %v2178, 4294901760
    %v2180 = vsub.f32 %v2178, %v2179
    %v2181 = vand.u32 %v2180, 4294901760
    %2182 = vmatpush1.msra.mxu0 %v2181
    %2183 = vmatprep.subr.mxu0 0.0
    %v2184 = vand.u32 %v2047, 4294901760
    %v2185 = vsub.f32 %v2047, %v2184
    %v2186 = vand.u32 %v2185, 4294901760
    %v2187 = vsub.f32 %v2185, %v2186
    %v2188 = vand.u32 %v2187, 4294901760
    %2189 = vmatpush1.msra.mxu0 %v2188
    %2190 = vmatprep.subr.mxu0 0.0
    %v2191 = vand.u32 %v2046, 4294901760
    %v2192 = vsub.f32 %v2046, %v2191
    %v2193 = vand.u32 %v2192, 4294901760
    %v2194 = vsub.f32 %v2192, %v2193
    %v2195 = vand.u32 %v2194, 4294901760
    %2196 = vmatpush1.msra.mxu0 %v2195
    %2197 = vmatprep.subr.mxu0 0.0
    %v2198 = vand.u32 %v2045, 4294901760
    %v2199 = vsub.f32 %v2045, %v2198
    %v2200 = vand.u32 %v2199, 4294901760
    %v2201 = vsub.f32 %v2199, %v2200
    %v2202 = vand.u32 %v2201, 4294901760
    %2203 = vmatpush1.msra.mxu0 %v2202
    %2204 = vmatprep.subr.mxu0 0.0
    %v2205 = vand.u32 %v2044, 4294901760
    %v2206 = vsub.f32 %v2044, %v2205
    %v2207 = vand.u32 %v2206, 4294901760
    %v2208 = vsub.f32 %v2206, %v2207
    %v2209 = vand.u32 %v2208, 4294901760
    %2210 = vmatpush1.msra.mxu0 %v2209
    %2211 = vmatprep.subr.mxu0 0.0
    %2212 = vmatpush2.msra.mxu0 0.0
    %2213 = vmatprep.subr.mxu0 0.0
    %2214 = vmatpush2.msra.mxu0 0.0
    %2215 = vmatprep.subr.mxu0 0.0
    %2216 = vmatpush2.msra.mxu0 0.0
    %2217 = vmatprep.subr.mxu0 0.0
    %2218 = vmatpush2.msra.mxu0 0.0
    %2219 = vmatprep.subr.mxu0 0.0
    %2220 = vmatpush2.msra.mxu0 0.0
    %2221 = vmatprep.subr.mxu0 0.0
    %2222 = vmatpush2.msra.mxu0 0.0
    %2223 = vmatprep.subr.mxu0 0.0
    %2224 = vmatpush2.msra.mxu0 0.0
    %2225 = vmatprep.subr.mxu0 0.0
    %2226 = vmatpush2.msra.mxu0 0.0
    %2227 = vmatprep.subr.mxu0 0.0
    %2228 = vmatpush2.msra.mxu0 0.0
    %2229 = vmatprep.subr.mxu0 0.0
    %2230 = vmatpush2.msra.mxu0 0.0
    %2231 = vmatprep.subr.mxu0 0.0
    %2232 = vmatpush2.msra.mxu0 0.0
    %2233 = vmatprep.subr.mxu0 0.0
    %2234 = vmatpush2.msra.mxu0 0.0
    %2235 = vmatprep.subr.mxu0 0.0
    %2236 = vmatpush2.msra.mxu0 0.0
    %2237 = vmatprep.subr.mxu0 0.0
    %2238 = vmatpush2.msra.mxu0 0.0
    %2239 = vmatprep.subr.mxu0 0.0
    %2240 = vmatpush2.msra.mxu0 0.0
    %2241 = vmatprep.subr.mxu0 0.0
    %2242 = vmatpush2.msra.mxu0 0.0
    %2243 = vmatprep.mubr.f32.mxu0 0.0
    %v2244 = vand.u32 %v2054, 4294901760
    %2245 = vmatmul.mubr.f32.gmra.mxu0 %v2244
    %v2246 = vpop.f32.mrf.mxu0
    %v2247 = vadd.f32 %v2136, %v2246
    %v2248 = vpop.f32.mrf.mxu0
    %2249 = vdwg.mxu0
    %2250 = vmatprep.subr.mxu0 0.0
    %2251 = vmatpush1.msra.mxu0 0.0
    %2252 = vmatprep.subr.mxu0 0.0
    %2253 = vmatpush1.msra.mxu0 0.0
    %2254 = vmatprep.subr.mxu0 0.0
    %2255 = vmatpush1.msra.mxu0 0.0
    %2256 = vmatprep.subr.mxu0 0.0
    %2257 = vmatpush1.msra.mxu0 0.0
    %2258 = vmatprep.subr.mxu0 0.0
    %2259 = vmatpush1.msra.mxu0 0.0
    %2260 = vmatprep.subr.mxu0 0.0
    %2261 = vmatpush1.msra.mxu0 0.0
    %2262 = vmatprep.subr.mxu0 0.0
    %2263 = vmatpush1.msra.mxu0 0.0
    %2264 = vmatprep.subr.mxu0 0.0
    %2265 = vmatpush1.msra.mxu0 0.0
    %2266 = vmatprep.subr.mxu0 0.0
    %v2267 = vand.u32 %v2051, 4294901760
    %v2268 = vsub.f32 %v2051, %v2267
    %2269 = vmatpush1.msra.mxu0 %v2268
    %2270 = vmatprep.subr.mxu0 0.0
    %v2271 = vand.u32 %v2050, 4294901760
    %v2272 = vsub.f32 %v2050, %v2271
    %2273 = vmatpush1.msra.mxu0 %v2272
    %2274 = vmatprep.subr.mxu0 0.0
    %v2275 = vand.u32 %v2049, 4294901760
    %v2276 = vsub.f32 %v2049, %v2275
    %2277 = vmatpush1.msra.mxu0 %v2276
    %2278 = vmatprep.subr.mxu0 0.0
    %v2279 = vand.u32 %v2048, 4294901760
    %v2280 = vsub.f32 %v2048, %v2279
    %2281 = vmatpush1.msra.mxu0 %v2280
    %2282 = vmatprep.subr.mxu0 0.0
    %v2283 = vand.u32 %v2047, 4294901760
    %v2284 = vsub.f32 %v2047, %v2283
    %2285 = vmatpush1.msra.mxu0 %v2284
    %2286 = vmatprep.subr.mxu0 0.0
    %v2287 = vand.u32 %v2046, 4294901760
    %v2288 = vsub.f32 %v2046, %v2287
    %2289 = vmatpush1.msra.mxu0 %v2288
    %2290 = vmatprep.subr.mxu0 0.0
    %v2291 = vand.u32 %v2045, 4294901760
    %v2292 = vsub.f32 %v2045, %v2291
    %2293 = vmatpush1.msra.mxu0 %v2292
    %2294 = vmatprep.subr.mxu0 0.0
    %v2295 = vand.u32 %v2044, 4294901760
    %v2296 = vsub.f32 %v2044, %v2295
    %2297 = vmatpush1.msra.mxu0 %v2296
    %2298 = vmatprep.subr.mxu0 0.0
    %2299 = vmatpush2.msra.mxu0 0.0
    %2300 = vmatprep.subr.mxu0 0.0
    %2301 = vmatpush2.msra.mxu0 0.0
    %2302 = vmatprep.subr.mxu0 0.0
    %2303 = vmatpush2.msra.mxu0 0.0
    %2304 = vmatprep.subr.mxu0 0.0
    %2305 = vmatpush2.msra.mxu0 0.0
    %2306 = vmatprep.subr.mxu0 0.0
    %2307 = vmatpush2.msra.mxu0 0.0
    %2308 = vmatprep.subr.mxu0 0.0
    %2309 = vmatpush2.msra.mxu0 0.0
    %2310 = vmatprep.subr.mxu0 0.0
    %2311 = vmatpush2.msra.mxu0 0.0
    %2312 = vmatprep.subr.mxu0 0.0
    %2313 = vmatpush2.msra.mxu0 0.0
    %2314 = vmatprep.subr.mxu0 0.0
    %2315 = vmatpush2.msra.mxu0 0.0
    %2316 = vmatprep.subr.mxu0 0.0
    %2317 = vmatpush2.msra.mxu0 0.0
    %2318 = vmatprep.subr.mxu0 0.0
    %2319 = vmatpush2.msra.mxu0 0.0
    %2320 = vmatprep.subr.mxu0 0.0
    %2321 = vmatpush2.msra.mxu0 0.0
    %2322 = vmatprep.subr.mxu0 0.0
    %2323 = vmatpush2.msra.mxu0 0.0
    %2324 = vmatprep.subr.mxu0 0.0
    %2325 = vmatpush2.msra.mxu0 0.0
    %2326 = vmatprep.subr.mxu0 0.0
    %2327 = vmatpush2.msra.mxu0 0.0
    %2328 = vmatprep.subr.mxu0 0.0
    %2329 = vmatpush2.msra.mxu0 0.0
    %2330 = vmatprep.mubr.f32.mxu0 0.0
    %v2331 = vand.u32 %v2054, 4294901760
    %v2332 = vsub.f32 %v2054, %v2331
    %2333 = vmatmul.mubr.f32.gmra.mxu0 %v2332
    %v2334 = vpop.f32.mrf.mxu0
    %v2335 = vadd.f32 %v2247, %v2334
    %v2336 = vpop.f32.mrf.mxu0
    %2337 = vdwg.mxu0
    %2338 = vmatprep.subr.mxu0 0.0
    %2339 = vmatpush1.msra.mxu0 0.0
    %2340 = vmatprep.subr.mxu0 0.0
    %2341 = vmatpush1.msra.mxu0 0.0
    %2342 = vmatprep.subr.mxu0 0.0
    %2343 = vmatpush1.msra.mxu0 0.0
    %2344 = vmatprep.subr.mxu0 0.0
    %2345 = vmatpush1.msra.mxu0 0.0
    %2346 = vmatprep.subr.mxu0 0.0
    %2347 = vmatpush1.msra.mxu0 0.0
    %2348 = vmatprep.subr.mxu0 0.0
    %2349 = vmatpush1.msra.mxu0 0.0
    %2350 = vmatprep.subr.mxu0 0.0
    %2351 = vmatpush1.msra.mxu0 0.0
    %2352 = vmatprep.subr.mxu0 0.0
    %2353 = vmatpush1.msra.mxu0 0.0
    %2354 = vmatprep.subr.mxu0 0.0
    %v2355 = vand.u32 %v2051, 4294901760
    %2356 = vmatpush1.msra.mxu0 %v2355
    %2357 = vmatprep.subr.mxu0 0.0
    %v2358 = vand.u32 %v2050, 4294901760
    %2359 = vmatpush1.msra.mxu0 %v2358
    %2360 = vmatprep.subr.mxu0 0.0
    %v2361 = vand.u32 %v2049, 4294901760
    %2362 = vmatpush1.msra.mxu0 %v2361
    %2363 = vmatprep.subr.mxu0 0.0
    %v2364 = vand.u32 %v2048, 4294901760
    %2365 = vmatpush1.msra.mxu0 %v2364
    %2366 = vmatprep.subr.mxu0 0.0
    %v2367 = vand.u32 %v2047, 4294901760
    %2368 = vmatpush1.msra.mxu0 %v2367
    %2369 = vmatprep.subr.mxu0 0.0
    %v2370 = vand.u32 %v2046, 4294901760
    %2371 = vmatpush1.msra.mxu0 %v2370
    %2372 = vmatprep.subr.mxu0 0.0
    %v2373 = vand.u32 %v2045, 4294901760
    %2374 = vmatpush1.msra.mxu0 %v2373
    %2375 = vmatprep.subr.mxu0 0.0
    %v2376 = vand.u32 %v2044, 4294901760
    %2377 = vmatpush1.msra.mxu0 %v2376
    %2378 = vmatprep.subr.mxu0 0.0
    %2379 = vmatpush2.msra.mxu0 0.0
    %2380 = vmatprep.subr.mxu0 0.0
    %2381 = vmatpush2.msra.mxu0 0.0
    %2382 = vmatprep.subr.mxu0 0.0
    %2383 = vmatpush2.msra.mxu0 0.0
    %2384 = vmatprep.subr.mxu0 0.0
    %2385 = vmatpush2.msra.mxu0 0.0
    %2386 = vmatprep.subr.mxu0 0.0
    %2387 = vmatpush2.msra.mxu0 0.0
    %2388 = vmatprep.subr.mxu0 0.0
    %2389 = vmatpush2.msra.mxu0 0.0
    %2390 = vmatprep.subr.mxu0 0.0
    %2391 = vmatpush2.msra.mxu0 0.0
    %2392 = vmatprep.subr.mxu0 0.0
    %2393 = vmatpush2.msra.mxu0 0.0
    %2394 = vmatprep.subr.mxu0 0.0
    %2395 = vmatpush2.msra.mxu0 0.0
    %2396 = vmatprep.subr.mxu0 0.0
    %2397 = vmatpush2.msra.mxu0 0.0
    %2398 = vmatprep.subr.mxu0 0.0
    %2399 = vmatpush2.msra.mxu0 0.0
    %2400 = vmatprep.subr.mxu0 0.0
    %2401 = vmatpush2.msra.mxu0 0.0
    %2402 = vmatprep.subr.mxu0 0.0
    %2403 = vmatpush2.msra.mxu0 0.0
    %2404 = vmatprep.subr.mxu0 0.0
    %2405 = vmatpush2.msra.mxu0 0.0
    %2406 = vmatprep.subr.mxu0 0.0
    %2407 = vmatpush2.msra.mxu0 0.0
    %2408 = vmatprep.subr.mxu0 0.0
    %2409 = vmatpush2.msra.mxu0 0.0
    %2410 = vmatprep.mubr.f32.mxu0 0.0
    %v2411 = vand.u32 %v2054, 4294901760
    %v2412 = vsub.f32 %v2054, %v2411
    %v2413 = vand.u32 %v2412, 4294901760
    %2414 = vmatmul.mubr.f32.gmra.mxu0 %v2413
    %v2415 = vpop.f32.mrf.mxu0
    %v2416 = vadd.f32 %v2335, %v2415
    %v2417 = vpop.f32.mrf.mxu0
    %2418 = vdwg.mxu0
    %2419 = vmatprep.subr.mxu0 0.0
    %2420 = vmatpush1.msra.mxu0 0.0
    %2421 = vmatprep.subr.mxu0 0.0
    %2422 = vmatpush1.msra.mxu0 0.0
    %2423 = vmatprep.subr.mxu0 0.0
    %2424 = vmatpush1.msra.mxu0 0.0
    %2425 = vmatprep.subr.mxu0 0.0
    %2426 = vmatpush1.msra.mxu0 0.0
    %2427 = vmatprep.subr.mxu0 0.0
    %2428 = vmatpush1.msra.mxu0 0.0
    %2429 = vmatprep.subr.mxu0 0.0
    %2430 = vmatpush1.msra.mxu0 0.0
    %2431 = vmatprep.subr.mxu0 0.0
    %2432 = vmatpush1.msra.mxu0 0.0
    %2433 = vmatprep.subr.mxu0 0.0
    %2434 = vmatpush1.msra.mxu0 0.0
    %2435 = vmatprep.subr.mxu0 0.0
    %v2436 = vand.u32 %v2051, 4294901760
    %v2437 = vsub.f32 %v2051, %v2436
    %v2438 = vand.u32 %v2437, 4294901760
    %2439 = vmatpush1.msra.mxu0 %v2438
    %2440 = vmatprep.subr.mxu0 0.0
    %v2441 = vand.u32 %v2050, 4294901760
    %v2442 = vsub.f32 %v2050, %v2441
    %v2443 = vand.u32 %v2442, 4294901760
    %2444 = vmatpush1.msra.mxu0 %v2443
    %2445 = vmatprep.subr.mxu0 0.0
    %v2446 = vand.u32 %v2049, 4294901760
    %v2447 = vsub.f32 %v2049, %v2446
    %v2448 = vand.u32 %v2447, 4294901760
    %2449 = vmatpush1.msra.mxu0 %v2448
    %2450 = vmatprep.subr.mxu0 0.0
    %v2451 = vand.u32 %v2048, 4294901760
    %v2452 = vsub.f32 %v2048, %v2451
    %v2453 = vand.u32 %v2452, 4294901760
    %2454 = vmatpush1.msra.mxu0 %v2453
    %2455 = vmatprep.subr.mxu0 0.0
    %v2456 = vand.u32 %v2047, 4294901760
    %v2457 = vsub.f32 %v2047, %v2456
    %v2458 = vand.u32 %v2457, 4294901760
    %2459 = vmatpush1.msra.mxu0 %v2458
    %2460 = vmatprep.subr.mxu0 0.0
    %v2461 = vand.u32 %v2046, 4294901760
    %v2462 = vsub.f32 %v2046, %v2461
    %v2463 = vand.u32 %v2462, 4294901760
    %2464 = vmatpush1.msra.mxu0 %v2463
    %2465 = vmatprep.subr.mxu0 0.0
    %v2466 = vand.u32 %v2045, 4294901760
    %v2467 = vsub.f32 %v2045, %v2466
    %v2468 = vand.u32 %v2467, 4294901760
    %2469 = vmatpush1.msra.mxu0 %v2468
    %2470 = vmatprep.subr.mxu0 0.0
    %v2471 = vand.u32 %v2044, 4294901760
    %v2472 = vsub.f32 %v2044, %v2471
    %v2473 = vand.u32 %v2472, 4294901760
    %2474 = vmatpush1.msra.mxu0 %v2473
    %2475 = vmatprep.subr.mxu0 0.0
    %2476 = vmatpush2.msra.mxu0 0.0
    %2477 = vmatprep.subr.mxu0 0.0
    %2478 = vmatpush2.msra.mxu0 0.0
    %2479 = vmatprep.subr.mxu0 0.0
    %2480 = vmatpush2.msra.mxu0 0.0
    %2481 = vmatprep.subr.mxu0 0.0
    %2482 = vmatpush2.msra.mxu0 0.0
    %2483 = vmatprep.subr.mxu0 0.0
    %2484 = vmatpush2.msra.mxu0 0.0
    %2485 = vmatprep.subr.mxu0 0.0
    %2486 = vmatpush2.msra.mxu0 0.0
    %2487 = vmatprep.subr.mxu0 0.0
    %2488 = vmatpush2.msra.mxu0 0.0
    %2489 = vmatprep.subr.mxu0 0.0
    %2490 = vmatpush2.msra.mxu0 0.0
    %2491 = vmatprep.subr.mxu0 0.0
    %2492 = vmatpush2.msra.mxu0 0.0
    %2493 = vmatprep.subr.mxu0 0.0
    %2494 = vmatpush2.msra.mxu0 0.0
    %2495 = vmatprep.subr.mxu0 0.0
    %2496 = vmatpush2.msra.mxu0 0.0
    %2497 = vmatprep.subr.mxu0 0.0
    %2498 = vmatpush2.msra.mxu0 0.0
    %2499 = vmatprep.subr.mxu0 0.0
    %2500 = vmatpush2.msra.mxu0 0.0
    %2501 = vmatprep.subr.mxu0 0.0
    %2502 = vmatpush2.msra.mxu0 0.0
    %2503 = vmatprep.subr.mxu0 0.0
    %2504 = vmatpush2.msra.mxu0 0.0
    %2505 = vmatprep.subr.mxu0 0.0
    %2506 = vmatpush2.msra.mxu0 0.0
    %2507 = vmatprep.mubr.f32.mxu0 0.0
    %v2508 = vand.u32 %v2054, 4294901760
    %2509 = vmatmul.mubr.f32.gmra.mxu0 %v2508
    %v2510 = vpop.f32.mrf.mxu0
    %v2511 = vadd.f32 %v2416, %v2510
    %v2512 = vpop.f32.mrf.mxu0
    %2513 = vdwg.mxu0
    %2514 = vmatprep.subr.mxu0 0.0
    %2515 = vmatpush1.msra.mxu0 0.0
    %2516 = vmatprep.subr.mxu0 0.0
    %2517 = vmatpush1.msra.mxu0 0.0
    %2518 = vmatprep.subr.mxu0 0.0
    %2519 = vmatpush1.msra.mxu0 0.0
    %2520 = vmatprep.subr.mxu0 0.0
    %2521 = vmatpush1.msra.mxu0 0.0
    %2522 = vmatprep.subr.mxu0 0.0
    %2523 = vmatpush1.msra.mxu0 0.0
    %2524 = vmatprep.subr.mxu0 0.0
    %2525 = vmatpush1.msra.mxu0 0.0
    %2526 = vmatprep.subr.mxu0 0.0
    %2527 = vmatpush1.msra.mxu0 0.0
    %2528 = vmatprep.subr.mxu0 0.0
    %2529 = vmatpush1.msra.mxu0 0.0
    %2530 = vmatprep.subr.mxu0 0.0
    %v2531 = vand.u32 %v2051, 4294901760
    %2532 = vmatpush1.msra.mxu0 %v2531
    %2533 = vmatprep.subr.mxu0 0.0
    %v2534 = vand.u32 %v2050, 4294901760
    %2535 = vmatpush1.msra.mxu0 %v2534
    %2536 = vmatprep.subr.mxu0 0.0
    %v2537 = vand.u32 %v2049, 4294901760
    %2538 = vmatpush1.msra.mxu0 %v2537
    %2539 = vmatprep.subr.mxu0 0.0
    %v2540 = vand.u32 %v2048, 4294901760
    %2541 = vmatpush1.msra.mxu0 %v2540
    %2542 = vmatprep.subr.mxu0 0.0
    %v2543 = vand.u32 %v2047, 4294901760
    %2544 = vmatpush1.msra.mxu0 %v2543
    %2545 = vmatprep.subr.mxu0 0.0
    %v2546 = vand.u32 %v2046, 4294901760
    %2547 = vmatpush1.msra.mxu0 %v2546
    %2548 = vmatprep.subr.mxu0 0.0
    %v2549 = vand.u32 %v2045, 4294901760
    %2550 = vmatpush1.msra.mxu0 %v2549
    %2551 = vmatprep.subr.mxu0 0.0
    %v2552 = vand.u32 %v2044, 4294901760
    %2553 = vmatpush1.msra.mxu0 %v2552
    %2554 = vmatprep.subr.mxu0 0.0
    %2555 = vmatpush2.msra.mxu0 0.0
    %2556 = vmatprep.subr.mxu0 0.0
    %2557 = vmatpush2.msra.mxu0 0.0
    %2558 = vmatprep.subr.mxu0 0.0
    %2559 = vmatpush2.msra.mxu0 0.0
    %2560 = vmatprep.subr.mxu0 0.0
    %2561 = vmatpush2.msra.mxu0 0.0
    %2562 = vmatprep.subr.mxu0 0.0
    %2563 = vmatpush2.msra.mxu0 0.0
    %2564 = vmatprep.subr.mxu0 0.0
    %2565 = vmatpush2.msra.mxu0 0.0
    %2566 = vmatprep.subr.mxu0 0.0
    %2567 = vmatpush2.msra.mxu0 0.0
    %2568 = vmatprep.subr.mxu0 0.0
    %2569 = vmatpush2.msra.mxu0 0.0
    %2570 = vmatprep.subr.mxu0 0.0
    %2571 = vmatpush2.msra.mxu0 0.0
    %2572 = vmatprep.subr.mxu0 0.0
    %2573 = vmatpush2.msra.mxu0 0.0
    %2574 = vmatprep.subr.mxu0 0.0
    %2575 = vmatpush2.msra.mxu0 0.0
    %2576 = vmatprep.subr.mxu0 0.0
    %2577 = vmatpush2.msra.mxu0 0.0
    %2578 = vmatprep.subr.mxu0 0.0
    %2579 = vmatpush2.msra.mxu0 0.0
    %2580 = vmatprep.subr.mxu0 0.0
    %2581 = vmatpush2.msra.mxu0 0.0
    %2582 = vmatprep.subr.mxu0 0.0
    %2583 = vmatpush2.msra.mxu0 0.0
    %2584 = vmatprep.subr.mxu0 0.0
    %2585 = vmatpush2.msra.mxu0 0.0
    %2586 = vmatprep.mubr.f32.mxu0 0.0
    %v2587 = vand.u32 %v2054, 4294901760
    %2588 = vmatmul.mubr.f32.gmra.mxu0 %v2587
    %v2589 = vpop.f32.mrf.mxu0
    %v2590 = vadd.f32 %v2511, %v2589
    %v2591 = vpop.f32.mrf.mxu0
    %2592 = vdwg.mxu0
    %v2593 = vxor.u32 %v2590, 2147483648
    %v2594 = vmul.f32 %v2593, 1.442695
    %v2595 = vpow.pop %v2594
    %v2596 = vadd.f32 %v2595, 1.0
    %v2597 = vrcp.pop %v2596
    %v2598 = vmul.f32 1.0, %v2597
    %v2599 = vlaneseq
    %vm2600 = vcmp.ge.s32.totalorder %v2599, 0
    %vm2601 = vcmp.lt.s32.totalorder %v2599, 128
    %vm2602 = vmand %vm2600, %vm2601
    %2603 = vst.msk [vmem:[#allocation3] sm:$0x1] %vm2602, %v2598
    %s2604 = scalar_lea.vmem %s0, 128
    %v2605 = vld [vmem:[%s2604] sm:$0xff]
    %v2606 = vld [vmem:[%s2604 + $0x8] sm:$0xff]
    %v2607 = vld [vmem:[%s2604 + $0x10] sm:$0xff]
    %v2608 = vld [vmem:[%s2604 + $0x18] sm:$0xff]
    %v2609 = vld [vmem:[%s2604 + $0x20] sm:$0xff]
    %v2610 = vld [vmem:[%s2604 + $0x28] sm:$0xff]
    %v2611 = vld [vmem:[%s2604 + $0x30] sm:$0xff]
    %v2612 = vld [vmem:[%s2604 + $0x38] sm:$0xff]
    %v2613 = vld [vmem:[%s2604 + $0x40] sm:$0xff]
    %v2614 = vld [vmem:[%s2604 + $0x48] sm:$0xff]
    %v2615 = vld [vmem:[%s2604 + $0x50] sm:$0xff]
    %v2616 = vld [vmem:[%s2604 + $0x58] sm:$0xff]
    %v2617 = vld [vmem:[%s2604 + $0x60] sm:$0xff]
    %v2618 = vld [vmem:[%s2604 + $0x68] sm:$0xff]
    %v2619 = vld [vmem:[%s2604 + $0x70] sm:$0xff]
    %v2620 = vld [vmem:[%s2604 + $0x78] sm:$0xff]
    %v2622 = vsel %vm118, %v2605, 0
    %v2625 = vsel %vm118, %v2606, 0
    %v2628 = vsel %vm118, %v2607, 0
    %v2631 = vsel %vm118, %v2608, 0
    %v2634 = vsel %vm118, %v2609, 0
    %v2637 = vsel %vm118, %v2610, 0
    %v2640 = vsel %vm118, %v2611, 0
    %v2643 = vsel %vm118, %v2612, 0
    %v2646 = vsel %vm118, %v2613, 0
    %v2649 = vsel %vm118, %v2614, 0
    %v2652 = vsel %vm118, %v2615, 0
    %v2655 = vsel %vm118, %v2616, 0
    %v2658 = vsel %vm118, %v2617, 0
    %v2661 = vsel %vm118, %v2618, 0
    %v2664 = vsel %vm118, %v2619, 0
    %v2667 = vsel %vm118, %v2620, 0
    %2669 = vmatprep.subr.mxu0 0.0
    %v2670 = vand.u32 %v2667, 4294901760
    %2671 = vmatpush1.xpose.msra.mxu0 %v2670
    %2672 = vmatprep.subr.mxu0 0.0
    %v2673 = vand.u32 %v2664, 4294901760
    %2674 = vmatpush1.xpose.msra.mxu0 %v2673
    %2675 = vmatprep.subr.mxu0 0.0
    %v2676 = vand.u32 %v2661, 4294901760
    %2677 = vmatpush1.xpose.msra.mxu0 %v2676
    %2678 = vmatprep.subr.mxu0 0.0
    %v2679 = vand.u32 %v2658, 4294901760
    %2680 = vmatpush1.xpose.msra.mxu0 %v2679
    %2681 = vmatprep.subr.mxu0 0.0
    %v2682 = vand.u32 %v2655, 4294901760
    %2683 = vmatpush1.xpose.msra.mxu0 %v2682
    %2684 = vmatprep.subr.mxu0 0.0
    %v2685 = vand.u32 %v2652, 4294901760
    %2686 = vmatpush1.xpose.msra.mxu0 %v2685
    %2687 = vmatprep.subr.mxu0 0.0
    %v2688 = vand.u32 %v2649, 4294901760
    %2689 = vmatpush1.xpose.msra.mxu0 %v2688
    %2690 = vmatprep.subr.mxu0 0.0
    %v2691 = vand.u32 %v2646, 4294901760
    %2692 = vmatpush1.xpose.msra.mxu0 %v2691
    %2693 = vmatprep.subr.mxu0 0.0
    %v2694 = vand.u32 %v2643, 4294901760
    %2695 = vmatpush1.xpose.msra.mxu0 %v2694
    %2696 = vmatprep.subr.mxu0 0.0
    %v2697 = vand.u32 %v2640, 4294901760
    %2698 = vmatpush1.xpose.msra.mxu0 %v2697
    %2699 = vmatprep.subr.mxu0 0.0
    %v2700 = vand.u32 %v2637, 4294901760
    %2701 = vmatpush1.xpose.msra.mxu0 %v2700
    %2702 = vmatprep.subr.mxu0 0.0
    %v2703 = vand.u32 %v2634, 4294901760
    %2704 = vmatpush1.xpose.msra.mxu0 %v2703
    %2705 = vmatprep.subr.mxu0 0.0
    %v2706 = vand.u32 %v2631, 4294901760
    %2707 = vmatpush1.xpose.msra.mxu0 %v2706
    %2708 = vmatprep.subr.mxu0 0.0
    %v2709 = vand.u32 %v2628, 4294901760
    %2710 = vmatpush1.xpose.msra.mxu0 %v2709
    %2711 = vmatprep.subr.mxu0 0.0
    %v2712 = vand.u32 %v2625, 4294901760
    %2713 = vmatpush1.xpose.msra.mxu0 %v2712
    %2714 = vmatprep.subr.mxu0 0.0
    %v2715 = vand.u32 %v2622, 4294901760
    %2716 = vmatpush1.xpose.msra.mxu0 %v2715
    %2717 = vmatprep.subr.mxu0 0.0
    %2718 = vmatpush2.xpose.msra.mxu0 0.0
    %2719 = vmatprep.subr.mxu0 0.0
    %2720 = vmatpush2.xpose.msra.mxu0 0.0
    %2721 = vmatprep.subr.mxu0 0.0
    %2722 = vmatpush2.xpose.msra.mxu0 0.0
    %2723 = vmatprep.subr.mxu0 0.0
    %2724 = vmatpush2.xpose.msra.mxu0 0.0
    %2725 = vmatprep.subr.mxu0 0.0
    %2726 = vmatpush2.xpose.msra.mxu0 0.0
    %2727 = vmatprep.subr.mxu0 0.0
    %2728 = vmatpush2.xpose.msra.mxu0 0.0
    %2729 = vmatprep.subr.mxu0 0.0
    %2730 = vmatpush2.xpose.msra.mxu0 0.0
    %2731 = vmatprep.subr.mxu0 0.0
    %2732 = vmatpush2.xpose.msra.mxu0 0.0
    %2733 = vmatprep.subr.mxu0 0.0
    %2734 = vmatpush2.xpose.msra.mxu0 0.0
    %2735 = vmatprep.subr.mxu0 0.0
    %2736 = vmatpush2.xpose.msra.mxu0 0.0
    %2737 = vmatprep.subr.mxu0 0.0
    %2738 = vmatpush2.xpose.msra.mxu0 0.0
    %2739 = vmatprep.subr.mxu0 0.0
    %2740 = vmatpush2.xpose.msra.mxu0 0.0
    %2741 = vmatprep.subr.mxu0 0.0
    %2742 = vmatpush2.xpose.msra.mxu0 0.0
    %2743 = vmatprep.subr.mxu0 0.0
    %2744 = vmatpush2.xpose.msra.mxu0 0.0
    %2745 = vmatprep.subr.mxu0 0.0
    %2746 = vmatpush2.xpose.msra.mxu0 0.0
    %2747 = vmatprep.subr.mxu0 0.0
    %2748 = vmatpush2.xpose.msra.mxu0 0.0
    %2749 = vmatprep.mubr.f32.mxu0 0.0
    %v2750 = vand.u32 %v120, 4294901760
    %v2751 = vsub.f32 %v120, %v2750
    %v2752 = vand.u32 %v2751, 4294901760
    %v2753 = vsub.f32 %v2751, %v2752
    %v2754 = vand.u32 %v2753, 4294901760
    %2755 = vmatmul.mubr.f32.gmra.mxu0 %v2754
    %v2756 = vpop.f32.mrf.mxu0
    %v2757 = vadd.f32 %v81, %v2756
    %v2758 = vpop.f32.mrf.mxu0
    %2759 = vmatprep.mubr.f32.mxu0 0.0
    %v2760 = vand.u32 %v123, 4294901760
    %v2761 = vsub.f32 %v123, %v2760
    %v2762 = vand.u32 %v2761, 4294901760
    %v2763 = vsub.f32 %v2761, %v2762
    %v2764 = vand.u32 %v2763, 4294901760
    %2765 = vmatmul.mubr.f32.gmra.mxu0 %v2764
    %v2766 = vpop.f32.mrf.mxu0
    %v2767 = vadd.f32 %v86, %v2766
    %v2768 = vpop.f32.mrf.mxu0
    %2769 = vmatprep.mubr.f32.mxu0 0.0
    %v2770 = vand.u32 %v126, 4294901760
    %v2771 = vsub.f32 %v126, %v2770
    %v2772 = vand.u32 %v2771, 4294901760
    %v2773 = vsub.f32 %v2771, %v2772
    %v2774 = vand.u32 %v2773, 4294901760
    %2775 = vmatmul.mubr.f32.gmra.mxu0 %v2774
    %v2776 = vpop.f32.mrf.mxu0
    %v2777 = vadd.f32 %v91, %v2776
    %v2778 = vpop.f32.mrf.mxu0
    %2779 = vmatprep.mubr.f32.mxu0 0.0
    %v2780 = vand.u32 %v129, 4294901760
    %v2781 = vsub.f32 %v129, %v2780
    %v2782 = vand.u32 %v2781, 4294901760
    %v2783 = vsub.f32 %v2781, %v2782
    %v2784 = vand.u32 %v2783, 4294901760
    %2785 = vmatmul.mubr.f32.gmra.mxu0 %v2784
    %v2786 = vpop.f32.mrf.mxu0
    %v2787 = vadd.f32 %v96, %v2786
    %v2788 = vpop.f32.mrf.mxu0
    %2789 = vmatprep.mubr.f32.mxu0 0.0
    %v2790 = vand.u32 %v132, 4294901760
    %v2791 = vsub.f32 %v132, %v2790
    %v2792 = vand.u32 %v2791, 4294901760
    %v2793 = vsub.f32 %v2791, %v2792
    %v2794 = vand.u32 %v2793, 4294901760
    %2795 = vmatmul.mubr.f32.gmra.mxu0 %v2794
    %v2796 = vpop.f32.mrf.mxu0
    %v2797 = vadd.f32 %v101, %v2796
    %v2798 = vpop.f32.mrf.mxu0
    %2799 = vmatprep.mubr.f32.mxu0 0.0
    %v2800 = vand.u32 %v135, 4294901760
    %v2801 = vsub.f32 %v135, %v2800
    %v2802 = vand.u32 %v2801, 4294901760
    %v2803 = vsub.f32 %v2801, %v2802
    %v2804 = vand.u32 %v2803, 4294901760
    %2805 = vmatmul.mubr.f32.gmra.mxu0 %v2804
    %v2806 = vpop.f32.mrf.mxu0
    %v2807 = vadd.f32 %v106, %v2806
    %v2808 = vpop.f32.mrf.mxu0
    %2809 = vmatprep.mubr.f32.mxu0 0.0
    %v2810 = vand.u32 %v138, 4294901760
    %v2811 = vsub.f32 %v138, %v2810
    %v2812 = vand.u32 %v2811, 4294901760
    %v2813 = vsub.f32 %v2811, %v2812
    %v2814 = vand.u32 %v2813, 4294901760
    %2815 = vmatmul.mubr.f32.gmra.mxu0 %v2814
    %v2816 = vpop.f32.mrf.mxu0
    %v2817 = vadd.f32 %v111, %v2816
    %v2818 = vpop.f32.mrf.mxu0
    %2819 = vmatprep.mubr.f32.mxu0 0.0
    %v2820 = vand.u32 %v141, 4294901760
    %v2821 = vsub.f32 %v141, %v2820
    %v2822 = vand.u32 %v2821, 4294901760
    %v2823 = vsub.f32 %v2821, %v2822
    %v2824 = vand.u32 %v2823, 4294901760
    %2825 = vmatmul.mubr.f32.gmra.mxu0 %v2824
    %v2826 = vpop.f32.mrf.mxu0
    %v2827 = vadd.f32 %v116, %v2826
    %v2828 = vpop.f32.mrf.mxu0
    %2829 = vdwg.mxu0
    %2830 = vmatprep.subr.mxu0 0.0
    %v2831 = vand.u32 %v2667, 4294901760
    %v2832 = vsub.f32 %v2667, %v2831
    %v2833 = vand.u32 %v2832, 4294901760
    %v2834 = vsub.f32 %v2832, %v2833
    %v2835 = vand.u32 %v2834, 4294901760
    %2836 = vmatpush1.xpose.msra.mxu0 %v2835
    %2837 = vmatprep.subr.mxu0 0.0
    %v2838 = vand.u32 %v2664, 4294901760
    %v2839 = vsub.f32 %v2664, %v2838
    %v2840 = vand.u32 %v2839, 4294901760
    %v2841 = vsub.f32 %v2839, %v2840
    %v2842 = vand.u32 %v2841, 4294901760
    %2843 = vmatpush1.xpose.msra.mxu0 %v2842
    %2844 = vmatprep.subr.mxu0 0.0
    %v2845 = vand.u32 %v2661, 4294901760
    %v2846 = vsub.f32 %v2661, %v2845
    %v2847 = vand.u32 %v2846, 4294901760
    %v2848 = vsub.f32 %v2846, %v2847
    %v2849 = vand.u32 %v2848, 4294901760
    %2850 = vmatpush1.xpose.msra.mxu0 %v2849
    %2851 = vmatprep.subr.mxu0 0.0
    %v2852 = vand.u32 %v2658, 4294901760
    %v2853 = vsub.f32 %v2658, %v2852
    %v2854 = vand.u32 %v2853, 4294901760
    %v2855 = vsub.f32 %v2853, %v2854
    %v2856 = vand.u32 %v2855, 4294901760
    %2857 = vmatpush1.xpose.msra.mxu0 %v2856
    %2858 = vmatprep.subr.mxu0 0.0
    %v2859 = vand.u32 %v2655, 4294901760
    %v2860 = vsub.f32 %v2655, %v2859
    %v2861 = vand.u32 %v2860, 4294901760
    %v2862 = vsub.f32 %v2860, %v2861
    %v2863 = vand.u32 %v2862, 4294901760
    %2864 = vmatpush1.xpose.msra.mxu0 %v2863
    %2865 = vmatprep.subr.mxu0 0.0
    %v2866 = vand.u32 %v2652, 4294901760
    %v2867 = vsub.f32 %v2652, %v2866
    %v2868 = vand.u32 %v2867, 4294901760
    %v2869 = vsub.f32 %v2867, %v2868
    %v2870 = vand.u32 %v2869, 4294901760
    %2871 = vmatpush1.xpose.msra.mxu0 %v2870
    %2872 = vmatprep.subr.mxu0 0.0
    %v2873 = vand.u32 %v2649, 4294901760
    %v2874 = vsub.f32 %v2649, %v2873
    %v2875 = vand.u32 %v2874, 4294901760
    %v2876 = vsub.f32 %v2874, %v2875
    %v2877 = vand.u32 %v2876, 4294901760
    %2878 = vmatpush1.xpose.msra.mxu0 %v2877
    %2879 = vmatprep.subr.mxu0 0.0
    %v2880 = vand.u32 %v2646, 4294901760
    %v2881 = vsub.f32 %v2646, %v2880
    %v2882 = vand.u32 %v2881, 4294901760
    %v2883 = vsub.f32 %v2881, %v2882
    %v2884 = vand.u32 %v2883, 4294901760
    %2885 = vmatpush1.xpose.msra.mxu0 %v2884
    %2886 = vmatprep.subr.mxu0 0.0
    %v2887 = vand.u32 %v2643, 4294901760
    %v2888 = vsub.f32 %v2643, %v2887
    %v2889 = vand.u32 %v2888, 4294901760
    %v2890 = vsub.f32 %v2888, %v2889
    %v2891 = vand.u32 %v2890, 4294901760
    %2892 = vmatpush1.xpose.msra.mxu0 %v2891
    %2893 = vmatprep.subr.mxu0 0.0
    %v2894 = vand.u32 %v2640, 4294901760
    %v2895 = vsub.f32 %v2640, %v2894
    %v2896 = vand.u32 %v2895, 4294901760
    %v2897 = vsub.f32 %v2895, %v2896
    %v2898 = vand.u32 %v2897, 4294901760
    %2899 = vmatpush1.xpose.msra.mxu0 %v2898
    %2900 = vmatprep.subr.mxu0 0.0
    %v2901 = vand.u32 %v2637, 4294901760
    %v2902 = vsub.f32 %v2637, %v2901
    %v2903 = vand.u32 %v2902, 4294901760
    %v2904 = vsub.f32 %v2902, %v2903
    %v2905 = vand.u32 %v2904, 4294901760
    %2906 = vmatpush1.xpose.msra.mxu0 %v2905
    %2907 = vmatprep.subr.mxu0 0.0
    %v2908 = vand.u32 %v2634, 4294901760
    %v2909 = vsub.f32 %v2634, %v2908
    %v2910 = vand.u32 %v2909, 4294901760
    %v2911 = vsub.f32 %v2909, %v2910
    %v2912 = vand.u32 %v2911, 4294901760
    %2913 = vmatpush1.xpose.msra.mxu0 %v2912
    %2914 = vmatprep.subr.mxu0 0.0
    %v2915 = vand.u32 %v2631, 4294901760
    %v2916 = vsub.f32 %v2631, %v2915
    %v2917 = vand.u32 %v2916, 4294901760
    %v2918 = vsub.f32 %v2916, %v2917
    %v2919 = vand.u32 %v2918, 4294901760
    %2920 = vmatpush1.xpose.msra.mxu0 %v2919
    %2921 = vmatprep.subr.mxu0 0.0
    %v2922 = vand.u32 %v2628, 4294901760
    %v2923 = vsub.f32 %v2628, %v2922
    %v2924 = vand.u32 %v2923, 4294901760
    %v2925 = vsub.f32 %v2923, %v2924
    %v2926 = vand.u32 %v2925, 4294901760
    %2927 = vmatpush1.xpose.msra.mxu0 %v2926
    %2928 = vmatprep.subr.mxu0 0.0
    %v2929 = vand.u32 %v2625, 4294901760
    %v2930 = vsub.f32 %v2625, %v2929
    %v2931 = vand.u32 %v2930, 4294901760
    %v2932 = vsub.f32 %v2930, %v2931
    %v2933 = vand.u32 %v2932, 4294901760
    %2934 = vmatpush1.xpose.msra.mxu0 %v2933
    %2935 = vmatprep.subr.mxu0 0.0
    %v2936 = vand.u32 %v2622, 4294901760
    %v2937 = vsub.f32 %v2622, %v2936
    %v2938 = vand.u32 %v2937, 4294901760
    %v2939 = vsub.f32 %v2937, %v2938
    %v2940 = vand.u32 %v2939, 4294901760
    %2941 = vmatpush1.xpose.msra.mxu0 %v2940
    %2942 = vmatprep.subr.mxu0 0.0
    %2943 = vmatpush2.xpose.msra.mxu0 0.0
    %2944 = vmatprep.subr.mxu0 0.0
    %2945 = vmatpush2.xpose.msra.mxu0 0.0
    %2946 = vmatprep.subr.mxu0 0.0
    %2947 = vmatpush2.xpose.msra.mxu0 0.0
    %2948 = vmatprep.subr.mxu0 0.0
    %2949 = vmatpush2.xpose.msra.mxu0 0.0
    %2950 = vmatprep.subr.mxu0 0.0
    %2951 = vmatpush2.xpose.msra.mxu0 0.0
    %2952 = vmatprep.subr.mxu0 0.0
    %2953 = vmatpush2.xpose.msra.mxu0 0.0
    %2954 = vmatprep.subr.mxu0 0.0
    %2955 = vmatpush2.xpose.msra.mxu0 0.0
    %2956 = vmatprep.subr.mxu0 0.0
    %2957 = vmatpush2.xpose.msra.mxu0 0.0
    %2958 = vmatprep.subr.mxu0 0.0
    %2959 = vmatpush2.xpose.msra.mxu0 0.0
    %2960 = vmatprep.subr.mxu0 0.0
    %2961 = vmatpush2.xpose.msra.mxu0 0.0
    %2962 = vmatprep.subr.mxu0 0.0
    %2963 = vmatpush2.xpose.msra.mxu0 0.0
    %2964 = vmatprep.subr.mxu0 0.0
    %2965 = vmatpush2.xpose.msra.mxu0 0.0
    %2966 = vmatprep.subr.mxu0 0.0
    %2967 = vmatpush2.xpose.msra.mxu0 0.0
    %2968 = vmatprep.subr.mxu0 0.0
    %2969 = vmatpush2.xpose.msra.mxu0 0.0
    %2970 = vmatprep.subr.mxu0 0.0
    %2971 = vmatpush2.xpose.msra.mxu0 0.0
    %2972 = vmatprep.subr.mxu0 0.0
    %2973 = vmatpush2.xpose.msra.mxu0 0.0
    %2974 = vmatprep.mubr.f32.mxu0 0.0
    %v2975 = vand.u32 %v120, 4294901760
    %2976 = vmatmul.mubr.f32.gmra.mxu0 %v2975
    %v2977 = vpop.f32.mrf.mxu0
    %v2978 = vadd.f32 %v2757, %v2977
    %v2979 = vpop.f32.mrf.mxu0
    %2980 = vmatprep.mubr.f32.mxu0 0.0
    %v2981 = vand.u32 %v123, 4294901760
    %2982 = vmatmul.mubr.f32.gmra.mxu0 %v2981
    %v2983 = vpop.f32.mrf.mxu0
    %v2984 = vadd.f32 %v2767, %v2983
    %v2985 = vpop.f32.mrf.mxu0
    %2986 = vmatprep.mubr.f32.mxu0 0.0
    %v2987 = vand.u32 %v126, 4294901760
    %2988 = vmatmul.mubr.f32.gmra.mxu0 %v2987
    %v2989 = vpop.f32.mrf.mxu0
    %v2990 = vadd.f32 %v2777, %v2989
    %v2991 = vpop.f32.mrf.mxu0
    %2992 = vmatprep.mubr.f32.mxu0 0.0
    %v2993 = vand.u32 %v129, 4294901760
    %2994 = vmatmul.mubr.f32.gmra.mxu0 %v2993
    %v2995 = vpop.f32.mrf.mxu0
    %v2996 = vadd.f32 %v2787, %v2995
    %v2997 = vpop.f32.mrf.mxu0
    %2998 = vmatprep.mubr.f32.mxu0 0.0
    %v2999 = vand.u32 %v132, 4294901760
    %3000 = vmatmul.mubr.f32.gmra.mxu0 %v2999
    %v3001 = vpop.f32.mrf.mxu0
    %v3002 = vadd.f32 %v2797, %v3001
    %v3003 = vpop.f32.mrf.mxu0
    %3004 = vmatprep.mubr.f32.mxu0 0.0
    %v3005 = vand.u32 %v135, 4294901760
    %3006 = vmatmul.mubr.f32.gmra.mxu0 %v3005
    %v3007 = vpop.f32.mrf.mxu0
    %v3008 = vadd.f32 %v2807, %v3007
    %v3009 = vpop.f32.mrf.mxu0
    %3010 = vmatprep.mubr.f32.mxu0 0.0
    %v3011 = vand.u32 %v138, 4294901760
    %3012 = vmatmul.mubr.f32.gmra.mxu0 %v3011
    %v3013 = vpop.f32.mrf.mxu0
    %v3014 = vadd.f32 %v2817, %v3013
    %v3015 = vpop.f32.mrf.mxu0
    %3016 = vmatprep.mubr.f32.mxu0 0.0
    %v3017 = vand.u32 %v141, 4294901760
    %3018 = vmatmul.mubr.f32.gmra.mxu0 %v3017
    %v3019 = vpop.f32.mrf.mxu0
    %v3020 = vadd.f32 %v2827, %v3019
    %v3021 = vpop.f32.mrf.mxu0
    %3022 = vdwg.mxu0
    %3023 = vmatprep.subr.mxu0 0.0
    %v3024 = vand.u32 %v2667, 4294901760
    %v3025 = vsub.f32 %v2667, %v3024
    %3026 = vmatpush1.xpose.msra.mxu0 %v3025
    %3027 = vmatprep.subr.mxu0 0.0
    %v3028 = vand.u32 %v2664, 4294901760
    %v3029 = vsub.f32 %v2664, %v3028
    %3030 = vmatpush1.xpose.msra.mxu0 %v3029
    %3031 = vmatprep.subr.mxu0 0.0
    %v3032 = vand.u32 %v2661, 4294901760
    %v3033 = vsub.f32 %v2661, %v3032
    %3034 = vmatpush1.xpose.msra.mxu0 %v3033
    %3035 = vmatprep.subr.mxu0 0.0
    %v3036 = vand.u32 %v2658, 4294901760
    %v3037 = vsub.f32 %v2658, %v3036
    %3038 = vmatpush1.xpose.msra.mxu0 %v3037
    %3039 = vmatprep.subr.mxu0 0.0
    %v3040 = vand.u32 %v2655, 4294901760
    %v3041 = vsub.f32 %v2655, %v3040
    %3042 = vmatpush1.xpose.msra.mxu0 %v3041
    %3043 = vmatprep.subr.mxu0 0.0
    %v3044 = vand.u32 %v2652, 4294901760
    %v3045 = vsub.f32 %v2652, %v3044
    %3046 = vmatpush1.xpose.msra.mxu0 %v3045
    %3047 = vmatprep.subr.mxu0 0.0
    %v3048 = vand.u32 %v2649, 4294901760
    %v3049 = vsub.f32 %v2649, %v3048
    %3050 = vmatpush1.xpose.msra.mxu0 %v3049
    %3051 = vmatprep.subr.mxu0 0.0
    %v3052 = vand.u32 %v2646, 4294901760
    %v3053 = vsub.f32 %v2646, %v3052
    %3054 = vmatpush1.xpose.msra.mxu0 %v3053
    %3055 = vmatprep.subr.mxu0 0.0
    %v3056 = vand.u32 %v2643, 4294901760
    %v3057 = vsub.f32 %v2643, %v3056
    %3058 = vmatpush1.xpose.msra.mxu0 %v3057
    %3059 = vmatprep.subr.mxu0 0.0
    %v3060 = vand.u32 %v2640, 4294901760
    %v3061 = vsub.f32 %v2640, %v3060
    %3062 = vmatpush1.xpose.msra.mxu0 %v3061
    %3063 = vmatprep.subr.mxu0 0.0
    %v3064 = vand.u32 %v2637, 4294901760
    %v3065 = vsub.f32 %v2637, %v3064
    %3066 = vmatpush1.xpose.msra.mxu0 %v3065
    %3067 = vmatprep.subr.mxu0 0.0
    %v3068 = vand.u32 %v2634, 4294901760
    %v3069 = vsub.f32 %v2634, %v3068
    %3070 = vmatpush1.xpose.msra.mxu0 %v3069
    %3071 = vmatprep.subr.mxu0 0.0
    %v3072 = vand.u32 %v2631, 4294901760
    %v3073 = vsub.f32 %v2631, %v3072
    %3074 = vmatpush1.xpose.msra.mxu0 %v3073
    %3075 = vmatprep.subr.mxu0 0.0
    %v3076 = vand.u32 %v2628, 4294901760
    %v3077 = vsub.f32 %v2628, %v3076
    %3078 = vmatpush1.xpose.msra.mxu0 %v3077
    %3079 = vmatprep.subr.mxu0 0.0
    %v3080 = vand.u32 %v2625, 4294901760
    %v3081 = vsub.f32 %v2625, %v3080
    %3082 = vmatpush1.xpose.msra.mxu0 %v3081
    %3083 = vmatprep.subr.mxu0 0.0
    %v3084 = vand.u32 %v2622, 4294901760
    %v3085 = vsub.f32 %v2622, %v3084
    %3086 = vmatpush1.xpose.msra.mxu0 %v3085
    %3087 = vmatprep.subr.mxu0 0.0
    %3088 = vmatpush2.xpose.msra.mxu0 0.0
    %3089 = vmatprep.subr.mxu0 0.0
    %3090 = vmatpush2.xpose.msra.mxu0 0.0
    %3091 = vmatprep.subr.mxu0 0.0
    %3092 = vmatpush2.xpose.msra.mxu0 0.0
    %3093 = vmatprep.subr.mxu0 0.0
    %3094 = vmatpush2.xpose.msra.mxu0 0.0
    %3095 = vmatprep.subr.mxu0 0.0
    %3096 = vmatpush2.xpose.msra.mxu0 0.0
    %3097 = vmatprep.subr.mxu0 0.0
    %3098 = vmatpush2.xpose.msra.mxu0 0.0
    %3099 = vmatprep.subr.mxu0 0.0
    %3100 = vmatpush2.xpose.msra.mxu0 0.0
    %3101 = vmatprep.subr.mxu0 0.0
    %3102 = vmatpush2.xpose.msra.mxu0 0.0
    %3103 = vmatprep.subr.mxu0 0.0
    %3104 = vmatpush2.xpose.msra.mxu0 0.0
    %3105 = vmatprep.subr.mxu0 0.0
    %3106 = vmatpush2.xpose.msra.mxu0 0.0
    %3107 = vmatprep.subr.mxu0 0.0
    %3108 = vmatpush2.xpose.msra.mxu0 0.0
    %3109 = vmatprep.subr.mxu0 0.0
    %3110 = vmatpush2.xpose.msra.mxu0 0.0
    %3111 = vmatprep.subr.mxu0 0.0
    %3112 = vmatpush2.xpose.msra.mxu0 0.0
    %3113 = vmatprep.subr.mxu0 0.0
    %3114 = vmatpush2.xpose.msra.mxu0 0.0
    %3115 = vmatprep.subr.mxu0 0.0
    %3116 = vmatpush2.xpose.msra.mxu0 0.0
    %3117 = vmatprep.subr.mxu0 0.0
    %3118 = vmatpush2.xpose.msra.mxu0 0.0
    %3119 = vmatprep.mubr.f32.mxu0 0.0
    %v3120 = vand.u32 %v120, 4294901760
    %v3121 = vsub.f32 %v120, %v3120
    %3122 = vmatmul.mubr.f32.gmra.mxu0 %v3121
    %v3123 = vpop.f32.mrf.mxu0
    %v3124 = vadd.f32 %v2978, %v3123
    %v3125 = vpop.f32.mrf.mxu0
    %3126 = vmatprep.mubr.f32.mxu0 0.0
    %v3127 = vand.u32 %v123, 4294901760
    %v3128 = vsub.f32 %v123, %v3127
    %3129 = vmatmul.mubr.f32.gmra.mxu0 %v3128
    %v3130 = vpop.f32.mrf.mxu0
    %v3131 = vadd.f32 %v2984, %v3130
    %v3132 = vpop.f32.mrf.mxu0
    %3133 = vmatprep.mubr.f32.mxu0 0.0
    %v3134 = vand.u32 %v126, 4294901760
    %v3135 = vsub.f32 %v126, %v3134
    %3136 = vmatmul.mubr.f32.gmra.mxu0 %v3135
    %v3137 = vpop.f32.mrf.mxu0
    %v3138 = vadd.f32 %v2990, %v3137
    %v3139 = vpop.f32.mrf.mxu0
    %3140 = vmatprep.mubr.f32.mxu0 0.0
    %v3141 = vand.u32 %v129, 4294901760
    %v3142 = vsub.f32 %v129, %v3141
    %3143 = vmatmul.mubr.f32.gmra.mxu0 %v3142
    %v3144 = vpop.f32.mrf.mxu0
    %v3145 = vadd.f32 %v2996, %v3144
    %v3146 = vpop.f32.mrf.mxu0
    %3147 = vmatprep.mubr.f32.mxu0 0.0
    %v3148 = vand.u32 %v132, 4294901760
    %v3149 = vsub.f32 %v132, %v3148
    %3150 = vmatmul.mubr.f32.gmra.mxu0 %v3149
    %v3151 = vpop.f32.mrf.mxu0
    %v3152 = vadd.f32 %v3002, %v3151
    %v3153 = vpop.f32.mrf.mxu0
    %3154 = vmatprep.mubr.f32.mxu0 0.0
    %v3155 = vand.u32 %v135, 4294901760
    %v3156 = vsub.f32 %v135, %v3155
    %3157 = vmatmul.mubr.f32.gmra.mxu0 %v3156
    %v3158 = vpop.f32.mrf.mxu0
    %v3159 = vadd.f32 %v3008, %v3158
    %v3160 = vpop.f32.mrf.mxu0
    %3161 = vmatprep.mubr.f32.mxu0 0.0
    %v3162 = vand.u32 %v138, 4294901760
    %v3163 = vsub.f32 %v138, %v3162
    %3164 = vmatmul.mubr.f32.gmra.mxu0 %v3163
    %v3165 = vpop.f32.mrf.mxu0
    %v3166 = vadd.f32 %v3014, %v3165
    %v3167 = vpop.f32.mrf.mxu0
    %3168 = vmatprep.mubr.f32.mxu0 0.0
    %v3169 = vand.u32 %v141, 4294901760
    %v3170 = vsub.f32 %v141, %v3169
    %3171 = vmatmul.mubr.f32.gmra.mxu0 %v3170
    %v3172 = vpop.f32.mrf.mxu0
    %v3173 = vadd.f32 %v3020, %v3172
    %v3174 = vpop.f32.mrf.mxu0
    %3175 = vdwg.mxu0
    %3176 = vmatprep.subr.mxu0 0.0
    %v3177 = vand.u32 %v2667, 4294901760
    %3178 = vmatpush1.xpose.msra.mxu0 %v3177
    %3179 = vmatprep.subr.mxu0 0.0
    %v3180 = vand.u32 %v2664, 4294901760
    %3181 = vmatpush1.xpose.msra.mxu0 %v3180
    %3182 = vmatprep.subr.mxu0 0.0
    %v3183 = vand.u32 %v2661, 4294901760
    %3184 = vmatpush1.xpose.msra.mxu0 %v3183
    %3185 = vmatprep.subr.mxu0 0.0
    %v3186 = vand.u32 %v2658, 4294901760
    %3187 = vmatpush1.xpose.msra.mxu0 %v3186
    %3188 = vmatprep.subr.mxu0 0.0
    %v3189 = vand.u32 %v2655, 4294901760
    %3190 = vmatpush1.xpose.msra.mxu0 %v3189
    %3191 = vmatprep.subr.mxu0 0.0
    %v3192 = vand.u32 %v2652, 4294901760
    %3193 = vmatpush1.xpose.msra.mxu0 %v3192
    %3194 = vmatprep.subr.mxu0 0.0
    %v3195 = vand.u32 %v2649, 4294901760
    %3196 = vmatpush1.xpose.msra.mxu0 %v3195
    %3197 = vmatprep.subr.mxu0 0.0
    %v3198 = vand.u32 %v2646, 4294901760
    %3199 = vmatpush1.xpose.msra.mxu0 %v3198
    %3200 = vmatprep.subr.mxu0 0.0
    %v3201 = vand.u32 %v2643, 4294901760
    %3202 = vmatpush1.xpose.msra.mxu0 %v3201
    %3203 = vmatprep.subr.mxu0 0.0
    %v3204 = vand.u32 %v2640, 4294901760
    %3205 = vmatpush1.xpose.msra.mxu0 %v3204
    %3206 = vmatprep.subr.mxu0 0.0
    %v3207 = vand.u32 %v2637, 4294901760
    %3208 = vmatpush1.xpose.msra.mxu0 %v3207
    %3209 = vmatprep.subr.mxu0 0.0
    %v3210 = vand.u32 %v2634, 4294901760
    %3211 = vmatpush1.xpose.msra.mxu0 %v3210
    %3212 = vmatprep.subr.mxu0 0.0
    %v3213 = vand.u32 %v2631, 4294901760
    %3214 = vmatpush1.xpose.msra.mxu0 %v3213
    %3215 = vmatprep.subr.mxu0 0.0
    %v3216 = vand.u32 %v2628, 4294901760
    %3217 = vmatpush1.xpose.msra.mxu0 %v3216
    %3218 = vmatprep.subr.mxu0 0.0
    %v3219 = vand.u32 %v2625, 4294901760
    %3220 = vmatpush1.xpose.msra.mxu0 %v3219
    %3221 = vmatprep.subr.mxu0 0.0
    %v3222 = vand.u32 %v2622, 4294901760
    %3223 = vmatpush1.xpose.msra.mxu0 %v3222
    %3224 = vmatprep.subr.mxu0 0.0
    %3225 = vmatpush2.xpose.msra.mxu0 0.0
    %3226 = vmatprep.subr.mxu0 0.0
    %3227 = vmatpush2.xpose.msra.mxu0 0.0
    %3228 = vmatprep.subr.mxu0 0.0
    %3229 = vmatpush2.xpose.msra.mxu0 0.0
    %3230 = vmatprep.subr.mxu0 0.0
    %3231 = vmatpush2.xpose.msra.mxu0 0.0
    %3232 = vmatprep.subr.mxu0 0.0
    %3233 = vmatpush2.xpose.msra.mxu0 0.0
    %3234 = vmatprep.subr.mxu0 0.0
    %3235 = vmatpush2.xpose.msra.mxu0 0.0
    %3236 = vmatprep.subr.mxu0 0.0
    %3237 = vmatpush2.xpose.msra.mxu0 0.0
    %3238 = vmatprep.subr.mxu0 0.0
    %3239 = vmatpush2.xpose.msra.mxu0 0.0
    %3240 = vmatprep.subr.mxu0 0.0
    %3241 = vmatpush2.xpose.msra.mxu0 0.0
    %3242 = vmatprep.subr.mxu0 0.0
    %3243 = vmatpush2.xpose.msra.mxu0 0.0
    %3244 = vmatprep.subr.mxu0 0.0
    %3245 = vmatpush2.xpose.msra.mxu0 0.0
    %3246 = vmatprep.subr.mxu0 0.0
    %3247 = vmatpush2.xpose.msra.mxu0 0.0
    %3248 = vmatprep.subr.mxu0 0.0
    %3249 = vmatpush2.xpose.msra.mxu0 0.0
    %3250 = vmatprep.subr.mxu0 0.0
    %3251 = vmatpush2.xpose.msra.mxu0 0.0
    %3252 = vmatprep.subr.mxu0 0.0
    %3253 = vmatpush2.xpose.msra.mxu0 0.0
    %3254 = vmatprep.subr.mxu0 0.0
    %3255 = vmatpush2.xpose.msra.mxu0 0.0
    %3256 = vmatprep.mubr.f32.mxu0 0.0
    %v3257 = vand.u32 %v120, 4294901760
    %v3258 = vsub.f32 %v120, %v3257
    %v3259 = vand.u32 %v3258, 4294901760
    %3260 = vmatmul.mubr.f32.gmra.mxu0 %v3259
    %v3261 = vpop.f32.mrf.mxu0
    %v3262 = vadd.f32 %v3124, %v3261
    %v3263 = vpop.f32.mrf.mxu0
    %3264 = vmatprep.mubr.f32.mxu0 0.0
    %v3265 = vand.u32 %v123, 4294901760
    %v3266 = vsub.f32 %v123, %v3265
    %v3267 = vand.u32 %v3266, 4294901760
    %3268 = vmatmul.mubr.f32.gmra.mxu0 %v3267
    %v3269 = vpop.f32.mrf.mxu0
    %v3270 = vadd.f32 %v3131, %v3269
    %v3271 = vpop.f32.mrf.mxu0
    %3272 = vmatprep.mubr.f32.mxu0 0.0
    %v3273 = vand.u32 %v126, 4294901760
    %v3274 = vsub.f32 %v126, %v3273
    %v3275 = vand.u32 %v3274, 4294901760
    %3276 = vmatmul.mubr.f32.gmra.mxu0 %v3275
    %v3277 = vpop.f32.mrf.mxu0
    %v3278 = vadd.f32 %v3138, %v3277
    %v3279 = vpop.f32.mrf.mxu0
    %3280 = vmatprep.mubr.f32.mxu0 0.0
    %v3281 = vand.u32 %v129, 4294901760
    %v3282 = vsub.f32 %v129, %v3281
    %v3283 = vand.u32 %v3282, 4294901760
    %3284 = vmatmul.mubr.f32.gmra.mxu0 %v3283
    %v3285 = vpop.f32.mrf.mxu0
    %v3286 = vadd.f32 %v3145, %v3285
    %v3287 = vpop.f32.mrf.mxu0
    %3288 = vmatprep.mubr.f32.mxu0 0.0
    %v3289 = vand.u32 %v132, 4294901760
    %v3290 = vsub.f32 %v132, %v3289
    %v3291 = vand.u32 %v3290, 4294901760
    %3292 = vmatmul.mubr.f32.gmra.mxu0 %v3291
    %v3293 = vpop.f32.mrf.mxu0
    %v3294 = vadd.f32 %v3152, %v3293
    %v3295 = vpop.f32.mrf.mxu0
    %3296 = vmatprep.mubr.f32.mxu0 0.0
    %v3297 = vand.u32 %v135, 4294901760
    %v3298 = vsub.f32 %v135, %v3297
    %v3299 = vand.u32 %v3298, 4294901760
    %3300 = vmatmul.mubr.f32.gmra.mxu0 %v3299
    %v3301 = vpop.f32.mrf.mxu0
    %v3302 = vadd.f32 %v3159, %v3301
    %v3303 = vpop.f32.mrf.mxu0
    %3304 = vmatprep.mubr.f32.mxu0 0.0
    %v3305 = vand.u32 %v138, 4294901760
    %v3306 = vsub.f32 %v138, %v3305
    %v3307 = vand.u32 %v3306, 4294901760
    %3308 = vmatmul.mubr.f32.gmra.mxu0 %v3307
    %v3309 = vpop.f32.mrf.mxu0
    %v3310 = vadd.f32 %v3166, %v3309
    %v3311 = vpop.f32.mrf.mxu0
    %3312 = vmatprep.mubr.f32.mxu0 0.0
    %v3313 = vand.u32 %v141, 4294901760
    %v3314 = vsub.f32 %v141, %v3313
    %v3315 = vand.u32 %v3314, 4294901760
    %3316 = vmatmul.mubr.f32.gmra.mxu0 %v3315
    %v3317 = vpop.f32.mrf.mxu0
    %v3318 = vadd.f32 %v3173, %v3317
    %v3319 = vpop.f32.mrf.mxu0
    %3320 = vdwg.mxu0
    %3321 = vmatprep.subr.mxu0 0.0
    %v3322 = vand.u32 %v2667, 4294901760
    %v3323 = vsub.f32 %v2667, %v3322
    %v3324 = vand.u32 %v3323, 4294901760
    %3325 = vmatpush1.xpose.msra.mxu0 %v3324
    %3326 = vmatprep.subr.mxu0 0.0
    %v3327 = vand.u32 %v2664, 4294901760
    %v3328 = vsub.f32 %v2664, %v3327
    %v3329 = vand.u32 %v3328, 4294901760
    %3330 = vmatpush1.xpose.msra.mxu0 %v3329
    %3331 = vmatprep.subr.mxu0 0.0
    %v3332 = vand.u32 %v2661, 4294901760
    %v3333 = vsub.f32 %v2661, %v3332
    %v3334 = vand.u32 %v3333, 4294901760
    %3335 = vmatpush1.xpose.msra.mxu0 %v3334
    %3336 = vmatprep.subr.mxu0 0.0
    %v3337 = vand.u32 %v2658, 4294901760
    %v3338 = vsub.f32 %v2658, %v3337
    %v3339 = vand.u32 %v3338, 4294901760
    %3340 = vmatpush1.xpose.msra.mxu0 %v3339
    %3341 = vmatprep.subr.mxu0 0.0
    %v3342 = vand.u32 %v2655, 4294901760
    %v3343 = vsub.f32 %v2655, %v3342
    %v3344 = vand.u32 %v3343, 4294901760
    %3345 = vmatpush1.xpose.msra.mxu0 %v3344
    %3346 = vmatprep.subr.mxu0 0.0
    %v3347 = vand.u32 %v2652, 4294901760
    %v3348 = vsub.f32 %v2652, %v3347
    %v3349 = vand.u32 %v3348, 4294901760
    %3350 = vmatpush1.xpose.msra.mxu0 %v3349
    %3351 = vmatprep.subr.mxu0 0.0
    %v3352 = vand.u32 %v2649, 4294901760
    %v3353 = vsub.f32 %v2649, %v3352
    %v3354 = vand.u32 %v3353, 4294901760
    %3355 = vmatpush1.xpose.msra.mxu0 %v3354
    %3356 = vmatprep.subr.mxu0 0.0
    %v3357 = vand.u32 %v2646, 4294901760
    %v3358 = vsub.f32 %v2646, %v3357
    %v3359 = vand.u32 %v3358, 4294901760
    %3360 = vmatpush1.xpose.msra.mxu0 %v3359
    %3361 = vmatprep.subr.mxu0 0.0
    %v3362 = vand.u32 %v2643, 4294901760
    %v3363 = vsub.f32 %v2643, %v3362
    %v3364 = vand.u32 %v3363, 4294901760
    %3365 = vmatpush1.xpose.msra.mxu0 %v3364
    %3366 = vmatprep.subr.mxu0 0.0
    %v3367 = vand.u32 %v2640, 4294901760
    %v3368 = vsub.f32 %v2640, %v3367
    %v3369 = vand.u32 %v3368, 4294901760
    %3370 = vmatpush1.xpose.msra.mxu0 %v3369
    %3371 = vmatprep.subr.mxu0 0.0
    %v3372 = vand.u32 %v2637, 4294901760
    %v3373 = vsub.f32 %v2637, %v3372
    %v3374 = vand.u32 %v3373, 4294901760
    %3375 = vmatpush1.xpose.msra.mxu0 %v3374
    %3376 = vmatprep.subr.mxu0 0.0
    %v3377 = vand.u32 %v2634, 4294901760
    %v3378 = vsub.f32 %v2634, %v3377
    %v3379 = vand.u32 %v3378, 4294901760
    %3380 = vmatpush1.xpose.msra.mxu0 %v3379
    %3381 = vmatprep.subr.mxu0 0.0
    %v3382 = vand.u32 %v2631, 4294901760
    %v3383 = vsub.f32 %v2631, %v3382
    %v3384 = vand.u32 %v3383, 4294901760
    %3385 = vmatpush1.xpose.msra.mxu0 %v3384
    %3386 = vmatprep.subr.mxu0 0.0
    %v3387 = vand.u32 %v2628, 4294901760
    %v3388 = vsub.f32 %v2628, %v3387
    %v3389 = vand.u32 %v3388, 4294901760
    %3390 = vmatpush1.xpose.msra.mxu0 %v3389
    %3391 = vmatprep.subr.mxu0 0.0
    %v3392 = vand.u32 %v2625, 4294901760
    %v3393 = vsub.f32 %v2625, %v3392
    %v3394 = vand.u32 %v3393, 4294901760
    %3395 = vmatpush1.xpose.msra.mxu0 %v3394
    %3396 = vmatprep.subr.mxu0 0.0
    %v3397 = vand.u32 %v2622, 4294901760
    %v3398 = vsub.f32 %v2622, %v3397
    %v3399 = vand.u32 %v3398, 4294901760
    %3400 = vmatpush1.xpose.msra.mxu0 %v3399
    %3401 = vmatprep.subr.mxu0 0.0
    %3402 = vmatpush2.xpose.msra.mxu0 0.0
    %3403 = vmatprep.subr.mxu0 0.0
    %3404 = vmatpush2.xpose.msra.mxu0 0.0
    %3405 = vmatprep.subr.mxu0 0.0
    %3406 = vmatpush2.xpose.msra.mxu0 0.0
    %3407 = vmatprep.subr.mxu0 0.0
    %3408 = vmatpush2.xpose.msra.mxu0 0.0
    %3409 = vmatprep.subr.mxu0 0.0
    %3410 = vmatpush2.xpose.msra.mxu0 0.0
    %3411 = vmatprep.subr.mxu0 0.0
    %3412 = vmatpush2.xpose.msra.mxu0 0.0
    %3413 = vmatprep.subr.mxu0 0.0
    %3414 = vmatpush2.xpose.msra.mxu0 0.0
    %3415 = vmatprep.subr.mxu0 0.0
    %3416 = vmatpush2.xpose.msra.mxu0 0.0
    %3417 = vmatprep.subr.mxu0 0.0
    %3418 = vmatpush2.xpose.msra.mxu0 0.0
    %3419 = vmatprep.subr.mxu0 0.0
    %3420 = vmatpush2.xpose.msra.mxu0 0.0
    %3421 = vmatprep.subr.mxu0 0.0
    %3422 = vmatpush2.xpose.msra.mxu0 0.0
    %3423 = vmatprep.subr.mxu0 0.0
    %3424 = vmatpush2.xpose.msra.mxu0 0.0
    %3425 = vmatprep.subr.mxu0 0.0
    %3426 = vmatpush2.xpose.msra.mxu0 0.0
    %3427 = vmatprep.subr.mxu0 0.0
    %3428 = vmatpush2.xpose.msra.mxu0 0.0
    %3429 = vmatprep.subr.mxu0 0.0
    %3430 = vmatpush2.xpose.msra.mxu0 0.0
    %3431 = vmatprep.subr.mxu0 0.0
    %3432 = vmatpush2.xpose.msra.mxu0 0.0
    %3433 = vmatprep.mubr.f32.mxu0 0.0
    %v3434 = vand.u32 %v120, 4294901760
    %3435 = vmatmul.mubr.f32.gmra.mxu0 %v3434
    %v3436 = vpop.f32.mrf.mxu0
    %v3437 = vadd.f32 %v3262, %v3436
    %v3438 = vpop.f32.mrf.mxu0
    %3439 = vmatprep.mubr.f32.mxu0 0.0
    %v3440 = vand.u32 %v123, 4294901760
    %3441 = vmatmul.mubr.f32.gmra.mxu0 %v3440
    %v3442 = vpop.f32.mrf.mxu0
    %v3443 = vadd.f32 %v3270, %v3442
    %v3444 = vpop.f32.mrf.mxu0
    %3445 = vmatprep.mubr.f32.mxu0 0.0
    %v3446 = vand.u32 %v126, 4294901760
    %3447 = vmatmul.mubr.f32.gmra.mxu0 %v3446
    %v3448 = vpop.f32.mrf.mxu0
    %v3449 = vadd.f32 %v3278, %v3448
    %v3450 = vpop.f32.mrf.mxu0
    %3451 = vmatprep.mubr.f32.mxu0 0.0
    %v3452 = vand.u32 %v129, 4294901760
    %3453 = vmatmul.mubr.f32.gmra.mxu0 %v3452
    %v3454 = vpop.f32.mrf.mxu0
    %v3455 = vadd.f32 %v3286, %v3454
    %v3456 = vpop.f32.mrf.mxu0
    %3457 = vmatprep.mubr.f32.mxu0 0.0
    %v3458 = vand.u32 %v132, 4294901760
    %3459 = vmatmul.mubr.f32.gmra.mxu0 %v3458
    %v3460 = vpop.f32.mrf.mxu0
    %v3461 = vadd.f32 %v3294, %v3460
    %v3462 = vpop.f32.mrf.mxu0
    %3463 = vmatprep.mubr.f32.mxu0 0.0
    %v3464 = vand.u32 %v135, 4294901760
    %3465 = vmatmul.mubr.f32.gmra.mxu0 %v3464
    %v3466 = vpop.f32.mrf.mxu0
    %v3467 = vadd.f32 %v3302, %v3466
    %v3468 = vpop.f32.mrf.mxu0
    %3469 = vmatprep.mubr.f32.mxu0 0.0
    %v3470 = vand.u32 %v138, 4294901760
    %3471 = vmatmul.mubr.f32.gmra.mxu0 %v3470
    %v3472 = vpop.f32.mrf.mxu0
    %v3473 = vadd.f32 %v3310, %v3472
    %v3474 = vpop.f32.mrf.mxu0
    %3475 = vmatprep.mubr.f32.mxu0 0.0
    %v3476 = vand.u32 %v141, 4294901760
    %3477 = vmatmul.mubr.f32.gmra.mxu0 %v3476
    %v3478 = vpop.f32.mrf.mxu0
    %v3479 = vadd.f32 %v3318, %v3478
    %v3480 = vpop.f32.mrf.mxu0
    %3481 = vdwg.mxu0
    %3482 = vmatprep.subr.mxu0 0.0
    %v3483 = vand.u32 %v2667, 4294901760
    %3484 = vmatpush1.xpose.msra.mxu0 %v3483
    %3485 = vmatprep.subr.mxu0 0.0
    %v3486 = vand.u32 %v2664, 4294901760
    %3487 = vmatpush1.xpose.msra.mxu0 %v3486
    %3488 = vmatprep.subr.mxu0 0.0
    %v3489 = vand.u32 %v2661, 4294901760
    %3490 = vmatpush1.xpose.msra.mxu0 %v3489
    %3491 = vmatprep.subr.mxu0 0.0
    %v3492 = vand.u32 %v2658, 4294901760
    %3493 = vmatpush1.xpose.msra.mxu0 %v3492
    %3494 = vmatprep.subr.mxu0 0.0
    %v3495 = vand.u32 %v2655, 4294901760
    %3496 = vmatpush1.xpose.msra.mxu0 %v3495
    %3497 = vmatprep.subr.mxu0 0.0
    %v3498 = vand.u32 %v2652, 4294901760
    %3499 = vmatpush1.xpose.msra.mxu0 %v3498
    %3500 = vmatprep.subr.mxu0 0.0
    %v3501 = vand.u32 %v2649, 4294901760
    %3502 = vmatpush1.xpose.msra.mxu0 %v3501
    %3503 = vmatprep.subr.mxu0 0.0
    %v3504 = vand.u32 %v2646, 4294901760
    %3505 = vmatpush1.xpose.msra.mxu0 %v3504
    %3506 = vmatprep.subr.mxu0 0.0
    %v3507 = vand.u32 %v2643, 4294901760
    %3508 = vmatpush1.xpose.msra.mxu0 %v3507
    %3509 = vmatprep.subr.mxu0 0.0
    %v3510 = vand.u32 %v2640, 4294901760
    %3511 = vmatpush1.xpose.msra.mxu0 %v3510
    %3512 = vmatprep.subr.mxu0 0.0
    %v3513 = vand.u32 %v2637, 4294901760
    %3514 = vmatpush1.xpose.msra.mxu0 %v3513
    %3515 = vmatprep.subr.mxu0 0.0
    %v3516 = vand.u32 %v2634, 4294901760
    %3517 = vmatpush1.xpose.msra.mxu0 %v3516
    %3518 = vmatprep.subr.mxu0 0.0
    %v3519 = vand.u32 %v2631, 4294901760
    %3520 = vmatpush1.xpose.msra.mxu0 %v3519
    %3521 = vmatprep.subr.mxu0 0.0
    %v3522 = vand.u32 %v2628, 4294901760
    %3523 = vmatpush1.xpose.msra.mxu0 %v3522
    %3524 = vmatprep.subr.mxu0 0.0
    %v3525 = vand.u32 %v2625, 4294901760
    %3526 = vmatpush1.xpose.msra.mxu0 %v3525
    %3527 = vmatprep.subr.mxu0 0.0
    %v3528 = vand.u32 %v2622, 4294901760
    %3529 = vmatpush1.xpose.msra.mxu0 %v3528
    %3530 = vmatprep.subr.mxu0 0.0
    %3531 = vmatpush2.xpose.msra.mxu0 0.0
    %3532 = vmatprep.subr.mxu0 0.0
    %3533 = vmatpush2.xpose.msra.mxu0 0.0
    %3534 = vmatprep.subr.mxu0 0.0
    %3535 = vmatpush2.xpose.msra.mxu0 0.0
    %3536 = vmatprep.subr.mxu0 0.0
    %3537 = vmatpush2.xpose.msra.mxu0 0.0
    %3538 = vmatprep.subr.mxu0 0.0
    %3539 = vmatpush2.xpose.msra.mxu0 0.0
    %3540 = vmatprep.subr.mxu0 0.0
    %3541 = vmatpush2.xpose.msra.mxu0 0.0
    %3542 = vmatprep.subr.mxu0 0.0
    %3543 = vmatpush2.xpose.msra.mxu0 0.0
    %3544 = vmatprep.subr.mxu0 0.0
    %3545 = vmatpush2.xpose.msra.mxu0 0.0
    %3546 = vmatprep.subr.mxu0 0.0
    %3547 = vmatpush2.xpose.msra.mxu0 0.0
    %3548 = vmatprep.subr.mxu0 0.0
    %3549 = vmatpush2.xpose.msra.mxu0 0.0
    %3550 = vmatprep.subr.mxu0 0.0
    %3551 = vmatpush2.xpose.msra.mxu0 0.0
    %3552 = vmatprep.subr.mxu0 0.0
    %3553 = vmatpush2.xpose.msra.mxu0 0.0
    %3554 = vmatprep.subr.mxu0 0.0
    %3555 = vmatpush2.xpose.msra.mxu0 0.0
    %3556 = vmatprep.subr.mxu0 0.0
    %3557 = vmatpush2.xpose.msra.mxu0 0.0
    %3558 = vmatprep.subr.mxu0 0.0
    %3559 = vmatpush2.xpose.msra.mxu0 0.0
    %3560 = vmatprep.subr.mxu0 0.0
    %3561 = vmatpush2.xpose.msra.mxu0 0.0
    %3562 = vmatprep.mubr.f32.mxu0 0.0
    %v3563 = vand.u32 %v120, 4294901760
    %3564 = vmatmul.mubr.f32.gmra.mxu0 %v3563
    %v3565 = vpop.f32.mrf.mxu0
    %v3566 = vadd.f32 %v3437, %v3565
    %v3567 = vpop.f32.mrf.mxu0
    %3568 = vmatprep.mubr.f32.mxu0 0.0
    %v3569 = vand.u32 %v123, 4294901760
    %3570 = vmatmul.mubr.f32.gmra.mxu0 %v3569
    %v3571 = vpop.f32.mrf.mxu0
    %v3572 = vadd.f32 %v3443, %v3571
    %v3573 = vpop.f32.mrf.mxu0
    %3574 = vmatprep.mubr.f32.mxu0 0.0
    %v3575 = vand.u32 %v126, 4294901760
    %3576 = vmatmul.mubr.f32.gmra.mxu0 %v3575
    %v3577 = vpop.f32.mrf.mxu0
    %v3578 = vadd.f32 %v3449, %v3577
    %v3579 = vpop.f32.mrf.mxu0
    %3580 = vmatprep.mubr.f32.mxu0 0.0
    %v3581 = vand.u32 %v129, 4294901760
    %3582 = vmatmul.mubr.f32.gmra.mxu0 %v3581
    %v3583 = vpop.f32.mrf.mxu0
    %v3584 = vadd.f32 %v3455, %v3583
    %v3585 = vpop.f32.mrf.mxu0
    %3586 = vmatprep.mubr.f32.mxu0 0.0
    %v3587 = vand.u32 %v132, 4294901760
    %3588 = vmatmul.mubr.f32.gmra.mxu0 %v3587
    %v3589 = vpop.f32.mrf.mxu0
    %v3590 = vadd.f32 %v3461, %v3589
    %v3591 = vpop.f32.mrf.mxu0
    %3592 = vmatprep.mubr.f32.mxu0 0.0
    %v3593 = vand.u32 %v135, 4294901760
    %3594 = vmatmul.mubr.f32.gmra.mxu0 %v3593
    %v3595 = vpop.f32.mrf.mxu0
    %v3596 = vadd.f32 %v3467, %v3595
    %v3597 = vpop.f32.mrf.mxu0
    %3598 = vmatprep.mubr.f32.mxu0 0.0
    %v3599 = vand.u32 %v138, 4294901760
    %3600 = vmatmul.mubr.f32.gmra.mxu0 %v3599
    %v3601 = vpop.f32.mrf.mxu0
    %v3602 = vadd.f32 %v3473, %v3601
    %v3603 = vpop.f32.mrf.mxu0
    %3604 = vmatprep.mubr.f32.mxu0 0.0
    %v3605 = vand.u32 %v141, 4294901760
    %3606 = vmatmul.mubr.f32.gmra.mxu0 %v3605
    %v3607 = vpop.f32.mrf.mxu0
    %v3608 = vadd.f32 %v3479, %v3607
    %v3609 = vpop.f32.mrf.mxu0
    %3610 = vdwg.mxu0
    %v3611 = vmax.f32 %v3566, 0.0
    %v3612 = vmax.f32 %v3572, 0.0
    %v3613 = vmax.f32 %v3578, 0.0
    %v3614 = vmax.f32 %v3584, 0.0
    %v3615 = vmax.f32 %v3590, 0.0
    %v3616 = vmax.f32 %v3596, 0.0
    %v3617 = vmax.f32 %v3602, 0.0
    %v3618 = vmax.f32 %v3608, 0.0
    %3619 = vmatprep.subr.mxu0 0.0
    %3620 = vmatpush1.msra.mxu0 0.0
    %3621 = vmatprep.subr.mxu0 0.0
    %3622 = vmatpush1.msra.mxu0 0.0
    %3623 = vmatprep.subr.mxu0 0.0
    %3624 = vmatpush1.msra.mxu0 0.0
    %3625 = vmatprep.subr.mxu0 0.0
    %3626 = vmatpush1.msra.mxu0 0.0
    %3627 = vmatprep.subr.mxu0 0.0
    %3628 = vmatpush1.msra.mxu0 0.0
    %3629 = vmatprep.subr.mxu0 0.0
    %3630 = vmatpush1.msra.mxu0 0.0
    %3631 = vmatprep.subr.mxu0 0.0
    %3632 = vmatpush1.msra.mxu0 0.0
    %3633 = vmatprep.subr.mxu0 0.0
    %3634 = vmatpush1.msra.mxu0 0.0
    %3635 = vmatprep.subr.mxu0 0.0
    %v3636 = vand.u32 %v3618, 4294901760
    %3637 = vmatpush1.msra.mxu0 %v3636
    %3638 = vmatprep.subr.mxu0 0.0
    %v3639 = vand.u32 %v3617, 4294901760
    %3640 = vmatpush1.msra.mxu0 %v3639
    %3641 = vmatprep.subr.mxu0 0.0
    %v3642 = vand.u32 %v3616, 4294901760
    %3643 = vmatpush1.msra.mxu0 %v3642
    %3644 = vmatprep.subr.mxu0 0.0
    %v3645 = vand.u32 %v3615, 4294901760
    %3646 = vmatpush1.msra.mxu0 %v3645
    %3647 = vmatprep.subr.mxu0 0.0
    %v3648 = vand.u32 %v3614, 4294901760
    %3649 = vmatpush1.msra.mxu0 %v3648
    %3650 = vmatprep.subr.mxu0 0.0
    %v3651 = vand.u32 %v3613, 4294901760
    %3652 = vmatpush1.msra.mxu0 %v3651
    %3653 = vmatprep.subr.mxu0 0.0
    %v3654 = vand.u32 %v3612, 4294901760
    %3655 = vmatpush1.msra.mxu0 %v3654
    %3656 = vmatprep.subr.mxu0 0.0
    %v3657 = vand.u32 %v3611, 4294901760
    %3658 = vmatpush1.msra.mxu0 %v3657
    %3659 = vmatprep.subr.mxu0 0.0
    %3660 = vmatpush2.msra.mxu0 0.0
    %3661 = vmatprep.subr.mxu0 0.0
    %3662 = vmatpush2.msra.mxu0 0.0
    %3663 = vmatprep.subr.mxu0 0.0
    %3664 = vmatpush2.msra.mxu0 0.0
    %3665 = vmatprep.subr.mxu0 0.0
    %3666 = vmatpush2.msra.mxu0 0.0
    %3667 = vmatprep.subr.mxu0 0.0
    %3668 = vmatpush2.msra.mxu0 0.0
    %3669 = vmatprep.subr.mxu0 0.0
    %3670 = vmatpush2.msra.mxu0 0.0
    %3671 = vmatprep.subr.mxu0 0.0
    %3672 = vmatpush2.msra.mxu0 0.0
    %3673 = vmatprep.subr.mxu0 0.0
    %3674 = vmatpush2.msra.mxu0 0.0
    %3675 = vmatprep.subr.mxu0 0.0
    %3676 = vmatpush2.msra.mxu0 0.0
    %3677 = vmatprep.subr.mxu0 0.0
    %3678 = vmatpush2.msra.mxu0 0.0
    %3679 = vmatprep.subr.mxu0 0.0
    %3680 = vmatpush2.msra.mxu0 0.0
    %3681 = vmatprep.subr.mxu0 0.0
    %3682 = vmatpush2.msra.mxu0 0.0
    %3683 = vmatprep.subr.mxu0 0.0
    %3684 = vmatpush2.msra.mxu0 0.0
    %3685 = vmatprep.subr.mxu0 0.0
    %3686 = vmatpush2.msra.mxu0 0.0
    %3687 = vmatprep.subr.mxu0 0.0
    %3688 = vmatpush2.msra.mxu0 0.0
    %3689 = vmatprep.subr.mxu0 0.0
    %3690 = vmatpush2.msra.mxu0 0.0
    %3691 = vmatprep.mubr.f32.mxu0 0.0
    %v3692 = vand.u32 %v1183, 4294901760
    %v3693 = vsub.f32 %v1183, %v3692
    %v3694 = vand.u32 %v3693, 4294901760
    %v3695 = vsub.f32 %v3693, %v3694
    %v3696 = vand.u32 %v3695, 4294901760
    %3697 = vmatmul.mubr.f32.gmra.mxu0 %v3696
    %v3698 = vpop.f32.mrf.mxu0
    %v3699 = vadd.f32 %v1144, %v3698
    %v3700 = vpop.f32.mrf.mxu0
    %3701 = vmatprep.mubr.f32.mxu0 0.0
    %v3702 = vand.u32 %v1186, 4294901760
    %v3703 = vsub.f32 %v1186, %v3702
    %v3704 = vand.u32 %v3703, 4294901760
    %v3705 = vsub.f32 %v3703, %v3704
    %v3706 = vand.u32 %v3705, 4294901760
    %3707 = vmatmul.mubr.f32.gmra.mxu0 %v3706
    %v3708 = vpop.f32.mrf.mxu0
    %v3709 = vadd.f32 %v1149, %v3708
    %v3710 = vpop.f32.mrf.mxu0
    %3711 = vmatprep.mubr.f32.mxu0 0.0
    %v3712 = vand.u32 %v1189, 4294901760
    %v3713 = vsub.f32 %v1189, %v3712
    %v3714 = vand.u32 %v3713, 4294901760
    %v3715 = vsub.f32 %v3713, %v3714
    %v3716 = vand.u32 %v3715, 4294901760
    %3717 = vmatmul.mubr.f32.gmra.mxu0 %v3716
    %v3718 = vpop.f32.mrf.mxu0
    %v3719 = vadd.f32 %v1154, %v3718
    %v3720 = vpop.f32.mrf.mxu0
    %3721 = vmatprep.mubr.f32.mxu0 0.0
    %v3722 = vand.u32 %v1192, 4294901760
    %v3723 = vsub.f32 %v1192, %v3722
    %v3724 = vand.u32 %v3723, 4294901760
    %v3725 = vsub.f32 %v3723, %v3724
    %v3726 = vand.u32 %v3725, 4294901760
    %3727 = vmatmul.mubr.f32.gmra.mxu0 %v3726
    %v3728 = vpop.f32.mrf.mxu0
    %v3729 = vadd.f32 %v1159, %v3728
    %v3730 = vpop.f32.mrf.mxu0
    %3731 = vmatprep.mubr.f32.mxu0 0.0
    %v3732 = vand.u32 %v1195, 4294901760
    %v3733 = vsub.f32 %v1195, %v3732
    %v3734 = vand.u32 %v3733, 4294901760
    %v3735 = vsub.f32 %v3733, %v3734
    %v3736 = vand.u32 %v3735, 4294901760
    %3737 = vmatmul.mubr.f32.gmra.mxu0 %v3736
    %v3738 = vpop.f32.mrf.mxu0
    %v3739 = vadd.f32 %v1164, %v3738
    %v3740 = vpop.f32.mrf.mxu0
    %3741 = vmatprep.mubr.f32.mxu0 0.0
    %v3742 = vand.u32 %v1198, 4294901760
    %v3743 = vsub.f32 %v1198, %v3742
    %v3744 = vand.u32 %v3743, 4294901760
    %v3745 = vsub.f32 %v3743, %v3744
    %v3746 = vand.u32 %v3745, 4294901760
    %3747 = vmatmul.mubr.f32.gmra.mxu0 %v3746
    %v3748 = vpop.f32.mrf.mxu0
    %v3749 = vadd.f32 %v1169, %v3748
    %v3750 = vpop.f32.mrf.mxu0
    %3751 = vmatprep.mubr.f32.mxu0 0.0
    %v3752 = vand.u32 %v1201, 4294901760
    %v3753 = vsub.f32 %v1201, %v3752
    %v3754 = vand.u32 %v3753, 4294901760
    %v3755 = vsub.f32 %v3753, %v3754
    %v3756 = vand.u32 %v3755, 4294901760
    %3757 = vmatmul.mubr.f32.gmra.mxu0 %v3756
    %v3758 = vpop.f32.mrf.mxu0
    %v3759 = vadd.f32 %v1174, %v3758
    %v3760 = vpop.f32.mrf.mxu0
    %3761 = vmatprep.mubr.f32.mxu0 0.0
    %v3762 = vand.u32 %v1204, 4294901760
    %v3763 = vsub.f32 %v1204, %v3762
    %v3764 = vand.u32 %v3763, 4294901760
    %v3765 = vsub.f32 %v3763, %v3764
    %v3766 = vand.u32 %v3765, 4294901760
    %3767 = vmatmul.mubr.f32.gmra.mxu0 %v3766
    %v3768 = vpop.f32.mrf.mxu0
    %v3769 = vadd.f32 %v1179, %v3768
    %v3770 = vpop.f32.mrf.mxu0
    %3771 = vdwg.mxu0
    %3772 = vmatprep.subr.mxu0 0.0
    %3773 = vmatpush1.msra.mxu0 0.0
    %3774 = vmatprep.subr.mxu0 0.0
    %3775 = vmatpush1.msra.mxu0 0.0
    %3776 = vmatprep.subr.mxu0 0.0
    %3777 = vmatpush1.msra.mxu0 0.0
    %3778 = vmatprep.subr.mxu0 0.0
    %3779 = vmatpush1.msra.mxu0 0.0
    %3780 = vmatprep.subr.mxu0 0.0
    %3781 = vmatpush1.msra.mxu0 0.0
    %3782 = vmatprep.subr.mxu0 0.0
    %3783 = vmatpush1.msra.mxu0 0.0
    %3784 = vmatprep.subr.mxu0 0.0
    %3785 = vmatpush1.msra.mxu0 0.0
    %3786 = vmatprep.subr.mxu0 0.0
    %3787 = vmatpush1.msra.mxu0 0.0
    %3788 = vmatprep.subr.mxu0 0.0
    %v3789 = vand.u32 %v3618, 4294901760
    %v3790 = vsub.f32 %v3618, %v3789
    %v3791 = vand.u32 %v3790, 4294901760
    %v3792 = vsub.f32 %v3790, %v3791
    %v3793 = vand.u32 %v3792, 4294901760
    %3794 = vmatpush1.msra.mxu0 %v3793
    %3795 = vmatprep.subr.mxu0 0.0
    %v3796 = vand.u32 %v3617, 4294901760
    %v3797 = vsub.f32 %v3617, %v3796
    %v3798 = vand.u32 %v3797, 4294901760
    %v3799 = vsub.f32 %v3797, %v3798
    %v3800 = vand.u32 %v3799, 4294901760
    %3801 = vmatpush1.msra.mxu0 %v3800
    %3802 = vmatprep.subr.mxu0 0.0
    %v3803 = vand.u32 %v3616, 4294901760
    %v3804 = vsub.f32 %v3616, %v3803
    %v3805 = vand.u32 %v3804, 4294901760
    %v3806 = vsub.f32 %v3804, %v3805
    %v3807 = vand.u32 %v3806, 4294901760
    %3808 = vmatpush1.msra.mxu0 %v3807
    %3809 = vmatprep.subr.mxu0 0.0
    %v3810 = vand.u32 %v3615, 4294901760
    %v3811 = vsub.f32 %v3615, %v3810
    %v3812 = vand.u32 %v3811, 4294901760
    %v3813 = vsub.f32 %v3811, %v3812
    %v3814 = vand.u32 %v3813, 4294901760
    %3815 = vmatpush1.msra.mxu0 %v3814
    %3816 = vmatprep.subr.mxu0 0.0
    %v3817 = vand.u32 %v3614, 4294901760
    %v3818 = vsub.f32 %v3614, %v3817
    %v3819 = vand.u32 %v3818, 4294901760
    %v3820 = vsub.f32 %v3818, %v3819
    %v3821 = vand.u32 %v3820, 4294901760
    %3822 = vmatpush1.msra.mxu0 %v3821
    %3823 = vmatprep.subr.mxu0 0.0
    %v3824 = vand.u32 %v3613, 4294901760
    %v3825 = vsub.f32 %v3613, %v3824
    %v3826 = vand.u32 %v3825, 4294901760
    %v3827 = vsub.f32 %v3825, %v3826
    %v3828 = vand.u32 %v3827, 4294901760
    %3829 = vmatpush1.msra.mxu0 %v3828
    %3830 = vmatprep.subr.mxu0 0.0
    %v3831 = vand.u32 %v3612, 4294901760
    %v3832 = vsub.f32 %v3612, %v3831
    %v3833 = vand.u32 %v3832, 4294901760
    %v3834 = vsub.f32 %v3832, %v3833
    %v3835 = vand.u32 %v3834, 4294901760
    %3836 = vmatpush1.msra.mxu0 %v3835
    %3837 = vmatprep.subr.mxu0 0.0
    %v3838 = vand.u32 %v3611, 4294901760
    %v3839 = vsub.f32 %v3611, %v3838
    %v3840 = vand.u32 %v3839, 4294901760
    %v3841 = vsub.f32 %v3839, %v3840
    %v3842 = vand.u32 %v3841, 4294901760
    %3843 = vmatpush1.msra.mxu0 %v3842
    %3844 = vmatprep.subr.mxu0 0.0
    %3845 = vmatpush2.msra.mxu0 0.0
    %3846 = vmatprep.subr.mxu0 0.0
    %3847 = vmatpush2.msra.mxu0 0.0
    %3848 = vmatprep.subr.mxu0 0.0
    %3849 = vmatpush2.msra.mxu0 0.0
    %3850 = vmatprep.subr.mxu0 0.0
    %3851 = vmatpush2.msra.mxu0 0.0
    %3852 = vmatprep.subr.mxu0 0.0
    %3853 = vmatpush2.msra.mxu0 0.0
    %3854 = vmatprep.subr.mxu0 0.0
    %3855 = vmatpush2.msra.mxu0 0.0
    %3856 = vmatprep.subr.mxu0 0.0
    %3857 = vmatpush2.msra.mxu0 0.0
    %3858 = vmatprep.subr.mxu0 0.0
    %3859 = vmatpush2.msra.mxu0 0.0
    %3860 = vmatprep.subr.mxu0 0.0
    %3861 = vmatpush2.msra.mxu0 0.0
    %3862 = vmatprep.subr.mxu0 0.0
    %3863 = vmatpush2.msra.mxu0 0.0
    %3864 = vmatprep.subr.mxu0 0.0
    %3865 = vmatpush2.msra.mxu0 0.0
    %3866 = vmatprep.subr.mxu0 0.0
    %3867 = vmatpush2.msra.mxu0 0.0
    %3868 = vmatprep.subr.mxu0 0.0
    %3869 = vmatpush2.msra.mxu0 0.0
    %3870 = vmatprep.subr.mxu0 0.0
    %3871 = vmatpush2.msra.mxu0 0.0
    %3872 = vmatprep.subr.mxu0 0.0
    %3873 = vmatpush2.msra.mxu0 0.0
    %3874 = vmatprep.subr.mxu0 0.0
    %3875 = vmatpush2.msra.mxu0 0.0
    %3876 = vmatprep.mubr.f32.mxu0 0.0
    %v3877 = vand.u32 %v1183, 4294901760
    %3878 = vmatmul.mubr.f32.gmra.mxu0 %v3877
    %v3879 = vpop.f32.mrf.mxu0
    %v3880 = vadd.f32 %v3699, %v3879
    %v3881 = vpop.f32.mrf.mxu0
    %3882 = vmatprep.mubr.f32.mxu0 0.0
    %v3883 = vand.u32 %v1186, 4294901760
    %3884 = vmatmul.mubr.f32.gmra.mxu0 %v3883
    %v3885 = vpop.f32.mrf.mxu0
    %v3886 = vadd.f32 %v3709, %v3885
    %v3887 = vpop.f32.mrf.mxu0
    %3888 = vmatprep.mubr.f32.mxu0 0.0
    %v3889 = vand.u32 %v1189, 4294901760
    %3890 = vmatmul.mubr.f32.gmra.mxu0 %v3889
    %v3891 = vpop.f32.mrf.mxu0
    %v3892 = vadd.f32 %v3719, %v3891
    %v3893 = vpop.f32.mrf.mxu0
    %3894 = vmatprep.mubr.f32.mxu0 0.0
    %v3895 = vand.u32 %v1192, 4294901760
    %3896 = vmatmul.mubr.f32.gmra.mxu0 %v3895
    %v3897 = vpop.f32.mrf.mxu0
    %v3898 = vadd.f32 %v3729, %v3897
    %v3899 = vpop.f32.mrf.mxu0
    %3900 = vmatprep.mubr.f32.mxu0 0.0
    %v3901 = vand.u32 %v1195, 4294901760
    %3902 = vmatmul.mubr.f32.gmra.mxu0 %v3901
    %v3903 = vpop.f32.mrf.mxu0
    %v3904 = vadd.f32 %v3739, %v3903
    %v3905 = vpop.f32.mrf.mxu0
    %3906 = vmatprep.mubr.f32.mxu0 0.0
    %v3907 = vand.u32 %v1198, 4294901760
    %3908 = vmatmul.mubr.f32.gmra.mxu0 %v3907
    %v3909 = vpop.f32.mrf.mxu0
    %v3910 = vadd.f32 %v3749, %v3909
    %v3911 = vpop.f32.mrf.mxu0
    %3912 = vmatprep.mubr.f32.mxu0 0.0
    %v3913 = vand.u32 %v1201, 4294901760
    %3914 = vmatmul.mubr.f32.gmra.mxu0 %v3913
    %v3915 = vpop.f32.mrf.mxu0
    %v3916 = vadd.f32 %v3759, %v3915
    %v3917 = vpop.f32.mrf.mxu0
    %3918 = vmatprep.mubr.f32.mxu0 0.0
    %v3919 = vand.u32 %v1204, 4294901760
    %3920 = vmatmul.mubr.f32.gmra.mxu0 %v3919
    %v3921 = vpop.f32.mrf.mxu0
    %v3922 = vadd.f32 %v3769, %v3921
    %v3923 = vpop.f32.mrf.mxu0
    %3924 = vdwg.mxu0
    %3925 = vmatprep.subr.mxu0 0.0
    %3926 = vmatpush1.msra.mxu0 0.0
    %3927 = vmatprep.subr.mxu0 0.0
    %3928 = vmatpush1.msra.mxu0 0.0
    %3929 = vmatprep.subr.mxu0 0.0
    %3930 = vmatpush1.msra.mxu0 0.0
    %3931 = vmatprep.subr.mxu0 0.0
    %3932 = vmatpush1.msra.mxu0 0.0
    %3933 = vmatprep.subr.mxu0 0.0
    %3934 = vmatpush1.msra.mxu0 0.0
    %3935 = vmatprep.subr.mxu0 0.0
    %3936 = vmatpush1.msra.mxu0 0.0
    %3937 = vmatprep.subr.mxu0 0.0
    %3938 = vmatpush1.msra.mxu0 0.0
    %3939 = vmatprep.subr.mxu0 0.0
    %3940 = vmatpush1.msra.mxu0 0.0
    %3941 = vmatprep.subr.mxu0 0.0
    %v3942 = vand.u32 %v3618, 4294901760
    %v3943 = vsub.f32 %v3618, %v3942
    %3944 = vmatpush1.msra.mxu0 %v3943
    %3945 = vmatprep.subr.mxu0 0.0
    %v3946 = vand.u32 %v3617, 4294901760
    %v3947 = vsub.f32 %v3617, %v3946
    %3948 = vmatpush1.msra.mxu0 %v3947
    %3949 = vmatprep.subr.mxu0 0.0
    %v3950 = vand.u32 %v3616, 4294901760
    %v3951 = vsub.f32 %v3616, %v3950
    %3952 = vmatpush1.msra.mxu0 %v3951
    %3953 = vmatprep.subr.mxu0 0.0
    %v3954 = vand.u32 %v3615, 4294901760
    %v3955 = vsub.f32 %v3615, %v3954
    %3956 = vmatpush1.msra.mxu0 %v3955
    %3957 = vmatprep.subr.mxu0 0.0
    %v3958 = vand.u32 %v3614, 4294901760
    %v3959 = vsub.f32 %v3614, %v3958
    %3960 = vmatpush1.msra.mxu0 %v3959
    %3961 = vmatprep.subr.mxu0 0.0
    %v3962 = vand.u32 %v3613, 4294901760
    %v3963 = vsub.f32 %v3613, %v3962
    %3964 = vmatpush1.msra.mxu0 %v3963
    %3965 = vmatprep.subr.mxu0 0.0
    %v3966 = vand.u32 %v3612, 4294901760
    %v3967 = vsub.f32 %v3612, %v3966
    %3968 = vmatpush1.msra.mxu0 %v3967
    %3969 = vmatprep.subr.mxu0 0.0
    %v3970 = vand.u32 %v3611, 4294901760
    %v3971 = vsub.f32 %v3611, %v3970
    %3972 = vmatpush1.msra.mxu0 %v3971
    %3973 = vmatprep.subr.mxu0 0.0
    %3974 = vmatpush2.msra.mxu0 0.0
    %3975 = vmatprep.subr.mxu0 0.0
    %3976 = vmatpush2.msra.mxu0 0.0
    %3977 = vmatprep.subr.mxu0 0.0
    %3978 = vmatpush2.msra.mxu0 0.0
    %3979 = vmatprep.subr.mxu0 0.0
    %3980 = vmatpush2.msra.mxu0 0.0
    %3981 = vmatprep.subr.mxu0 0.0
    %3982 = vmatpush2.msra.mxu0 0.0
    %3983 = vmatprep.subr.mxu0 0.0
    %3984 = vmatpush2.msra.mxu0 0.0
    %3985 = vmatprep.subr.mxu0 0.0
    %3986 = vmatpush2.msra.mxu0 0.0
    %3987 = vmatprep.subr.mxu0 0.0
    %3988 = vmatpush2.msra.mxu0 0.0
    %3989 = vmatprep.subr.mxu0 0.0
    %3990 = vmatpush2.msra.mxu0 0.0
    %3991 = vmatprep.subr.mxu0 0.0
    %3992 = vmatpush2.msra.mxu0 0.0
    %3993 = vmatprep.subr.mxu0 0.0
    %3994 = vmatpush2.msra.mxu0 0.0
    %3995 = vmatprep.subr.mxu0 0.0
    %3996 = vmatpush2.msra.mxu0 0.0
    %3997 = vmatprep.subr.mxu0 0.0
    %3998 = vmatpush2.msra.mxu0 0.0
    %3999 = vmatprep.subr.mxu0 0.0
    %4000 = vmatpush2.msra.mxu0 0.0
    %4001 = vmatprep.subr.mxu0 0.0
    %4002 = vmatpush2.msra.mxu0 0.0
    %4003 = vmatprep.subr.mxu0 0.0
    %4004 = vmatpush2.msra.mxu0 0.0
    %4005 = vmatprep.mubr.f32.mxu0 0.0
    %v4006 = vand.u32 %v1183, 4294901760
    %v4007 = vsub.f32 %v1183, %v4006
    %4008 = vmatmul.mubr.f32.gmra.mxu0 %v4007
    %v4009 = vpop.f32.mrf.mxu0
    %v4010 = vadd.f32 %v3880, %v4009
    %v4011 = vpop.f32.mrf.mxu0
    %4012 = vmatprep.mubr.f32.mxu0 0.0
    %v4013 = vand.u32 %v1186, 4294901760
    %v4014 = vsub.f32 %v1186, %v4013
    %4015 = vmatmul.mubr.f32.gmra.mxu0 %v4014
    %v4016 = vpop.f32.mrf.mxu0
    %v4017 = vadd.f32 %v3886, %v4016
    %v4018 = vpop.f32.mrf.mxu0
    %4019 = vmatprep.mubr.f32.mxu0 0.0
    %v4020 = vand.u32 %v1189, 4294901760
    %v4021 = vsub.f32 %v1189, %v4020
    %4022 = vmatmul.mubr.f32.gmra.mxu0 %v4021
    %v4023 = vpop.f32.mrf.mxu0
    %v4024 = vadd.f32 %v3892, %v4023
    %v4025 = vpop.f32.mrf.mxu0
    %4026 = vmatprep.mubr.f32.mxu0 0.0
    %v4027 = vand.u32 %v1192, 4294901760
    %v4028 = vsub.f32 %v1192, %v4027
    %4029 = vmatmul.mubr.f32.gmra.mxu0 %v4028
    %v4030 = vpop.f32.mrf.mxu0
    %v4031 = vadd.f32 %v3898, %v4030
    %v4032 = vpop.f32.mrf.mxu0
    %4033 = vmatprep.mubr.f32.mxu0 0.0
    %v4034 = vand.u32 %v1195, 4294901760
    %v4035 = vsub.f32 %v1195, %v4034
    %4036 = vmatmul.mubr.f32.gmra.mxu0 %v4035
    %v4037 = vpop.f32.mrf.mxu0
    %v4038 = vadd.f32 %v3904, %v4037
    %v4039 = vpop.f32.mrf.mxu0
    %4040 = vmatprep.mubr.f32.mxu0 0.0
    %v4041 = vand.u32 %v1198, 4294901760
    %v4042 = vsub.f32 %v1198, %v4041
    %4043 = vmatmul.mubr.f32.gmra.mxu0 %v4042
    %v4044 = vpop.f32.mrf.mxu0
    %v4045 = vadd.f32 %v3910, %v4044
    %v4046 = vpop.f32.mrf.mxu0
    %4047 = vmatprep.mubr.f32.mxu0 0.0
    %v4048 = vand.u32 %v1201, 4294901760
    %v4049 = vsub.f32 %v1201, %v4048
    %4050 = vmatmul.mubr.f32.gmra.mxu0 %v4049
    %v4051 = vpop.f32.mrf.mxu0
    %v4052 = vadd.f32 %v3916, %v4051
    %v4053 = vpop.f32.mrf.mxu0
    %4054 = vmatprep.mubr.f32.mxu0 0.0
    %v4055 = vand.u32 %v1204, 4294901760
    %v4056 = vsub.f32 %v1204, %v4055
    %4057 = vmatmul.mubr.f32.gmra.mxu0 %v4056
    %v4058 = vpop.f32.mrf.mxu0
    %v4059 = vadd.f32 %v3922, %v4058
    %v4060 = vpop.f32.mrf.mxu0
    %4061 = vdwg.mxu0
    %4062 = vmatprep.subr.mxu0 0.0
    %4063 = vmatpush1.msra.mxu0 0.0
    %4064 = vmatprep.subr.mxu0 0.0
    %4065 = vmatpush1.msra.mxu0 0.0
    %4066 = vmatprep.subr.mxu0 0.0
    %4067 = vmatpush1.msra.mxu0 0.0
    %4068 = vmatprep.subr.mxu0 0.0
    %4069 = vmatpush1.msra.mxu0 0.0
    %4070 = vmatprep.subr.mxu0 0.0
    %4071 = vmatpush1.msra.mxu0 0.0
    %4072 = vmatprep.subr.mxu0 0.0
    %4073 = vmatpush1.msra.mxu0 0.0
    %4074 = vmatprep.subr.mxu0 0.0
    %4075 = vmatpush1.msra.mxu0 0.0
    %4076 = vmatprep.subr.mxu0 0.0
    %4077 = vmatpush1.msra.mxu0 0.0
    %4078 = vmatprep.subr.mxu0 0.0
    %v4079 = vand.u32 %v3618, 4294901760
    %4080 = vmatpush1.msra.mxu0 %v4079
    %4081 = vmatprep.subr.mxu0 0.0
    %v4082 = vand.u32 %v3617, 4294901760
    %4083 = vmatpush1.msra.mxu0 %v4082
    %4084 = vmatprep.subr.mxu0 0.0
    %v4085 = vand.u32 %v3616, 4294901760
    %4086 = vmatpush1.msra.mxu0 %v4085
    %4087 = vmatprep.subr.mxu0 0.0
    %v4088 = vand.u32 %v3615, 4294901760
    %4089 = vmatpush1.msra.mxu0 %v4088
    %4090 = vmatprep.subr.mxu0 0.0
    %v4091 = vand.u32 %v3614, 4294901760
    %4092 = vmatpush1.msra.mxu0 %v4091
    %4093 = vmatprep.subr.mxu0 0.0
    %v4094 = vand.u32 %v3613, 4294901760
    %4095 = vmatpush1.msra.mxu0 %v4094
    %4096 = vmatprep.subr.mxu0 0.0
    %v4097 = vand.u32 %v3612, 4294901760
    %4098 = vmatpush1.msra.mxu0 %v4097
    %4099 = vmatprep.subr.mxu0 0.0
    %v4100 = vand.u32 %v3611, 4294901760
    %4101 = vmatpush1.msra.mxu0 %v4100
    %4102 = vmatprep.subr.mxu0 0.0
    %4103 = vmatpush2.msra.mxu0 0.0
    %4104 = vmatprep.subr.mxu0 0.0
    %4105 = vmatpush2.msra.mxu0 0.0
    %4106 = vmatprep.subr.mxu0 0.0
    %4107 = vmatpush2.msra.mxu0 0.0
    %4108 = vmatprep.subr.mxu0 0.0
    %4109 = vmatpush2.msra.mxu0 0.0
    %4110 = vmatprep.subr.mxu0 0.0
    %4111 = vmatpush2.msra.mxu0 0.0
    %4112 = vmatprep.subr.mxu0 0.0
    %4113 = vmatpush2.msra.mxu0 0.0
    %4114 = vmatprep.subr.mxu0 0.0
    %4115 = vmatpush2.msra.mxu0 0.0
    %4116 = vmatprep.subr.mxu0 0.0
    %4117 = vmatpush2.msra.mxu0 0.0
    %4118 = vmatprep.subr.mxu0 0.0
    %4119 = vmatpush2.msra.mxu0 0.0
    %4120 = vmatprep.subr.mxu0 0.0
    %4121 = vmatpush2.msra.mxu0 0.0
    %4122 = vmatprep.subr.mxu0 0.0
    %4123 = vmatpush2.msra.mxu0 0.0
    %4124 = vmatprep.subr.mxu0 0.0
    %4125 = vmatpush2.msra.mxu0 0.0
    %4126 = vmatprep.subr.mxu0 0.0
    %4127 = vmatpush2.msra.mxu0 0.0
    %4128 = vmatprep.subr.mxu0 0.0
    %4129 = vmatpush2.msra.mxu0 0.0
    %4130 = vmatprep.subr.mxu0 0.0
    %4131 = vmatpush2.msra.mxu0 0.0
    %4132 = vmatprep.subr.mxu0 0.0
    %4133 = vmatpush2.msra.mxu0 0.0
    %4134 = vmatprep.mubr.f32.mxu0 0.0
    %v4135 = vand.u32 %v1183, 4294901760
    %v4136 = vsub.f32 %v1183, %v4135
    %v4137 = vand.u32 %v4136, 4294901760
    %4138 = vmatmul.mubr.f32.gmra.mxu0 %v4137
    %v4139 = vpop.f32.mrf.mxu0
    %v4140 = vadd.f32 %v4010, %v4139
    %v4141 = vpop.f32.mrf.mxu0
    %4142 = vmatprep.mubr.f32.mxu0 0.0
    %v4143 = vand.u32 %v1186, 4294901760
    %v4144 = vsub.f32 %v1186, %v4143
    %v4145 = vand.u32 %v4144, 4294901760
    %4146 = vmatmul.mubr.f32.gmra.mxu0 %v4145
    %v4147 = vpop.f32.mrf.mxu0
    %v4148 = vadd.f32 %v4017, %v4147
    %v4149 = vpop.f32.mrf.mxu0
    %4150 = vmatprep.mubr.f32.mxu0 0.0
    %v4151 = vand.u32 %v1189, 4294901760
    %v4152 = vsub.f32 %v1189, %v4151
    %v4153 = vand.u32 %v4152, 4294901760
    %4154 = vmatmul.mubr.f32.gmra.mxu0 %v4153
    %v4155 = vpop.f32.mrf.mxu0
    %v4156 = vadd.f32 %v4024, %v4155
    %v4157 = vpop.f32.mrf.mxu0
    %4158 = vmatprep.mubr.f32.mxu0 0.0
    %v4159 = vand.u32 %v1192, 4294901760
    %v4160 = vsub.f32 %v1192, %v4159
    %v4161 = vand.u32 %v4160, 4294901760
    %4162 = vmatmul.mubr.f32.gmra.mxu0 %v4161
    %v4163 = vpop.f32.mrf.mxu0
    %v4164 = vadd.f32 %v4031, %v4163
    %v4165 = vpop.f32.mrf.mxu0
    %4166 = vmatprep.mubr.f32.mxu0 0.0
    %v4167 = vand.u32 %v1195, 4294901760
    %v4168 = vsub.f32 %v1195, %v4167
    %v4169 = vand.u32 %v4168, 4294901760
    %4170 = vmatmul.mubr.f32.gmra.mxu0 %v4169
    %v4171 = vpop.f32.mrf.mxu0
    %v4172 = vadd.f32 %v4038, %v4171
    %v4173 = vpop.f32.mrf.mxu0
    %4174 = vmatprep.mubr.f32.mxu0 0.0
    %v4175 = vand.u32 %v1198, 4294901760
    %v4176 = vsub.f32 %v1198, %v4175
    %v4177 = vand.u32 %v4176, 4294901760
    %4178 = vmatmul.mubr.f32.gmra.mxu0 %v4177
    %v4179 = vpop.f32.mrf.mxu0
    %v4180 = vadd.f32 %v4045, %v4179
    %v4181 = vpop.f32.mrf.mxu0
    %4182 = vmatprep.mubr.f32.mxu0 0.0
    %v4183 = vand.u32 %v1201, 4294901760
    %v4184 = vsub.f32 %v1201, %v4183
    %v4185 = vand.u32 %v4184, 4294901760
    %4186 = vmatmul.mubr.f32.gmra.mxu0 %v4185
    %v4187 = vpop.f32.mrf.mxu0
    %v4188 = vadd.f32 %v4052, %v4187
    %v4189 = vpop.f32.mrf.mxu0
    %4190 = vmatprep.mubr.f32.mxu0 0.0
    %v4191 = vand.u32 %v1204, 4294901760
    %v4192 = vsub.f32 %v1204, %v4191
    %v4193 = vand.u32 %v4192, 4294901760
    %4194 = vmatmul.mubr.f32.gmra.mxu0 %v4193
    %v4195 = vpop.f32.mrf.mxu0
    %v4196 = vadd.f32 %v4059, %v4195
    %v4197 = vpop.f32.mrf.mxu0
    %4198 = vdwg.mxu0
    %4199 = vmatprep.subr.mxu0 0.0
    %4200 = vmatpush1.msra.mxu0 0.0
    %4201 = vmatprep.subr.mxu0 0.0
    %4202 = vmatpush1.msra.mxu0 0.0
    %4203 = vmatprep.subr.mxu0 0.0
    %4204 = vmatpush1.msra.mxu0 0.0
    %4205 = vmatprep.subr.mxu0 0.0
    %4206 = vmatpush1.msra.mxu0 0.0
    %4207 = vmatprep.subr.mxu0 0.0
    %4208 = vmatpush1.msra.mxu0 0.0
    %4209 = vmatprep.subr.mxu0 0.0
    %4210 = vmatpush1.msra.mxu0 0.0
    %4211 = vmatprep.subr.mxu0 0.0
    %4212 = vmatpush1.msra.mxu0 0.0
    %4213 = vmatprep.subr.mxu0 0.0
    %4214 = vmatpush1.msra.mxu0 0.0
    %4215 = vmatprep.subr.mxu0 0.0
    %v4216 = vand.u32 %v3618, 4294901760
    %v4217 = vsub.f32 %v3618, %v4216
    %v4218 = vand.u32 %v4217, 4294901760
    %4219 = vmatpush1.msra.mxu0 %v4218
    %4220 = vmatprep.subr.mxu0 0.0
    %v4221 = vand.u32 %v3617, 4294901760
    %v4222 = vsub.f32 %v3617, %v4221
    %v4223 = vand.u32 %v4222, 4294901760
    %4224 = vmatpush1.msra.mxu0 %v4223
    %4225 = vmatprep.subr.mxu0 0.0
    %v4226 = vand.u32 %v3616, 4294901760
    %v4227 = vsub.f32 %v3616, %v4226
    %v4228 = vand.u32 %v4227, 4294901760
    %4229 = vmatpush1.msra.mxu0 %v4228
    %4230 = vmatprep.subr.mxu0 0.0
    %v4231 = vand.u32 %v3615, 4294901760
    %v4232 = vsub.f32 %v3615, %v4231
    %v4233 = vand.u32 %v4232, 4294901760
    %4234 = vmatpush1.msra.mxu0 %v4233
    %4235 = vmatprep.subr.mxu0 0.0
    %v4236 = vand.u32 %v3614, 4294901760
    %v4237 = vsub.f32 %v3614, %v4236
    %v4238 = vand.u32 %v4237, 4294901760
    %4239 = vmatpush1.msra.mxu0 %v4238
    %4240 = vmatprep.subr.mxu0 0.0
    %v4241 = vand.u32 %v3613, 4294901760
    %v4242 = vsub.f32 %v3613, %v4241
    %v4243 = vand.u32 %v4242, 4294901760
    %4244 = vmatpush1.msra.mxu0 %v4243
    %4245 = vmatprep.subr.mxu0 0.0
    %v4246 = vand.u32 %v3612, 4294901760
    %v4247 = vsub.f32 %v3612, %v4246
    %v4248 = vand.u32 %v4247, 4294901760
    %4249 = vmatpush1.msra.mxu0 %v4248
    %4250 = vmatprep.subr.mxu0 0.0
    %v4251 = vand.u32 %v3611, 4294901760
    %v4252 = vsub.f32 %v3611, %v4251
    %v4253 = vand.u32 %v4252, 4294901760
    %4254 = vmatpush1.msra.mxu0 %v4253
    %4255 = vmatprep.subr.mxu0 0.0
    %4256 = vmatpush2.msra.mxu0 0.0
    %4257 = vmatprep.subr.mxu0 0.0
    %4258 = vmatpush2.msra.mxu0 0.0
    %4259 = vmatprep.subr.mxu0 0.0
    %4260 = vmatpush2.msra.mxu0 0.0
    %4261 = vmatprep.subr.mxu0 0.0
    %4262 = vmatpush2.msra.mxu0 0.0
    %4263 = vmatprep.subr.mxu0 0.0
    %4264 = vmatpush2.msra.mxu0 0.0
    %4265 = vmatprep.subr.mxu0 0.0
    %4266 = vmatpush2.msra.mxu0 0.0
    %4267 = vmatprep.subr.mxu0 0.0
    %4268 = vmatpush2.msra.mxu0 0.0
    %4269 = vmatprep.subr.mxu0 0.0
    %4270 = vmatpush2.msra.mxu0 0.0
    %4271 = vmatprep.subr.mxu0 0.0
    %4272 = vmatpush2.msra.mxu0 0.0
    %4273 = vmatprep.subr.mxu0 0.0
    %4274 = vmatpush2.msra.mxu0 0.0
    %4275 = vmatprep.subr.mxu0 0.0
    %4276 = vmatpush2.msra.mxu0 0.0
    %4277 = vmatprep.subr.mxu0 0.0
    %4278 = vmatpush2.msra.mxu0 0.0
    %4279 = vmatprep.subr.mxu0 0.0
    %4280 = vmatpush2.msra.mxu0 0.0
    %4281 = vmatprep.subr.mxu0 0.0
    %4282 = vmatpush2.msra.mxu0 0.0
    %4283 = vmatprep.subr.mxu0 0.0
    %4284 = vmatpush2.msra.mxu0 0.0
    %4285 = vmatprep.subr.mxu0 0.0
    %4286 = vmatpush2.msra.mxu0 0.0
    %4287 = vmatprep.mubr.f32.mxu0 0.0
    %v4288 = vand.u32 %v1183, 4294901760
    %4289 = vmatmul.mubr.f32.gmra.mxu0 %v4288
    %v4290 = vpop.f32.mrf.mxu0
    %v4291 = vadd.f32 %v4140, %v4290
    %v4292 = vpop.f32.mrf.mxu0
    %4293 = vmatprep.mubr.f32.mxu0 0.0
    %v4294 = vand.u32 %v1186, 4294901760
    %4295 = vmatmul.mubr.f32.gmra.mxu0 %v4294
    %v4296 = vpop.f32.mrf.mxu0
    %v4297 = vadd.f32 %v4148, %v4296
    %v4298 = vpop.f32.mrf.mxu0
    %4299 = vmatprep.mubr.f32.mxu0 0.0
    %v4300 = vand.u32 %v1189, 4294901760
    %4301 = vmatmul.mubr.f32.gmra.mxu0 %v4300
    %v4302 = vpop.f32.mrf.mxu0
    %v4303 = vadd.f32 %v4156, %v4302
    %v4304 = vpop.f32.mrf.mxu0
    %4305 = vmatprep.mubr.f32.mxu0 0.0
    %v4306 = vand.u32 %v1192, 4294901760
    %4307 = vmatmul.mubr.f32.gmra.mxu0 %v4306
    %v4308 = vpop.f32.mrf.mxu0
    %v4309 = vadd.f32 %v4164, %v4308
    %v4310 = vpop.f32.mrf.mxu0
    %4311 = vmatprep.mubr.f32.mxu0 0.0
    %v4312 = vand.u32 %v1195, 4294901760
    %4313 = vmatmul.mubr.f32.gmra.mxu0 %v4312
    %v4314 = vpop.f32.mrf.mxu0
    %v4315 = vadd.f32 %v4172, %v4314
    %v4316 = vpop.f32.mrf.mxu0
    %4317 = vmatprep.mubr.f32.mxu0 0.0
    %v4318 = vand.u32 %v1198, 4294901760
    %4319 = vmatmul.mubr.f32.gmra.mxu0 %v4318
    %v4320 = vpop.f32.mrf.mxu0
    %v4321 = vadd.f32 %v4180, %v4320
    %v4322 = vpop.f32.mrf.mxu0
    %4323 = vmatprep.mubr.f32.mxu0 0.0
    %v4324 = vand.u32 %v1201, 4294901760
    %4325 = vmatmul.mubr.f32.gmra.mxu0 %v4324
    %v4326 = vpop.f32.mrf.mxu0
    %v4327 = vadd.f32 %v4188, %v4326
    %v4328 = vpop.f32.mrf.mxu0
    %4329 = vmatprep.mubr.f32.mxu0 0.0
    %v4330 = vand.u32 %v1204, 4294901760
    %4331 = vmatmul.mubr.f32.gmra.mxu0 %v4330
    %v4332 = vpop.f32.mrf.mxu0
    %v4333 = vadd.f32 %v4196, %v4332
    %v4334 = vpop.f32.mrf.mxu0
    %4335 = vdwg.mxu0
    %4336 = vmatprep.subr.mxu0 0.0
    %4337 = vmatpush1.msra.mxu0 0.0
    %4338 = vmatprep.subr.mxu0 0.0
    %4339 = vmatpush1.msra.mxu0 0.0
    %4340 = vmatprep.subr.mxu0 0.0
    %4341 = vmatpush1.msra.mxu0 0.0
    %4342 = vmatprep.subr.mxu0 0.0
    %4343 = vmatpush1.msra.mxu0 0.0
    %4344 = vmatprep.subr.mxu0 0.0
    %4345 = vmatpush1.msra.mxu0 0.0
    %4346 = vmatprep.subr.mxu0 0.0
    %4347 = vmatpush1.msra.mxu0 0.0
    %4348 = vmatprep.subr.mxu0 0.0
    %4349 = vmatpush1.msra.mxu0 0.0
    %4350 = vmatprep.subr.mxu0 0.0
    %4351 = vmatpush1.msra.mxu0 0.0
    %4352 = vmatprep.subr.mxu0 0.0
    %v4353 = vand.u32 %v3618, 4294901760
    %4354 = vmatpush1.msra.mxu0 %v4353
    %4355 = vmatprep.subr.mxu0 0.0
    %v4356 = vand.u32 %v3617, 4294901760
    %4357 = vmatpush1.msra.mxu0 %v4356
    %4358 = vmatprep.subr.mxu0 0.0
    %v4359 = vand.u32 %v3616, 4294901760
    %4360 = vmatpush1.msra.mxu0 %v4359
    %4361 = vmatprep.subr.mxu0 0.0
    %v4362 = vand.u32 %v3615, 4294901760
    %4363 = vmatpush1.msra.mxu0 %v4362
    %4364 = vmatprep.subr.mxu0 0.0
    %v4365 = vand.u32 %v3614, 4294901760
    %4366 = vmatpush1.msra.mxu0 %v4365
    %4367 = vmatprep.subr.mxu0 0.0
    %v4368 = vand.u32 %v3613, 4294901760
    %4369 = vmatpush1.msra.mxu0 %v4368
    %4370 = vmatprep.subr.mxu0 0.0
    %v4371 = vand.u32 %v3612, 4294901760
    %4372 = vmatpush1.msra.mxu0 %v4371
    %4373 = vmatprep.subr.mxu0 0.0
    %v4374 = vand.u32 %v3611, 4294901760
    %4375 = vmatpush1.msra.mxu0 %v4374
    %4376 = vmatprep.subr.mxu0 0.0
    %4377 = vmatpush2.msra.mxu0 0.0
    %4378 = vmatprep.subr.mxu0 0.0
    %4379 = vmatpush2.msra.mxu0 0.0
    %4380 = vmatprep.subr.mxu0 0.0
    %4381 = vmatpush2.msra.mxu0 0.0
    %4382 = vmatprep.subr.mxu0 0.0
    %4383 = vmatpush2.msra.mxu0 0.0
    %4384 = vmatprep.subr.mxu0 0.0
    %4385 = vmatpush2.msra.mxu0 0.0
    %4386 = vmatprep.subr.mxu0 0.0
    %4387 = vmatpush2.msra.mxu0 0.0
    %4388 = vmatprep.subr.mxu0 0.0
    %4389 = vmatpush2.msra.mxu0 0.0
    %4390 = vmatprep.subr.mxu0 0.0
    %4391 = vmatpush2.msra.mxu0 0.0
    %4392 = vmatprep.subr.mxu0 0.0
    %4393 = vmatpush2.msra.mxu0 0.0
    %4394 = vmatprep.subr.mxu0 0.0
    %4395 = vmatpush2.msra.mxu0 0.0
    %4396 = vmatprep.subr.mxu0 0.0
    %4397 = vmatpush2.msra.mxu0 0.0
    %4398 = vmatprep.subr.mxu0 0.0
    %4399 = vmatpush2.msra.mxu0 0.0
    %4400 = vmatprep.subr.mxu0 0.0
    %4401 = vmatpush2.msra.mxu0 0.0
    %4402 = vmatprep.subr.mxu0 0.0
    %4403 = vmatpush2.msra.mxu0 0.0
    %4404 = vmatprep.subr.mxu0 0.0
    %4405 = vmatpush2.msra.mxu0 0.0
    %4406 = vmatprep.subr.mxu0 0.0
    %4407 = vmatpush2.msra.mxu0 0.0
    %4408 = vmatprep.mubr.f32.mxu0 0.0
    %v4409 = vand.u32 %v1183, 4294901760
    %4410 = vmatmul.mubr.f32.gmra.mxu0 %v4409
    %v4411 = vpop.f32.mrf.mxu0
    %v4412 = vadd.f32 %v4291, %v4411
    %v4413 = vpop.f32.mrf.mxu0
    %4414 = vmatprep.mubr.f32.mxu0 0.0
    %v4415 = vand.u32 %v1186, 4294901760
    %4416 = vmatmul.mubr.f32.gmra.mxu0 %v4415
    %v4417 = vpop.f32.mrf.mxu0
    %v4418 = vadd.f32 %v4297, %v4417
    %v4419 = vpop.f32.mrf.mxu0
    %4420 = vmatprep.mubr.f32.mxu0 0.0
    %v4421 = vand.u32 %v1189, 4294901760
    %4422 = vmatmul.mubr.f32.gmra.mxu0 %v4421
    %v4423 = vpop.f32.mrf.mxu0
    %v4424 = vadd.f32 %v4303, %v4423
    %v4425 = vpop.f32.mrf.mxu0
    %4426 = vmatprep.mubr.f32.mxu0 0.0
    %v4427 = vand.u32 %v1192, 4294901760
    %4428 = vmatmul.mubr.f32.gmra.mxu0 %v4427
    %v4429 = vpop.f32.mrf.mxu0
    %v4430 = vadd.f32 %v4309, %v4429
    %v4431 = vpop.f32.mrf.mxu0
    %4432 = vmatprep.mubr.f32.mxu0 0.0
    %v4433 = vand.u32 %v1195, 4294901760
    %4434 = vmatmul.mubr.f32.gmra.mxu0 %v4433
    %v4435 = vpop.f32.mrf.mxu0
    %v4436 = vadd.f32 %v4315, %v4435
    %v4437 = vpop.f32.mrf.mxu0
    %4438 = vmatprep.mubr.f32.mxu0 0.0
    %v4439 = vand.u32 %v1198, 4294901760
    %4440 = vmatmul.mubr.f32.gmra.mxu0 %v4439
    %v4441 = vpop.f32.mrf.mxu0
    %v4442 = vadd.f32 %v4321, %v4441
    %v4443 = vpop.f32.mrf.mxu0
    %4444 = vmatprep.mubr.f32.mxu0 0.0
    %v4445 = vand.u32 %v1201, 4294901760
    %4446 = vmatmul.mubr.f32.gmra.mxu0 %v4445
    %v4447 = vpop.f32.mrf.mxu0
    %v4448 = vadd.f32 %v4327, %v4447
    %v4449 = vpop.f32.mrf.mxu0
    %4450 = vmatprep.mubr.f32.mxu0 0.0
    %v4451 = vand.u32 %v1204, 4294901760
    %4452 = vmatmul.mubr.f32.gmra.mxu0 %v4451
    %v4453 = vpop.f32.mrf.mxu0
    %v4454 = vadd.f32 %v4333, %v4453
    %v4455 = vpop.f32.mrf.mxu0
    %4456 = vdwg.mxu0
    %v4457 = vmax.f32 %v4412, 0.0
    %v4458 = vmax.f32 %v4418, 0.0
    %v4459 = vmax.f32 %v4424, 0.0
    %v4460 = vmax.f32 %v4430, 0.0
    %v4461 = vmax.f32 %v4436, 0.0
    %v4462 = vmax.f32 %v4442, 0.0
    %v4463 = vmax.f32 %v4448, 0.0
    %v4464 = vmax.f32 %v4454, 0.0
    %4465 = vmatprep.subr.mxu0 0.0
    %4466 = vmatpush1.msra.mxu0 0.0
    %4467 = vmatprep.subr.mxu0 0.0
    %4468 = vmatpush1.msra.mxu0 0.0
    %4469 = vmatprep.subr.mxu0 0.0
    %4470 = vmatpush1.msra.mxu0 0.0
    %4471 = vmatprep.subr.mxu0 0.0
    %4472 = vmatpush1.msra.mxu0 0.0
    %4473 = vmatprep.subr.mxu0 0.0
    %4474 = vmatpush1.msra.mxu0 0.0
    %4475 = vmatprep.subr.mxu0 0.0
    %4476 = vmatpush1.msra.mxu0 0.0
    %4477 = vmatprep.subr.mxu0 0.0
    %4478 = vmatpush1.msra.mxu0 0.0
    %4479 = vmatprep.subr.mxu0 0.0
    %4480 = vmatpush1.msra.mxu0 0.0
    %4481 = vmatprep.subr.mxu0 0.0
    %v4482 = vand.u32 %v4464, 4294901760
    %4483 = vmatpush1.msra.mxu0 %v4482
    %4484 = vmatprep.subr.mxu0 0.0
    %v4485 = vand.u32 %v4463, 4294901760
    %4486 = vmatpush1.msra.mxu0 %v4485
    %4487 = vmatprep.subr.mxu0 0.0
    %v4488 = vand.u32 %v4462, 4294901760
    %4489 = vmatpush1.msra.mxu0 %v4488
    %4490 = vmatprep.subr.mxu0 0.0
    %v4491 = vand.u32 %v4461, 4294901760
    %4492 = vmatpush1.msra.mxu0 %v4491
    %4493 = vmatprep.subr.mxu0 0.0
    %v4494 = vand.u32 %v4460, 4294901760
    %4495 = vmatpush1.msra.mxu0 %v4494
    %4496 = vmatprep.subr.mxu0 0.0
    %v4497 = vand.u32 %v4459, 4294901760
    %4498 = vmatpush1.msra.mxu0 %v4497
    %4499 = vmatprep.subr.mxu0 0.0
    %v4500 = vand.u32 %v4458, 4294901760
    %4501 = vmatpush1.msra.mxu0 %v4500
    %4502 = vmatprep.subr.mxu0 0.0
    %v4503 = vand.u32 %v4457, 4294901760
    %4504 = vmatpush1.msra.mxu0 %v4503
    %4505 = vmatprep.subr.mxu0 0.0
    %4506 = vmatpush2.msra.mxu0 0.0
    %4507 = vmatprep.subr.mxu0 0.0
    %4508 = vmatpush2.msra.mxu0 0.0
    %4509 = vmatprep.subr.mxu0 0.0
    %4510 = vmatpush2.msra.mxu0 0.0
    %4511 = vmatprep.subr.mxu0 0.0
    %4512 = vmatpush2.msra.mxu0 0.0
    %4513 = vmatprep.subr.mxu0 0.0
    %4514 = vmatpush2.msra.mxu0 0.0
    %4515 = vmatprep.subr.mxu0 0.0
    %4516 = vmatpush2.msra.mxu0 0.0
    %4517 = vmatprep.subr.mxu0 0.0
    %4518 = vmatpush2.msra.mxu0 0.0
    %4519 = vmatprep.subr.mxu0 0.0
    %4520 = vmatpush2.msra.mxu0 0.0
    %4521 = vmatprep.subr.mxu0 0.0
    %4522 = vmatpush2.msra.mxu0 0.0
    %4523 = vmatprep.subr.mxu0 0.0
    %4524 = vmatpush2.msra.mxu0 0.0
    %4525 = vmatprep.subr.mxu0 0.0
    %4526 = vmatpush2.msra.mxu0 0.0
    %4527 = vmatprep.subr.mxu0 0.0
    %4528 = vmatpush2.msra.mxu0 0.0
    %4529 = vmatprep.subr.mxu0 0.0
    %4530 = vmatpush2.msra.mxu0 0.0
    %4531 = vmatprep.subr.mxu0 0.0
    %4532 = vmatpush2.msra.mxu0 0.0
    %4533 = vmatprep.subr.mxu0 0.0
    %4534 = vmatpush2.msra.mxu0 0.0
    %4535 = vmatprep.subr.mxu0 0.0
    %4536 = vmatpush2.msra.mxu0 0.0
    %4537 = vmatprep.mubr.f32.mxu0 0.0
    %v4538 = vand.u32 %v2054, 4294901760
    %v4539 = vsub.f32 %v2054, %v4538
    %v4540 = vand.u32 %v4539, 4294901760
    %v4541 = vsub.f32 %v4539, %v4540
    %v4542 = vand.u32 %v4541, 4294901760
    %4543 = vmatmul.mubr.f32.gmra.mxu0 %v4542
    %v4544 = vpop.f32.mrf.mxu0
    %v4545 = vadd.f32 %v2052, %v4544
    %v4546 = vpop.f32.mrf.mxu0
    %4547 = vdwg.mxu0
    %4548 = vmatprep.subr.mxu0 0.0
    %4549 = vmatpush1.msra.mxu0 0.0
    %4550 = vmatprep.subr.mxu0 0.0
    %4551 = vmatpush1.msra.mxu0 0.0
    %4552 = vmatprep.subr.mxu0 0.0
    %4553 = vmatpush1.msra.mxu0 0.0
    %4554 = vmatprep.subr.mxu0 0.0
    %4555 = vmatpush1.msra.mxu0 0.0
    %4556 = vmatprep.subr.mxu0 0.0
    %4557 = vmatpush1.msra.mxu0 0.0
    %4558 = vmatprep.subr.mxu0 0.0
    %4559 = vmatpush1.msra.mxu0 0.0
    %4560 = vmatprep.subr.mxu0 0.0
    %4561 = vmatpush1.msra.mxu0 0.0
    %4562 = vmatprep.subr.mxu0 0.0
    %4563 = vmatpush1.msra.mxu0 0.0
    %4564 = vmatprep.subr.mxu0 0.0
    %v4565 = vand.u32 %v4464, 4294901760
    %v4566 = vsub.f32 %v4464, %v4565
    %v4567 = vand.u32 %v4566, 4294901760
    %v4568 = vsub.f32 %v4566, %v4567
    %v4569 = vand.u32 %v4568, 4294901760
    %4570 = vmatpush1.msra.mxu0 %v4569
    %4571 = vmatprep.subr.mxu0 0.0
    %v4572 = vand.u32 %v4463, 4294901760
    %v4573 = vsub.f32 %v4463, %v4572
    %v4574 = vand.u32 %v4573, 4294901760
    %v4575 = vsub.f32 %v4573, %v4574
    %v4576 = vand.u32 %v4575, 4294901760
    %4577 = vmatpush1.msra.mxu0 %v4576
    %4578 = vmatprep.subr.mxu0 0.0
    %v4579 = vand.u32 %v4462, 4294901760
    %v4580 = vsub.f32 %v4462, %v4579
    %v4581 = vand.u32 %v4580, 4294901760
    %v4582 = vsub.f32 %v4580, %v4581
    %v4583 = vand.u32 %v4582, 4294901760
    %4584 = vmatpush1.msra.mxu0 %v4583
    %4585 = vmatprep.subr.mxu0 0.0
    %v4586 = vand.u32 %v4461, 4294901760
    %v4587 = vsub.f32 %v4461, %v4586
    %v4588 = vand.u32 %v4587, 4294901760
    %v4589 = vsub.f32 %v4587, %v4588
    %v4590 = vand.u32 %v4589, 4294901760
    %4591 = vmatpush1.msra.mxu0 %v4590
    %4592 = vmatprep.subr.mxu0 0.0
    %v4593 = vand.u32 %v4460, 4294901760
    %v4594 = vsub.f32 %v4460, %v4593
    %v4595 = vand.u32 %v4594, 4294901760
    %v4596 = vsub.f32 %v4594, %v4595
    %v4597 = vand.u32 %v4596, 4294901760
    %4598 = vmatpush1.msra.mxu0 %v4597
    %4599 = vmatprep.subr.mxu0 0.0
    %v4600 = vand.u32 %v4459, 4294901760
    %v4601 = vsub.f32 %v4459, %v4600
    %v4602 = vand.u32 %v4601, 4294901760
    %v4603 = vsub.f32 %v4601, %v4602
    %v4604 = vand.u32 %v4603, 4294901760
    %4605 = vmatpush1.msra.mxu0 %v4604
    %4606 = vmatprep.subr.mxu0 0.0
    %v4607 = vand.u32 %v4458, 4294901760
    %v4608 = vsub.f32 %v4458, %v4607
    %v4609 = vand.u32 %v4608, 4294901760
    %v4610 = vsub.f32 %v4608, %v4609
    %v4611 = vand.u32 %v4610, 4294901760
    %4612 = vmatpush1.msra.mxu0 %v4611
    %4613 = vmatprep.subr.mxu0 0.0
    %v4614 = vand.u32 %v4457, 4294901760
    %v4615 = vsub.f32 %v4457, %v4614
    %v4616 = vand.u32 %v4615, 4294901760
    %v4617 = vsub.f32 %v4615, %v4616
    %v4618 = vand.u32 %v4617, 4294901760
    %4619 = vmatpush1.msra.mxu0 %v4618
    %4620 = vmatprep.subr.mxu0 0.0
    %4621 = vmatpush2.msra.mxu0 0.0
    %4622 = vmatprep.subr.mxu0 0.0
    %4623 = vmatpush2.msra.mxu0 0.0
    %4624 = vmatprep.subr.mxu0 0.0
    %4625 = vmatpush2.msra.mxu0 0.0
    %4626 = vmatprep.subr.mxu0 0.0
    %4627 = vmatpush2.msra.mxu0 0.0
    %4628 = vmatprep.subr.mxu0 0.0
    %4629 = vmatpush2.msra.mxu0 0.0
    %4630 = vmatprep.subr.mxu0 0.0
    %4631 = vmatpush2.msra.mxu0 0.0
    %4632 = vmatprep.subr.mxu0 0.0
    %4633 = vmatpush2.msra.mxu0 0.0
    %4634 = vmatprep.subr.mxu0 0.0
    %4635 = vmatpush2.msra.mxu0 0.0
    %4636 = vmatprep.subr.mxu0 0.0
    %4637 = vmatpush2.msra.mxu0 0.0
    %4638 = vmatprep.subr.mxu0 0.0
    %4639 = vmatpush2.msra.mxu0 0.0
    %4640 = vmatprep.subr.mxu0 0.0
    %4641 = vmatpush2.msra.mxu0 0.0
    %4642 = vmatprep.subr.mxu0 0.0
    %4643 = vmatpush2.msra.mxu0 0.0
    %4644 = vmatprep.subr.mxu0 0.0
    %4645 = vmatpush2.msra.mxu0 0.0
    %4646 = vmatprep.subr.mxu0 0.0
    %4647 = vmatpush2.msra.mxu0 0.0
    %4648 = vmatprep.subr.mxu0 0.0
    %4649 = vmatpush2.msra.mxu0 0.0
    %4650 = vmatprep.subr.mxu0 0.0
    %4651 = vmatpush2.msra.mxu0 0.0
    %4652 = vmatprep.mubr.f32.mxu0 0.0
    %v4653 = vand.u32 %v2054, 4294901760
    %4654 = vmatmul.mubr.f32.gmra.mxu0 %v4653
    %v4655 = vpop.f32.mrf.mxu0
    %v4656 = vadd.f32 %v4545, %v4655
    %v4657 = vpop.f32.mrf.mxu0
    %4658 = vdwg.mxu0
    %4659 = vmatprep.subr.mxu0 0.0
    %4660 = vmatpush1.msra.mxu0 0.0
    %4661 = vmatprep.subr.mxu0 0.0
    %4662 = vmatpush1.msra.mxu0 0.0
    %4663 = vmatprep.subr.mxu0 0.0
    %4664 = vmatpush1.msra.mxu0 0.0
    %4665 = vmatprep.subr.mxu0 0.0
    %4666 = vmatpush1.msra.mxu0 0.0
    %4667 = vmatprep.subr.mxu0 0.0
    %4668 = vmatpush1.msra.mxu0 0.0
    %4669 = vmatprep.subr.mxu0 0.0
    %4670 = vmatpush1.msra.mxu0 0.0
    %4671 = vmatprep.subr.mxu0 0.0
    %4672 = vmatpush1.msra.mxu0 0.0
    %4673 = vmatprep.subr.mxu0 0.0
    %4674 = vmatpush1.msra.mxu0 0.0
    %4675 = vmatprep.subr.mxu0 0.0
    %v4676 = vand.u32 %v4464, 4294901760
    %v4677 = vsub.f32 %v4464, %v4676
    %4678 = vmatpush1.msra.mxu0 %v4677
    %4679 = vmatprep.subr.mxu0 0.0
    %v4680 = vand.u32 %v4463, 4294901760
    %v4681 = vsub.f32 %v4463, %v4680
    %4682 = vmatpush1.msra.mxu0 %v4681
    %4683 = vmatprep.subr.mxu0 0.0
    %v4684 = vand.u32 %v4462, 4294901760
    %v4685 = vsub.f32 %v4462, %v4684
    %4686 = vmatpush1.msra.mxu0 %v4685
    %4687 = vmatprep.subr.mxu0 0.0
    %v4688 = vand.u32 %v4461, 4294901760
    %v4689 = vsub.f32 %v4461, %v4688
    %4690 = vmatpush1.msra.mxu0 %v4689
    %4691 = vmatprep.subr.mxu0 0.0
    %v4692 = vand.u32 %v4460, 4294901760
    %v4693 = vsub.f32 %v4460, %v4692
    %4694 = vmatpush1.msra.mxu0 %v4693
    %4695 = vmatprep.subr.mxu0 0.0
    %v4696 = vand.u32 %v4459, 4294901760
    %v4697 = vsub.f32 %v4459, %v4696
    %4698 = vmatpush1.msra.mxu0 %v4697
    %4699 = vmatprep.subr.mxu0 0.0
    %v4700 = vand.u32 %v4458, 4294901760
    %v4701 = vsub.f32 %v4458, %v4700
    %4702 = vmatpush1.msra.mxu0 %v4701
    %4703 = vmatprep.subr.mxu0 0.0
    %v4704 = vand.u32 %v4457, 4294901760
    %v4705 = vsub.f32 %v4457, %v4704
    %4706 = vmatpush1.msra.mxu0 %v4705
    %4707 = vmatprep.subr.mxu0 0.0
    %4708 = vmatpush2.msra.mxu0 0.0
    %4709 = vmatprep.subr.mxu0 0.0
    %4710 = vmatpush2.msra.mxu0 0.0
    %4711 = vmatprep.subr.mxu0 0.0
    %4712 = vmatpush2.msra.mxu0 0.0
    %4713 = vmatprep.subr.mxu0 0.0
    %4714 = vmatpush2.msra.mxu0 0.0
    %4715 = vmatprep.subr.mxu0 0.0
    %4716 = vmatpush2.msra.mxu0 0.0
    %4717 = vmatprep.subr.mxu0 0.0
    %4718 = vmatpush2.msra.mxu0 0.0
    %4719 = vmatprep.subr.mxu0 0.0
    %4720 = vmatpush2.msra.mxu0 0.0
    %4721 = vmatprep.subr.mxu0 0.0
    %4722 = vmatpush2.msra.mxu0 0.0
    %4723 = vmatprep.subr.mxu0 0.0
    %4724 = vmatpush2.msra.mxu0 0.0
    %4725 = vmatprep.subr.mxu0 0.0
    %4726 = vmatpush2.msra.mxu0 0.0
    %4727 = vmatprep.subr.mxu0 0.0
    %4728 = vmatpush2.msra.mxu0 0.0
    %4729 = vmatprep.subr.mxu0 0.0
    %4730 = vmatpush2.msra.mxu0 0.0
    %4731 = vmatprep.subr.mxu0 0.0
    %4732 = vmatpush2.msra.mxu0 0.0
    %4733 = vmatprep.subr.mxu0 0.0
    %4734 = vmatpush2.msra.mxu0 0.0
    %4735 = vmatprep.subr.mxu0 0.0
    %4736 = vmatpush2.msra.mxu0 0.0
    %4737 = vmatprep.subr.mxu0 0.0
    %4738 = vmatpush2.msra.mxu0 0.0
    %4739 = vmatprep.mubr.f32.mxu0 0.0
    %v4740 = vand.u32 %v2054, 4294901760
    %v4741 = vsub.f32 %v2054, %v4740
    %4742 = vmatmul.mubr.f32.gmra.mxu0 %v4741
    %v4743 = vpop.f32.mrf.mxu0
    %v4744 = vadd.f32 %v4656, %v4743
    %v4745 = vpop.f32.mrf.mxu0
    %4746 = vdwg.mxu0
    %4747 = vmatprep.subr.mxu0 0.0
    %4748 = vmatpush1.msra.mxu0 0.0
    %4749 = vmatprep.subr.mxu0 0.0
    %4750 = vmatpush1.msra.mxu0 0.0
    %4751 = vmatprep.subr.mxu0 0.0
    %4752 = vmatpush1.msra.mxu0 0.0
    %4753 = vmatprep.subr.mxu0 0.0
    %4754 = vmatpush1.msra.mxu0 0.0
    %4755 = vmatprep.subr.mxu0 0.0
    %4756 = vmatpush1.msra.mxu0 0.0
    %4757 = vmatprep.subr.mxu0 0.0
    %4758 = vmatpush1.msra.mxu0 0.0
    %4759 = vmatprep.subr.mxu0 0.0
    %4760 = vmatpush1.msra.mxu0 0.0
    %4761 = vmatprep.subr.mxu0 0.0
    %4762 = vmatpush1.msra.mxu0 0.0
    %4763 = vmatprep.subr.mxu0 0.0
    %v4764 = vand.u32 %v4464, 4294901760
    %4765 = vmatpush1.msra.mxu0 %v4764
    %4766 = vmatprep.subr.mxu0 0.0
    %v4767 = vand.u32 %v4463, 4294901760
    %4768 = vmatpush1.msra.mxu0 %v4767
    %4769 = vmatprep.subr.mxu0 0.0
    %v4770 = vand.u32 %v4462, 4294901760
    %4771 = vmatpush1.msra.mxu0 %v4770
    %4772 = vmatprep.subr.mxu0 0.0
    %v4773 = vand.u32 %v4461, 4294901760
    %4774 = vmatpush1.msra.mxu0 %v4773
    %4775 = vmatprep.subr.mxu0 0.0
    %v4776 = vand.u32 %v4460, 4294901760
    %4777 = vmatpush1.msra.mxu0 %v4776
    %4778 = vmatprep.subr.mxu0 0.0
    %v4779 = vand.u32 %v4459, 4294901760
    %4780 = vmatpush1.msra.mxu0 %v4779
    %4781 = vmatprep.subr.mxu0 0.0
    %v4782 = vand.u32 %v4458, 4294901760
    %4783 = vmatpush1.msra.mxu0 %v4782
    %4784 = vmatprep.subr.mxu0 0.0
    %v4785 = vand.u32 %v4457, 4294901760
    %4786 = vmatpush1.msra.mxu0 %v4785
    %4787 = vmatprep.subr.mxu0 0.0
    %4788 = vmatpush2.msra.mxu0 0.0
    %4789 = vmatprep.subr.mxu0 0.0
    %4790 = vmatpush2.msra.mxu0 0.0
    %4791 = vmatprep.subr.mxu0 0.0
    %4792 = vmatpush2.msra.mxu0 0.0
    %4793 = vmatprep.subr.mxu0 0.0
    %4794 = vmatpush2.msra.mxu0 0.0
    %4795 = vmatprep.subr.mxu0 0.0
    %4796 = vmatpush2.msra.mxu0 0.0
    %4797 = vmatprep.subr.mxu0 0.0
    %4798 = vmatpush2.msra.mxu0 0.0
    %4799 = vmatprep.subr.mxu0 0.0
    %4800 = vmatpush2.msra.mxu0 0.0
    %4801 = vmatprep.subr.mxu0 0.0
    %4802 = vmatpush2.msra.mxu0 0.0
    %4803 = vmatprep.subr.mxu0 0.0
    %4804 = vmatpush2.msra.mxu0 0.0
    %4805 = vmatprep.subr.mxu0 0.0
    %4806 = vmatpush2.msra.mxu0 0.0
    %4807 = vmatprep.subr.mxu0 0.0
    %4808 = vmatpush2.msra.mxu0 0.0
    %4809 = vmatprep.subr.mxu0 0.0
    %4810 = vmatpush2.msra.mxu0 0.0
    %4811 = vmatprep.subr.mxu0 0.0
    %4812 = vmatpush2.msra.mxu0 0.0
    %4813 = vmatprep.subr.mxu0 0.0
    %4814 = vmatpush2.msra.mxu0 0.0
    %4815 = vmatprep.subr.mxu0 0.0
    %4816 = vmatpush2.msra.mxu0 0.0
    %4817 = vmatprep.subr.mxu0 0.0
    %4818 = vmatpush2.msra.mxu0 0.0
    %4819 = vmatprep.mubr.f32.mxu0 0.0
    %v4820 = vand.u32 %v2054, 4294901760
    %v4821 = vsub.f32 %v2054, %v4820
    %v4822 = vand.u32 %v4821, 4294901760
    %4823 = vmatmul.mubr.f32.gmra.mxu0 %v4822
    %v4824 = vpop.f32.mrf.mxu0
    %v4825 = vadd.f32 %v4744, %v4824
    %v4826 = vpop.f32.mrf.mxu0
    %4827 = vdwg.mxu0
    %4828 = vmatprep.subr.mxu0 0.0
    %4829 = vmatpush1.msra.mxu0 0.0
    %4830 = vmatprep.subr.mxu0 0.0
    %4831 = vmatpush1.msra.mxu0 0.0
    %4832 = vmatprep.subr.mxu0 0.0
    %4833 = vmatpush1.msra.mxu0 0.0
    %4834 = vmatprep.subr.mxu0 0.0
    %4835 = vmatpush1.msra.mxu0 0.0
    %4836 = vmatprep.subr.mxu0 0.0
    %4837 = vmatpush1.msra.mxu0 0.0
    %4838 = vmatprep.subr.mxu0 0.0
    %4839 = vmatpush1.msra.mxu0 0.0
    %4840 = vmatprep.subr.mxu0 0.0
    %4841 = vmatpush1.msra.mxu0 0.0
    %4842 = vmatprep.subr.mxu0 0.0
    %4843 = vmatpush1.msra.mxu0 0.0
    %4844 = vmatprep.subr.mxu0 0.0
    %v4845 = vand.u32 %v4464, 4294901760
    %v4846 = vsub.f32 %v4464, %v4845
    %v4847 = vand.u32 %v4846, 4294901760
    %4848 = vmatpush1.msra.mxu0 %v4847
    %4849 = vmatprep.subr.mxu0 0.0
    %v4850 = vand.u32 %v4463, 4294901760
    %v4851 = vsub.f32 %v4463, %v4850
    %v4852 = vand.u32 %v4851, 4294901760
    %4853 = vmatpush1.msra.mxu0 %v4852
    %4854 = vmatprep.subr.mxu0 0.0
    %v4855 = vand.u32 %v4462, 4294901760
    %v4856 = vsub.f32 %v4462, %v4855
    %v4857 = vand.u32 %v4856, 4294901760
    %4858 = vmatpush1.msra.mxu0 %v4857
    %4859 = vmatprep.subr.mxu0 0.0
    %v4860 = vand.u32 %v4461, 4294901760
    %v4861 = vsub.f32 %v4461, %v4860
    %v4862 = vand.u32 %v4861, 4294901760
    %4863 = vmatpush1.msra.mxu0 %v4862
    %4864 = vmatprep.subr.mxu0 0.0
    %v4865 = vand.u32 %v4460, 4294901760
    %v4866 = vsub.f32 %v4460, %v4865
    %v4867 = vand.u32 %v4866, 4294901760
    %4868 = vmatpush1.msra.mxu0 %v4867
    %4869 = vmatprep.subr.mxu0 0.0
    %v4870 = vand.u32 %v4459, 4294901760
    %v4871 = vsub.f32 %v4459, %v4870
    %v4872 = vand.u32 %v4871, 4294901760
    %4873 = vmatpush1.msra.mxu0 %v4872
    %4874 = vmatprep.subr.mxu0 0.0
    %v4875 = vand.u32 %v4458, 4294901760
    %v4876 = vsub.f32 %v4458, %v4875
    %v4877 = vand.u32 %v4876, 4294901760
    %4878 = vmatpush1.msra.mxu0 %v4877
    %4879 = vmatprep.subr.mxu0 0.0
    %v4880 = vand.u32 %v4457, 4294901760
    %v4881 = vsub.f32 %v4457, %v4880
    %v4882 = vand.u32 %v4881, 4294901760
    %4883 = vmatpush1.msra.mxu0 %v4882
    %4884 = vmatprep.subr.mxu0 0.0
    %4885 = vmatpush2.msra.mxu0 0.0
    %4886 = vmatprep.subr.mxu0 0.0
    %4887 = vmatpush2.msra.mxu0 0.0
    %4888 = vmatprep.subr.mxu0 0.0
    %4889 = vmatpush2.msra.mxu0 0.0
    %4890 = vmatprep.subr.mxu0 0.0
    %4891 = vmatpush2.msra.mxu0 0.0
    %4892 = vmatprep.subr.mxu0 0.0
    %4893 = vmatpush2.msra.mxu0 0.0
    %4894 = vmatprep.subr.mxu0 0.0
    %4895 = vmatpush2.msra.mxu0 0.0
    %4896 = vmatprep.subr.mxu0 0.0
    %4897 = vmatpush2.msra.mxu0 0.0
    %4898 = vmatprep.subr.mxu0 0.0
    %4899 = vmatpush2.msra.mxu0 0.0
    %4900 = vmatprep.subr.mxu0 0.0
    %4901 = vmatpush2.msra.mxu0 0.0
    %4902 = vmatprep.subr.mxu0 0.0
    %4903 = vmatpush2.msra.mxu0 0.0
    %4904 = vmatprep.subr.mxu0 0.0
    %4905 = vmatpush2.msra.mxu0 0.0
    %4906 = vmatprep.subr.mxu0 0.0
    %4907 = vmatpush2.msra.mxu0 0.0
    %4908 = vmatprep.subr.mxu0 0.0
    %4909 = vmatpush2.msra.mxu0 0.0
    %4910 = vmatprep.subr.mxu0 0.0
    %4911 = vmatpush2.msra.mxu0 0.0
    %4912 = vmatprep.subr.mxu0 0.0
    %4913 = vmatpush2.msra.mxu0 0.0
    %4914 = vmatprep.subr.mxu0 0.0
    %4915 = vmatpush2.msra.mxu0 0.0
    %4916 = vmatprep.mubr.f32.mxu0 0.0
    %v4917 = vand.u32 %v2054, 4294901760
    %4918 = vmatmul.mubr.f32.gmra.mxu0 %v4917
    %v4919 = vpop.f32.mrf.mxu0
    %v4920 = vadd.f32 %v4825, %v4919
    %v4921 = vpop.f32.mrf.mxu0
    %4922 = vdwg.mxu0
    %4923 = vmatprep.subr.mxu0 0.0
    %4924 = vmatpush1.msra.mxu0 0.0
    %4925 = vmatprep.subr.mxu0 0.0
    %4926 = vmatpush1.msra.mxu0 0.0
    %4927 = vmatprep.subr.mxu0 0.0
    %4928 = vmatpush1.msra.mxu0 0.0
    %4929 = vmatprep.subr.mxu0 0.0
    %4930 = vmatpush1.msra.mxu0 0.0
    %4931 = vmatprep.subr.mxu0 0.0
    %4932 = vmatpush1.msra.mxu0 0.0
    %4933 = vmatprep.subr.mxu0 0.0
    %4934 = vmatpush1.msra.mxu0 0.0
    %4935 = vmatprep.subr.mxu0 0.0
    %4936 = vmatpush1.msra.mxu0 0.0
    %4937 = vmatprep.subr.mxu0 0.0
    %4938 = vmatpush1.msra.mxu0 0.0
    %4939 = vmatprep.subr.mxu0 0.0
    %v4940 = vand.u32 %v4464, 4294901760
    %4941 = vmatpush1.msra.mxu0 %v4940
    %4942 = vmatprep.subr.mxu0 0.0
    %v4943 = vand.u32 %v4463, 4294901760
    %4944 = vmatpush1.msra.mxu0 %v4943
    %4945 = vmatprep.subr.mxu0 0.0
    %v4946 = vand.u32 %v4462, 4294901760
    %4947 = vmatpush1.msra.mxu0 %v4946
    %4948 = vmatprep.subr.mxu0 0.0
    %v4949 = vand.u32 %v4461, 4294901760
    %4950 = vmatpush1.msra.mxu0 %v4949
    %4951 = vmatprep.subr.mxu0 0.0
    %v4952 = vand.u32 %v4460, 4294901760
    %4953 = vmatpush1.msra.mxu0 %v4952
    %4954 = vmatprep.subr.mxu0 0.0
    %v4955 = vand.u32 %v4459, 4294901760
    %4956 = vmatpush1.msra.mxu0 %v4955
    %4957 = vmatprep.subr.mxu0 0.0
    %v4958 = vand.u32 %v4458, 4294901760
    %4959 = vmatpush1.msra.mxu0 %v4958
    %4960 = vmatprep.subr.mxu0 0.0
    %v4961 = vand.u32 %v4457, 4294901760
    %4962 = vmatpush1.msra.mxu0 %v4961
    %4963 = vmatprep.subr.mxu0 0.0
    %4964 = vmatpush2.msra.mxu0 0.0
    %4965 = vmatprep.subr.mxu0 0.0
    %4966 = vmatpush2.msra.mxu0 0.0
    %4967 = vmatprep.subr.mxu0 0.0
    %4968 = vmatpush2.msra.mxu0 0.0
    %4969 = vmatprep.subr.mxu0 0.0
    %4970 = vmatpush2.msra.mxu0 0.0
    %4971 = vmatprep.subr.mxu0 0.0
    %4972 = vmatpush2.msra.mxu0 0.0
    %4973 = vmatprep.subr.mxu0 0.0
    %4974 = vmatpush2.msra.mxu0 0.0
    %4975 = vmatprep.subr.mxu0 0.0
    %4976 = vmatpush2.msra.mxu0 0.0
    %4977 = vmatprep.subr.mxu0 0.0
    %4978 = vmatpush2.msra.mxu0 0.0
    %4979 = vmatprep.subr.mxu0 0.0
    %4980 = vmatpush2.msra.mxu0 0.0
    %4981 = vmatprep.subr.mxu0 0.0
    %4982 = vmatpush2.msra.mxu0 0.0
    %4983 = vmatprep.subr.mxu0 0.0
    %4984 = vmatpush2.msra.mxu0 0.0
    %4985 = vmatprep.subr.mxu0 0.0
    %4986 = vmatpush2.msra.mxu0 0.0
    %4987 = vmatprep.subr.mxu0 0.0
    %4988 = vmatpush2.msra.mxu0 0.0
    %4989 = vmatprep.subr.mxu0 0.0
    %4990 = vmatpush2.msra.mxu0 0.0
    %4991 = vmatprep.subr.mxu0 0.0
    %4992 = vmatpush2.msra.mxu0 0.0
    %4993 = vmatprep.subr.mxu0 0.0
    %4994 = vmatpush2.msra.mxu0 0.0
    %4995 = vmatprep.mubr.f32.mxu0 0.0
    %v4996 = vand.u32 %v2054, 4294901760
    %4997 = vmatmul.mubr.f32.gmra.mxu0 %v4996
    %v4998 = vpop.f32.mrf.mxu0
    %v4999 = vadd.f32 %v4920, %v4998
    %v5000 = vpop.f32.mrf.mxu0
    %5001 = vdwg.mxu0
    %v5002 = vxor.u32 %v4999, 2147483648
    %v5003 = vmul.f32 %v5002, 1.442695
    %v5004 = vpow.pop %v5003
    %v5005 = vadd.f32 %v5004, 1.0
    %v5006 = vrcp.pop %v5005
    %v5007 = vmul.f32 1.0, %v5006
    %s5008 = scalar_lea.vmem [#allocation3], 1
    %5009 = vst.msk [vmem:[%s5008] sm:$0x1] %vm2602, %v5007
    %s5010 = scalar_lea.vmem %s0, 256
    %v5011 = vld [vmem:[%s5010] sm:$0xff]
    %v5012 = vld [vmem:[%s5010 + $0x8] sm:$0xff]
    %v5013 = vld [vmem:[%s5010 + $0x10] sm:$0xff]
    %v5014 = vld [vmem:[%s5010 + $0x18] sm:$0xff]
    %v5015 = vld [vmem:[%s5010 + $0x20] sm:$0xff]
    %v5016 = vld [vmem:[%s5010 + $0x28] sm:$0xff]
    %v5017 = vld [vmem:[%s5010 + $0x30] sm:$0xff]
    %v5018 = vld [vmem:[%s5010 + $0x38] sm:$0xff]
    %v5019 = vld [vmem:[%s5010 + $0x40] sm:$0xff]
    %v5020 = vld [vmem:[%s5010 + $0x48] sm:$0xff]
    %v5021 = vld [vmem:[%s5010 + $0x50] sm:$0xff]
    %v5022 = vld [vmem:[%s5010 + $0x58] sm:$0xff]
    %v5023 = vld [vmem:[%s5010 + $0x60] sm:$0xff]
    %v5024 = vld [vmem:[%s5010 + $0x68] sm:$0xff]
    %v5025 = vld [vmem:[%s5010 + $0x70] sm:$0xff]
    %v5026 = vld [vmem:[%s5010 + $0x78] sm:$0xff]
    %v5028 = vsel %vm118, %v5011, 0
    %v5031 = vsel %vm118, %v5012, 0
    %v5034 = vsel %vm118, %v5013, 0
    %v5037 = vsel %vm118, %v5014, 0
    %v5040 = vsel %vm118, %v5015, 0
    %v5043 = vsel %vm118, %v5016, 0
    %v5046 = vsel %vm118, %v5017, 0
    %v5049 = vsel %vm118, %v5018, 0
    %v5052 = vsel %vm118, %v5019, 0
    %v5055 = vsel %vm118, %v5020, 0
    %v5058 = vsel %vm118, %v5021, 0
    %v5061 = vsel %vm118, %v5022, 0
    %v5064 = vsel %vm118, %v5023, 0
    %v5067 = vsel %vm118, %v5024, 0
    %v5070 = vsel %vm118, %v5025, 0
    %v5073 = vsel %vm118, %v5026, 0
    %5075 = vmatprep.subr.mxu0 0.0
    %v5076 = vand.u32 %v5073, 4294901760
    %5077 = vmatpush1.xpose.msra.mxu0 %v5076
    %5078 = vmatprep.subr.mxu0 0.0
    %v5079 = vand.u32 %v5070, 4294901760
    %5080 = vmatpush1.xpose.msra.mxu0 %v5079
    %5081 = vmatprep.subr.mxu0 0.0
    %v5082 = vand.u32 %v5067, 4294901760
    %5083 = vmatpush1.xpose.msra.mxu0 %v5082
    %5084 = vmatprep.subr.mxu0 0.0
    %v5085 = vand.u32 %v5064, 4294901760
    %5086 = vmatpush1.xpose.msra.mxu0 %v5085
    %5087 = vmatprep.subr.mxu0 0.0
    %v5088 = vand.u32 %v5061, 4294901760
    %5089 = vmatpush1.xpose.msra.mxu0 %v5088
    %5090 = vmatprep.subr.mxu0 0.0
    %v5091 = vand.u32 %v5058, 4294901760
    %5092 = vmatpush1.xpose.msra.mxu0 %v5091
    %5093 = vmatprep.subr.mxu0 0.0
    %v5094 = vand.u32 %v5055, 4294901760
    %5095 = vmatpush1.xpose.msra.mxu0 %v5094
    %5096 = vmatprep.subr.mxu0 0.0
    %v5097 = vand.u32 %v5052, 4294901760
    %5098 = vmatpush1.xpose.msra.mxu0 %v5097
    %5099 = vmatprep.subr.mxu0 0.0
    %v5100 = vand.u32 %v5049, 4294901760
    %5101 = vmatpush1.xpose.msra.mxu0 %v5100
    %5102 = vmatprep.subr.mxu0 0.0
    %v5103 = vand.u32 %v5046, 4294901760
    %5104 = vmatpush1.xpose.msra.mxu0 %v5103
    %5105 = vmatprep.subr.mxu0 0.0
    %v5106 = vand.u32 %v5043, 4294901760
    %5107 = vmatpush1.xpose.msra.mxu0 %v5106
    %5108 = vmatprep.subr.mxu0 0.0
    %v5109 = vand.u32 %v5040, 4294901760
    %5110 = vmatpush1.xpose.msra.mxu0 %v5109
    %5111 = vmatprep.subr.mxu0 0.0
    %v5112 = vand.u32 %v5037, 4294901760
    %5113 = vmatpush1.xpose.msra.mxu0 %v5112
    %5114 = vmatprep.subr.mxu0 0.0
    %v5115 = vand.u32 %v5034, 4294901760
    %5116 = vmatpush1.xpose.msra.mxu0 %v5115
    %5117 = vmatprep.subr.mxu0 0.0
    %v5118 = vand.u32 %v5031, 4294901760
    %5119 = vmatpush1.xpose.msra.mxu0 %v5118
    %5120 = vmatprep.subr.mxu0 0.0
    %v5121 = vand.u32 %v5028, 4294901760
    %5122 = vmatpush1.xpose.msra.mxu0 %v5121
    %5123 = vmatprep.subr.mxu0 0.0
    %5124 = vmatpush2.xpose.msra.mxu0 0.0
    %5125 = vmatprep.subr.mxu0 0.0
    %5126 = vmatpush2.xpose.msra.mxu0 0.0
    %5127 = vmatprep.subr.mxu0 0.0
    %5128 = vmatpush2.xpose.msra.mxu0 0.0
    %5129 = vmatprep.subr.mxu0 0.0
    %5130 = vmatpush2.xpose.msra.mxu0 0.0
    %5131 = vmatprep.subr.mxu0 0.0
    %5132 = vmatpush2.xpose.msra.mxu0 0.0
    %5133 = vmatprep.subr.mxu0 0.0
    %5134 = vmatpush2.xpose.msra.mxu0 0.0
    %5135 = vmatprep.subr.mxu0 0.0
    %5136 = vmatpush2.xpose.msra.mxu0 0.0
    %5137 = vmatprep.subr.mxu0 0.0
    %5138 = vmatpush2.xpose.msra.mxu0 0.0
    %5139 = vmatprep.subr.mxu0 0.0
    %5140 = vmatpush2.xpose.msra.mxu0 0.0
    %5141 = vmatprep.subr.mxu0 0.0
    %5142 = vmatpush2.xpose.msra.mxu0 0.0
    %5143 = vmatprep.subr.mxu0 0.0
    %5144 = vmatpush2.xpose.msra.mxu0 0.0
    %5145 = vmatprep.subr.mxu0 0.0
    %5146 = vmatpush2.xpose.msra.mxu0 0.0
    %5147 = vmatprep.subr.mxu0 0.0
    %5148 = vmatpush2.xpose.msra.mxu0 0.0
    %5149 = vmatprep.subr.mxu0 0.0
    %5150 = vmatpush2.xpose.msra.mxu0 0.0
    %5151 = vmatprep.subr.mxu0 0.0
    %5152 = vmatpush2.xpose.msra.mxu0 0.0
    %5153 = vmatprep.subr.mxu0 0.0
    %5154 = vmatpush2.xpose.msra.mxu0 0.0
    %5155 = vmatprep.mubr.f32.mxu0 0.0
    %v5156 = vand.u32 %v120, 4294901760
    %v5157 = vsub.f32 %v120, %v5156
    %v5158 = vand.u32 %v5157, 4294901760
    %v5159 = vsub.f32 %v5157, %v5158
    %v5160 = vand.u32 %v5159, 4294901760
    %5161 = vmatmul.mubr.f32.gmra.mxu0 %v5160
    %v5162 = vpop.f32.mrf.mxu0
    %v5163 = vadd.f32 %v81, %v5162
    %v5164 = vpop.f32.mrf.mxu0
    %5165 = vmatprep.mubr.f32.mxu0 0.0
    %v5166 = vand.u32 %v123, 4294901760
    %v5167 = vsub.f32 %v123, %v5166
    %v5168 = vand.u32 %v5167, 4294901760
    %v5169 = vsub.f32 %v5167, %v5168
    %v5170 = vand.u32 %v5169, 4294901760
    %5171 = vmatmul.mubr.f32.gmra.mxu0 %v5170
    %v5172 = vpop.f32.mrf.mxu0
    %v5173 = vadd.f32 %v86, %v5172
    %v5174 = vpop.f32.mrf.mxu0
    %5175 = vmatprep.mubr.f32.mxu0 0.0
    %v5176 = vand.u32 %v126, 4294901760
    %v5177 = vsub.f32 %v126, %v5176
    %v5178 = vand.u32 %v5177, 4294901760
    %v5179 = vsub.f32 %v5177, %v5178
    %v5180 = vand.u32 %v5179, 4294901760
    %5181 = vmatmul.mubr.f32.gmra.mxu0 %v5180
    %v5182 = vpop.f32.mrf.mxu0
    %v5183 = vadd.f32 %v91, %v5182
    %v5184 = vpop.f32.mrf.mxu0
    %5185 = vmatprep.mubr.f32.mxu0 0.0
    %v5186 = vand.u32 %v129, 4294901760
    %v5187 = vsub.f32 %v129, %v5186
    %v5188 = vand.u32 %v5187, 4294901760
    %v5189 = vsub.f32 %v5187, %v5188
    %v5190 = vand.u32 %v5189, 4294901760
    %5191 = vmatmul.mubr.f32.gmra.mxu0 %v5190
    %v5192 = vpop.f32.mrf.mxu0
    %v5193 = vadd.f32 %v96, %v5192
    %v5194 = vpop.f32.mrf.mxu0
    %5195 = vmatprep.mubr.f32.mxu0 0.0
    %v5196 = vand.u32 %v132, 4294901760
    %v5197 = vsub.f32 %v132, %v5196
    %v5198 = vand.u32 %v5197, 4294901760
    %v5199 = vsub.f32 %v5197, %v5198
    %v5200 = vand.u32 %v5199, 4294901760
    %5201 = vmatmul.mubr.f32.gmra.mxu0 %v5200
    %v5202 = vpop.f32.mrf.mxu0
    %v5203 = vadd.f32 %v101, %v5202
    %v5204 = vpop.f32.mrf.mxu0
    %5205 = vmatprep.mubr.f32.mxu0 0.0
    %v5206 = vand.u32 %v135, 4294901760
    %v5207 = vsub.f32 %v135, %v5206
    %v5208 = vand.u32 %v5207, 4294901760
    %v5209 = vsub.f32 %v5207, %v5208
    %v5210 = vand.u32 %v5209, 4294901760
    %5211 = vmatmul.mubr.f32.gmra.mxu0 %v5210
    %v5212 = vpop.f32.mrf.mxu0
    %v5213 = vadd.f32 %v106, %v5212
    %v5214 = vpop.f32.mrf.mxu0
    %5215 = vmatprep.mubr.f32.mxu0 0.0
    %v5216 = vand.u32 %v138, 4294901760
    %v5217 = vsub.f32 %v138, %v5216
    %v5218 = vand.u32 %v5217, 4294901760
    %v5219 = vsub.f32 %v5217, %v5218
    %v5220 = vand.u32 %v5219, 4294901760
    %5221 = vmatmul.mubr.f32.gmra.mxu0 %v5220
    %v5222 = vpop.f32.mrf.mxu0
    %v5223 = vadd.f32 %v111, %v5222
    %v5224 = vpop.f32.mrf.mxu0
    %5225 = vmatprep.mubr.f32.mxu0 0.0
    %v5226 = vand.u32 %v141, 4294901760
    %v5227 = vsub.f32 %v141, %v5226
    %v5228 = vand.u32 %v5227, 4294901760
    %v5229 = vsub.f32 %v5227, %v5228
    %v5230 = vand.u32 %v5229, 4294901760
    %5231 = vmatmul.mubr.f32.gmra.mxu0 %v5230
    %v5232 = vpop.f32.mrf.mxu0
    %v5233 = vadd.f32 %v116, %v5232
    %v5234 = vpop.f32.mrf.mxu0
    %5235 = vdwg.mxu0
    %5236 = vmatprep.subr.mxu0 0.0
    %v5237 = vand.u32 %v5073, 4294901760
    %v5238 = vsub.f32 %v5073, %v5237
    %v5239 = vand.u32 %v5238, 4294901760
    %v5240 = vsub.f32 %v5238, %v5239
    %v5241 = vand.u32 %v5240, 4294901760
    %5242 = vmatpush1.xpose.msra.mxu0 %v5241
    %5243 = vmatprep.subr.mxu0 0.0
    %v5244 = vand.u32 %v5070, 4294901760
    %v5245 = vsub.f32 %v5070, %v5244
    %v5246 = vand.u32 %v5245, 4294901760
    %v5247 = vsub.f32 %v5245, %v5246
    %v5248 = vand.u32 %v5247, 4294901760
    %5249 = vmatpush1.xpose.msra.mxu0 %v5248
    %5250 = vmatprep.subr.mxu0 0.0
    %v5251 = vand.u32 %v5067, 4294901760
    %v5252 = vsub.f32 %v5067, %v5251
    %v5253 = vand.u32 %v5252, 4294901760
    %v5254 = vsub.f32 %v5252, %v5253
    %v5255 = vand.u32 %v5254, 4294901760
    %5256 = vmatpush1.xpose.msra.mxu0 %v5255
    %5257 = vmatprep.subr.mxu0 0.0
    %v5258 = vand.u32 %v5064, 4294901760
    %v5259 = vsub.f32 %v5064, %v5258
    %v5260 = vand.u32 %v5259, 4294901760
    %v5261 = vsub.f32 %v5259, %v5260
    %v5262 = vand.u32 %v5261, 4294901760
    %5263 = vmatpush1.xpose.msra.mxu0 %v5262
    %5264 = vmatprep.subr.mxu0 0.0
    %v5265 = vand.u32 %v5061, 4294901760
    %v5266 = vsub.f32 %v5061, %v5265
    %v5267 = vand.u32 %v5266, 4294901760
    %v5268 = vsub.f32 %v5266, %v5267
    %v5269 = vand.u32 %v5268, 4294901760
    %5270 = vmatpush1.xpose.msra.mxu0 %v5269
    %5271 = vmatprep.subr.mxu0 0.0
    %v5272 = vand.u32 %v5058, 4294901760
    %v5273 = vsub.f32 %v5058, %v5272
    %v5274 = vand.u32 %v5273, 4294901760
    %v5275 = vsub.f32 %v5273, %v5274
    %v5276 = vand.u32 %v5275, 4294901760
    %5277 = vmatpush1.xpose.msra.mxu0 %v5276
    %5278 = vmatprep.subr.mxu0 0.0
    %v5279 = vand.u32 %v5055, 4294901760
    %v5280 = vsub.f32 %v5055, %v5279
    %v5281 = vand.u32 %v5280, 4294901760
    %v5282 = vsub.f32 %v5280, %v5281
    %v5283 = vand.u32 %v5282, 4294901760
    %5284 = vmatpush1.xpose.msra.mxu0 %v5283
    %5285 = vmatprep.subr.mxu0 0.0
    %v5286 = vand.u32 %v5052, 4294901760
    %v5287 = vsub.f32 %v5052, %v5286
    %v5288 = vand.u32 %v5287, 4294901760
    %v5289 = vsub.f32 %v5287, %v5288
    %v5290 = vand.u32 %v5289, 4294901760
    %5291 = vmatpush1.xpose.msra.mxu0 %v5290
    %5292 = vmatprep.subr.mxu0 0.0
    %v5293 = vand.u32 %v5049, 4294901760
    %v5294 = vsub.f32 %v5049, %v5293
    %v5295 = vand.u32 %v5294, 4294901760
    %v5296 = vsub.f32 %v5294, %v5295
    %v5297 = vand.u32 %v5296, 4294901760
    %5298 = vmatpush1.xpose.msra.mxu0 %v5297
    %5299 = vmatprep.subr.mxu0 0.0
    %v5300 = vand.u32 %v5046, 4294901760
    %v5301 = vsub.f32 %v5046, %v5300
    %v5302 = vand.u32 %v5301, 4294901760
    %v5303 = vsub.f32 %v5301, %v5302
    %v5304 = vand.u32 %v5303, 4294901760
    %5305 = vmatpush1.xpose.msra.mxu0 %v5304
    %5306 = vmatprep.subr.mxu0 0.0
    %v5307 = vand.u32 %v5043, 4294901760
    %v5308 = vsub.f32 %v5043, %v5307
    %v5309 = vand.u32 %v5308, 4294901760
    %v5310 = vsub.f32 %v5308, %v5309
    %v5311 = vand.u32 %v5310, 4294901760
    %5312 = vmatpush1.xpose.msra.mxu0 %v5311
    %5313 = vmatprep.subr.mxu0 0.0
    %v5314 = vand.u32 %v5040, 4294901760
    %v5315 = vsub.f32 %v5040, %v5314
    %v5316 = vand.u32 %v5315, 4294901760
    %v5317 = vsub.f32 %v5315, %v5316
    %v5318 = vand.u32 %v5317, 4294901760
    %5319 = vmatpush1.xpose.msra.mxu0 %v5318
    %5320 = vmatprep.subr.mxu0 0.0
    %v5321 = vand.u32 %v5037, 4294901760
    %v5322 = vsub.f32 %v5037, %v5321
    %v5323 = vand.u32 %v5322, 4294901760
    %v5324 = vsub.f32 %v5322, %v5323
    %v5325 = vand.u32 %v5324, 4294901760
    %5326 = vmatpush1.xpose.msra.mxu0 %v5325
    %5327 = vmatprep.subr.mxu0 0.0
    %v5328 = vand.u32 %v5034, 4294901760
    %v5329 = vsub.f32 %v5034, %v5328
    %v5330 = vand.u32 %v5329, 4294901760
    %v5331 = vsub.f32 %v5329, %v5330
    %v5332 = vand.u32 %v5331, 4294901760
    %5333 = vmatpush1.xpose.msra.mxu0 %v5332
    %5334 = vmatprep.subr.mxu0 0.0
    %v5335 = vand.u32 %v5031, 4294901760
    %v5336 = vsub.f32 %v5031, %v5335
    %v5337 = vand.u32 %v5336, 4294901760
    %v5338 = vsub.f32 %v5336, %v5337
    %v5339 = vand.u32 %v5338, 4294901760
    %5340 = vmatpush1.xpose.msra.mxu0 %v5339
    %5341 = vmatprep.subr.mxu0 0.0
    %v5342 = vand.u32 %v5028, 4294901760
    %v5343 = vsub.f32 %v5028, %v5342
    %v5344 = vand.u32 %v5343, 4294901760
    %v5345 = vsub.f32 %v5343, %v5344
    %v5346 = vand.u32 %v5345, 4294901760
    %5347 = vmatpush1.xpose.msra.mxu0 %v5346
    %5348 = vmatprep.subr.mxu0 0.0
    %5349 = vmatpush2.xpose.msra.mxu0 0.0
    %5350 = vmatprep.subr.mxu0 0.0
    %5351 = vmatpush2.xpose.msra.mxu0 0.0
    %5352 = vmatprep.subr.mxu0 0.0
    %5353 = vmatpush2.xpose.msra.mxu0 0.0
    %5354 = vmatprep.subr.mxu0 0.0
    %5355 = vmatpush2.xpose.msra.mxu0 0.0
    %5356 = vmatprep.subr.mxu0 0.0
    %5357 = vmatpush2.xpose.msra.mxu0 0.0
    %5358 = vmatprep.subr.mxu0 0.0
    %5359 = vmatpush2.xpose.msra.mxu0 0.0
    %5360 = vmatprep.subr.mxu0 0.0
    %5361 = vmatpush2.xpose.msra.mxu0 0.0
    %5362 = vmatprep.subr.mxu0 0.0
    %5363 = vmatpush2.xpose.msra.mxu0 0.0
    %5364 = vmatprep.subr.mxu0 0.0
    %5365 = vmatpush2.xpose.msra.mxu0 0.0
    %5366 = vmatprep.subr.mxu0 0.0
    %5367 = vmatpush2.xpose.msra.mxu0 0.0
    %5368 = vmatprep.subr.mxu0 0.0
    %5369 = vmatpush2.xpose.msra.mxu0 0.0
    %5370 = vmatprep.subr.mxu0 0.0
    %5371 = vmatpush2.xpose.msra.mxu0 0.0
    %5372 = vmatprep.subr.mxu0 0.0
    %5373 = vmatpush2.xpose.msra.mxu0 0.0
    %5374 = vmatprep.subr.mxu0 0.0
    %5375 = vmatpush2.xpose.msra.mxu0 0.0
    %5376 = vmatprep.subr.mxu0 0.0
    %5377 = vmatpush2.xpose.msra.mxu0 0.0
    %5378 = vmatprep.subr.mxu0 0.0
    %5379 = vmatpush2.xpose.msra.mxu0 0.0
    %5380 = vmatprep.mubr.f32.mxu0 0.0
    %v5381 = vand.u32 %v120, 4294901760
    %5382 = vmatmul.mubr.f32.gmra.mxu0 %v5381
    %v5383 = vpop.f32.mrf.mxu0
    %v5384 = vadd.f32 %v5163, %v5383
    %v5385 = vpop.f32.mrf.mxu0
    %5386 = vmatprep.mubr.f32.mxu0 0.0
    %v5387 = vand.u32 %v123, 4294901760
    %5388 = vmatmul.mubr.f32.gmra.mxu0 %v5387
    %v5389 = vpop.f32.mrf.mxu0
    %v5390 = vadd.f32 %v5173, %v5389
    %v5391 = vpop.f32.mrf.mxu0
    %5392 = vmatprep.mubr.f32.mxu0 0.0
    %v5393 = vand.u32 %v126, 4294901760
    %5394 = vmatmul.mubr.f32.gmra.mxu0 %v5393
    %v5395 = vpop.f32.mrf.mxu0
    %v5396 = vadd.f32 %v5183, %v5395
    %v5397 = vpop.f32.mrf.mxu0
    %5398 = vmatprep.mubr.f32.mxu0 0.0
    %v5399 = vand.u32 %v129, 4294901760
    %5400 = vmatmul.mubr.f32.gmra.mxu0 %v5399
    %v5401 = vpop.f32.mrf.mxu0
    %v5402 = vadd.f32 %v5193, %v5401
    %v5403 = vpop.f32.mrf.mxu0
    %5404 = vmatprep.mubr.f32.mxu0 0.0
    %v5405 = vand.u32 %v132, 4294901760
    %5406 = vmatmul.mubr.f32.gmra.mxu0 %v5405
    %v5407 = vpop.f32.mrf.mxu0
    %v5408 = vadd.f32 %v5203, %v5407
    %v5409 = vpop.f32.mrf.mxu0
    %5410 = vmatprep.mubr.f32.mxu0 0.0
    %v5411 = vand.u32 %v135, 4294901760
    %5412 = vmatmul.mubr.f32.gmra.mxu0 %v5411
    %v5413 = vpop.f32.mrf.mxu0
    %v5414 = vadd.f32 %v5213, %v5413
    %v5415 = vpop.f32.mrf.mxu0
    %5416 = vmatprep.mubr.f32.mxu0 0.0
    %v5417 = vand.u32 %v138, 4294901760
    %5418 = vmatmul.mubr.f32.gmra.mxu0 %v5417
    %v5419 = vpop.f32.mrf.mxu0
    %v5420 = vadd.f32 %v5223, %v5419
    %v5421 = vpop.f32.mrf.mxu0
    %5422 = vmatprep.mubr.f32.mxu0 0.0
    %v5423 = vand.u32 %v141, 4294901760
    %5424 = vmatmul.mubr.f32.gmra.mxu0 %v5423
    %v5425 = vpop.f32.mrf.mxu0
    %v5426 = vadd.f32 %v5233, %v5425
    %v5427 = vpop.f32.mrf.mxu0
    %5428 = vdwg.mxu0
    %5429 = vmatprep.subr.mxu0 0.0
    %v5430 = vand.u32 %v5073, 4294901760
    %v5431 = vsub.f32 %v5073, %v5430
    %5432 = vmatpush1.xpose.msra.mxu0 %v5431
    %5433 = vmatprep.subr.mxu0 0.0
    %v5434 = vand.u32 %v5070, 4294901760
    %v5435 = vsub.f32 %v5070, %v5434
    %5436 = vmatpush1.xpose.msra.mxu0 %v5435
    %5437 = vmatprep.subr.mxu0 0.0
    %v5438 = vand.u32 %v5067, 4294901760
    %v5439 = vsub.f32 %v5067, %v5438
    %5440 = vmatpush1.xpose.msra.mxu0 %v5439
    %5441 = vmatprep.subr.mxu0 0.0
    %v5442 = vand.u32 %v5064, 4294901760
    %v5443 = vsub.f32 %v5064, %v5442
    %5444 = vmatpush1.xpose.msra.mxu0 %v5443
    %5445 = vmatprep.subr.mxu0 0.0
    %v5446 = vand.u32 %v5061, 4294901760
    %v5447 = vsub.f32 %v5061, %v5446
    %5448 = vmatpush1.xpose.msra.mxu0 %v5447
    %5449 = vmatprep.subr.mxu0 0.0
    %v5450 = vand.u32 %v5058, 4294901760
    %v5451 = vsub.f32 %v5058, %v5450
    %5452 = vmatpush1.xpose.msra.mxu0 %v5451
    %5453 = vmatprep.subr.mxu0 0.0
    %v5454 = vand.u32 %v5055, 4294901760
    %v5455 = vsub.f32 %v5055, %v5454
    %5456 = vmatpush1.xpose.msra.mxu0 %v5455
    %5457 = vmatprep.subr.mxu0 0.0
    %v5458 = vand.u32 %v5052, 4294901760
    %v5459 = vsub.f32 %v5052, %v5458
    %5460 = vmatpush1.xpose.msra.mxu0 %v5459
    %5461 = vmatprep.subr.mxu0 0.0
    %v5462 = vand.u32 %v5049, 4294901760
    %v5463 = vsub.f32 %v5049, %v5462
    %5464 = vmatpush1.xpose.msra.mxu0 %v5463
    %5465 = vmatprep.subr.mxu0 0.0
    %v5466 = vand.u32 %v5046, 4294901760
    %v5467 = vsub.f32 %v5046, %v5466
    %5468 = vmatpush1.xpose.msra.mxu0 %v5467
    %5469 = vmatprep.subr.mxu0 0.0
    %v5470 = vand.u32 %v5043, 4294901760
    %v5471 = vsub.f32 %v5043, %v5470
    %5472 = vmatpush1.xpose.msra.mxu0 %v5471
    %5473 = vmatprep.subr.mxu0 0.0
    %v5474 = vand.u32 %v5040, 4294901760
    %v5475 = vsub.f32 %v5040, %v5474
    %5476 = vmatpush1.xpose.msra.mxu0 %v5475
    %5477 = vmatprep.subr.mxu0 0.0
    %v5478 = vand.u32 %v5037, 4294901760
    %v5479 = vsub.f32 %v5037, %v5478
    %5480 = vmatpush1.xpose.msra.mxu0 %v5479
    %5481 = vmatprep.subr.mxu0 0.0
    %v5482 = vand.u32 %v5034, 4294901760
    %v5483 = vsub.f32 %v5034, %v5482
    %5484 = vmatpush1.xpose.msra.mxu0 %v5483
    %5485 = vmatprep.subr.mxu0 0.0
    %v5486 = vand.u32 %v5031, 4294901760
    %v5487 = vsub.f32 %v5031, %v5486
    %5488 = vmatpush1.xpose.msra.mxu0 %v5487
    %5489 = vmatprep.subr.mxu0 0.0
    %v5490 = vand.u32 %v5028, 4294901760
    %v5491 = vsub.f32 %v5028, %v5490
    %5492 = vmatpush1.xpose.msra.mxu0 %v5491
    %5493 = vmatprep.subr.mxu0 0.0
    %5494 = vmatpush2.xpose.msra.mxu0 0.0
    %5495 = vmatprep.subr.mxu0 0.0
    %5496 = vmatpush2.xpose.msra.mxu0 0.0
    %5497 = vmatprep.subr.mxu0 0.0
    %5498 = vmatpush2.xpose.msra.mxu0 0.0
    %5499 = vmatprep.subr.mxu0 0.0
    %5500 = vmatpush2.xpose.msra.mxu0 0.0
    %5501 = vmatprep.subr.mxu0 0.0
    %5502 = vmatpush2.xpose.msra.mxu0 0.0
    %5503 = vmatprep.subr.mxu0 0.0
    %5504 = vmatpush2.xpose.msra.mxu0 0.0
    %5505 = vmatprep.subr.mxu0 0.0
    %5506 = vmatpush2.xpose.msra.mxu0 0.0
    %5507 = vmatprep.subr.mxu0 0.0
    %5508 = vmatpush2.xpose.msra.mxu0 0.0
    %5509 = vmatprep.subr.mxu0 0.0
    %5510 = vmatpush2.xpose.msra.mxu0 0.0
    %5511 = vmatprep.subr.mxu0 0.0
    %5512 = vmatpush2.xpose.msra.mxu0 0.0
    %5513 = vmatprep.subr.mxu0 0.0
    %5514 = vmatpush2.xpose.msra.mxu0 0.0
    %5515 = vmatprep.subr.mxu0 0.0
    %5516 = vmatpush2.xpose.msra.mxu0 0.0
    %5517 = vmatprep.subr.mxu0 0.0
    %5518 = vmatpush2.xpose.msra.mxu0 0.0
    %5519 = vmatprep.subr.mxu0 0.0
    %5520 = vmatpush2.xpose.msra.mxu0 0.0
    %5521 = vmatprep.subr.mxu0 0.0
    %5522 = vmatpush2.xpose.msra.mxu0 0.0
    %5523 = vmatprep.subr.mxu0 0.0
    %5524 = vmatpush2.xpose.msra.mxu0 0.0
    %5525 = vmatprep.mubr.f32.mxu0 0.0
    %v5526 = vand.u32 %v120, 4294901760
    %v5527 = vsub.f32 %v120, %v5526
    %5528 = vmatmul.mubr.f32.gmra.mxu0 %v5527
    %v5529 = vpop.f32.mrf.mxu0
    %v5530 = vadd.f32 %v5384, %v5529
    %v5531 = vpop.f32.mrf.mxu0
    %5532 = vmatprep.mubr.f32.mxu0 0.0
    %v5533 = vand.u32 %v123, 4294901760
    %v5534 = vsub.f32 %v123, %v5533
    %5535 = vmatmul.mubr.f32.gmra.mxu0 %v5534
    %v5536 = vpop.f32.mrf.mxu0
    %v5537 = vadd.f32 %v5390, %v5536
    %v5538 = vpop.f32.mrf.mxu0
    %5539 = vmatprep.mubr.f32.mxu0 0.0
    %v5540 = vand.u32 %v126, 4294901760
    %v5541 = vsub.f32 %v126, %v5540
    %5542 = vmatmul.mubr.f32.gmra.mxu0 %v5541
    %v5543 = vpop.f32.mrf.mxu0
    %v5544 = vadd.f32 %v5396, %v5543
    %v5545 = vpop.f32.mrf.mxu0
    %5546 = vmatprep.mubr.f32.mxu0 0.0
    %v5547 = vand.u32 %v129, 4294901760
    %v5548 = vsub.f32 %v129, %v5547
    %5549 = vmatmul.mubr.f32.gmra.mxu0 %v5548
    %v5550 = vpop.f32.mrf.mxu0
    %v5551 = vadd.f32 %v5402, %v5550
    %v5552 = vpop.f32.mrf.mxu0
    %5553 = vmatprep.mubr.f32.mxu0 0.0
    %v5554 = vand.u32 %v132, 4294901760
    %v5555 = vsub.f32 %v132, %v5554
    %5556 = vmatmul.mubr.f32.gmra.mxu0 %v5555
    %v5557 = vpop.f32.mrf.mxu0
    %v5558 = vadd.f32 %v5408, %v5557
    %v5559 = vpop.f32.mrf.mxu0
    %5560 = vmatprep.mubr.f32.mxu0 0.0
    %v5561 = vand.u32 %v135, 4294901760
    %v5562 = vsub.f32 %v135, %v5561
    %5563 = vmatmul.mubr.f32.gmra.mxu0 %v5562
    %v5564 = vpop.f32.mrf.mxu0
    %v5565 = vadd.f32 %v5414, %v5564
    %v5566 = vpop.f32.mrf.mxu0
    %5567 = vmatprep.mubr.f32.mxu0 0.0
    %v5568 = vand.u32 %v138, 4294901760
    %v5569 = vsub.f32 %v138, %v5568
    %5570 = vmatmul.mubr.f32.gmra.mxu0 %v5569
    %v5571 = vpop.f32.mrf.mxu0
    %v5572 = vadd.f32 %v5420, %v5571
    %v5573 = vpop.f32.mrf.mxu0
    %5574 = vmatprep.mubr.f32.mxu0 0.0
    %v5575 = vand.u32 %v141, 4294901760
    %v5576 = vsub.f32 %v141, %v5575
    %5577 = vmatmul.mubr.f32.gmra.mxu0 %v5576
    %v5578 = vpop.f32.mrf.mxu0
    %v5579 = vadd.f32 %v5426, %v5578
    %v5580 = vpop.f32.mrf.mxu0
    %5581 = vdwg.mxu0
    %5582 = vmatprep.subr.mxu0 0.0
    %v5583 = vand.u32 %v5073, 4294901760
    %5584 = vmatpush1.xpose.msra.mxu0 %v5583
    %5585 = vmatprep.subr.mxu0 0.0
    %v5586 = vand.u32 %v5070, 4294901760
    %5587 = vmatpush1.xpose.msra.mxu0 %v5586
    %5588 = vmatprep.subr.mxu0 0.0
    %v5589 = vand.u32 %v5067, 4294901760
    %5590 = vmatpush1.xpose.msra.mxu0 %v5589
    %5591 = vmatprep.subr.mxu0 0.0
    %v5592 = vand.u32 %v5064, 4294901760
    %5593 = vmatpush1.xpose.msra.mxu0 %v5592
    %5594 = vmatprep.subr.mxu0 0.0
    %v5595 = vand.u32 %v5061, 4294901760
    %5596 = vmatpush1.xpose.msra.mxu0 %v5595
    %5597 = vmatprep.subr.mxu0 0.0
    %v5598 = vand.u32 %v5058, 4294901760
    %5599 = vmatpush1.xpose.msra.mxu0 %v5598
    %5600 = vmatprep.subr.mxu0 0.0
    %v5601 = vand.u32 %v5055, 4294901760
    %5602 = vmatpush1.xpose.msra.mxu0 %v5601
    %5603 = vmatprep.subr.mxu0 0.0
    %v5604 = vand.u32 %v5052, 4294901760
    %5605 = vmatpush1.xpose.msra.mxu0 %v5604
    %5606 = vmatprep.subr.mxu0 0.0
    %v5607 = vand.u32 %v5049, 4294901760
    %5608 = vmatpush1.xpose.msra.mxu0 %v5607
    %5609 = vmatprep.subr.mxu0 0.0
    %v5610 = vand.u32 %v5046, 4294901760
    %5611 = vmatpush1.xpose.msra.mxu0 %v5610
    %5612 = vmatprep.subr.mxu0 0.0
    %v5613 = vand.u32 %v5043, 4294901760
    %5614 = vmatpush1.xpose.msra.mxu0 %v5613
    %5615 = vmatprep.subr.mxu0 0.0
    %v5616 = vand.u32 %v5040, 4294901760
    %5617 = vmatpush1.xpose.msra.mxu0 %v5616
    %5618 = vmatprep.subr.mxu0 0.0
    %v5619 = vand.u32 %v5037, 4294901760
    %5620 = vmatpush1.xpose.msra.mxu0 %v5619
    %5621 = vmatprep.subr.mxu0 0.0
    %v5622 = vand.u32 %v5034, 4294901760
    %5623 = vmatpush1.xpose.msra.mxu0 %v5622
    %5624 = vmatprep.subr.mxu0 0.0
    %v5625 = vand.u32 %v5031, 4294901760
    %5626 = vmatpush1.xpose.msra.mxu0 %v5625
    %5627 = vmatprep.subr.mxu0 0.0
    %v5628 = vand.u32 %v5028, 4294901760
    %5629 = vmatpush1.xpose.msra.mxu0 %v5628
    %5630 = vmatprep.subr.mxu0 0.0
    %5631 = vmatpush2.xpose.msra.mxu0 0.0
    %5632 = vmatprep.subr.mxu0 0.0
    %5633 = vmatpush2.xpose.msra.mxu0 0.0
    %5634 = vmatprep.subr.mxu0 0.0
    %5635 = vmatpush2.xpose.msra.mxu0 0.0
    %5636 = vmatprep.subr.mxu0 0.0
    %5637 = vmatpush2.xpose.msra.mxu0 0.0
    %5638 = vmatprep.subr.mxu0 0.0
    %5639 = vmatpush2.xpose.msra.mxu0 0.0
    %5640 = vmatprep.subr.mxu0 0.0
    %5641 = vmatpush2.xpose.msra.mxu0 0.0
    %5642 = vmatprep.subr.mxu0 0.0
    %5643 = vmatpush2.xpose.msra.mxu0 0.0
    %5644 = vmatprep.subr.mxu0 0.0
    %5645 = vmatpush2.xpose.msra.mxu0 0.0
    %5646 = vmatprep.subr.mxu0 0.0
    %5647 = vmatpush2.xpose.msra.mxu0 0.0
    %5648 = vmatprep.subr.mxu0 0.0
    %5649 = vmatpush2.xpose.msra.mxu0 0.0
    %5650 = vmatprep.subr.mxu0 0.0
    %5651 = vmatpush2.xpose.msra.mxu0 0.0
    %5652 = vmatprep.subr.mxu0 0.0
    %5653 = vmatpush2.xpose.msra.mxu0 0.0
    %5654 = vmatprep.subr.mxu0 0.0
    %5655 = vmatpush2.xpose.msra.mxu0 0.0
    %5656 = vmatprep.subr.mxu0 0.0
    %5657 = vmatpush2.xpose.msra.mxu0 0.0
    %5658 = vmatprep.subr.mxu0 0.0
    %5659 = vmatpush2.xpose.msra.mxu0 0.0
    %5660 = vmatprep.subr.mxu0 0.0
    %5661 = vmatpush2.xpose.msra.mxu0 0.0
    %5662 = vmatprep.mubr.f32.mxu0 0.0
    %v5663 = vand.u32 %v120, 4294901760
    %v5664 = vsub.f32 %v120, %v5663
    %v5665 = vand.u32 %v5664, 4294901760
    %5666 = vmatmul.mubr.f32.gmra.mxu0 %v5665
    %v5667 = vpop.f32.mrf.mxu0
    %v5668 = vadd.f32 %v5530, %v5667
    %v5669 = vpop.f32.mrf.mxu0
    %5670 = vmatprep.mubr.f32.mxu0 0.0
    %v5671 = vand.u32 %v123, 4294901760
    %v5672 = vsub.f32 %v123, %v5671
    %v5673 = vand.u32 %v5672, 4294901760
    %5674 = vmatmul.mubr.f32.gmra.mxu0 %v5673
    %v5675 = vpop.f32.mrf.mxu0
    %v5676 = vadd.f32 %v5537, %v5675
    %v5677 = vpop.f32.mrf.mxu0
    %5678 = vmatprep.mubr.f32.mxu0 0.0
    %v5679 = vand.u32 %v126, 4294901760
    %v5680 = vsub.f32 %v126, %v5679
    %v5681 = vand.u32 %v5680, 4294901760
    %5682 = vmatmul.mubr.f32.gmra.mxu0 %v5681
    %v5683 = vpop.f32.mrf.mxu0
    %v5684 = vadd.f32 %v5544, %v5683
    %v5685 = vpop.f32.mrf.mxu0
    %5686 = vmatprep.mubr.f32.mxu0 0.0
    %v5687 = vand.u32 %v129, 4294901760
    %v5688 = vsub.f32 %v129, %v5687
    %v5689 = vand.u32 %v5688, 4294901760
    %5690 = vmatmul.mubr.f32.gmra.mxu0 %v5689
    %v5691 = vpop.f32.mrf.mxu0
    %v5692 = vadd.f32 %v5551, %v5691
    %v5693 = vpop.f32.mrf.mxu0
    %5694 = vmatprep.mubr.f32.mxu0 0.0
    %v5695 = vand.u32 %v132, 4294901760
    %v5696 = vsub.f32 %v132, %v5695
    %v5697 = vand.u32 %v5696, 4294901760
    %5698 = vmatmul.mubr.f32.gmra.mxu0 %v5697
    %v5699 = vpop.f32.mrf.mxu0
    %v5700 = vadd.f32 %v5558, %v5699
    %v5701 = vpop.f32.mrf.mxu0
    %5702 = vmatprep.mubr.f32.mxu0 0.0
    %v5703 = vand.u32 %v135, 4294901760
    %v5704 = vsub.f32 %v135, %v5703
    %v5705 = vand.u32 %v5704, 4294901760
    %5706 = vmatmul.mubr.f32.gmra.mxu0 %v5705
    %v5707 = vpop.f32.mrf.mxu0
    %v5708 = vadd.f32 %v5565, %v5707
    %v5709 = vpop.f32.mrf.mxu0
    %5710 = vmatprep.mubr.f32.mxu0 0.0
    %v5711 = vand.u32 %v138, 4294901760
    %v5712 = vsub.f32 %v138, %v5711
    %v5713 = vand.u32 %v5712, 4294901760
    %5714 = vmatmul.mubr.f32.gmra.mxu0 %v5713
    %v5715 = vpop.f32.mrf.mxu0
    %v5716 = vadd.f32 %v5572, %v5715
    %v5717 = vpop.f32.mrf.mxu0
    %5718 = vmatprep.mubr.f32.mxu0 0.0
    %v5719 = vand.u32 %v141, 4294901760
    %v5720 = vsub.f32 %v141, %v5719
    %v5721 = vand.u32 %v5720, 4294901760
    %5722 = vmatmul.mubr.f32.gmra.mxu0 %v5721
    %v5723 = vpop.f32.mrf.mxu0
    %v5724 = vadd.f32 %v5579, %v5723
    %v5725 = vpop.f32.mrf.mxu0
    %5726 = vdwg.mxu0
    %5727 = vmatprep.subr.mxu0 0.0
    %v5728 = vand.u32 %v5073, 4294901760
    %v5729 = vsub.f32 %v5073, %v5728
    %v5730 = vand.u32 %v5729, 4294901760
    %5731 = vmatpush1.xpose.msra.mxu0 %v5730
    %5732 = vmatprep.subr.mxu0 0.0
    %v5733 = vand.u32 %v5070, 4294901760
    %v5734 = vsub.f32 %v5070, %v5733
    %v5735 = vand.u32 %v5734, 4294901760
    %5736 = vmatpush1.xpose.msra.mxu0 %v5735
    %5737 = vmatprep.subr.mxu0 0.0
    %v5738 = vand.u32 %v5067, 4294901760
    %v5739 = vsub.f32 %v5067, %v5738
    %v5740 = vand.u32 %v5739, 4294901760
    %5741 = vmatpush1.xpose.msra.mxu0 %v5740
    %5742 = vmatprep.subr.mxu0 0.0
    %v5743 = vand.u32 %v5064, 4294901760
    %v5744 = vsub.f32 %v5064, %v5743
    %v5745 = vand.u32 %v5744, 4294901760
    %5746 = vmatpush1.xpose.msra.mxu0 %v5745
    %5747 = vmatprep.subr.mxu0 0.0
    %v5748 = vand.u32 %v5061, 4294901760
    %v5749 = vsub.f32 %v5061, %v5748
    %v5750 = vand.u32 %v5749, 4294901760
    %5751 = vmatpush1.xpose.msra.mxu0 %v5750
    %5752 = vmatprep.subr.mxu0 0.0
    %v5753 = vand.u32 %v5058, 4294901760
    %v5754 = vsub.f32 %v5058, %v5753
    %v5755 = vand.u32 %v5754, 4294901760
    %5756 = vmatpush1.xpose.msra.mxu0 %v5755
    %5757 = vmatprep.subr.mxu0 0.0
    %v5758 = vand.u32 %v5055, 4294901760
    %v5759 = vsub.f32 %v5055, %v5758
    %v5760 = vand.u32 %v5759, 4294901760
    %5761 = vmatpush1.xpose.msra.mxu0 %v5760
    %5762 = vmatprep.subr.mxu0 0.0
    %v5763 = vand.u32 %v5052, 4294901760
    %v5764 = vsub.f32 %v5052, %v5763
    %v5765 = vand.u32 %v5764, 4294901760
    %5766 = vmatpush1.xpose.msra.mxu0 %v5765
    %5767 = vmatprep.subr.mxu0 0.0
    %v5768 = vand.u32 %v5049, 4294901760
    %v5769 = vsub.f32 %v5049, %v5768
    %v5770 = vand.u32 %v5769, 4294901760
    %5771 = vmatpush1.xpose.msra.mxu0 %v5770
    %5772 = vmatprep.subr.mxu0 0.0
    %v5773 = vand.u32 %v5046, 4294901760
    %v5774 = vsub.f32 %v5046, %v5773
    %v5775 = vand.u32 %v5774, 4294901760
    %5776 = vmatpush1.xpose.msra.mxu0 %v5775
    %5777 = vmatprep.subr.mxu0 0.0
    %v5778 = vand.u32 %v5043, 4294901760
    %v5779 = vsub.f32 %v5043, %v5778
    %v5780 = vand.u32 %v5779, 4294901760
    %5781 = vmatpush1.xpose.msra.mxu0 %v5780
    %5782 = vmatprep.subr.mxu0 0.0
    %v5783 = vand.u32 %v5040, 4294901760
    %v5784 = vsub.f32 %v5040, %v5783
    %v5785 = vand.u32 %v5784, 4294901760
    %5786 = vmatpush1.xpose.msra.mxu0 %v5785
    %5787 = vmatprep.subr.mxu0 0.0
    %v5788 = vand.u32 %v5037, 4294901760
    %v5789 = vsub.f32 %v5037, %v5788
    %v5790 = vand.u32 %v5789, 4294901760
    %5791 = vmatpush1.xpose.msra.mxu0 %v5790
    %5792 = vmatprep.subr.mxu0 0.0
    %v5793 = vand.u32 %v5034, 4294901760
    %v5794 = vsub.f32 %v5034, %v5793
    %v5795 = vand.u32 %v5794, 4294901760
    %5796 = vmatpush1.xpose.msra.mxu0 %v5795
    %5797 = vmatprep.subr.mxu0 0.0
    %v5798 = vand.u32 %v5031, 4294901760
    %v5799 = vsub.f32 %v5031, %v5798
    %v5800 = vand.u32 %v5799, 4294901760
    %5801 = vmatpush1.xpose.msra.mxu0 %v5800
    %5802 = vmatprep.subr.mxu0 0.0
    %v5803 = vand.u32 %v5028, 4294901760
    %v5804 = vsub.f32 %v5028, %v5803
    %v5805 = vand.u32 %v5804, 4294901760
    %5806 = vmatpush1.xpose.msra.mxu0 %v5805
    %5807 = vmatprep.subr.mxu0 0.0
    %5808 = vmatpush2.xpose.msra.mxu0 0.0
    %5809 = vmatprep.subr.mxu0 0.0
    %5810 = vmatpush2.xpose.msra.mxu0 0.0
    %5811 = vmatprep.subr.mxu0 0.0
    %5812 = vmatpush2.xpose.msra.mxu0 0.0
    %5813 = vmatprep.subr.mxu0 0.0
    %5814 = vmatpush2.xpose.msra.mxu0 0.0
    %5815 = vmatprep.subr.mxu0 0.0
    %5816 = vmatpush2.xpose.msra.mxu0 0.0
    %5817 = vmatprep.subr.mxu0 0.0
    %5818 = vmatpush2.xpose.msra.mxu0 0.0
    %5819 = vmatprep.subr.mxu0 0.0
    %5820 = vmatpush2.xpose.msra.mxu0 0.0
    %5821 = vmatprep.subr.mxu0 0.0
    %5822 = vmatpush2.xpose.msra.mxu0 0.0
    %5823 = vmatprep.subr.mxu0 0.0
    %5824 = vmatpush2.xpose.msra.mxu0 0.0
    %5825 = vmatprep.subr.mxu0 0.0
    %5826 = vmatpush2.xpose.msra.mxu0 0.0
    %5827 = vmatprep.subr.mxu0 0.0
    %5828 = vmatpush2.xpose.msra.mxu0 0.0
    %5829 = vmatprep.subr.mxu0 0.0
    %5830 = vmatpush2.xpose.msra.mxu0 0.0
    %5831 = vmatprep.subr.mxu0 0.0
    %5832 = vmatpush2.xpose.msra.mxu0 0.0
    %5833 = vmatprep.subr.mxu0 0.0
    %5834 = vmatpush2.xpose.msra.mxu0 0.0
    %5835 = vmatprep.subr.mxu0 0.0
    %5836 = vmatpush2.xpose.msra.mxu0 0.0
    %5837 = vmatprep.subr.mxu0 0.0
    %5838 = vmatpush2.xpose.msra.mxu0 0.0
    %5839 = vmatprep.mubr.f32.mxu0 0.0
    %v5840 = vand.u32 %v120, 4294901760
    %5841 = vmatmul.mubr.f32.gmra.mxu0 %v5840
    %v5842 = vpop.f32.mrf.mxu0
    %v5843 = vadd.f32 %v5668, %v5842
    %v5844 = vpop.f32.mrf.mxu0
    %5845 = vmatprep.mubr.f32.mxu0 0.0
    %v5846 = vand.u32 %v123, 4294901760
    %5847 = vmatmul.mubr.f32.gmra.mxu0 %v5846
    %v5848 = vpop.f32.mrf.mxu0
    %v5849 = vadd.f32 %v5676, %v5848
    %v5850 = vpop.f32.mrf.mxu0
    %5851 = vmatprep.mubr.f32.mxu0 0.0
    %v5852 = vand.u32 %v126, 4294901760
    %5853 = vmatmul.mubr.f32.gmra.mxu0 %v5852
    %v5854 = vpop.f32.mrf.mxu0
    %v5855 = vadd.f32 %v5684, %v5854
    %v5856 = vpop.f32.mrf.mxu0
    %5857 = vmatprep.mubr.f32.mxu0 0.0
    %v5858 = vand.u32 %v129, 4294901760
    %5859 = vmatmul.mubr.f32.gmra.mxu0 %v5858
    %v5860 = vpop.f32.mrf.mxu0
    %v5861 = vadd.f32 %v5692, %v5860
    %v5862 = vpop.f32.mrf.mxu0
    %5863 = vmatprep.mubr.f32.mxu0 0.0
    %v5864 = vand.u32 %v132, 4294901760
    %5865 = vmatmul.mubr.f32.gmra.mxu0 %v5864
    %v5866 = vpop.f32.mrf.mxu0
    %v5867 = vadd.f32 %v5700, %v5866
    %v5868 = vpop.f32.mrf.mxu0
    %5869 = vmatprep.mubr.f32.mxu0 0.0
    %v5870 = vand.u32 %v135, 4294901760
    %5871 = vmatmul.mubr.f32.gmra.mxu0 %v5870
    %v5872 = vpop.f32.mrf.mxu0
    %v5873 = vadd.f32 %v5708, %v5872
    %v5874 = vpop.f32.mrf.mxu0
    %5875 = vmatprep.mubr.f32.mxu0 0.0
    %v5876 = vand.u32 %v138, 4294901760
    %5877 = vmatmul.mubr.f32.gmra.mxu0 %v5876
    %v5878 = vpop.f32.mrf.mxu0
    %v5879 = vadd.f32 %v5716, %v5878
    %v5880 = vpop.f32.mrf.mxu0
    %5881 = vmatprep.mubr.f32.mxu0 0.0
    %v5882 = vand.u32 %v141, 4294901760
    %5883 = vmatmul.mubr.f32.gmra.mxu0 %v5882
    %v5884 = vpop.f32.mrf.mxu0
    %v5885 = vadd.f32 %v5724, %v5884
    %v5886 = vpop.f32.mrf.mxu0
    %5887 = vdwg.mxu0
    %5888 = vmatprep.subr.mxu0 0.0
    %v5889 = vand.u32 %v5073, 4294901760
    %5890 = vmatpush1.xpose.msra.mxu0 %v5889
    %5891 = vmatprep.subr.mxu0 0.0
    %v5892 = vand.u32 %v5070, 4294901760
    %5893 = vmatpush1.xpose.msra.mxu0 %v5892
    %5894 = vmatprep.subr.mxu0 0.0
    %v5895 = vand.u32 %v5067, 4294901760
    %5896 = vmatpush1.xpose.msra.mxu0 %v5895
    %5897 = vmatprep.subr.mxu0 0.0
    %v5898 = vand.u32 %v5064, 4294901760
    %5899 = vmatpush1.xpose.msra.mxu0 %v5898
    %5900 = vmatprep.subr.mxu0 0.0
    %v5901 = vand.u32 %v5061, 4294901760
    %5902 = vmatpush1.xpose.msra.mxu0 %v5901
    %5903 = vmatprep.subr.mxu0 0.0
    %v5904 = vand.u32 %v5058, 4294901760
    %5905 = vmatpush1.xpose.msra.mxu0 %v5904
    %5906 = vmatprep.subr.mxu0 0.0
    %v5907 = vand.u32 %v5055, 4294901760
    %5908 = vmatpush1.xpose.msra.mxu0 %v5907
    %5909 = vmatprep.subr.mxu0 0.0
    %v5910 = vand.u32 %v5052, 4294901760
    %5911 = vmatpush1.xpose.msra.mxu0 %v5910
    %5912 = vmatprep.subr.mxu0 0.0
    %v5913 = vand.u32 %v5049, 4294901760
    %5914 = vmatpush1.xpose.msra.mxu0 %v5913
    %5915 = vmatprep.subr.mxu0 0.0
    %v5916 = vand.u32 %v5046, 4294901760
    %5917 = vmatpush1.xpose.msra.mxu0 %v5916
    %5918 = vmatprep.subr.mxu0 0.0
    %v5919 = vand.u32 %v5043, 4294901760
    %5920 = vmatpush1.xpose.msra.mxu0 %v5919
    %5921 = vmatprep.subr.mxu0 0.0
    %v5922 = vand.u32 %v5040, 4294901760
    %5923 = vmatpush1.xpose.msra.mxu0 %v5922
    %5924 = vmatprep.subr.mxu0 0.0
    %v5925 = vand.u32 %v5037, 4294901760
    %5926 = vmatpush1.xpose.msra.mxu0 %v5925
    %5927 = vmatprep.subr.mxu0 0.0
    %v5928 = vand.u32 %v5034, 4294901760
    %5929 = vmatpush1.xpose.msra.mxu0 %v5928
    %5930 = vmatprep.subr.mxu0 0.0
    %v5931 = vand.u32 %v5031, 4294901760
    %5932 = vmatpush1.xpose.msra.mxu0 %v5931
    %5933 = vmatprep.subr.mxu0 0.0
    %v5934 = vand.u32 %v5028, 4294901760
    %5935 = vmatpush1.xpose.msra.mxu0 %v5934
    %5936 = vmatprep.subr.mxu0 0.0
    %5937 = vmatpush2.xpose.msra.mxu0 0.0
    %5938 = vmatprep.subr.mxu0 0.0
    %5939 = vmatpush2.xpose.msra.mxu0 0.0
    %5940 = vmatprep.subr.mxu0 0.0
    %5941 = vmatpush2.xpose.msra.mxu0 0.0
    %5942 = vmatprep.subr.mxu0 0.0
    %5943 = vmatpush2.xpose.msra.mxu0 0.0
    %5944 = vmatprep.subr.mxu0 0.0
    %5945 = vmatpush2.xpose.msra.mxu0 0.0
    %5946 = vmatprep.subr.mxu0 0.0
    %5947 = vmatpush2.xpose.msra.mxu0 0.0
    %5948 = vmatprep.subr.mxu0 0.0
    %5949 = vmatpush2.xpose.msra.mxu0 0.0
    %5950 = vmatprep.subr.mxu0 0.0
    %5951 = vmatpush2.xpose.msra.mxu0 0.0
    %5952 = vmatprep.subr.mxu0 0.0
    %5953 = vmatpush2.xpose.msra.mxu0 0.0
    %5954 = vmatprep.subr.mxu0 0.0
    %5955 = vmatpush2.xpose.msra.mxu0 0.0
    %5956 = vmatprep.subr.mxu0 0.0
    %5957 = vmatpush2.xpose.msra.mxu0 0.0
    %5958 = vmatprep.subr.mxu0 0.0
    %5959 = vmatpush2.xpose.msra.mxu0 0.0
    %5960 = vmatprep.subr.mxu0 0.0
    %5961 = vmatpush2.xpose.msra.mxu0 0.0
    %5962 = vmatprep.subr.mxu0 0.0
    %5963 = vmatpush2.xpose.msra.mxu0 0.0
    %5964 = vmatprep.subr.mxu0 0.0
    %5965 = vmatpush2.xpose.msra.mxu0 0.0
    %5966 = vmatprep.subr.mxu0 0.0
    %5967 = vmatpush2.xpose.msra.mxu0 0.0
    %5968 = vmatprep.mubr.f32.mxu0 0.0
    %v5969 = vand.u32 %v120, 4294901760
    %5970 = vmatmul.mubr.f32.gmra.mxu0 %v5969
    %v5971 = vpop.f32.mrf.mxu0
    %v5972 = vadd.f32 %v5843, %v5971
    %v5973 = vpop.f32.mrf.mxu0
    %5974 = vmatprep.mubr.f32.mxu0 0.0
    %v5975 = vand.u32 %v123, 4294901760
    %5976 = vmatmul.mubr.f32.gmra.mxu0 %v5975
    %v5977 = vpop.f32.mrf.mxu0
    %v5978 = vadd.f32 %v5849, %v5977
    %v5979 = vpop.f32.mrf.mxu0
    %5980 = vmatprep.mubr.f32.mxu0 0.0
    %v5981 = vand.u32 %v126, 4294901760
    %5982 = vmatmul.mubr.f32.gmra.mxu0 %v5981
    %v5983 = vpop.f32.mrf.mxu0
    %v5984 = vadd.f32 %v5855, %v5983
    %v5985 = vpop.f32.mrf.mxu0
    %5986 = vmatprep.mubr.f32.mxu0 0.0
    %v5987 = vand.u32 %v129, 4294901760
    %5988 = vmatmul.mubr.f32.gmra.mxu0 %v5987
    %v5989 = vpop.f32.mrf.mxu0
    %v5990 = vadd.f32 %v5861, %v5989
    %v5991 = vpop.f32.mrf.mxu0
    %5992 = vmatprep.mubr.f32.mxu0 0.0
    %v5993 = vand.u32 %v132, 4294901760
    %5994 = vmatmul.mubr.f32.gmra.mxu0 %v5993
    %v5995 = vpop.f32.mrf.mxu0
    %v5996 = vadd.f32 %v5867, %v5995
    %v5997 = vpop.f32.mrf.mxu0
    %5998 = vmatprep.mubr.f32.mxu0 0.0
    %v5999 = vand.u32 %v135, 4294901760
    %6000 = vmatmul.mubr.f32.gmra.mxu0 %v5999
    %v6001 = vpop.f32.mrf.mxu0
    %v6002 = vadd.f32 %v5873, %v6001
    %v6003 = vpop.f32.mrf.mxu0
    %6004 = vmatprep.mubr.f32.mxu0 0.0
    %v6005 = vand.u32 %v138, 4294901760
    %6006 = vmatmul.mubr.f32.gmra.mxu0 %v6005
    %v6007 = vpop.f32.mrf.mxu0
    %v6008 = vadd.f32 %v5879, %v6007
    %v6009 = vpop.f32.mrf.mxu0
    %6010 = vmatprep.mubr.f32.mxu0 0.0
    %v6011 = vand.u32 %v141, 4294901760
    %6012 = vmatmul.mubr.f32.gmra.mxu0 %v6011
    %v6013 = vpop.f32.mrf.mxu0
    %v6014 = vadd.f32 %v5885, %v6013
    %v6015 = vpop.f32.mrf.mxu0
    %6016 = vdwg.mxu0
    %v6017 = vmax.f32 %v5972, 0.0
    %v6018 = vmax.f32 %v5978, 0.0
    %v6019 = vmax.f32 %v5984, 0.0
    %v6020 = vmax.f32 %v5990, 0.0
    %v6021 = vmax.f32 %v5996, 0.0
    %v6022 = vmax.f32 %v6002, 0.0
    %v6023 = vmax.f32 %v6008, 0.0
    %v6024 = vmax.f32 %v6014, 0.0
    %6025 = vmatprep.subr.mxu0 0.0
    %6026 = vmatpush1.msra.mxu0 0.0
    %6027 = vmatprep.subr.mxu0 0.0
    %6028 = vmatpush1.msra.mxu0 0.0
    %6029 = vmatprep.subr.mxu0 0.0
    %6030 = vmatpush1.msra.mxu0 0.0
    %6031 = vmatprep.subr.mxu0 0.0
    %6032 = vmatpush1.msra.mxu0 0.0
    %6033 = vmatprep.subr.mxu0 0.0
    %6034 = vmatpush1.msra.mxu0 0.0
    %6035 = vmatprep.subr.mxu0 0.0
    %6036 = vmatpush1.msra.mxu0 0.0
    %6037 = vmatprep.subr.mxu0 0.0
    %6038 = vmatpush1.msra.mxu0 0.0
    %6039 = vmatprep.subr.mxu0 0.0
    %6040 = vmatpush1.msra.mxu0 0.0
    %6041 = vmatprep.subr.mxu0 0.0
    %v6042 = vand.u32 %v6024, 4294901760
    %6043 = vmatpush1.msra.mxu0 %v6042
    %6044 = vmatprep.subr.mxu0 0.0
    %v6045 = vand.u32 %v6023, 4294901760
    %6046 = vmatpush1.msra.mxu0 %v6045
    %6047 = vmatprep.subr.mxu0 0.0
    %v6048 = vand.u32 %v6022, 4294901760
    %6049 = vmatpush1.msra.mxu0 %v6048
    %6050 = vmatprep.subr.mxu0 0.0
    %v6051 = vand.u32 %v6021, 4294901760
    %6052 = vmatpush1.msra.mxu0 %v6051
    %6053 = vmatprep.subr.mxu0 0.0
    %v6054 = vand.u32 %v6020, 4294901760
    %6055 = vmatpush1.msra.mxu0 %v6054
    %6056 = vmatprep.subr.mxu0 0.0
    %v6057 = vand.u32 %v6019, 4294901760
    %6058 = vmatpush1.msra.mxu0 %v6057
    %6059 = vmatprep.subr.mxu0 0.0
    %v6060 = vand.u32 %v6018, 4294901760
    %6061 = vmatpush1.msra.mxu0 %v6060
    %6062 = vmatprep.subr.mxu0 0.0
    %v6063 = vand.u32 %v6017, 4294901760
    %6064 = vmatpush1.msra.mxu0 %v6063
    %6065 = vmatprep.subr.mxu0 0.0
    %6066 = vmatpush2.msra.mxu0 0.0
    %6067 = vmatprep.subr.mxu0 0.0
    %6068 = vmatpush2.msra.mxu0 0.0
    %6069 = vmatprep.subr.mxu0 0.0
    %6070 = vmatpush2.msra.mxu0 0.0
    %6071 = vmatprep.subr.mxu0 0.0
    %6072 = vmatpush2.msra.mxu0 0.0
    %6073 = vmatprep.subr.mxu0 0.0
    %6074 = vmatpush2.msra.mxu0 0.0
    %6075 = vmatprep.subr.mxu0 0.0
    %6076 = vmatpush2.msra.mxu0 0.0
    %6077 = vmatprep.subr.mxu0 0.0
    %6078 = vmatpush2.msra.mxu0 0.0
    %6079 = vmatprep.subr.mxu0 0.0
    %6080 = vmatpush2.msra.mxu0 0.0
    %6081 = vmatprep.subr.mxu0 0.0
    %6082 = vmatpush2.msra.mxu0 0.0
    %6083 = vmatprep.subr.mxu0 0.0
    %6084 = vmatpush2.msra.mxu0 0.0
    %6085 = vmatprep.subr.mxu0 0.0
    %6086 = vmatpush2.msra.mxu0 0.0
    %6087 = vmatprep.subr.mxu0 0.0
    %6088 = vmatpush2.msra.mxu0 0.0
    %6089 = vmatprep.subr.mxu0 0.0
    %6090 = vmatpush2.msra.mxu0 0.0
    %6091 = vmatprep.subr.mxu0 0.0
    %6092 = vmatpush2.msra.mxu0 0.0
    %6093 = vmatprep.subr.mxu0 0.0
    %6094 = vmatpush2.msra.mxu0 0.0
    %6095 = vmatprep.subr.mxu0 0.0
    %6096 = vmatpush2.msra.mxu0 0.0
    %6097 = vmatprep.mubr.f32.mxu0 0.0
    %v6098 = vand.u32 %v1183, 4294901760
    %v6099 = vsub.f32 %v1183, %v6098
    %v6100 = vand.u32 %v6099, 4294901760
    %v6101 = vsub.f32 %v6099, %v6100
    %v6102 = vand.u32 %v6101, 4294901760
    %6103 = vmatmul.mubr.f32.gmra.mxu0 %v6102
    %v6104 = vpop.f32.mrf.mxu0
    %v6105 = vadd.f32 %v1144, %v6104
    %v6106 = vpop.f32.mrf.mxu0
    %6107 = vmatprep.mubr.f32.mxu0 0.0
    %v6108 = vand.u32 %v1186, 4294901760
    %v6109 = vsub.f32 %v1186, %v6108
    %v6110 = vand.u32 %v6109, 4294901760
    %v6111 = vsub.f32 %v6109, %v6110
    %v6112 = vand.u32 %v6111, 4294901760
    %6113 = vmatmul.mubr.f32.gmra.mxu0 %v6112
    %v6114 = vpop.f32.mrf.mxu0
    %v6115 = vadd.f32 %v1149, %v6114
    %v6116 = vpop.f32.mrf.mxu0
    %6117 = vmatprep.mubr.f32.mxu0 0.0
    %v6118 = vand.u32 %v1189, 4294901760
    %v6119 = vsub.f32 %v1189, %v6118
    %v6120 = vand.u32 %v6119, 4294901760
    %v6121 = vsub.f32 %v6119, %v6120
    %v6122 = vand.u32 %v6121, 4294901760
    %6123 = vmatmul.mubr.f32.gmra.mxu0 %v6122
    %v6124 = vpop.f32.mrf.mxu0
    %v6125 = vadd.f32 %v1154, %v6124
    %v6126 = vpop.f32.mrf.mxu0
    %6127 = vmatprep.mubr.f32.mxu0 0.0
    %v6128 = vand.u32 %v1192, 4294901760
    %v6129 = vsub.f32 %v1192, %v6128
    %v6130 = vand.u32 %v6129, 4294901760
    %v6131 = vsub.f32 %v6129, %v6130
    %v6132 = vand.u32 %v6131, 4294901760
    %6133 = vmatmul.mubr.f32.gmra.mxu0 %v6132
    %v6134 = vpop.f32.mrf.mxu0
    %v6135 = vadd.f32 %v1159, %v6134
    %v6136 = vpop.f32.mrf.mxu0
    %6137 = vmatprep.mubr.f32.mxu0 0.0
    %v6138 = vand.u32 %v1195, 4294901760
    %v6139 = vsub.f32 %v1195, %v6138
    %v6140 = vand.u32 %v6139, 4294901760
    %v6141 = vsub.f32 %v6139, %v6140
    %v6142 = vand.u32 %v6141, 4294901760
    %6143 = vmatmul.mubr.f32.gmra.mxu0 %v6142
    %v6144 = vpop.f32.mrf.mxu0
    %v6145 = vadd.f32 %v1164, %v6144
    %v6146 = vpop.f32.mrf.mxu0
    %6147 = vmatprep.mubr.f32.mxu0 0.0
    %v6148 = vand.u32 %v1198, 4294901760
    %v6149 = vsub.f32 %v1198, %v6148
    %v6150 = vand.u32 %v6149, 4294901760
    %v6151 = vsub.f32 %v6149, %v6150
    %v6152 = vand.u32 %v6151, 4294901760
    %6153 = vmatmul.mubr.f32.gmra.mxu0 %v6152
    %v6154 = vpop.f32.mrf.mxu0
    %v6155 = vadd.f32 %v1169, %v6154
    %v6156 = vpop.f32.mrf.mxu0
    %6157 = vmatprep.mubr.f32.mxu0 0.0
    %v6158 = vand.u32 %v1201, 4294901760
    %v6159 = vsub.f32 %v1201, %v6158
    %v6160 = vand.u32 %v6159, 4294901760
    %v6161 = vsub.f32 %v6159, %v6160
    %v6162 = vand.u32 %v6161, 4294901760
    %6163 = vmatmul.mubr.f32.gmra.mxu0 %v6162
    %v6164 = vpop.f32.mrf.mxu0
    %v6165 = vadd.f32 %v1174, %v6164
    %v6166 = vpop.f32.mrf.mxu0
    %6167 = vmatprep.mubr.f32.mxu0 0.0
    %v6168 = vand.u32 %v1204, 4294901760
    %v6169 = vsub.f32 %v1204, %v6168
    %v6170 = vand.u32 %v6169, 4294901760
    %v6171 = vsub.f32 %v6169, %v6170
    %v6172 = vand.u32 %v6171, 4294901760
    %6173 = vmatmul.mubr.f32.gmra.mxu0 %v6172
    %v6174 = vpop.f32.mrf.mxu0
    %v6175 = vadd.f32 %v1179, %v6174
    %v6176 = vpop.f32.mrf.mxu0
    %6177 = vdwg.mxu0
    %6178 = vmatprep.subr.mxu0 0.0
    %6179 = vmatpush1.msra.mxu0 0.0
    %6180 = vmatprep.subr.mxu0 0.0
    %6181 = vmatpush1.msra.mxu0 0.0
    %6182 = vmatprep.subr.mxu0 0.0
    %6183 = vmatpush1.msra.mxu0 0.0
    %6184 = vmatprep.subr.mxu0 0.0
    %6185 = vmatpush1.msra.mxu0 0.0
    %6186 = vmatprep.subr.mxu0 0.0
    %6187 = vmatpush1.msra.mxu0 0.0
    %6188 = vmatprep.subr.mxu0 0.0
    %6189 = vmatpush1.msra.mxu0 0.0
    %6190 = vmatprep.subr.mxu0 0.0
    %6191 = vmatpush1.msra.mxu0 0.0
    %6192 = vmatprep.subr.mxu0 0.0
    %6193 = vmatpush1.msra.mxu0 0.0
    %6194 = vmatprep.subr.mxu0 0.0
    %v6195 = vand.u32 %v6024, 4294901760
    %v6196 = vsub.f32 %v6024, %v6195
    %v6197 = vand.u32 %v6196, 4294901760
    %v6198 = vsub.f32 %v6196, %v6197
    %v6199 = vand.u32 %v6198, 4294901760
    %6200 = vmatpush1.msra.mxu0 %v6199
    %6201 = vmatprep.subr.mxu0 0.0
    %v6202 = vand.u32 %v6023, 4294901760
    %v6203 = vsub.f32 %v6023, %v6202
    %v6204 = vand.u32 %v6203, 4294901760
    %v6205 = vsub.f32 %v6203, %v6204
    %v6206 = vand.u32 %v6205, 4294901760
    %6207 = vmatpush1.msra.mxu0 %v6206
    %6208 = vmatprep.subr.mxu0 0.0
    %v6209 = vand.u32 %v6022, 4294901760
    %v6210 = vsub.f32 %v6022, %v6209
    %v6211 = vand.u32 %v6210, 4294901760
    %v6212 = vsub.f32 %v6210, %v6211
    %v6213 = vand.u32 %v6212, 4294901760
    %6214 = vmatpush1.msra.mxu0 %v6213
    %6215 = vmatprep.subr.mxu0 0.0
    %v6216 = vand.u32 %v6021, 4294901760
    %v6217 = vsub.f32 %v6021, %v6216
    %v6218 = vand.u32 %v6217, 4294901760
    %v6219 = vsub.f32 %v6217, %v6218
    %v6220 = vand.u32 %v6219, 4294901760
    %6221 = vmatpush1.msra.mxu0 %v6220
    %6222 = vmatprep.subr.mxu0 0.0
    %v6223 = vand.u32 %v6020, 4294901760
    %v6224 = vsub.f32 %v6020, %v6223
    %v6225 = vand.u32 %v6224, 4294901760
    %v6226 = vsub.f32 %v6224, %v6225
    %v6227 = vand.u32 %v6226, 4294901760
    %6228 = vmatpush1.msra.mxu0 %v6227
    %6229 = vmatprep.subr.mxu0 0.0
    %v6230 = vand.u32 %v6019, 4294901760
    %v6231 = vsub.f32 %v6019, %v6230
    %v6232 = vand.u32 %v6231, 4294901760
    %v6233 = vsub.f32 %v6231, %v6232
    %v6234 = vand.u32 %v6233, 4294901760
    %6235 = vmatpush1.msra.mxu0 %v6234
    %6236 = vmatprep.subr.mxu0 0.0
    %v6237 = vand.u32 %v6018, 4294901760
    %v6238 = vsub.f32 %v6018, %v6237
    %v6239 = vand.u32 %v6238, 4294901760
    %v6240 = vsub.f32 %v6238, %v6239
    %v6241 = vand.u32 %v6240, 4294901760
    %6242 = vmatpush1.msra.mxu0 %v6241
    %6243 = vmatprep.subr.mxu0 0.0
    %v6244 = vand.u32 %v6017, 4294901760
    %v6245 = vsub.f32 %v6017, %v6244
    %v6246 = vand.u32 %v6245, 4294901760
    %v6247 = vsub.f32 %v6245, %v6246
    %v6248 = vand.u32 %v6247, 4294901760
    %6249 = vmatpush1.msra.mxu0 %v6248
    %6250 = vmatprep.subr.mxu0 0.0
    %6251 = vmatpush2.msra.mxu0 0.0
    %6252 = vmatprep.subr.mxu0 0.0
    %6253 = vmatpush2.msra.mxu0 0.0
    %6254 = vmatprep.subr.mxu0 0.0
    %6255 = vmatpush2.msra.mxu0 0.0
    %6256 = vmatprep.subr.mxu0 0.0
    %6257 = vmatpush2.msra.mxu0 0.0
    %6258 = vmatprep.subr.mxu0 0.0
    %6259 = vmatpush2.msra.mxu0 0.0
    %6260 = vmatprep.subr.mxu0 0.0
    %6261 = vmatpush2.msra.mxu0 0.0
    %6262 = vmatprep.subr.mxu0 0.0
    %6263 = vmatpush2.msra.mxu0 0.0
    %6264 = vmatprep.subr.mxu0 0.0
    %6265 = vmatpush2.msra.mxu0 0.0
    %6266 = vmatprep.subr.mxu0 0.0
    %6267 = vmatpush2.msra.mxu0 0.0
    %6268 = vmatprep.subr.mxu0 0.0
    %6269 = vmatpush2.msra.mxu0 0.0
    %6270 = vmatprep.subr.mxu0 0.0
    %6271 = vmatpush2.msra.mxu0 0.0
    %6272 = vmatprep.subr.mxu0 0.0
    %6273 = vmatpush2.msra.mxu0 0.0
    %6274 = vmatprep.subr.mxu0 0.0
    %6275 = vmatpush2.msra.mxu0 0.0
    %6276 = vmatprep.subr.mxu0 0.0
    %6277 = vmatpush2.msra.mxu0 0.0
    %6278 = vmatprep.subr.mxu0 0.0
    %6279 = vmatpush2.msra.mxu0 0.0
    %6280 = vmatprep.subr.mxu0 0.0
    %6281 = vmatpush2.msra.mxu0 0.0
    %6282 = vmatprep.mubr.f32.mxu0 0.0
    %v6283 = vand.u32 %v1183, 4294901760
    %6284 = vmatmul.mubr.f32.gmra.mxu0 %v6283
    %v6285 = vpop.f32.mrf.mxu0
    %v6286 = vadd.f32 %v6105, %v6285
    %v6287 = vpop.f32.mrf.mxu0
    %6288 = vmatprep.mubr.f32.mxu0 0.0
    %v6289 = vand.u32 %v1186, 4294901760
    %6290 = vmatmul.mubr.f32.gmra.mxu0 %v6289
    %v6291 = vpop.f32.mrf.mxu0
    %v6292 = vadd.f32 %v6115, %v6291
    %v6293 = vpop.f32.mrf.mxu0
    %6294 = vmatprep.mubr.f32.mxu0 0.0
    %v6295 = vand.u32 %v1189, 4294901760
    %6296 = vmatmul.mubr.f32.gmra.mxu0 %v6295
    %v6297 = vpop.f32.mrf.mxu0
    %v6298 = vadd.f32 %v6125, %v6297
    %v6299 = vpop.f32.mrf.mxu0
    %6300 = vmatprep.mubr.f32.mxu0 0.0
    %v6301 = vand.u32 %v1192, 4294901760
    %6302 = vmatmul.mubr.f32.gmra.mxu0 %v6301
    %v6303 = vpop.f32.mrf.mxu0
    %v6304 = vadd.f32 %v6135, %v6303
    %v6305 = vpop.f32.mrf.mxu0
    %6306 = vmatprep.mubr.f32.mxu0 0.0
    %v6307 = vand.u32 %v1195, 4294901760
    %6308 = vmatmul.mubr.f32.gmra.mxu0 %v6307
    %v6309 = vpop.f32.mrf.mxu0
    %v6310 = vadd.f32 %v6145, %v6309
    %v6311 = vpop.f32.mrf.mxu0
    %6312 = vmatprep.mubr.f32.mxu0 0.0
    %v6313 = vand.u32 %v1198, 4294901760
    %6314 = vmatmul.mubr.f32.gmra.mxu0 %v6313
    %v6315 = vpop.f32.mrf.mxu0
    %v6316 = vadd.f32 %v6155, %v6315
    %v6317 = vpop.f32.mrf.mxu0
    %6318 = vmatprep.mubr.f32.mxu0 0.0
    %v6319 = vand.u32 %v1201, 4294901760
    %6320 = vmatmul.mubr.f32.gmra.mxu0 %v6319
    %v6321 = vpop.f32.mrf.mxu0
    %v6322 = vadd.f32 %v6165, %v6321
    %v6323 = vpop.f32.mrf.mxu0
    %6324 = vmatprep.mubr.f32.mxu0 0.0
    %v6325 = vand.u32 %v1204, 4294901760
    %6326 = vmatmul.mubr.f32.gmra.mxu0 %v6325
    %v6327 = vpop.f32.mrf.mxu0
    %v6328 = vadd.f32 %v6175, %v6327
    %v6329 = vpop.f32.mrf.mxu0
    %6330 = vdwg.mxu0
    %6331 = vmatprep.subr.mxu0 0.0
    %6332 = vmatpush1.msra.mxu0 0.0
    %6333 = vmatprep.subr.mxu0 0.0
    %6334 = vmatpush1.msra.mxu0 0.0
    %6335 = vmatprep.subr.mxu0 0.0
    %6336 = vmatpush1.msra.mxu0 0.0
    %6337 = vmatprep.subr.mxu0 0.0
    %6338 = vmatpush1.msra.mxu0 0.0
    %6339 = vmatprep.subr.mxu0 0.0
    %6340 = vmatpush1.msra.mxu0 0.0
    %6341 = vmatprep.subr.mxu0 0.0
    %6342 = vmatpush1.msra.mxu0 0.0
    %6343 = vmatprep.subr.mxu0 0.0
    %6344 = vmatpush1.msra.mxu0 0.0
    %6345 = vmatprep.subr.mxu0 0.0
    %6346 = vmatpush1.msra.mxu0 0.0
    %6347 = vmatprep.subr.mxu0 0.0
    %v6348 = vand.u32 %v6024, 4294901760
    %v6349 = vsub.f32 %v6024, %v6348
    %6350 = vmatpush1.msra.mxu0 %v6349
    %6351 = vmatprep.subr.mxu0 0.0
    %v6352 = vand.u32 %v6023, 4294901760
    %v6353 = vsub.f32 %v6023, %v6352
    %6354 = vmatpush1.msra.mxu0 %v6353
    %6355 = vmatprep.subr.mxu0 0.0
    %v6356 = vand.u32 %v6022, 4294901760
    %v6357 = vsub.f32 %v6022, %v6356
    %6358 = vmatpush1.msra.mxu0 %v6357
    %6359 = vmatprep.subr.mxu0 0.0
    %v6360 = vand.u32 %v6021, 4294901760
    %v6361 = vsub.f32 %v6021, %v6360
    %6362 = vmatpush1.msra.mxu0 %v6361
    %6363 = vmatprep.subr.mxu0 0.0
    %v6364 = vand.u32 %v6020, 4294901760
    %v6365 = vsub.f32 %v6020, %v6364
    %6366 = vmatpush1.msra.mxu0 %v6365
    %6367 = vmatprep.subr.mxu0 0.0
    %v6368 = vand.u32 %v6019, 4294901760
    %v6369 = vsub.f32 %v6019, %v6368
    %6370 = vmatpush1.msra.mxu0 %v6369
    %6371 = vmatprep.subr.mxu0 0.0
    %v6372 = vand.u32 %v6018, 4294901760
    %v6373 = vsub.f32 %v6018, %v6372
    %6374 = vmatpush1.msra.mxu0 %v6373
    %6375 = vmatprep.subr.mxu0 0.0
    %v6376 = vand.u32 %v6017, 4294901760
    %v6377 = vsub.f32 %v6017, %v6376
    %6378 = vmatpush1.msra.mxu0 %v6377
    %6379 = vmatprep.subr.mxu0 0.0
    %6380 = vmatpush2.msra.mxu0 0.0
    %6381 = vmatprep.subr.mxu0 0.0
    %6382 = vmatpush2.msra.mxu0 0.0
    %6383 = vmatprep.subr.mxu0 0.0
    %6384 = vmatpush2.msra.mxu0 0.0
    %6385 = vmatprep.subr.mxu0 0.0
    %6386 = vmatpush2.msra.mxu0 0.0
    %6387 = vmatprep.subr.mxu0 0.0
    %6388 = vmatpush2.msra.mxu0 0.0
    %6389 = vmatprep.subr.mxu0 0.0
    %6390 = vmatpush2.msra.mxu0 0.0
    %6391 = vmatprep.subr.mxu0 0.0
    %6392 = vmatpush2.msra.mxu0 0.0
    %6393 = vmatprep.subr.mxu0 0.0
    %6394 = vmatpush2.msra.mxu0 0.0
    %6395 = vmatprep.subr.mxu0 0.0
    %6396 = vmatpush2.msra.mxu0 0.0
    %6397 = vmatprep.subr.mxu0 0.0
    %6398 = vmatpush2.msra.mxu0 0.0
    %6399 = vmatprep.subr.mxu0 0.0
    %6400 = vmatpush2.msra.mxu0 0.0
    %6401 = vmatprep.subr.mxu0 0.0
    %6402 = vmatpush2.msra.mxu0 0.0
    %6403 = vmatprep.subr.mxu0 0.0
    %6404 = vmatpush2.msra.mxu0 0.0
    %6405 = vmatprep.subr.mxu0 0.0
    %6406 = vmatpush2.msra.mxu0 0.0
    %6407 = vmatprep.subr.mxu0 0.0
    %6408 = vmatpush2.msra.mxu0 0.0
    %6409 = vmatprep.subr.mxu0 0.0
    %6410 = vmatpush2.msra.mxu0 0.0
    %6411 = vmatprep.mubr.f32.mxu0 0.0
    %v6412 = vand.u32 %v1183, 4294901760
    %v6413 = vsub.f32 %v1183, %v6412
    %6414 = vmatmul.mubr.f32.gmra.mxu0 %v6413
    %v6415 = vpop.f32.mrf.mxu0
    %v6416 = vadd.f32 %v6286, %v6415
    %v6417 = vpop.f32.mrf.mxu0
    %6418 = vmatprep.mubr.f32.mxu0 0.0
    %v6419 = vand.u32 %v1186, 4294901760
    %v6420 = vsub.f32 %v1186, %v6419
    %6421 = vmatmul.mubr.f32.gmra.mxu0 %v6420
    %v6422 = vpop.f32.mrf.mxu0
    %v6423 = vadd.f32 %v6292, %v6422
    %v6424 = vpop.f32.mrf.mxu0
    %6425 = vmatprep.mubr.f32.mxu0 0.0
    %v6426 = vand.u32 %v1189, 4294901760
    %v6427 = vsub.f32 %v1189, %v6426
    %6428 = vmatmul.mubr.f32.gmra.mxu0 %v6427
    %v6429 = vpop.f32.mrf.mxu0
    %v6430 = vadd.f32 %v6298, %v6429
    %v6431 = vpop.f32.mrf.mxu0
    %6432 = vmatprep.mubr.f32.mxu0 0.0
    %v6433 = vand.u32 %v1192, 4294901760
    %v6434 = vsub.f32 %v1192, %v6433
    %6435 = vmatmul.mubr.f32.gmra.mxu0 %v6434
    %v6436 = vpop.f32.mrf.mxu0
    %v6437 = vadd.f32 %v6304, %v6436
    %v6438 = vpop.f32.mrf.mxu0
    %6439 = vmatprep.mubr.f32.mxu0 0.0
    %v6440 = vand.u32 %v1195, 4294901760
    %v6441 = vsub.f32 %v1195, %v6440
    %6442 = vmatmul.mubr.f32.gmra.mxu0 %v6441
    %v6443 = vpop.f32.mrf.mxu0
    %v6444 = vadd.f32 %v6310, %v6443
    %v6445 = vpop.f32.mrf.mxu0
    %6446 = vmatprep.mubr.f32.mxu0 0.0
    %v6447 = vand.u32 %v1198, 4294901760
    %v6448 = vsub.f32 %v1198, %v6447
    %6449 = vmatmul.mubr.f32.gmra.mxu0 %v6448
    %v6450 = vpop.f32.mrf.mxu0
    %v6451 = vadd.f32 %v6316, %v6450
    %v6452 = vpop.f32.mrf.mxu0
    %6453 = vmatprep.mubr.f32.mxu0 0.0
    %v6454 = vand.u32 %v1201, 4294901760
    %v6455 = vsub.f32 %v1201, %v6454
    %6456 = vmatmul.mubr.f32.gmra.mxu0 %v6455
    %v6457 = vpop.f32.mrf.mxu0
    %v6458 = vadd.f32 %v6322, %v6457
    %v6459 = vpop.f32.mrf.mxu0
    %6460 = vmatprep.mubr.f32.mxu0 0.0
    %v6461 = vand.u32 %v1204, 4294901760
    %v6462 = vsub.f32 %v1204, %v6461
    %6463 = vmatmul.mubr.f32.gmra.mxu0 %v6462
    %v6464 = vpop.f32.mrf.mxu0
    %v6465 = vadd.f32 %v6328, %v6464
    %v6466 = vpop.f32.mrf.mxu0
    %6467 = vdwg.mxu0
    %6468 = vmatprep.subr.mxu0 0.0
    %6469 = vmatpush1.msra.mxu0 0.0
    %6470 = vmatprep.subr.mxu0 0.0
    %6471 = vmatpush1.msra.mxu0 0.0
    %6472 = vmatprep.subr.mxu0 0.0
    %6473 = vmatpush1.msra.mxu0 0.0
    %6474 = vmatprep.subr.mxu0 0.0
    %6475 = vmatpush1.msra.mxu0 0.0
    %6476 = vmatprep.subr.mxu0 0.0
    %6477 = vmatpush1.msra.mxu0 0.0
    %6478 = vmatprep.subr.mxu0 0.0
    %6479 = vmatpush1.msra.mxu0 0.0
    %6480 = vmatprep.subr.mxu0 0.0
    %6481 = vmatpush1.msra.mxu0 0.0
    %6482 = vmatprep.subr.mxu0 0.0
    %6483 = vmatpush1.msra.mxu0 0.0
    %6484 = vmatprep.subr.mxu0 0.0
    %v6485 = vand.u32 %v6024, 4294901760
    %6486 = vmatpush1.msra.mxu0 %v6485
    %6487 = vmatprep.subr.mxu0 0.0
    %v6488 = vand.u32 %v6023, 4294901760
    %6489 = vmatpush1.msra.mxu0 %v6488
    %6490 = vmatprep.subr.mxu0 0.0
    %v6491 = vand.u32 %v6022, 4294901760
    %6492 = vmatpush1.msra.mxu0 %v6491
    %6493 = vmatprep.subr.mxu0 0.0
    %v6494 = vand.u32 %v6021, 4294901760
    %6495 = vmatpush1.msra.mxu0 %v6494
    %6496 = vmatprep.subr.mxu0 0.0
    %v6497 = vand.u32 %v6020, 4294901760
    %6498 = vmatpush1.msra.mxu0 %v6497
    %6499 = vmatprep.subr.mxu0 0.0
    %v6500 = vand.u32 %v6019, 4294901760
    %6501 = vmatpush1.msra.mxu0 %v6500
    %6502 = vmatprep.subr.mxu0 0.0
    %v6503 = vand.u32 %v6018, 4294901760
    %6504 = vmatpush1.msra.mxu0 %v6503
    %6505 = vmatprep.subr.mxu0 0.0
    %v6506 = vand.u32 %v6017, 4294901760
    %6507 = vmatpush1.msra.mxu0 %v6506
    %6508 = vmatprep.subr.mxu0 0.0
    %6509 = vmatpush2.msra.mxu0 0.0
    %6510 = vmatprep.subr.mxu0 0.0
    %6511 = vmatpush2.msra.mxu0 0.0
    %6512 = vmatprep.subr.mxu0 0.0
    %6513 = vmatpush2.msra.mxu0 0.0
    %6514 = vmatprep.subr.mxu0 0.0
    %6515 = vmatpush2.msra.mxu0 0.0
    %6516 = vmatprep.subr.mxu0 0.0
    %6517 = vmatpush2.msra.mxu0 0.0
    %6518 = vmatprep.subr.mxu0 0.0
    %6519 = vmatpush2.msra.mxu0 0.0
    %6520 = vmatprep.subr.mxu0 0.0
    %6521 = vmatpush2.msra.mxu0 0.0
    %6522 = vmatprep.subr.mxu0 0.0
    %6523 = vmatpush2.msra.mxu0 0.0
    %6524 = vmatprep.subr.mxu0 0.0
    %6525 = vmatpush2.msra.mxu0 0.0
    %6526 = vmatprep.subr.mxu0 0.0
    %6527 = vmatpush2.msra.mxu0 0.0
    %6528 = vmatprep.subr.mxu0 0.0
    %6529 = vmatpush2.msra.mxu0 0.0
    %6530 = vmatprep.subr.mxu0 0.0
    %6531 = vmatpush2.msra.mxu0 0.0
    %6532 = vmatprep.subr.mxu0 0.0
    %6533 = vmatpush2.msra.mxu0 0.0
    %6534 = vmatprep.subr.mxu0 0.0
    %6535 = vmatpush2.msra.mxu0 0.0
    %6536 = vmatprep.subr.mxu0 0.0
    %6537 = vmatpush2.msra.mxu0 0.0
    %6538 = vmatprep.subr.mxu0 0.0
    %6539 = vmatpush2.msra.mxu0 0.0
    %6540 = vmatprep.mubr.f32.mxu0 0.0
    %v6541 = vand.u32 %v1183, 4294901760
    %v6542 = vsub.f32 %v1183, %v6541
    %v6543 = vand.u32 %v6542, 4294901760
    %6544 = vmatmul.mubr.f32.gmra.mxu0 %v6543
    %v6545 = vpop.f32.mrf.mxu0
    %v6546 = vadd.f32 %v6416, %v6545
    %v6547 = vpop.f32.mrf.mxu0
    %6548 = vmatprep.mubr.f32.mxu0 0.0
    %v6549 = vand.u32 %v1186, 4294901760
    %v6550 = vsub.f32 %v1186, %v6549
    %v6551 = vand.u32 %v6550, 4294901760
    %6552 = vmatmul.mubr.f32.gmra.mxu0 %v6551
    %v6553 = vpop.f32.mrf.mxu0
    %v6554 = vadd.f32 %v6423, %v6553
    %v6555 = vpop.f32.mrf.mxu0
    %6556 = vmatprep.mubr.f32.mxu0 0.0
    %v6557 = vand.u32 %v1189, 4294901760
    %v6558 = vsub.f32 %v1189, %v6557
    %v6559 = vand.u32 %v6558, 4294901760
    %6560 = vmatmul.mubr.f32.gmra.mxu0 %v6559
    %v6561 = vpop.f32.mrf.mxu0
    %v6562 = vadd.f32 %v6430, %v6561
    %v6563 = vpop.f32.mrf.mxu0
    %6564 = vmatprep.mubr.f32.mxu0 0.0
    %v6565 = vand.u32 %v1192, 4294901760
    %v6566 = vsub.f32 %v1192, %v6565
    %v6567 = vand.u32 %v6566, 4294901760
    %6568 = vmatmul.mubr.f32.gmra.mxu0 %v6567
    %v6569 = vpop.f32.mrf.mxu0
    %v6570 = vadd.f32 %v6437, %v6569
    %v6571 = vpop.f32.mrf.mxu0
    %6572 = vmatprep.mubr.f32.mxu0 0.0
    %v6573 = vand.u32 %v1195, 4294901760
    %v6574 = vsub.f32 %v1195, %v6573
    %v6575 = vand.u32 %v6574, 4294901760
    %6576 = vmatmul.mubr.f32.gmra.mxu0 %v6575
    %v6577 = vpop.f32.mrf.mxu0
    %v6578 = vadd.f32 %v6444, %v6577
    %v6579 = vpop.f32.mrf.mxu0
    %6580 = vmatprep.mubr.f32.mxu0 0.0
    %v6581 = vand.u32 %v1198, 4294901760
    %v6582 = vsub.f32 %v1198, %v6581
    %v6583 = vand.u32 %v6582, 4294901760
    %6584 = vmatmul.mubr.f32.gmra.mxu0 %v6583
    %v6585 = vpop.f32.mrf.mxu0
    %v6586 = vadd.f32 %v6451, %v6585
    %v6587 = vpop.f32.mrf.mxu0
    %6588 = vmatprep.mubr.f32.mxu0 0.0
    %v6589 = vand.u32 %v1201, 4294901760
    %v6590 = vsub.f32 %v1201, %v6589
    %v6591 = vand.u32 %v6590, 4294901760
    %6592 = vmatmul.mubr.f32.gmra.mxu0 %v6591
    %v6593 = vpop.f32.mrf.mxu0
    %v6594 = vadd.f32 %v6458, %v6593
    %v6595 = vpop.f32.mrf.mxu0
    %6596 = vmatprep.mubr.f32.mxu0 0.0
    %v6597 = vand.u32 %v1204, 4294901760
    %v6598 = vsub.f32 %v1204, %v6597
    %v6599 = vand.u32 %v6598, 4294901760
    %6600 = vmatmul.mubr.f32.gmra.mxu0 %v6599
    %v6601 = vpop.f32.mrf.mxu0
    %v6602 = vadd.f32 %v6465, %v6601
    %v6603 = vpop.f32.mrf.mxu0
    %6604 = vdwg.mxu0
    %6605 = vmatprep.subr.mxu0 0.0
    %6606 = vmatpush1.msra.mxu0 0.0
    %6607 = vmatprep.subr.mxu0 0.0
    %6608 = vmatpush1.msra.mxu0 0.0
    %6609 = vmatprep.subr.mxu0 0.0
    %6610 = vmatpush1.msra.mxu0 0.0
    %6611 = vmatprep.subr.mxu0 0.0
    %6612 = vmatpush1.msra.mxu0 0.0
    %6613 = vmatprep.subr.mxu0 0.0
    %6614 = vmatpush1.msra.mxu0 0.0
    %6615 = vmatprep.subr.mxu0 0.0
    %6616 = vmatpush1.msra.mxu0 0.0
    %6617 = vmatprep.subr.mxu0 0.0
    %6618 = vmatpush1.msra.mxu0 0.0
    %6619 = vmatprep.subr.mxu0 0.0
    %6620 = vmatpush1.msra.mxu0 0.0
    %6621 = vmatprep.subr.mxu0 0.0
    %v6622 = vand.u32 %v6024, 4294901760
    %v6623 = vsub.f32 %v6024, %v6622
    %v6624 = vand.u32 %v6623, 4294901760
    %6625 = vmatpush1.msra.mxu0 %v6624
    %6626 = vmatprep.subr.mxu0 0.0
    %v6627 = vand.u32 %v6023, 4294901760
    %v6628 = vsub.f32 %v6023, %v6627
    %v6629 = vand.u32 %v6628, 4294901760
    %6630 = vmatpush1.msra.mxu0 %v6629
    %6631 = vmatprep.subr.mxu0 0.0
    %v6632 = vand.u32 %v6022, 4294901760
    %v6633 = vsub.f32 %v6022, %v6632
    %v6634 = vand.u32 %v6633, 4294901760
    %6635 = vmatpush1.msra.mxu0 %v6634
    %6636 = vmatprep.subr.mxu0 0.0
    %v6637 = vand.u32 %v6021, 4294901760
    %v6638 = vsub.f32 %v6021, %v6637
    %v6639 = vand.u32 %v6638, 4294901760
    %6640 = vmatpush1.msra.mxu0 %v6639
    %6641 = vmatprep.subr.mxu0 0.0
    %v6642 = vand.u32 %v6020, 4294901760
    %v6643 = vsub.f32 %v6020, %v6642
    %v6644 = vand.u32 %v6643, 4294901760
    %6645 = vmatpush1.msra.mxu0 %v6644
    %6646 = vmatprep.subr.mxu0 0.0
    %v6647 = vand.u32 %v6019, 4294901760
    %v6648 = vsub.f32 %v6019, %v6647
    %v6649 = vand.u32 %v6648, 4294901760
    %6650 = vmatpush1.msra.mxu0 %v6649
    %6651 = vmatprep.subr.mxu0 0.0
    %v6652 = vand.u32 %v6018, 4294901760
    %v6653 = vsub.f32 %v6018, %v6652
    %v6654 = vand.u32 %v6653, 4294901760
    %6655 = vmatpush1.msra.mxu0 %v6654
    %6656 = vmatprep.subr.mxu0 0.0
    %v6657 = vand.u32 %v6017, 4294901760
    %v6658 = vsub.f32 %v6017, %v6657
    %v6659 = vand.u32 %v6658, 4294901760
    %6660 = vmatpush1.msra.mxu0 %v6659
    %6661 = vmatprep.subr.mxu0 0.0
    %6662 = vmatpush2.msra.mxu0 0.0
    %6663 = vmatprep.subr.mxu0 0.0
    %6664 = vmatpush2.msra.mxu0 0.0
    %6665 = vmatprep.subr.mxu0 0.0
    %6666 = vmatpush2.msra.mxu0 0.0
    %6667 = vmatprep.subr.mxu0 0.0
    %6668 = vmatpush2.msra.mxu0 0.0
    %6669 = vmatprep.subr.mxu0 0.0
    %6670 = vmatpush2.msra.mxu0 0.0
    %6671 = vmatprep.subr.mxu0 0.0
    %6672 = vmatpush2.msra.mxu0 0.0
    %6673 = vmatprep.subr.mxu0 0.0
    %6674 = vmatpush2.msra.mxu0 0.0
    %6675 = vmatprep.subr.mxu0 0.0
    %6676 = vmatpush2.msra.mxu0 0.0
    %6677 = vmatprep.subr.mxu0 0.0
    %6678 = vmatpush2.msra.mxu0 0.0
    %6679 = vmatprep.subr.mxu0 0.0
    %6680 = vmatpush2.msra.mxu0 0.0
    %6681 = vmatprep.subr.mxu0 0.0
    %6682 = vmatpush2.msra.mxu0 0.0
    %6683 = vmatprep.subr.mxu0 0.0
    %6684 = vmatpush2.msra.mxu0 0.0
    %6685 = vmatprep.subr.mxu0 0.0
    %6686 = vmatpush2.msra.mxu0 0.0
    %6687 = vmatprep.subr.mxu0 0.0
    %6688 = vmatpush2.msra.mxu0 0.0
    %6689 = vmatprep.subr.mxu0 0.0
    %6690 = vmatpush2.msra.mxu0 0.0
    %6691 = vmatprep.subr.mxu0 0.0
    %6692 = vmatpush2.msra.mxu0 0.0
    %6693 = vmatprep.mubr.f32.mxu0 0.0
    %v6694 = vand.u32 %v1183, 4294901760
    %6695 = vmatmul.mubr.f32.gmra.mxu0 %v6694
    %v6696 = vpop.f32.mrf.mxu0
    %v6697 = vadd.f32 %v6546, %v6696
    %v6698 = vpop.f32.mrf.mxu0
    %6699 = vmatprep.mubr.f32.mxu0 0.0
    %v6700 = vand.u32 %v1186, 4294901760
    %6701 = vmatmul.mubr.f32.gmra.mxu0 %v6700
    %v6702 = vpop.f32.mrf.mxu0
    %v6703 = vadd.f32 %v6554, %v6702
    %v6704 = vpop.f32.mrf.mxu0
    %6705 = vmatprep.mubr.f32.mxu0 0.0
    %v6706 = vand.u32 %v1189, 4294901760
    %6707 = vmatmul.mubr.f32.gmra.mxu0 %v6706
    %v6708 = vpop.f32.mrf.mxu0
    %v6709 = vadd.f32 %v6562, %v6708
    %v6710 = vpop.f32.mrf.mxu0
    %6711 = vmatprep.mubr.f32.mxu0 0.0
    %v6712 = vand.u32 %v1192, 4294901760
    %6713 = vmatmul.mubr.f32.gmra.mxu0 %v6712
    %v6714 = vpop.f32.mrf.mxu0
    %v6715 = vadd.f32 %v6570, %v6714
    %v6716 = vpop.f32.mrf.mxu0
    %6717 = vmatprep.mubr.f32.mxu0 0.0
    %v6718 = vand.u32 %v1195, 4294901760
    %6719 = vmatmul.mubr.f32.gmra.mxu0 %v6718
    %v6720 = vpop.f32.mrf.mxu0
    %v6721 = vadd.f32 %v6578, %v6720
    %v6722 = vpop.f32.mrf.mxu0
    %6723 = vmatprep.mubr.f32.mxu0 0.0
    %v6724 = vand.u32 %v1198, 4294901760
    %6725 = vmatmul.mubr.f32.gmra.mxu0 %v6724
    %v6726 = vpop.f32.mrf.mxu0
    %v6727 = vadd.f32 %v6586, %v6726
    %v6728 = vpop.f32.mrf.mxu0
    %6729 = vmatprep.mubr.f32.mxu0 0.0
    %v6730 = vand.u32 %v1201, 4294901760
    %6731 = vmatmul.mubr.f32.gmra.mxu0 %v6730
    %v6732 = vpop.f32.mrf.mxu0
    %v6733 = vadd.f32 %v6594, %v6732
    %v6734 = vpop.f32.mrf.mxu0
    %6735 = vmatprep.mubr.f32.mxu0 0.0
    %v6736 = vand.u32 %v1204, 4294901760
    %6737 = vmatmul.mubr.f32.gmra.mxu0 %v6736
    %v6738 = vpop.f32.mrf.mxu0
    %v6739 = vadd.f32 %v6602, %v6738
    %v6740 = vpop.f32.mrf.mxu0
    %6741 = vdwg.mxu0
    %6742 = vmatprep.subr.mxu0 0.0
    %6743 = vmatpush1.msra.mxu0 0.0
    %6744 = vmatprep.subr.mxu0 0.0
    %6745 = vmatpush1.msra.mxu0 0.0
    %6746 = vmatprep.subr.mxu0 0.0
    %6747 = vmatpush1.msra.mxu0 0.0
    %6748 = vmatprep.subr.mxu0 0.0
    %6749 = vmatpush1.msra.mxu0 0.0
    %6750 = vmatprep.subr.mxu0 0.0
    %6751 = vmatpush1.msra.mxu0 0.0
    %6752 = vmatprep.subr.mxu0 0.0
    %6753 = vmatpush1.msra.mxu0 0.0
    %6754 = vmatprep.subr.mxu0 0.0
    %6755 = vmatpush1.msra.mxu0 0.0
    %6756 = vmatprep.subr.mxu0 0.0
    %6757 = vmatpush1.msra.mxu0 0.0
    %6758 = vmatprep.subr.mxu0 0.0
    %v6759 = vand.u32 %v6024, 4294901760
    %6760 = vmatpush1.msra.mxu0 %v6759
    %6761 = vmatprep.subr.mxu0 0.0
    %v6762 = vand.u32 %v6023, 4294901760
    %6763 = vmatpush1.msra.mxu0 %v6762
    %6764 = vmatprep.subr.mxu0 0.0
    %v6765 = vand.u32 %v6022, 4294901760
    %6766 = vmatpush1.msra.mxu0 %v6765
    %6767 = vmatprep.subr.mxu0 0.0
    %v6768 = vand.u32 %v6021, 4294901760
    %6769 = vmatpush1.msra.mxu0 %v6768
    %6770 = vmatprep.subr.mxu0 0.0
    %v6771 = vand.u32 %v6020, 4294901760
    %6772 = vmatpush1.msra.mxu0 %v6771
    %6773 = vmatprep.subr.mxu0 0.0
    %v6774 = vand.u32 %v6019, 4294901760
    %6775 = vmatpush1.msra.mxu0 %v6774
    %6776 = vmatprep.subr.mxu0 0.0
    %v6777 = vand.u32 %v6018, 4294901760
    %6778 = vmatpush1.msra.mxu0 %v6777
    %6779 = vmatprep.subr.mxu0 0.0
    %v6780 = vand.u32 %v6017, 4294901760
    %6781 = vmatpush1.msra.mxu0 %v6780
    %6782 = vmatprep.subr.mxu0 0.0
    %6783 = vmatpush2.msra.mxu0 0.0
    %6784 = vmatprep.subr.mxu0 0.0
    %6785 = vmatpush2.msra.mxu0 0.0
    %6786 = vmatprep.subr.mxu0 0.0
    %6787 = vmatpush2.msra.mxu0 0.0
    %6788 = vmatprep.subr.mxu0 0.0
    %6789 = vmatpush2.msra.mxu0 0.0
    %6790 = vmatprep.subr.mxu0 0.0
    %6791 = vmatpush2.msra.mxu0 0.0
    %6792 = vmatprep.subr.mxu0 0.0
    %6793 = vmatpush2.msra.mxu0 0.0
    %6794 = vmatprep.subr.mxu0 0.0
    %6795 = vmatpush2.msra.mxu0 0.0
    %6796 = vmatprep.subr.mxu0 0.0
    %6797 = vmatpush2.msra.mxu0 0.0
    %6798 = vmatprep.subr.mxu0 0.0
    %6799 = vmatpush2.msra.mxu0 0.0
    %6800 = vmatprep.subr.mxu0 0.0
    %6801 = vmatpush2.msra.mxu0 0.0
    %6802 = vmatprep.subr.mxu0 0.0
    %6803 = vmatpush2.msra.mxu0 0.0
    %6804 = vmatprep.subr.mxu0 0.0
    %6805 = vmatpush2.msra.mxu0 0.0
    %6806 = vmatprep.subr.mxu0 0.0
    %6807 = vmatpush2.msra.mxu0 0.0
    %6808 = vmatprep.subr.mxu0 0.0
    %6809 = vmatpush2.msra.mxu0 0.0
    %6810 = vmatprep.subr.mxu0 0.0
    %6811 = vmatpush2.msra.mxu0 0.0
    %6812 = vmatprep.subr.mxu0 0.0
    %6813 = vmatpush2.msra.mxu0 0.0
    %6814 = vmatprep.mubr.f32.mxu0 0.0
    %v6815 = vand.u32 %v1183, 4294901760
    %6816 = vmatmul.mubr.f32.gmra.mxu0 %v6815
    %v6817 = vpop.f32.mrf.mxu0
    %v6818 = vadd.f32 %v6697, %v6817
    %v6819 = vpop.f32.mrf.mxu0
    %6820 = vmatprep.mubr.f32.mxu0 0.0
    %v6821 = vand.u32 %v1186, 4294901760
    %6822 = vmatmul.mubr.f32.gmra.mxu0 %v6821
    %v6823 = vpop.f32.mrf.mxu0
    %v6824 = vadd.f32 %v6703, %v6823
    %v6825 = vpop.f32.mrf.mxu0
    %6826 = vmatprep.mubr.f32.mxu0 0.0
    %v6827 = vand.u32 %v1189, 4294901760
    %6828 = vmatmul.mubr.f32.gmra.mxu0 %v6827
    %v6829 = vpop.f32.mrf.mxu0
    %v6830 = vadd.f32 %v6709, %v6829
    %v6831 = vpop.f32.mrf.mxu0
    %6832 = vmatprep.mubr.f32.mxu0 0.0
    %v6833 = vand.u32 %v1192, 4294901760
    %6834 = vmatmul.mubr.f32.gmra.mxu0 %v6833
    %v6835 = vpop.f32.mrf.mxu0
    %v6836 = vadd.f32 %v6715, %v6835
    %v6837 = vpop.f32.mrf.mxu0
    %6838 = vmatprep.mubr.f32.mxu0 0.0
    %v6839 = vand.u32 %v1195, 4294901760
    %6840 = vmatmul.mubr.f32.gmra.mxu0 %v6839
    %v6841 = vpop.f32.mrf.mxu0
    %v6842 = vadd.f32 %v6721, %v6841
    %v6843 = vpop.f32.mrf.mxu0
    %6844 = vmatprep.mubr.f32.mxu0 0.0
    %v6845 = vand.u32 %v1198, 4294901760
    %6846 = vmatmul.mubr.f32.gmra.mxu0 %v6845
    %v6847 = vpop.f32.mrf.mxu0
    %v6848 = vadd.f32 %v6727, %v6847
    %v6849 = vpop.f32.mrf.mxu0
    %6850 = vmatprep.mubr.f32.mxu0 0.0
    %v6851 = vand.u32 %v1201, 4294901760
    %6852 = vmatmul.mubr.f32.gmra.mxu0 %v6851
    %v6853 = vpop.f32.mrf.mxu0
    %v6854 = vadd.f32 %v6733, %v6853
    %v6855 = vpop.f32.mrf.mxu0
    %6856 = vmatprep.mubr.f32.mxu0 0.0
    %v6857 = vand.u32 %v1204, 4294901760
    %6858 = vmatmul.mubr.f32.gmra.mxu0 %v6857
    %v6859 = vpop.f32.mrf.mxu0
    %v6860 = vadd.f32 %v6739, %v6859
    %v6861 = vpop.f32.mrf.mxu0
    %6862 = vdwg.mxu0
    %v6863 = vmax.f32 %v6818, 0.0
    %v6864 = vmax.f32 %v6824, 0.0
    %v6865 = vmax.f32 %v6830, 0.0
    %v6866 = vmax.f32 %v6836, 0.0
    %v6867 = vmax.f32 %v6842, 0.0
    %v6868 = vmax.f32 %v6848, 0.0
    %v6869 = vmax.f32 %v6854, 0.0
    %v6870 = vmax.f32 %v6860, 0.0
    %6871 = vmatprep.subr.mxu0 0.0
    %6872 = vmatpush1.msra.mxu0 0.0
    %6873 = vmatprep.subr.mxu0 0.0
    %6874 = vmatpush1.msra.mxu0 0.0
    %6875 = vmatprep.subr.mxu0 0.0
    %6876 = vmatpush1.msra.mxu0 0.0
    %6877 = vmatprep.subr.mxu0 0.0
    %6878 = vmatpush1.msra.mxu0 0.0
    %6879 = vmatprep.subr.mxu0 0.0
    %6880 = vmatpush1.msra.mxu0 0.0
    %6881 = vmatprep.subr.mxu0 0.0
    %6882 = vmatpush1.msra.mxu0 0.0
    %6883 = vmatprep.subr.mxu0 0.0
    %6884 = vmatpush1.msra.mxu0 0.0
    %6885 = vmatprep.subr.mxu0 0.0
    %6886 = vmatpush1.msra.mxu0 0.0
    %6887 = vmatprep.subr.mxu0 0.0
    %v6888 = vand.u32 %v6870, 4294901760
    %6889 = vmatpush1.msra.mxu0 %v6888
    %6890 = vmatprep.subr.mxu0 0.0
    %v6891 = vand.u32 %v6869, 4294901760
    %6892 = vmatpush1.msra.mxu0 %v6891
    %6893 = vmatprep.subr.mxu0 0.0
    %v6894 = vand.u32 %v6868, 4294901760
    %6895 = vmatpush1.msra.mxu0 %v6894
    %6896 = vmatprep.subr.mxu0 0.0
    %v6897 = vand.u32 %v6867, 4294901760
    %6898 = vmatpush1.msra.mxu0 %v6897
    %6899 = vmatprep.subr.mxu0 0.0
    %v6900 = vand.u32 %v6866, 4294901760
    %6901 = vmatpush1.msra.mxu0 %v6900
    %6902 = vmatprep.subr.mxu0 0.0
    %v6903 = vand.u32 %v6865, 4294901760
    %6904 = vmatpush1.msra.mxu0 %v6903
    %6905 = vmatprep.subr.mxu0 0.0
    %v6906 = vand.u32 %v6864, 4294901760
    %6907 = vmatpush1.msra.mxu0 %v6906
    %6908 = vmatprep.subr.mxu0 0.0
    %v6909 = vand.u32 %v6863, 4294901760
    %6910 = vmatpush1.msra.mxu0 %v6909
    %6911 = vmatprep.subr.mxu0 0.0
    %6912 = vmatpush2.msra.mxu0 0.0
    %6913 = vmatprep.subr.mxu0 0.0
    %6914 = vmatpush2.msra.mxu0 0.0
    %6915 = vmatprep.subr.mxu0 0.0
    %6916 = vmatpush2.msra.mxu0 0.0
    %6917 = vmatprep.subr.mxu0 0.0
    %6918 = vmatpush2.msra.mxu0 0.0
    %6919 = vmatprep.subr.mxu0 0.0
    %6920 = vmatpush2.msra.mxu0 0.0
    %6921 = vmatprep.subr.mxu0 0.0
    %6922 = vmatpush2.msra.mxu0 0.0
    %6923 = vmatprep.subr.mxu0 0.0
    %6924 = vmatpush2.msra.mxu0 0.0
    %6925 = vmatprep.subr.mxu0 0.0
    %6926 = vmatpush2.msra.mxu0 0.0
    %6927 = vmatprep.subr.mxu0 0.0
    %6928 = vmatpush2.msra.mxu0 0.0
    %6929 = vmatprep.subr.mxu0 0.0
    %6930 = vmatpush2.msra.mxu0 0.0
    %6931 = vmatprep.subr.mxu0 0.0
    %6932 = vmatpush2.msra.mxu0 0.0
    %6933 = vmatprep.subr.mxu0 0.0
    %6934 = vmatpush2.msra.mxu0 0.0
    %6935 = vmatprep.subr.mxu0 0.0
    %6936 = vmatpush2.msra.mxu0 0.0
    %6937 = vmatprep.subr.mxu0 0.0
    %6938 = vmatpush2.msra.mxu0 0.0
    %6939 = vmatprep.subr.mxu0 0.0
    %6940 = vmatpush2.msra.mxu0 0.0
    %6941 = vmatprep.subr.mxu0 0.0
    %6942 = vmatpush2.msra.mxu0 0.0
    %6943 = vmatprep.mubr.f32.mxu0 0.0
    %v6944 = vand.u32 %v2054, 4294901760
    %v6945 = vsub.f32 %v2054, %v6944
    %v6946 = vand.u32 %v6945, 4294901760
    %v6947 = vsub.f32 %v6945, %v6946
    %v6948 = vand.u32 %v6947, 4294901760
    %6949 = vmatmul.mubr.f32.gmra.mxu0 %v6948
    %v6950 = vpop.f32.mrf.mxu0
    %v6951 = vadd.f32 %v2052, %v6950
    %v6952 = vpop.f32.mrf.mxu0
    %6953 = vdwg.mxu0
    %6954 = vmatprep.subr.mxu0 0.0
    %6955 = vmatpush1.msra.mxu0 0.0
    %6956 = vmatprep.subr.mxu0 0.0
    %6957 = vmatpush1.msra.mxu0 0.0
    %6958 = vmatprep.subr.mxu0 0.0
    %6959 = vmatpush1.msra.mxu0 0.0
    %6960 = vmatprep.subr.mxu0 0.0
    %6961 = vmatpush1.msra.mxu0 0.0
    %6962 = vmatprep.subr.mxu0 0.0
    %6963 = vmatpush1.msra.mxu0 0.0
    %6964 = vmatprep.subr.mxu0 0.0
    %6965 = vmatpush1.msra.mxu0 0.0
    %6966 = vmatprep.subr.mxu0 0.0
    %6967 = vmatpush1.msra.mxu0 0.0
    %6968 = vmatprep.subr.mxu0 0.0
    %6969 = vmatpush1.msra.mxu0 0.0
    %6970 = vmatprep.subr.mxu0 0.0
    %v6971 = vand.u32 %v6870, 4294901760
    %v6972 = vsub.f32 %v6870, %v6971
    %v6973 = vand.u32 %v6972, 4294901760
    %v6974 = vsub.f32 %v6972, %v6973
    %v6975 = vand.u32 %v6974, 4294901760
    %6976 = vmatpush1.msra.mxu0 %v6975
    %6977 = vmatprep.subr.mxu0 0.0
    %v6978 = vand.u32 %v6869, 4294901760
    %v6979 = vsub.f32 %v6869, %v6978
    %v6980 = vand.u32 %v6979, 4294901760
    %v6981 = vsub.f32 %v6979, %v6980
    %v6982 = vand.u32 %v6981, 4294901760
    %6983 = vmatpush1.msra.mxu0 %v6982
    %6984 = vmatprep.subr.mxu0 0.0
    %v6985 = vand.u32 %v6868, 4294901760
    %v6986 = vsub.f32 %v6868, %v6985
    %v6987 = vand.u32 %v6986, 4294901760
    %v6988 = vsub.f32 %v6986, %v6987
    %v6989 = vand.u32 %v6988, 4294901760
    %6990 = vmatpush1.msra.mxu0 %v6989
    %6991 = vmatprep.subr.mxu0 0.0
    %v6992 = vand.u32 %v6867, 4294901760
    %v6993 = vsub.f32 %v6867, %v6992
    %v6994 = vand.u32 %v6993, 4294901760
    %v6995 = vsub.f32 %v6993, %v6994
    %v6996 = vand.u32 %v6995, 4294901760
    %6997 = vmatpush1.msra.mxu0 %v6996
    %6998 = vmatprep.subr.mxu0 0.0
    %v6999 = vand.u32 %v6866, 4294901760
    %v7000 = vsub.f32 %v6866, %v6999
    %v7001 = vand.u32 %v7000, 4294901760
    %v7002 = vsub.f32 %v7000, %v7001
    %v7003 = vand.u32 %v7002, 4294901760
    %7004 = vmatpush1.msra.mxu0 %v7003
    %7005 = vmatprep.subr.mxu0 0.0
    %v7006 = vand.u32 %v6865, 4294901760
    %v7007 = vsub.f32 %v6865, %v7006
    %v7008 = vand.u32 %v7007, 4294901760
    %v7009 = vsub.f32 %v7007, %v7008
    %v7010 = vand.u32 %v7009, 4294901760
    %7011 = vmatpush1.msra.mxu0 %v7010
    %7012 = vmatprep.subr.mxu0 0.0
    %v7013 = vand.u32 %v6864, 4294901760
    %v7014 = vsub.f32 %v6864, %v7013
    %v7015 = vand.u32 %v7014, 4294901760
    %v7016 = vsub.f32 %v7014, %v7015
    %v7017 = vand.u32 %v7016, 4294901760
    %7018 = vmatpush1.msra.mxu0 %v7017
    %7019 = vmatprep.subr.mxu0 0.0
    %v7020 = vand.u32 %v6863, 4294901760
    %v7021 = vsub.f32 %v6863, %v7020
    %v7022 = vand.u32 %v7021, 4294901760
    %v7023 = vsub.f32 %v7021, %v7022
    %v7024 = vand.u32 %v7023, 4294901760
    %7025 = vmatpush1.msra.mxu0 %v7024
    %7026 = vmatprep.subr.mxu0 0.0
    %7027 = vmatpush2.msra.mxu0 0.0
    %7028 = vmatprep.subr.mxu0 0.0
    %7029 = vmatpush2.msra.mxu0 0.0
    %7030 = vmatprep.subr.mxu0 0.0
    %7031 = vmatpush2.msra.mxu0 0.0
    %7032 = vmatprep.subr.mxu0 0.0
    %7033 = vmatpush2.msra.mxu0 0.0
    %7034 = vmatprep.subr.mxu0 0.0
    %7035 = vmatpush2.msra.mxu0 0.0
    %7036 = vmatprep.subr.mxu0 0.0
    %7037 = vmatpush2.msra.mxu0 0.0
    %7038 = vmatprep.subr.mxu0 0.0
    %7039 = vmatpush2.msra.mxu0 0.0
    %7040 = vmatprep.subr.mxu0 0.0
    %7041 = vmatpush2.msra.mxu0 0.0
    %7042 = vmatprep.subr.mxu0 0.0
    %7043 = vmatpush2.msra.mxu0 0.0
    %7044 = vmatprep.subr.mxu0 0.0
    %7045 = vmatpush2.msra.mxu0 0.0
    %7046 = vmatprep.subr.mxu0 0.0
    %7047 = vmatpush2.msra.mxu0 0.0
    %7048 = vmatprep.subr.mxu0 0.0
    %7049 = vmatpush2.msra.mxu0 0.0
    %7050 = vmatprep.subr.mxu0 0.0
    %7051 = vmatpush2.msra.mxu0 0.0
    %7052 = vmatprep.subr.mxu0 0.0
    %7053 = vmatpush2.msra.mxu0 0.0
    %7054 = vmatprep.subr.mxu0 0.0
    %7055 = vmatpush2.msra.mxu0 0.0
    %7056 = vmatprep.subr.mxu0 0.0
    %7057 = vmatpush2.msra.mxu0 0.0
    %7058 = vmatprep.mubr.f32.mxu0 0.0
    %v7059 = vand.u32 %v2054, 4294901760
    %7060 = vmatmul.mubr.f32.gmra.mxu0 %v7059
    %v7061 = vpop.f32.mrf.mxu0
    %v7062 = vadd.f32 %v6951, %v7061
    %v7063 = vpop.f32.mrf.mxu0
    %7064 = vdwg.mxu0
    %7065 = vmatprep.subr.mxu0 0.0
    %7066 = vmatpush1.msra.mxu0 0.0
    %7067 = vmatprep.subr.mxu0 0.0
    %7068 = vmatpush1.msra.mxu0 0.0
    %7069 = vmatprep.subr.mxu0 0.0
    %7070 = vmatpush1.msra.mxu0 0.0
    %7071 = vmatprep.subr.mxu0 0.0
    %7072 = vmatpush1.msra.mxu0 0.0
    %7073 = vmatprep.subr.mxu0 0.0
    %7074 = vmatpush1.msra.mxu0 0.0
    %7075 = vmatprep.subr.mxu0 0.0
    %7076 = vmatpush1.msra.mxu0 0.0
    %7077 = vmatprep.subr.mxu0 0.0
    %7078 = vmatpush1.msra.mxu0 0.0
    %7079 = vmatprep.subr.mxu0 0.0
    %7080 = vmatpush1.msra.mxu0 0.0
    %7081 = vmatprep.subr.mxu0 0.0
    %v7082 = vand.u32 %v6870, 4294901760
    %v7083 = vsub.f32 %v6870, %v7082
    %7084 = vmatpush1.msra.mxu0 %v7083
    %7085 = vmatprep.subr.mxu0 0.0
    %v7086 = vand.u32 %v6869, 4294901760
    %v7087 = vsub.f32 %v6869, %v7086
    %7088 = vmatpush1.msra.mxu0 %v7087
    %7089 = vmatprep.subr.mxu0 0.0
    %v7090 = vand.u32 %v6868, 4294901760
    %v7091 = vsub.f32 %v6868, %v7090
    %7092 = vmatpush1.msra.mxu0 %v7091
    %7093 = vmatprep.subr.mxu0 0.0
    %v7094 = vand.u32 %v6867, 4294901760
    %v7095 = vsub.f32 %v6867, %v7094
    %7096 = vmatpush1.msra.mxu0 %v7095
    %7097 = vmatprep.subr.mxu0 0.0
    %v7098 = vand.u32 %v6866, 4294901760
    %v7099 = vsub.f32 %v6866, %v7098
    %7100 = vmatpush1.msra.mxu0 %v7099
    %7101 = vmatprep.subr.mxu0 0.0
    %v7102 = vand.u32 %v6865, 4294901760
    %v7103 = vsub.f32 %v6865, %v7102
    %7104 = vmatpush1.msra.mxu0 %v7103
    %7105 = vmatprep.subr.mxu0 0.0
    %v7106 = vand.u32 %v6864, 4294901760
    %v7107 = vsub.f32 %v6864, %v7106
    %7108 = vmatpush1.msra.mxu0 %v7107
    %7109 = vmatprep.subr.mxu0 0.0
    %v7110 = vand.u32 %v6863, 4294901760
    %v7111 = vsub.f32 %v6863, %v7110
    %7112 = vmatpush1.msra.mxu0 %v7111
    %7113 = vmatprep.subr.mxu0 0.0
    %7114 = vmatpush2.msra.mxu0 0.0
    %7115 = vmatprep.subr.mxu0 0.0
    %7116 = vmatpush2.msra.mxu0 0.0
    %7117 = vmatprep.subr.mxu0 0.0
    %7118 = vmatpush2.msra.mxu0 0.0
    %7119 = vmatprep.subr.mxu0 0.0
    %7120 = vmatpush2.msra.mxu0 0.0
    %7121 = vmatprep.subr.mxu0 0.0
    %7122 = vmatpush2.msra.mxu0 0.0
    %7123 = vmatprep.subr.mxu0 0.0
    %7124 = vmatpush2.msra.mxu0 0.0
    %7125 = vmatprep.subr.mxu0 0.0
    %7126 = vmatpush2.msra.mxu0 0.0
    %7127 = vmatprep.subr.mxu0 0.0
    %7128 = vmatpush2.msra.mxu0 0.0
    %7129 = vmatprep.subr.mxu0 0.0
    %7130 = vmatpush2.msra.mxu0 0.0
    %7131 = vmatprep.subr.mxu0 0.0
    %7132 = vmatpush2.msra.mxu0 0.0
    %7133 = vmatprep.subr.mxu0 0.0
    %7134 = vmatpush2.msra.mxu0 0.0
    %7135 = vmatprep.subr.mxu0 0.0
    %7136 = vmatpush2.msra.mxu0 0.0
    %7137 = vmatprep.subr.mxu0 0.0
    %7138 = vmatpush2.msra.mxu0 0.0
    %7139 = vmatprep.subr.mxu0 0.0
    %7140 = vmatpush2.msra.mxu0 0.0
    %7141 = vmatprep.subr.mxu0 0.0
    %7142 = vmatpush2.msra.mxu0 0.0
    %7143 = vmatprep.subr.mxu0 0.0
    %7144 = vmatpush2.msra.mxu0 0.0
    %7145 = vmatprep.mubr.f32.mxu0 0.0
    %v7146 = vand.u32 %v2054, 4294901760
    %v7147 = vsub.f32 %v2054, %v7146
    %7148 = vmatmul.mubr.f32.gmra.mxu0 %v7147
    %v7149 = vpop.f32.mrf.mxu0
    %v7150 = vadd.f32 %v7062, %v7149
    %v7151 = vpop.f32.mrf.mxu0
    %7152 = vdwg.mxu0
    %7153 = vmatprep.subr.mxu0 0.0
    %7154 = vmatpush1.msra.mxu0 0.0
    %7155 = vmatprep.subr.mxu0 0.0
    %7156 = vmatpush1.msra.mxu0 0.0
    %7157 = vmatprep.subr.mxu0 0.0
    %7158 = vmatpush1.msra.mxu0 0.0
    %7159 = vmatprep.subr.mxu0 0.0
    %7160 = vmatpush1.msra.mxu0 0.0
    %7161 = vmatprep.subr.mxu0 0.0
    %7162 = vmatpush1.msra.mxu0 0.0
    %7163 = vmatprep.subr.mxu0 0.0
    %7164 = vmatpush1.msra.mxu0 0.0
    %7165 = vmatprep.subr.mxu0 0.0
    %7166 = vmatpush1.msra.mxu0 0.0
    %7167 = vmatprep.subr.mxu0 0.0
    %7168 = vmatpush1.msra.mxu0 0.0
    %7169 = vmatprep.subr.mxu0 0.0
    %v7170 = vand.u32 %v6870, 4294901760
    %7171 = vmatpush1.msra.mxu0 %v7170
    %7172 = vmatprep.subr.mxu0 0.0
    %v7173 = vand.u32 %v6869, 4294901760
    %7174 = vmatpush1.msra.mxu0 %v7173
    %7175 = vmatprep.subr.mxu0 0.0
    %v7176 = vand.u32 %v6868, 4294901760
    %7177 = vmatpush1.msra.mxu0 %v7176
    %7178 = vmatprep.subr.mxu0 0.0
    %v7179 = vand.u32 %v6867, 4294901760
    %7180 = vmatpush1.msra.mxu0 %v7179
    %7181 = vmatprep.subr.mxu0 0.0
    %v7182 = vand.u32 %v6866, 4294901760
    %7183 = vmatpush1.msra.mxu0 %v7182
    %7184 = vmatprep.subr.mxu0 0.0
    %v7185 = vand.u32 %v6865, 4294901760
    %7186 = vmatpush1.msra.mxu0 %v7185
    %7187 = vmatprep.subr.mxu0 0.0
    %v7188 = vand.u32 %v6864, 4294901760
    %7189 = vmatpush1.msra.mxu0 %v7188
    %7190 = vmatprep.subr.mxu0 0.0
    %v7191 = vand.u32 %v6863, 4294901760
    %7192 = vmatpush1.msra.mxu0 %v7191
    %7193 = vmatprep.subr.mxu0 0.0
    %7194 = vmatpush2.msra.mxu0 0.0
    %7195 = vmatprep.subr.mxu0 0.0
    %7196 = vmatpush2.msra.mxu0 0.0
    %7197 = vmatprep.subr.mxu0 0.0
    %7198 = vmatpush2.msra.mxu0 0.0
    %7199 = vmatprep.subr.mxu0 0.0
    %7200 = vmatpush2.msra.mxu0 0.0
    %7201 = vmatprep.subr.mxu0 0.0
    %7202 = vmatpush2.msra.mxu0 0.0
    %7203 = vmatprep.subr.mxu0 0.0
    %7204 = vmatpush2.msra.mxu0 0.0
    %7205 = vmatprep.subr.mxu0 0.0
    %7206 = vmatpush2.msra.mxu0 0.0
    %7207 = vmatprep.subr.mxu0 0.0
    %7208 = vmatpush2.msra.mxu0 0.0
    %7209 = vmatprep.subr.mxu0 0.0
    %7210 = vmatpush2.msra.mxu0 0.0
    %7211 = vmatprep.subr.mxu0 0.0
    %7212 = vmatpush2.msra.mxu0 0.0
    %7213 = vmatprep.subr.mxu0 0.0
    %7214 = vmatpush2.msra.mxu0 0.0
    %7215 = vmatprep.subr.mxu0 0.0
    %7216 = vmatpush2.msra.mxu0 0.0
    %7217 = vmatprep.subr.mxu0 0.0
    %7218 = vmatpush2.msra.mxu0 0.0
    %7219 = vmatprep.subr.mxu0 0.0
    %7220 = vmatpush2.msra.mxu0 0.0
    %7221 = vmatprep.subr.mxu0 0.0
    %7222 = vmatpush2.msra.mxu0 0.0
    %7223 = vmatprep.subr.mxu0 0.0
    %7224 = vmatpush2.msra.mxu0 0.0
    %7225 = vmatprep.mubr.f32.mxu0 0.0
    %v7226 = vand.u32 %v2054, 4294901760
    %v7227 = vsub.f32 %v2054, %v7226
    %v7228 = vand.u32 %v7227, 4294901760
    %7229 = vmatmul.mubr.f32.gmra.mxu0 %v7228
    %v7230 = vpop.f32.mrf.mxu0
    %v7231 = vadd.f32 %v7150, %v7230
    %v7232 = vpop.f32.mrf.mxu0
    %7233 = vdwg.mxu0
    %7234 = vmatprep.subr.mxu0 0.0
    %7235 = vmatpush1.msra.mxu0 0.0
    %7236 = vmatprep.subr.mxu0 0.0
    %7237 = vmatpush1.msra.mxu0 0.0
    %7238 = vmatprep.subr.mxu0 0.0
    %7239 = vmatpush1.msra.mxu0 0.0
    %7240 = vmatprep.subr.mxu0 0.0
    %7241 = vmatpush1.msra.mxu0 0.0
    %7242 = vmatprep.subr.mxu0 0.0
    %7243 = vmatpush1.msra.mxu0 0.0
    %7244 = vmatprep.subr.mxu0 0.0
    %7245 = vmatpush1.msra.mxu0 0.0
    %7246 = vmatprep.subr.mxu0 0.0
    %7247 = vmatpush1.msra.mxu0 0.0
    %7248 = vmatprep.subr.mxu0 0.0
    %7249 = vmatpush1.msra.mxu0 0.0
    %7250 = vmatprep.subr.mxu0 0.0
    %v7251 = vand.u32 %v6870, 4294901760
    %v7252 = vsub.f32 %v6870, %v7251
    %v7253 = vand.u32 %v7252, 4294901760
    %7254 = vmatpush1.msra.mxu0 %v7253
    %7255 = vmatprep.subr.mxu0 0.0
    %v7256 = vand.u32 %v6869, 4294901760
    %v7257 = vsub.f32 %v6869, %v7256
    %v7258 = vand.u32 %v7257, 4294901760
    %7259 = vmatpush1.msra.mxu0 %v7258
    %7260 = vmatprep.subr.mxu0 0.0
    %v7261 = vand.u32 %v6868, 4294901760
    %v7262 = vsub.f32 %v6868, %v7261
    %v7263 = vand.u32 %v7262, 4294901760
    %7264 = vmatpush1.msra.mxu0 %v7263
    %7265 = vmatprep.subr.mxu0 0.0
    %v7266 = vand.u32 %v6867, 4294901760
    %v7267 = vsub.f32 %v6867, %v7266
    %v7268 = vand.u32 %v7267, 4294901760
    %7269 = vmatpush1.msra.mxu0 %v7268
    %7270 = vmatprep.subr.mxu0 0.0
    %v7271 = vand.u32 %v6866, 4294901760
    %v7272 = vsub.f32 %v6866, %v7271
    %v7273 = vand.u32 %v7272, 4294901760
    %7274 = vmatpush1.msra.mxu0 %v7273
    %7275 = vmatprep.subr.mxu0 0.0
    %v7276 = vand.u32 %v6865, 4294901760
    %v7277 = vsub.f32 %v6865, %v7276
    %v7278 = vand.u32 %v7277, 4294901760
    %7279 = vmatpush1.msra.mxu0 %v7278
    %7280 = vmatprep.subr.mxu0 0.0
    %v7281 = vand.u32 %v6864, 4294901760
    %v7282 = vsub.f32 %v6864, %v7281
    %v7283 = vand.u32 %v7282, 4294901760
    %7284 = vmatpush1.msra.mxu0 %v7283
    %7285 = vmatprep.subr.mxu0 0.0
    %v7286 = vand.u32 %v6863, 4294901760
    %v7287 = vsub.f32 %v6863, %v7286
    %v7288 = vand.u32 %v7287, 4294901760
    %7289 = vmatpush1.msra.mxu0 %v7288
    %7290 = vmatprep.subr.mxu0 0.0
    %7291 = vmatpush2.msra.mxu0 0.0
    %7292 = vmatprep.subr.mxu0 0.0
    %7293 = vmatpush2.msra.mxu0 0.0
    %7294 = vmatprep.subr.mxu0 0.0
    %7295 = vmatpush2.msra.mxu0 0.0
    %7296 = vmatprep.subr.mxu0 0.0
    %7297 = vmatpush2.msra.mxu0 0.0
    %7298 = vmatprep.subr.mxu0 0.0
    %7299 = vmatpush2.msra.mxu0 0.0
    %7300 = vmatprep.subr.mxu0 0.0
    %7301 = vmatpush2.msra.mxu0 0.0
    %7302 = vmatprep.subr.mxu0 0.0
    %7303 = vmatpush2.msra.mxu0 0.0
    %7304 = vmatprep.subr.mxu0 0.0
    %7305 = vmatpush2.msra.mxu0 0.0
    %7306 = vmatprep.subr.mxu0 0.0
    %7307 = vmatpush2.msra.mxu0 0.0
    %7308 = vmatprep.subr.mxu0 0.0
    %7309 = vmatpush2.msra.mxu0 0.0
    %7310 = vmatprep.subr.mxu0 0.0
    %7311 = vmatpush2.msra.mxu0 0.0
    %7312 = vmatprep.subr.mxu0 0.0
    %7313 = vmatpush2.msra.mxu0 0.0
    %7314 = vmatprep.subr.mxu0 0.0
    %7315 = vmatpush2.msra.mxu0 0.0
    %7316 = vmatprep.subr.mxu0 0.0
    %7317 = vmatpush2.msra.mxu0 0.0
    %7318 = vmatprep.subr.mxu0 0.0
    %7319 = vmatpush2.msra.mxu0 0.0
    %7320 = vmatprep.subr.mxu0 0.0
    %7321 = vmatpush2.msra.mxu0 0.0
    %7322 = vmatprep.mubr.f32.mxu0 0.0
    %v7323 = vand.u32 %v2054, 4294901760
    %7324 = vmatmul.mubr.f32.gmra.mxu0 %v7323
    %v7325 = vpop.f32.mrf.mxu0
    %v7326 = vadd.f32 %v7231, %v7325
    %v7327 = vpop.f32.mrf.mxu0
    %7328 = vdwg.mxu0
    %7329 = vmatprep.subr.mxu0 0.0
    %7330 = vmatpush1.msra.mxu0 0.0
    %7331 = vmatprep.subr.mxu0 0.0
    %7332 = vmatpush1.msra.mxu0 0.0
    %7333 = vmatprep.subr.mxu0 0.0
    %7334 = vmatpush1.msra.mxu0 0.0
    %7335 = vmatprep.subr.mxu0 0.0
    %7336 = vmatpush1.msra.mxu0 0.0
    %7337 = vmatprep.subr.mxu0 0.0
    %7338 = vmatpush1.msra.mxu0 0.0
    %7339 = vmatprep.subr.mxu0 0.0
    %7340 = vmatpush1.msra.mxu0 0.0
    %7341 = vmatprep.subr.mxu0 0.0
    %7342 = vmatpush1.msra.mxu0 0.0
    %7343 = vmatprep.subr.mxu0 0.0
    %7344 = vmatpush1.msra.mxu0 0.0
    %7345 = vmatprep.subr.mxu0 0.0
    %v7346 = vand.u32 %v6870, 4294901760
    %7347 = vmatpush1.msra.mxu0 %v7346
    %7348 = vmatprep.subr.mxu0 0.0
    %v7349 = vand.u32 %v6869, 4294901760
    %7350 = vmatpush1.msra.mxu0 %v7349
    %7351 = vmatprep.subr.mxu0 0.0
    %v7352 = vand.u32 %v6868, 4294901760
    %7353 = vmatpush1.msra.mxu0 %v7352
    %7354 = vmatprep.subr.mxu0 0.0
    %v7355 = vand.u32 %v6867, 4294901760
    %7356 = vmatpush1.msra.mxu0 %v7355
    %7357 = vmatprep.subr.mxu0 0.0
    %v7358 = vand.u32 %v6866, 4294901760
    %7359 = vmatpush1.msra.mxu0 %v7358
    %7360 = vmatprep.subr.mxu0 0.0
    %v7361 = vand.u32 %v6865, 4294901760
    %7362 = vmatpush1.msra.mxu0 %v7361
    %7363 = vmatprep.subr.mxu0 0.0
    %v7364 = vand.u32 %v6864, 4294901760
    %7365 = vmatpush1.msra.mxu0 %v7364
    %7366 = vmatprep.subr.mxu0 0.0
    %v7367 = vand.u32 %v6863, 4294901760
    %7368 = vmatpush1.msra.mxu0 %v7367
    %7369 = vmatprep.subr.mxu0 0.0
    %7370 = vmatpush2.msra.mxu0 0.0
    %7371 = vmatprep.subr.mxu0 0.0
    %7372 = vmatpush2.msra.mxu0 0.0
    %7373 = vmatprep.subr.mxu0 0.0
    %7374 = vmatpush2.msra.mxu0 0.0
    %7375 = vmatprep.subr.mxu0 0.0
    %7376 = vmatpush2.msra.mxu0 0.0
    %7377 = vmatprep.subr.mxu0 0.0
    %7378 = vmatpush2.msra.mxu0 0.0
    %7379 = vmatprep.subr.mxu0 0.0
    %7380 = vmatpush2.msra.mxu0 0.0
    %7381 = vmatprep.subr.mxu0 0.0
    %7382 = vmatpush2.msra.mxu0 0.0
    %7383 = vmatprep.subr.mxu0 0.0
    %7384 = vmatpush2.msra.mxu0 0.0
    %7385 = vmatprep.subr.mxu0 0.0
    %7386 = vmatpush2.msra.mxu0 0.0
    %7387 = vmatprep.subr.mxu0 0.0
    %7388 = vmatpush2.msra.mxu0 0.0
    %7389 = vmatprep.subr.mxu0 0.0
    %7390 = vmatpush2.msra.mxu0 0.0
    %7391 = vmatprep.subr.mxu0 0.0
    %7392 = vmatpush2.msra.mxu0 0.0
    %7393 = vmatprep.subr.mxu0 0.0
    %7394 = vmatpush2.msra.mxu0 0.0
    %7395 = vmatprep.subr.mxu0 0.0
    %7396 = vmatpush2.msra.mxu0 0.0
    %7397 = vmatprep.subr.mxu0 0.0
    %7398 = vmatpush2.msra.mxu0 0.0
    %7399 = vmatprep.subr.mxu0 0.0
    %7400 = vmatpush2.msra.mxu0 0.0
    %7401 = vmatprep.mubr.f32.mxu0 0.0
    %v7402 = vand.u32 %v2054, 4294901760
    %7403 = vmatmul.mubr.f32.gmra.mxu0 %v7402
    %v7404 = vpop.f32.mrf.mxu0
    %v7405 = vadd.f32 %v7326, %v7404
    %v7406 = vpop.f32.mrf.mxu0
    %7407 = vdwg.mxu0
    %v7408 = vxor.u32 %v7405, 2147483648
    %v7409 = vmul.f32 %v7408, 1.442695
    %v7410 = vpow.pop %v7409
    %v7411 = vadd.f32 %v7410, 1.0
    %v7412 = vrcp.pop %v7411
    %v7413 = vmul.f32 1.0, %v7412
    %s7414 = scalar_lea.vmem [#allocation3], 2
    %7415 = vst.msk [vmem:[%s7414] sm:$0x1] %vm2602, %v7413
    // Predicated region
    $region30: #{tpu_custom_call.1} parent=1 // pred_check
      _
    $region31: #{tpu_custom_call.1} parent=1 // pred_check_branch
      %7417 = sbr.rel (0) target = $region33
    $region32: #{tpu_custom_call.1} parent=1 // pred_region
      %s7419 = ssub.s32 48, 48
      %7420 = vsyncadd [#allocation4], %s7419
      %s7422 = sshll.u32 [#allocation3], 4
      %s7423 = int_to_ptr.vmem [resolvable:$true] %s7422
      %7425 = dma.vmem_to_hbm [thread:$0]  %s7423, 48, %s7, [#allocation4]
    $region33: #{tpu_custom_call.1} parent=1 // pred_fallthru
      _
    // Predicated region
    $region34: #{tpu_custom_call.1} parent=1 // pred_check
      _
    $region35: #{tpu_custom_call.1} parent=1 // pred_check_branch
      %7427 = sbr.rel (0) target = $region37
    $region36: #{tpu_custom_call.1} parent=1 // pred_region
      %7428 = dma.done [#allocation4], 48
    $region37: #{tpu_custom_call.1} parent=1 // pred_fallthru
      _
    %7429 = vsyncpa [#allocation4], 1

</llo_original>
